<compile_context>
chip_gen: v7x
topology: tpu7x:2x2x1
jax: 0.10.0
libtpu: 0.0.40
codegen_flags: <defaults>
</compile_context>

<pallas_src>
import jax
import jax.numpy as jnp
from jax import lax
from jax.experimental import pallas as pl
from jax.experimental.pallas import tpu as pltpu

# ---- model dimensions (from the PyTorch spec) ------------------------------
IN_H = IN_W = 16
C0, C1, C2, HID = 3, 32, 64, 32     # in ch, conv1 ch, conv2 ch, linear1 width
K1, K2 = 3, 5                       # conv kernel sizes
OH1 = 12                            # conv1 rows/cols actually consumed (of 14)
SP = 11                             # "sparse" pooled map extent (valid at even idx)
POS = ((0, 0), (0, 1), (1, 0), (1, 1))  # conv2 outputs kept by MaxPool2d(2,2) on 3x3


def _fused_net_kernel(x_ref, w1_ref, b1_ref, w2f_ref, b2_ref,
                      wl1_ref, bl1_ref, wl2_ref, bl2_ref,
                      out_ref, p1s_ref, lhs_ref):
    nb = x_ref.shape[0]   # images in this grid step (block batch = 1)

    # ---- conv1 (3->32, k=3, valid, no activation): 9 shifted VPU MACs ------
    acc1 = None
    for kh in range(K1):
        for kw in range(K1):
            slab = x_ref[:, kh:kh + OH1, kw:kw + OH1, :]          # (nb,12,12,3)
            contrib = slab[..., 0:1] * w1_ref[kh, kw, 0]
            contrib = contrib + slab[..., 1:2] * w1_ref[kh, kw, 1]
            contrib = contrib + slab[..., 2:3] * w1_ref[kh, kw, 2]
            acc1 = contrib if acc1 is None else acc1 + contrib    # (nb,12,12,32)

    # ---- MaxPool2d(2,2): two dense shifted maxima (no per-pixel slices) ----
    # s[h, w] = max over acc1[h:h+2, w:w+2]; pooled value p1[i,j] = s[2i, 2j].
    t = jnp.maximum(acc1[:, 0:SP], acc1[:, 1:SP + 1])             # pairs along H
    s = jnp.maximum(t[:, :, 0:SP, :], t[:, :, 1:SP + 1, :])       # pairs along W
    # conv1 bias is per-channel constant -> commutes with max; add it here.
    p1s_ref[...] = s + b1_ref[...]                                # (nb,11,11,32)

    # ---- conv2 (32->64, k=5) restricted to the 2x2 outputs pool2 keeps -----
    # 25 MXU matmuls of (4*nb,32)@(32,64); LHS rows staged in a VMEM buffer.
    acc2 = jnp.zeros((4 * nb, C2), jnp.float32)
    for kh in range(K2):
        for kw in range(K2):
            for idx, (dh, dw) in enumerate(POS):
                lhs_ref[idx * nb:(idx + 1) * nb, :] = (
                    p1s_ref[:, 2 * (kh + dh), 2 * (kw + dw), :])
            w_tap = w2f_ref[kh * K2 + kw]                          # (32,64)
            acc2 = acc2 + jnp.dot(lhs_ref[...], w_tap,
                                  preferred_element_type=jnp.float32)

    # TODO(synk): nn.Dropout2d(p=0.1) is identity in inference mode; no-op.
    # ---- MaxPool2d(2,2) on 3x3 + AdaptiveMaxPool2d((1,1)) + Flatten --------
    feat = jnp.maximum(jnp.maximum(acc2[0 * nb:1 * nb], acc2[1 * nb:2 * nb]),
                       jnp.maximum(acc2[2 * nb:3 * nb], acc2[3 * nb:4 * nb]))
    feat = feat + b2_ref[...]                                      # (nb,64)

    # ---- Linear(64,32) + ReLU + Linear(32,1) + Sigmoid ---------------------
    h = jnp.dot(feat, wl1_ref[...], preferred_element_type=jnp.float32)
    h = jnp.maximum(h + bl1_ref[...], 0.0)                         # (nb,32)
    z = jnp.dot(h, wl2_ref[...], preferred_element_type=jnp.float32)
    z = z + bl2_ref[...]                                           # (nb,1)
    y = jax.nn.sigmoid(z)
    for n in range(nb):
        out_ref[n] = y[n:n + 1, :]


def net_forward(x_nchw, params):
    n = x_nchw.shape[0]
    x = jnp.transpose(x_nchw, (0, 2, 3, 1)).astype(jnp.float32)    # NCHW -> NHWC
    w2f = params["w_conv2"].reshape(K2 * K2, C1, C2)               # taps flattened

    fused = pl.pallas_call(
        _fused_net_kernel,
        out_shape=jax.ShapeDtypeStruct((n, 1, 1), jnp.float32),
        grid=(n,),
        in_specs=[
            pl.BlockSpec((1, IN_H, IN_W, C0), lambda b: (b, 0, 0, 0)),  # x
            pl.BlockSpec((K1, K1, C0, C1), lambda b: (0, 0, 0, 0)),     # conv1 W (HWIO)
            pl.BlockSpec((1, C1), lambda b: (0, 0)),                    # conv1 b
            pl.BlockSpec((K2 * K2, C1, C2), lambda b: (0, 0, 0)),       # conv2 W
            pl.BlockSpec((1, C2), lambda b: (0, 0)),                    # conv2 b
            pl.BlockSpec((C2, HID), lambda b: (0, 0)),                  # linear1 W
            pl.BlockSpec((1, HID), lambda b: (0, 0)),                   # linear1 b
            pl.BlockSpec((HID, 1), lambda b: (0, 0)),                   # linear2 W
            pl.BlockSpec((1, 1), lambda b: (0, 0)),                     # linear2 b
        ],
        out_specs=pl.BlockSpec((1, 1, 1), lambda b: (b, 0, 0)),
        scratch_shapes=[
            pltpu.VMEM((1, SP, SP, C1), jnp.float32),   # pooled conv1 map (sparse)
            pltpu.VMEM((4, C1), jnp.float32),           # conv2 LHS staging buffer
        ],
        compiler_params=pltpu.CompilerParams(
            dimension_semantics=("parallel",)),
    )
    out = fused(x, params["w_conv1"], params["b_conv1"], w2f, params["b_conv2"],
                params["w_lin1"], params["b_lin1"],
                params["w_lin2"], params["b_lin2"])
    return out.reshape(n, 1)


# -------------------- pure-JAX reference (for self-check) -------------------
def net_reference(x_nchw, params):
    x = jnp.transpose(x_nchw, (0, 2, 3, 1))
    dn1 = lax.conv_dimension_numbers(x.shape, params["w_conv1"].shape,
                                     ("NHWC", "HWIO", "NHWC"))
    y = lax.conv_general_dilated(x, params["w_conv1"], (1, 1), "VALID",
                                 dimension_numbers=dn1,
                                 precision=lax.Precision.HIGHEST)
    y = y + params["b_conv1"].reshape(1, 1, 1, -1)
    y = lax.reduce_window(y, -jnp.inf, lax.max, (1, 2, 2, 1), (1, 2, 2, 1), "VALID")
    dn2 = lax.conv_dimension_numbers(y.shape, params["w_conv2"].shape,
                                     ("NHWC", "HWIO", "NHWC"))
    y = lax.conv_general_dilated(y, params["w_conv2"], (1, 1), "VALID",
                                 dimension_numbers=dn2,
                                 precision=lax.Precision.HIGHEST)
    y = y + params["b_conv2"].reshape(1, 1, 1, -1)
    y = lax.reduce_window(y, -jnp.inf, lax.max, (1, 2, 2, 1), (1, 2, 2, 1), "VALID")
    feat = jnp.max(y, axis=(1, 2))                        # adaptive max -> (N,64)
    h = jnp.maximum(jnp.dot(feat, params["w_lin1"],
                            precision=lax.Precision.HIGHEST) + params["b_lin1"], 0.0)
    z = jnp.dot(h, params["w_lin2"],
                precision=lax.Precision.HIGHEST) + params["b_lin2"]
    return jax.nn.sigmoid(z)


# ---------------------------------- main -------------------------------------
if __name__ == "__main__":
    key = jax.random.PRNGKey(0)
    ks = jax.random.split(key, 9)
    # Weights generated directly in the layouts the kernel expects.
    # (If loading real PyTorch weights: conv (Cout,Cin,kh,kw) -> HWIO via
    #  transpose(2,3,1,0); linear (out,in) -> (in,out) via transpose.)
    params = {
        "w_conv1": 0.10 * jax.random.normal(ks[0], (K1, K1, C0, C1), jnp.float32),
        "b_conv1": 0.10 * jax.random.normal(ks[1], (1, C1), jnp.float32),
        "w_conv2": 0.05 * jax.random.normal(ks[2], (K2, K2, C1, C2), jnp.float32),
        "b_conv2": 0.05 * jax.random.normal(ks[3], (1, C2), jnp.float32),
        "w_lin1": 0.10 * jax.random.normal(ks[4], (C2, HID), jnp.float32),
        "b_lin1": 0.10 * jax.random.normal(ks[5], (1, HID), jnp.float32),
        "w_lin2": 0.10 * jax.random.normal(ks[6], (HID, 1), jnp.float32),
        "b_lin2": 0.10 * jax.random.normal(ks[7], (1, 1), jnp.float32),
    }
    # PyTorch-style NCHW input: batch=2, channels=3, spatial 16x16.
    x = jax.random.normal(ks[8], (2, 3, 16, 16), jnp.float32)

    out = jax.jit(net_forward)(x, params)
    out = jax.block_until_ready(out)
    ref = net_reference(x, params)

    assert out.shape == (2, 1), out.shape
    assert bool(jnp.all((out >= 0.0) & (out <= 1.0)))
    assert bool(jnp.allclose(out, ref, atol=2e-3, rtol=2e-3)), (out, ref)
    print("KERNEL_OK")
</pallas_src>

<mosaic_0001>
module attributes {stable_mosaic.version = 11 : i64} {
  func.func @_fused_net_kernel(%arg0: i32, %arg1: memref<1x16x16x3xf32, #tpu.memory_space<vmem>>, %arg2: memref<3x3x3x32xf32, #tpu.memory_space<vmem>>, %arg3: memref<1x32xf32, #tpu.memory_space<vmem>>, %arg4: memref<25x32x64xf32, #tpu.memory_space<vmem>>, %arg5: memref<1x64xf32, #tpu.memory_space<vmem>>, %arg6: memref<64x32xf32, #tpu.memory_space<vmem>>, %arg7: memref<1x32xf32, #tpu.memory_space<vmem>>, %arg8: memref<32x1xf32, #tpu.memory_space<vmem>>, %arg9: memref<1x1xf32, #tpu.memory_space<vmem>>, %arg10: memref<1x1x1xf32, #tpu.memory_space<vmem>>, %arg11: memref<1x11x11x32xf32, #tpu.memory_space<vmem>>, %arg12: memref<4x32xf32, #tpu.memory_space<vmem>>) attributes {dimension_semantics = [#tpu.dimension_semantics<parallel>], iteration_bounds = array<i64: 2>, scalar_prefetch = 0 : i64, scratch_operands = 2 : i64, tpu.core_type = #tpu.core_type<tc>, window_params = [{transform_indices = @transform_0, window_bounds = array<i64: 1, 16, 16, 3>}, {pipeline_mode = #tpu.pipeline_mode<synchronous>, transform_indices = @transform_1, window_bounds = array<i64: 3, 3, 3, 32>}, {pipeline_mode = #tpu.pipeline_mode<synchronous>, transform_indices = @transform_2, window_bounds = array<i64: 1, 32>}, {pipeline_mode = #tpu.pipeline_mode<synchronous>, transform_indices = @transform_3, window_bounds = array<i64: 25, 32, 64>}, {pipeline_mode = #tpu.pipeline_mode<synchronous>, transform_indices = @transform_4, window_bounds = array<i64: 1, 64>}, {pipeline_mode = #tpu.pipeline_mode<synchronous>, transform_indices = @transform_5, window_bounds = array<i64: 64, 32>}, {pipeline_mode = #tpu.pipeline_mode<synchronous>, transform_indices = @transform_6, window_bounds = array<i64: 1, 32>}, {pipeline_mode = #tpu.pipeline_mode<synchronous>, transform_indices = @transform_7, window_bounds = array<i64: 32, 1>}, {pipeline_mode = #tpu.pipeline_mode<synchronous>, transform_indices = @transform_8, window_bounds = array<i64: 1, 1>}, {transform_indices = @transform_9, window_bounds = array<i64: 1, 1, 1>}]} {
    %c0 = arith.constant 0 : index
    %c0_0 = arith.constant 0 : index
    %c0_1 = arith.constant 0 : index
    %c0_2 = arith.constant 0 : index
    %0 = vector.load %arg1[%c0, %c0_0, %c0_1, %c0_2] : memref<1x16x16x3xf32, #tpu.memory_space<vmem>>, vector<1x12x12x3xf32>
    %1 = vector.extract_strided_slice %0 {offsets = [0, 0, 0, 0], sizes = [1, 12, 12, 1], strides = [1, 1, 1, 1]} : vector<1x12x12x3xf32> to vector<1x12x12x1xf32>
    %c0_3 = arith.constant 0 : index
    %c0_4 = arith.constant 0 : index
    %c0_5 = arith.constant 0 : index
    %c0_6 = arith.constant 0 : index
    %2 = vector.load %arg2[%c0_3, %c0_4, %c0_5, %c0_6] : memref<3x3x3x32xf32, #tpu.memory_space<vmem>>, vector<1x1x1x32xf32>
    %3 = vector.shape_cast %2 : vector<1x1x1x32xf32> to vector<32xf32>
    %4 = vector.shape_cast %3 : vector<32xf32> to vector<1x1x1x32xf32>
    %5 = vector.broadcast %1 : vector<1x12x12x1xf32> to vector<1x12x12x32xf32>
    %6 = vector.broadcast %4 : vector<1x1x1x32xf32> to vector<1x12x12x32xf32>
    %7 = arith.mulf %5, %6 : vector<1x12x12x32xf32>
    %8 = vector.extract_strided_slice %0 {offsets = [0, 0, 0, 1], sizes = [1, 12, 12, 1], strides = [1, 1, 1, 1]} : vector<1x12x12x3xf32> to vector<1x12x12x1xf32>
    %c0_7 = arith.constant 0 : index
    %c0_8 = arith.constant 0 : index
    %c1 = arith.constant 1 : index
    %c0_9 = arith.constant 0 : index
    %9 = vector.load %arg2[%c0_7, %c0_8, %c1, %c0_9] : memref<3x3x3x32xf32, #tpu.memory_space<vmem>>, vector<1x1x1x32xf32>
    %10 = vector.shape_cast %9 : vector<1x1x1x32xf32> to vector<32xf32>
    %11 = vector.shape_cast %10 : vector<32xf32> to vector<1x1x1x32xf32>
    %12 = vector.broadcast %8 : vector<1x12x12x1xf32> to vector<1x12x12x32xf32>
    %13 = vector.broadcast %11 : vector<1x1x1x32xf32> to vector<1x12x12x32xf32>
    %14 = arith.mulf %12, %13 : vector<1x12x12x32xf32>
    %15 = arith.addf %7, %14 : vector<1x12x12x32xf32>
    %16 = vector.extract_strided_slice %0 {offsets = [0, 0, 0, 2], sizes = [1, 12, 12, 1], strides = [1, 1, 1, 1]} : vector<1x12x12x3xf32> to vector<1x12x12x1xf32>
    %c0_10 = arith.constant 0 : index
    %c0_11 = arith.constant 0 : index
    %c2 = arith.constant 2 : index
    %c0_12 = arith.constant 0 : index
    %17 = vector.load %arg2[%c0_10, %c0_11, %c2, %c0_12] : memref<3x3x3x32xf32, #tpu.memory_space<vmem>>, vector<1x1x1x32xf32>
    %18 = vector.shape_cast %17 : vector<1x1x1x32xf32> to vector<32xf32>
    %19 = vector.shape_cast %18 : vector<32xf32> to vector<1x1x1x32xf32>
    %20 = vector.broadcast %16 : vector<1x12x12x1xf32> to vector<1x12x12x32xf32>
    %21 = vector.broadcast %19 : vector<1x1x1x32xf32> to vector<1x12x12x32xf32>
    %22 = arith.mulf %20, %21 : vector<1x12x12x32xf32>
    %23 = arith.addf %15, %22 : vector<1x12x12x32xf32>
    %c0_13 = arith.constant 0 : index
    %c0_14 = arith.constant 0 : index
    %c1_15 = arith.constant 1 : index
    %c0_16 = arith.constant 0 : index
    %24 = vector.load %arg1[%c0_13, %c0_14, %c1_15, %c0_16] : memref<1x16x16x3xf32, #tpu.memory_space<vmem>>, vector<1x12x12x3xf32>
    %25 = vector.extract_strided_slice %24 {offsets = [0, 0, 0, 0], sizes = [1, 12, 12, 1], strides = [1, 1, 1, 1]} : vector<1x12x12x3xf32> to vector<1x12x12x1xf32>
    %c0_17 = arith.constant 0 : index
    %c1_18 = arith.constant 1 : index
    %c0_19 = arith.constant 0 : index
    %c0_20 = arith.constant 0 : index
    %26 = vector.load %arg2[%c0_17, %c1_18, %c0_19, %c0_20] : memref<3x3x3x32xf32, #tpu.memory_space<vmem>>, vector<1x1x1x32xf32>
    %27 = vector.shape_cast %26 : vector<1x1x1x32xf32> to vector<32xf32>
    %28 = vector.shape_cast %27 : vector<32xf32> to vector<1x1x1x32xf32>
    %29 = vector.broadcast %25 : vector<1x12x12x1xf32> to vector<1x12x12x32xf32>
    %30 = vector.broadcast %28 : vector<1x1x1x32xf32> to vector<1x12x12x32xf32>
    %31 = arith.mulf %29, %30 : vector<1x12x12x32xf32>
    %32 = vector.extract_strided_slice %24 {offsets = [0, 0, 0, 1], sizes = [1, 12, 12, 1], strides = [1, 1, 1, 1]} : vector<1x12x12x3xf32> to vector<1x12x12x1xf32>
    %c0_21 = arith.constant 0 : index
    %c1_22 = arith.constant 1 : index
    %c1_23 = arith.constant 1 : index
    %c0_24 = arith.constant 0 : index
    %33 = vector.load %arg2[%c0_21, %c1_22, %c1_23, %c0_24] : memref<3x3x3x32xf32, #tpu.memory_space<vmem>>, vector<1x1x1x32xf32>
    %34 = vector.shape_cast %33 : vector<1x1x1x32xf32> to vector<32xf32>
    %35 = vector.shape_cast %34 : vector<32xf32> to vector<1x1x1x32xf32>
    %36 = vector.broadcast %32 : vector<1x12x12x1xf32> to vector<1x12x12x32xf32>
    %37 = vector.broadcast %35 : vector<1x1x1x32xf32> to vector<1x12x12x32xf32>
    %38 = arith.mulf %36, %37 : vector<1x12x12x32xf32>
    %39 = arith.addf %31, %38 : vector<1x12x12x32xf32>
    %40 = vector.extract_strided_slice %24 {offsets = [0, 0, 0, 2], sizes = [1, 12, 12, 1], strides = [1, 1, 1, 1]} : vector<1x12x12x3xf32> to vector<1x12x12x1xf32>
    %c0_25 = arith.constant 0 : index
    %c1_26 = arith.constant 1 : index
    %c2_27 = arith.constant 2 : index
    %c0_28 = arith.constant 0 : index
    %41 = vector.load %arg2[%c0_25, %c1_26, %c2_27, %c0_28] : memref<3x3x3x32xf32, #tpu.memory_space<vmem>>, vector<1x1x1x32xf32>
    %42 = vector.shape_cast %41 : vector<1x1x1x32xf32> to vector<32xf32>
    %43 = vector.shape_cast %42 : vector<32xf32> to vector<1x1x1x32xf32>
    %44 = vector.broadcast %40 : vector<1x12x12x1xf32> to vector<1x12x12x32xf32>
    %45 = vector.broadcast %43 : vector<1x1x1x32xf32> to vector<1x12x12x32xf32>
    %46 = arith.mulf %44, %45 : vector<1x12x12x32xf32>
    %47 = arith.addf %39, %46 : vector<1x12x12x32xf32>
    %48 = arith.addf %23, %47 : vector<1x12x12x32xf32>
    %c0_29 = arith.constant 0 : index
    %c0_30 = arith.constant 0 : index
    %c2_31 = arith.constant 2 : index
    %c0_32 = arith.constant 0 : index
    %49 = vector.load %arg1[%c0_29, %c0_30, %c2_31, %c0_32] : memref<1x16x16x3xf32, #tpu.memory_space<vmem>>, vector<1x12x12x3xf32>
    %50 = vector.extract_strided_slice %49 {offsets = [0, 0, 0, 0], sizes = [1, 12, 12, 1], strides = [1, 1, 1, 1]} : vector<1x12x12x3xf32> to vector<1x12x12x1xf32>
    %c0_33 = arith.constant 0 : index
    %c2_34 = arith.constant 2 : index
    %c0_35 = arith.constant 0 : index
    %c0_36 = arith.constant 0 : index
    %51 = vector.load %arg2[%c0_33, %c2_34, %c0_35, %c0_36] : memref<3x3x3x32xf32, #tpu.memory_space<vmem>>, vector<1x1x1x32xf32>
    %52 = vector.shape_cast %51 : vector<1x1x1x32xf32> to vector<32xf32>
    %53 = vector.shape_cast %52 : vector<32xf32> to vector<1x1x1x32xf32>
    %54 = vector.broadcast %50 : vector<1x12x12x1xf32> to vector<1x12x12x32xf32>
    %55 = vector.broadcast %53 : vector<1x1x1x32xf32> to vector<1x12x12x32xf32>
    %56 = arith.mulf %54, %55 : vector<1x12x12x32xf32>
    %57 = vector.extract_strided_slice %49 {offsets = [0, 0, 0, 1], sizes = [1, 12, 12, 1], strides = [1, 1, 1, 1]} : vector<1x12x12x3xf32> to vector<1x12x12x1xf32>
    %c0_37 = arith.constant 0 : index
    %c2_38 = arith.constant 2 : index
    %c1_39 = arith.constant 1 : index
    %c0_40 = arith.constant 0 : index
    %58 = vector.load %arg2[%c0_37, %c2_38, %c1_39, %c0_40] : memref<3x3x3x32xf32, #tpu.memory_space<vmem>>, vector<1x1x1x32xf32>
    %59 = vector.shape_cast %58 : vector<1x1x1x32xf32> to vector<32xf32>
    %60 = vector.shape_cast %59 : vector<32xf32> to vector<1x1x1x32xf32>
    %61 = vector.broadcast %57 : vector<1x12x12x1xf32> to vector<1x12x12x32xf32>
    %62 = vector.broadcast %60 : vector<1x1x1x32xf32> to vector<1x12x12x32xf32>
    %63 = arith.mulf %61, %62 : vector<1x12x12x32xf32>
    %64 = arith.addf %56, %63 : vector<1x12x12x32xf32>
    %65 = vector.extract_strided_slice %49 {offsets = [0, 0, 0, 2], sizes = [1, 12, 12, 1], strides = [1, 1, 1, 1]} : vector<1x12x12x3xf32> to vector<1x12x12x1xf32>
    %c0_41 = arith.constant 0 : index
    %c2_42 = arith.constant 2 : index
    %c2_43 = arith.constant 2 : index
    %c0_44 = arith.constant 0 : index
    %66 = vector.load %arg2[%c0_41, %c2_42, %c2_43, %c0_44] : memref<3x3x3x32xf32, #tpu.memory_space<vmem>>, vector<1x1x1x32xf32>
    %67 = vector.shape_cast %66 : vector<1x1x1x32xf32> to vector<32xf32>
    %68 = vector.shape_cast %67 : vector<32xf32> to vector<1x1x1x32xf32>
    %69 = vector.broadcast %65 : vector<1x12x12x1xf32> to vector<1x12x12x32xf32>
    %70 = vector.broadcast %68 : vector<1x1x1x32xf32> to vector<1x12x12x32xf32>
    %71 = arith.mulf %69, %70 : vector<1x12x12x32xf32>
    %72 = arith.addf %64, %71 : vector<1x12x12x32xf32>
    %73 = arith.addf %48, %72 : vector<1x12x12x32xf32>
    %c0_45 = arith.constant 0 : index
    %c1_46 = arith.constant 1 : index
    %c0_47 = arith.constant 0 : index
    %c0_48 = arith.constant 0 : index
    %74 = vector.load %arg1[%c0_45, %c1_46, %c0_47, %c0_48] : memref<1x16x16x3xf32, #tpu.memory_space<vmem>>, vector<1x12x12x3xf32>
    %75 = vector.extract_strided_slice %74 {offsets = [0, 0, 0, 0], sizes = [1, 12, 12, 1], strides = [1, 1, 1, 1]} : vector<1x12x12x3xf32> to vector<1x12x12x1xf32>
    %c1_49 = arith.constant 1 : index
    %c0_50 = arith.constant 0 : index
    %c0_51 = arith.constant 0 : index
    %c0_52 = arith.constant 0 : index
    %76 = vector.load %arg2[%c1_49, %c0_50, %c0_51, %c0_52] : memref<3x3x3x32xf32, #tpu.memory_space<vmem>>, vector<1x1x1x32xf32>
    %77 = vector.shape_cast %76 : vector<1x1x1x32xf32> to vector<32xf32>
    %78 = vector.shape_cast %77 : vector<32xf32> to vector<1x1x1x32xf32>
    %79 = vector.broadcast %75 : vector<1x12x12x1xf32> to vector<1x12x12x32xf32>
    %80 = vector.broadcast %78 : vector<1x1x1x32xf32> to vector<1x12x12x32xf32>
    %81 = arith.mulf %79, %80 : vector<1x12x12x32xf32>
    %82 = vector.extract_strided_slice %74 {offsets = [0, 0, 0, 1], sizes = [1, 12, 12, 1], strides = [1, 1, 1, 1]} : vector<1x12x12x3xf32> to vector<1x12x12x1xf32>
    %c1_53 = arith.constant 1 : index
    %c0_54 = arith.constant 0 : index
    %c1_55 = arith.constant 1 : index
    %c0_56 = arith.constant 0 : index
    %83 = vector.load %arg2[%c1_53, %c0_54, %c1_55, %c0_56] : memref<3x3x3x32xf32, #tpu.memory_space<vmem>>, vector<1x1x1x32xf32>
    %84 = vector.shape_cast %83 : vector<1x1x1x32xf32> to vector<32xf32>
    %85 = vector.shape_cast %84 : vector<32xf32> to vector<1x1x1x32xf32>
    %86 = vector.broadcast %82 : vector<1x12x12x1xf32> to vector<1x12x12x32xf32>
    %87 = vector.broadcast %85 : vector<1x1x1x32xf32> to vector<1x12x12x32xf32>
    %88 = arith.mulf %86, %87 : vector<1x12x12x32xf32>
    %89 = arith.addf %81, %88 : vector<1x12x12x32xf32>
    %90 = vector.extract_strided_slice %74 {offsets = [0, 0, 0, 2], sizes = [1, 12, 12, 1], strides = [1, 1, 1, 1]} : vector<1x12x12x3xf32> to vector<1x12x12x1xf32>
    %c1_57 = arith.constant 1 : index
    %c0_58 = arith.constant 0 : index
    %c2_59 = arith.constant 2 : index
    %c0_60 = arith.constant 0 : index
    %91 = vector.load %arg2[%c1_57, %c0_58, %c2_59, %c0_60] : memref<3x3x3x32xf32, #tpu.memory_space<vmem>>, vector<1x1x1x32xf32>
    %92 = vector.shape_cast %91 : vector<1x1x1x32xf32> to vector<32xf32>
    %93 = vector.shape_cast %92 : vector<32xf32> to vector<1x1x1x32xf32>
    %94 = vector.broadcast %90 : vector<1x12x12x1xf32> to vector<1x12x12x32xf32>
    %95 = vector.broadcast %93 : vector<1x1x1x32xf32> to vector<1x12x12x32xf32>
    %96 = arith.mulf %94, %95 : vector<1x12x12x32xf32>
    %97 = arith.addf %89, %96 : vector<1x12x12x32xf32>
    %98 = arith.addf %73, %97 : vector<1x12x12x32xf32>
    %c0_61 = arith.constant 0 : index
    %c1_62 = arith.constant 1 : index
    %c1_63 = arith.constant 1 : index
    %c0_64 = arith.constant 0 : index
    %99 = vector.load %arg1[%c0_61, %c1_62, %c1_63, %c0_64] : memref<1x16x16x3xf32, #tpu.memory_space<vmem>>, vector<1x12x12x3xf32>
    %100 = vector.extract_strided_slice %99 {offsets = [0, 0, 0, 0], sizes = [1, 12, 12, 1], strides = [1, 1, 1, 1]} : vector<1x12x12x3xf32> to vector<1x12x12x1xf32>
    %c1_65 = arith.constant 1 : index
    %c1_66 = arith.constant 1 : index
    %c0_67 = arith.constant 0 : index
    %c0_68 = arith.constant 0 : index
    %101 = vector.load %arg2[%c1_65, %c1_66, %c0_67, %c0_68] : memref<3x3x3x32xf32, #tpu.memory_space<vmem>>, vector<1x1x1x32xf32>
    %102 = vector.shape_cast %101 : vector<1x1x1x32xf32> to vector<32xf32>
    %103 = vector.shape_cast %102 : vector<32xf32> to vector<1x1x1x32xf32>
    %104 = vector.broadcast %100 : vector<1x12x12x1xf32> to vector<1x12x12x32xf32>
    %105 = vector.broadcast %103 : vector<1x1x1x32xf32> to vector<1x12x12x32xf32>
    %106 = arith.mulf %104, %105 : vector<1x12x12x32xf32>
    %107 = vector.extract_strided_slice %99 {offsets = [0, 0, 0, 1], sizes = [1, 12, 12, 1], strides = [1, 1, 1, 1]} : vector<1x12x12x3xf32> to vector<1x12x12x1xf32>
    %c1_69 = arith.constant 1 : index
    %c1_70 = arith.constant 1 : index
    %c1_71 = arith.constant 1 : index
    %c0_72 = arith.constant 0 : index
    %108 = vector.load %arg2[%c1_69, %c1_70, %c1_71, %c0_72] : memref<3x3x3x32xf32, #tpu.memory_space<vmem>>, vector<1x1x1x32xf32>
    %109 = vector.shape_cast %108 : vector<1x1x1x32xf32> to vector<32xf32>
    %110 = vector.shape_cast %109 : vector<32xf32> to vector<1x1x1x32xf32>
    %111 = vector.broadcast %107 : vector<1x12x12x1xf32> to vector<1x12x12x32xf32>
    %112 = vector.broadcast %110 : vector<1x1x1x32xf32> to vector<1x12x12x32xf32>
    %113 = arith.mulf %111, %112 : vector<1x12x12x32xf32>
    %114 = arith.addf %106, %113 : vector<1x12x12x32xf32>
    %115 = vector.extract_strided_slice %99 {offsets = [0, 0, 0, 2], sizes = [1, 12, 12, 1], strides = [1, 1, 1, 1]} : vector<1x12x12x3xf32> to vector<1x12x12x1xf32>
    %c1_73 = arith.constant 1 : index
    %c1_74 = arith.constant 1 : index
    %c2_75 = arith.constant 2 : index
    %c0_76 = arith.constant 0 : index
    %116 = vector.load %arg2[%c1_73, %c1_74, %c2_75, %c0_76] : memref<3x3x3x32xf32, #tpu.memory_space<vmem>>, vector<1x1x1x32xf32>
    %117 = vector.shape_cast %116 : vector<1x1x1x32xf32> to vector<32xf32>
    %118 = vector.shape_cast %117 : vector<32xf32> to vector<1x1x1x32xf32>
    %119 = vector.broadcast %115 : vector<1x12x12x1xf32> to vector<1x12x12x32xf32>
    %120 = vector.broadcast %118 : vector<1x1x1x32xf32> to vector<1x12x12x32xf32>
    %121 = arith.mulf %119, %120 : vector<1x12x12x32xf32>
    %122 = arith.addf %114, %121 : vector<1x12x12x32xf32>
    %123 = arith.addf %98, %122 : vector<1x12x12x32xf32>
    %c0_77 = arith.constant 0 : index
    %c1_78 = arith.constant 1 : index
    %c2_79 = arith.constant 2 : index
    %c0_80 = arith.constant 0 : index
    %124 = vector.load %arg1[%c0_77, %c1_78, %c2_79, %c0_80] : memref<1x16x16x3xf32, #tpu.memory_space<vmem>>, vector<1x12x12x3xf32>
    %125 = vector.extract_strided_slice %124 {offsets = [0, 0, 0, 0], sizes = [1, 12, 12, 1], strides = [1, 1, 1, 1]} : vector<1x12x12x3xf32> to vector<1x12x12x1xf32>
    %c1_81 = arith.constant 1 : index
    %c2_82 = arith.constant 2 : index
    %c0_83 = arith.constant 0 : index
    %c0_84 = arith.constant 0 : index
    %126 = vector.load %arg2[%c1_81, %c2_82, %c0_83, %c0_84] : memref<3x3x3x32xf32, #tpu.memory_space<vmem>>, vector<1x1x1x32xf32>
    %127 = vector.shape_cast %126 : vector<1x1x1x32xf32> to vector<32xf32>
    %128 = vector.shape_cast %127 : vector<32xf32> to vector<1x1x1x32xf32>
    %129 = vector.broadcast %125 : vector<1x12x12x1xf32> to vector<1x12x12x32xf32>
    %130 = vector.broadcast %128 : vector<1x1x1x32xf32> to vector<1x12x12x32xf32>
    %131 = arith.mulf %129, %130 : vector<1x12x12x32xf32>
    %132 = vector.extract_strided_slice %124 {offsets = [0, 0, 0, 1], sizes = [1, 12, 12, 1], strides = [1, 1, 1, 1]} : vector<1x12x12x3xf32> to vector<1x12x12x1xf32>
    %c1_85 = arith.constant 1 : index
    %c2_86 = arith.constant 2 : index
    %c1_87 = arith.constant 1 : index
    %c0_88 = arith.constant 0 : index
    %133 = vector.load %arg2[%c1_85, %c2_86, %c1_87, %c0_88] : memref<3x3x3x32xf32, #tpu.memory_space<vmem>>, vector<1x1x1x32xf32>
    %134 = vector.shape_cast %133 : vector<1x1x1x32xf32> to vector<32xf32>
    %135 = vector.shape_cast %134 : vector<32xf32> to vector<1x1x1x32xf32>
    %136 = vector.broadcast %132 : vector<1x12x12x1xf32> to vector<1x12x12x32xf32>
    %137 = vector.broadcast %135 : vector<1x1x1x32xf32> to vector<1x12x12x32xf32>
    %138 = arith.mulf %136, %137 : vector<1x12x12x32xf32>
    %139 = arith.addf %131, %138 : vector<1x12x12x32xf32>
    %140 = vector.extract_strided_slice %124 {offsets = [0, 0, 0, 2], sizes = [1, 12, 12, 1], strides = [1, 1, 1, 1]} : vector<1x12x12x3xf32> to vector<1x12x12x1xf32>
    %c1_89 = arith.constant 1 : index
    %c2_90 = arith.constant 2 : index
    %c2_91 = arith.constant 2 : index
    %c0_92 = arith.constant 0 : index
    %141 = vector.load %arg2[%c1_89, %c2_90, %c2_91, %c0_92] : memref<3x3x3x32xf32, #tpu.memory_space<vmem>>, vector<1x1x1x32xf32>
    %142 = vector.shape_cast %141 : vector<1x1x1x32xf32> to vector<32xf32>
    %143 = vector.shape_cast %142 : vector<32xf32> to vector<1x1x1x32xf32>
    %144 = vector.broadcast %140 : vector<1x12x12x1xf32> to vector<1x12x12x32xf32>
    %145 = vector.broadcast %143 : vector<1x1x1x32xf32> to vector<1x12x12x32xf32>
    %146 = arith.mulf %144, %145 : vector<1x12x12x32xf32>
    %147 = arith.addf %139, %146 : vector<1x12x12x32xf32>
    %148 = arith.addf %123, %147 : vector<1x12x12x32xf32>
    %c0_93 = arith.constant 0 : index
    %c2_94 = arith.constant 2 : index
    %c0_95 = arith.constant 0 : index
    %c0_96 = arith.constant 0 : index
    %149 = vector.load %arg1[%c0_93, %c2_94, %c0_95, %c0_96] : memref<1x16x16x3xf32, #tpu.memory_space<vmem>>, vector<1x12x12x3xf32>
    %150 = vector.extract_strided_slice %149 {offsets = [0, 0, 0, 0], sizes = [1, 12, 12, 1], strides = [1, 1, 1, 1]} : vector<1x12x12x3xf32> to vector<1x12x12x1xf32>
    %c2_97 = arith.constant 2 : index
    %c0_98 = arith.constant 0 : index
    %c0_99 = arith.constant 0 : index
    %c0_100 = arith.constant 0 : index
    %151 = vector.load %arg2[%c2_97, %c0_98, %c0_99, %c0_100] : memref<3x3x3x32xf32, #tpu.memory_space<vmem>>, vector<1x1x1x32xf32>
    %152 = vector.shape_cast %151 : vector<1x1x1x32xf32> to vector<32xf32>
    %153 = vector.shape_cast %152 : vector<32xf32> to vector<1x1x1x32xf32>
    %154 = vector.broadcast %150 : vector<1x12x12x1xf32> to vector<1x12x12x32xf32>
    %155 = vector.broadcast %153 : vector<1x1x1x32xf32> to vector<1x12x12x32xf32>
    %156 = arith.mulf %154, %155 : vector<1x12x12x32xf32>
    %157 = vector.extract_strided_slice %149 {offsets = [0, 0, 0, 1], sizes = [1, 12, 12, 1], strides = [1, 1, 1, 1]} : vector<1x12x12x3xf32> to vector<1x12x12x1xf32>
    %c2_101 = arith.constant 2 : index
    %c0_102 = arith.constant 0 : index
    %c1_103 = arith.constant 1 : index
    %c0_104 = arith.constant 0 : index
    %158 = vector.load %arg2[%c2_101, %c0_102, %c1_103, %c0_104] : memref<3x3x3x32xf32, #tpu.memory_space<vmem>>, vector<1x1x1x32xf32>
    %159 = vector.shape_cast %158 : vector<1x1x1x32xf32> to vector<32xf32>
    %160 = vector.shape_cast %159 : vector<32xf32> to vector<1x1x1x32xf32>
    %161 = vector.broadcast %157 : vector<1x12x12x1xf32> to vector<1x12x12x32xf32>
    %162 = vector.broadcast %160 : vector<1x1x1x32xf32> to vector<1x12x12x32xf32>
    %163 = arith.mulf %161, %162 : vector<1x12x12x32xf32>
    %164 = arith.addf %156, %163 : vector<1x12x12x32xf32>
    %165 = vector.extract_strided_slice %149 {offsets = [0, 0, 0, 2], sizes = [1, 12, 12, 1], strides = [1, 1, 1, 1]} : vector<1x12x12x3xf32> to vector<1x12x12x1xf32>
    %c2_105 = arith.constant 2 : index
    %c0_106 = arith.constant 0 : index
    %c2_107 = arith.constant 2 : index
    %c0_108 = arith.constant 0 : index
    %166 = vector.load %arg2[%c2_105, %c0_106, %c2_107, %c0_108] : memref<3x3x3x32xf32, #tpu.memory_space<vmem>>, vector<1x1x1x32xf32>
    %167 = vector.shape_cast %166 : vector<1x1x1x32xf32> to vector<32xf32>
    %168 = vector.shape_cast %167 : vector<32xf32> to vector<1x1x1x32xf32>
    %169 = vector.broadcast %165 : vector<1x12x12x1xf32> to vector<1x12x12x32xf32>
    %170 = vector.broadcast %168 : vector<1x1x1x32xf32> to vector<1x12x12x32xf32>
    %171 = arith.mulf %169, %170 : vector<1x12x12x32xf32>
    %172 = arith.addf %164, %171 : vector<1x12x12x32xf32>
    %173 = arith.addf %148, %172 : vector<1x12x12x32xf32>
    %c0_109 = arith.constant 0 : index
    %c2_110 = arith.constant 2 : index
    %c1_111 = arith.constant 1 : index
    %c0_112 = arith.constant 0 : index
    %174 = vector.load %arg1[%c0_109, %c2_110, %c1_111, %c0_112] : memref<1x16x16x3xf32, #tpu.memory_space<vmem>>, vector<1x12x12x3xf32>
    %175 = vector.extract_strided_slice %174 {offsets = [0, 0, 0, 0], sizes = [1, 12, 12, 1], strides = [1, 1, 1, 1]} : vector<1x12x12x3xf32> to vector<1x12x12x1xf32>
    %c2_113 = arith.constant 2 : index
    %c1_114 = arith.constant 1 : index
    %c0_115 = arith.constant 0 : index
    %c0_116 = arith.constant 0 : index
    %176 = vector.load %arg2[%c2_113, %c1_114, %c0_115, %c0_116] : memref<3x3x3x32xf32, #tpu.memory_space<vmem>>, vector<1x1x1x32xf32>
    %177 = vector.shape_cast %176 : vector<1x1x1x32xf32> to vector<32xf32>
    %178 = vector.shape_cast %177 : vector<32xf32> to vector<1x1x1x32xf32>
    %179 = vector.broadcast %175 : vector<1x12x12x1xf32> to vector<1x12x12x32xf32>
    %180 = vector.broadcast %178 : vector<1x1x1x32xf32> to vector<1x12x12x32xf32>
    %181 = arith.mulf %179, %180 : vector<1x12x12x32xf32>
    %182 = vector.extract_strided_slice %174 {offsets = [0, 0, 0, 1], sizes = [1, 12, 12, 1], strides = [1, 1, 1, 1]} : vector<1x12x12x3xf32> to vector<1x12x12x1xf32>
    %c2_117 = arith.constant 2 : index
    %c1_118 = arith.constant 1 : index
    %c1_119 = arith.constant 1 : index
    %c0_120 = arith.constant 0 : index
    %183 = vector.load %arg2[%c2_117, %c1_118, %c1_119, %c0_120] : memref<3x3x3x32xf32, #tpu.memory_space<vmem>>, vector<1x1x1x32xf32>
    %184 = vector.shape_cast %183 : vector<1x1x1x32xf32> to vector<32xf32>
    %185 = vector.shape_cast %184 : vector<32xf32> to vector<1x1x1x32xf32>
    %186 = vector.broadcast %182 : vector<1x12x12x1xf32> to vector<1x12x12x32xf32>
    %187 = vector.broadcast %185 : vector<1x1x1x32xf32> to vector<1x12x12x32xf32>
    %188 = arith.mulf %186, %187 : vector<1x12x12x32xf32>
    %189 = arith.addf %181, %188 : vector<1x12x12x32xf32>
    %190 = vector.extract_strided_slice %174 {offsets = [0, 0, 0, 2], sizes = [1, 12, 12, 1], strides = [1, 1, 1, 1]} : vector<1x12x12x3xf32> to vector<1x12x12x1xf32>
    %c2_121 = arith.constant 2 : index
    %c1_122 = arith.constant 1 : index
    %c2_123 = arith.constant 2 : index
    %c0_124 = arith.constant 0 : index
    %191 = vector.load %arg2[%c2_121, %c1_122, %c2_123, %c0_124] : memref<3x3x3x32xf32, #tpu.memory_space<vmem>>, vector<1x1x1x32xf32>
    %192 = vector.shape_cast %191 : vector<1x1x1x32xf32> to vector<32xf32>
    %193 = vector.shape_cast %192 : vector<32xf32> to vector<1x1x1x32xf32>
    %194 = vector.broadcast %190 : vector<1x12x12x1xf32> to vector<1x12x12x32xf32>
    %195 = vector.broadcast %193 : vector<1x1x1x32xf32> to vector<1x12x12x32xf32>
    %196 = arith.mulf %194, %195 : vector<1x12x12x32xf32>
    %197 = arith.addf %189, %196 : vector<1x12x12x32xf32>
    %198 = arith.addf %173, %197 : vector<1x12x12x32xf32>
    %c0_125 = arith.constant 0 : index
    %c2_126 = arith.constant 2 : index
    %c2_127 = arith.constant 2 : index
    %c0_128 = arith.constant 0 : index
    %199 = vector.load %arg1[%c0_125, %c2_126, %c2_127, %c0_128] : memref<1x16x16x3xf32, #tpu.memory_space<vmem>>, vector<1x12x12x3xf32>
    %200 = vector.extract_strided_slice %199 {offsets = [0, 0, 0, 0], sizes = [1, 12, 12, 1], strides = [1, 1, 1, 1]} : vector<1x12x12x3xf32> to vector<1x12x12x1xf32>
    %c2_129 = arith.constant 2 : index
    %c2_130 = arith.constant 2 : index
    %c0_131 = arith.constant 0 : index
    %c0_132 = arith.constant 0 : index
    %201 = vector.load %arg2[%c2_129, %c2_130, %c0_131, %c0_132] : memref<3x3x3x32xf32, #tpu.memory_space<vmem>>, vector<1x1x1x32xf32>
    %202 = vector.shape_cast %201 : vector<1x1x1x32xf32> to vector<32xf32>
    %203 = vector.shape_cast %202 : vector<32xf32> to vector<1x1x1x32xf32>
    %204 = vector.broadcast %200 : vector<1x12x12x1xf32> to vector<1x12x12x32xf32>
    %205 = vector.broadcast %203 : vector<1x1x1x32xf32> to vector<1x12x12x32xf32>
    %206 = arith.mulf %204, %205 : vector<1x12x12x32xf32>
    %207 = vector.extract_strided_slice %199 {offsets = [0, 0, 0, 1], sizes = [1, 12, 12, 1], strides = [1, 1, 1, 1]} : vector<1x12x12x3xf32> to vector<1x12x12x1xf32>
    %c2_133 = arith.constant 2 : index
    %c2_134 = arith.constant 2 : index
    %c1_135 = arith.constant 1 : index
    %c0_136 = arith.constant 0 : index
    %208 = vector.load %arg2[%c2_133, %c2_134, %c1_135, %c0_136] : memref<3x3x3x32xf32, #tpu.memory_space<vmem>>, vector<1x1x1x32xf32>
    %209 = vector.shape_cast %208 : vector<1x1x1x32xf32> to vector<32xf32>
    %210 = vector.shape_cast %209 : vector<32xf32> to vector<1x1x1x32xf32>
    %211 = vector.broadcast %207 : vector<1x12x12x1xf32> to vector<1x12x12x32xf32>
    %212 = vector.broadcast %210 : vector<1x1x1x32xf32> to vector<1x12x12x32xf32>
    %213 = arith.mulf %211, %212 : vector<1x12x12x32xf32>
    %214 = arith.addf %206, %213 : vector<1x12x12x32xf32>
    %215 = vector.extract_strided_slice %199 {offsets = [0, 0, 0, 2], sizes = [1, 12, 12, 1], strides = [1, 1, 1, 1]} : vector<1x12x12x3xf32> to vector<1x12x12x1xf32>
    %c2_137 = arith.constant 2 : index
    %c2_138 = arith.constant 2 : index
    %c2_139 = arith.constant 2 : index
    %c0_140 = arith.constant 0 : index
    %216 = vector.load %arg2[%c2_137, %c2_138, %c2_139, %c0_140] : memref<3x3x3x32xf32, #tpu.memory_space<vmem>>, vector<1x1x1x32xf32>
    %217 = vector.shape_cast %216 : vector<1x1x1x32xf32> to vector<32xf32>
    %218 = vector.shape_cast %217 : vector<32xf32> to vector<1x1x1x32xf32>
    %219 = vector.broadcast %215 : vector<1x12x12x1xf32> to vector<1x12x12x32xf32>
    %220 = vector.broadcast %218 : vector<1x1x1x32xf32> to vector<1x12x12x32xf32>
    %221 = arith.mulf %219, %220 : vector<1x12x12x32xf32>
    %222 = arith.addf %214, %221 : vector<1x12x12x32xf32>
    %223 = arith.addf %198, %222 : vector<1x12x12x32xf32>
    %224 = vector.extract_strided_slice %223 {offsets = [0, 0, 0, 0], sizes = [1, 11, 12, 32], strides = [1, 1, 1, 1]} : vector<1x12x12x32xf32> to vector<1x11x12x32xf32>
    %225 = vector.extract_strided_slice %223 {offsets = [0, 1, 0, 0], sizes = [1, 11, 12, 32], strides = [1, 1, 1, 1]} : vector<1x12x12x32xf32> to vector<1x11x12x32xf32>
    %226 = arith.maximumf %224, %225 : vector<1x11x12x32xf32>
    %227 = vector.extract_strided_slice %226 {offsets = [0, 0, 0, 0], sizes = [1, 11, 11, 32], strides = [1, 1, 1, 1]} : vector<1x11x12x32xf32> to vector<1x11x11x32xf32>
    %228 = vector.extract_strided_slice %226 {offsets = [0, 0, 1, 0], sizes = [1, 11, 11, 32], strides = [1, 1, 1, 1]} : vector<1x11x12x32xf32> to vector<1x11x11x32xf32>
    %229 = arith.maximumf %227, %228 : vector<1x11x11x32xf32>
    %c0_141 = arith.constant 0 : index
    %c0_142 = arith.constant 0 : index
    %230 = vector.load %arg3[%c0_141, %c0_142] : memref<1x32xf32, #tpu.memory_space<vmem>>, vector<1x32xf32>
    %231 = vector.shape_cast %230 : vector<1x32xf32> to vector<1x1x1x32xf32>
    %232 = vector.broadcast %231 : vector<1x1x1x32xf32> to vector<1x11x11x32xf32>
    %233 = arith.addf %229, %232 : vector<1x11x11x32xf32>
    %c0_143 = arith.constant 0 : index
    %c0_144 = arith.constant 0 : index
    %c0_145 = arith.constant 0 : index
    %c0_146 = arith.constant 0 : index
    %234 = vector.load %arg11[%c0_143, %c0_144, %c0_145, %c0_146] : memref<1x11x11x32xf32, #tpu.memory_space<vmem>>, vector<1x11x11x32xf32>
    tpu.vector_store %arg11[%c0_143, %c0_144, %c0_145, %c0_146], %233 {strides = array<i32>} : memref<1x11x11x32xf32, #tpu.memory_space<vmem>>, vector<1x11x11x32xf32>,
    %cst = arith.constant 0.000000e+00 : f32
    %235 = vector.broadcast %cst : f32 to vector<4x64xf32>
    %c0_147 = arith.constant 0 : index
    %c0_148 = arith.constant 0 : index
    %c0_149 = arith.constant 0 : index
    %c0_150 = arith.constant 0 : index
    %236 = vector.load %arg11[%c0_147, %c0_148, %c0_149, %c0_150] : memref<1x11x11x32xf32, #tpu.memory_space<vmem>>, vector<1x1x1x32xf32>
    %237 = vector.shape_cast %236 : vector<1x1x1x32xf32> to vector<1x32xf32>
    %c0_151 = arith.constant 0 : index
    %c0_152 = arith.constant 0 : index
    %238 = vector.load %arg12[%c0_151, %c0_152] : memref<4x32xf32, #tpu.memory_space<vmem>>, vector<1x32xf32>
    tpu.vector_store %arg12[%c0_151, %c0_152], %237 {strides = array<i32>} : memref<4x32xf32, #tpu.memory_space<vmem>>, vector<1x32xf32>,
    %c0_153 = arith.constant 0 : index
    %c0_154 = arith.constant 0 : index
    %c2_155 = arith.constant 2 : index
    %c0_156 = arith.constant 0 : index
    %239 = vector.load %arg11[%c0_153, %c0_154, %c2_155, %c0_156] : memref<1x11x11x32xf32, #tpu.memory_space<vmem>>, vector<1x1x1x32xf32>
    %240 = vector.shape_cast %239 : vector<1x1x1x32xf32> to vector<1x32xf32>
    %c1_157 = arith.constant 1 : index
    %c0_158 = arith.constant 0 : index
    %241 = vector.load %arg12[%c1_157, %c0_158] : memref<4x32xf32, #tpu.memory_space<vmem>>, vector<1x32xf32>
    tpu.vector_store %arg12[%c1_157, %c0_158], %240 {strides = array<i32>} : memref<4x32xf32, #tpu.memory_space<vmem>>, vector<1x32xf32>,
    %c0_159 = arith.constant 0 : index
    %c2_160 = arith.constant 2 : index
    %c0_161 = arith.constant 0 : index
    %c0_162 = arith.constant 0 : index
    %242 = vector.load %arg11[%c0_159, %c2_160, %c0_161, %c0_162] : memref<1x11x11x32xf32, #tpu.memory_space<vmem>>, vector<1x1x1x32xf32>
    %243 = vector.shape_cast %242 : vector<1x1x1x32xf32> to vector<1x32xf32>
    %c2_163 = arith.constant 2 : index
    %c0_164 = arith.constant 0 : index
    %244 = vector.load %arg12[%c2_163, %c0_164] : memref<4x32xf32, #tpu.memory_space<vmem>>, vector<1x32xf32>
    tpu.vector_store %arg12[%c2_163, %c0_164], %243 {strides = array<i32>} : memref<4x32xf32, #tpu.memory_space<vmem>>, vector<1x32xf32>,
    %c0_165 = arith.constant 0 : index
    %c2_166 = arith.constant 2 : index
    %c2_167 = arith.constant 2 : index
    %c0_168 = arith.constant 0 : index
    %245 = vector.load %arg11[%c0_165, %c2_166, %c2_167, %c0_168] : memref<1x11x11x32xf32, #tpu.memory_space<vmem>>, vector<1x1x1x32xf32>
    %246 = vector.shape_cast %245 : vector<1x1x1x32xf32> to vector<1x32xf32>
    %c3 = arith.constant 3 : index
    %c0_169 = arith.constant 0 : index
    %247 = vector.load %arg12[%c3, %c0_169] : memref<4x32xf32, #tpu.memory_space<vmem>>, vector<1x32xf32>
    tpu.vector_store %arg12[%c3, %c0_169], %246 {strides = array<i32>} : memref<4x32xf32, #tpu.memory_space<vmem>>, vector<1x32xf32>,
    %c0_170 = arith.constant 0 : index
    %c0_171 = arith.constant 0 : index
    %c0_172 = arith.constant 0 : index
    %248 = vector.load %arg4[%c0_170, %c0_171, %c0_172] : memref<25x32x64xf32, #tpu.memory_space<vmem>>, vector<1x32x64xf32>
    %249 = vector.shape_cast %248 : vector<1x32x64xf32> to vector<32x64xf32>
    %c0_173 = arith.constant 0 : index
    %c0_174 = arith.constant 0 : index
    %250 = vector.load %arg12[%c0_173, %c0_174] : memref<4x32xf32, #tpu.memory_space<vmem>>, vector<4x32xf32>
    %cst_175 = arith.constant dense<0.000000e+00> : vector<4x64xf32>
    %251 = tpu.matmul %250, %249, %cst_175 {dimension_numbers = #tpu.dot_dimension_numbers<[1], [0], [0], [1], [0, 0, 1, 1], [], []>} : vector<4x32xf32>, vector<32x64xf32>, vector<4x64xf32> -> vector<4x64xf32>
    %252 = arith.addf %235, %251 : vector<4x64xf32>
    %c0_176 = arith.constant 0 : index
    %c0_177 = arith.constant 0 : index
    %c2_178 = arith.constant 2 : index
    %c0_179 = arith.constant 0 : index
    %253 = vector.load %arg11[%c0_176, %c0_177, %c2_178, %c0_179] : memref<1x11x11x32xf32, #tpu.memory_space<vmem>>, vector<1x1x1x32xf32>
    %254 = vector.shape_cast %253 : vector<1x1x1x32xf32> to vector<1x32xf32>
    %c0_180 = arith.constant 0 : index
    %c0_181 = arith.constant 0 : index
    %255 = vector.load %arg12[%c0_180, %c0_181] : memref<4x32xf32, #tpu.memory_space<vmem>>, vector<1x32xf32>
    tpu.vector_store %arg12[%c0_180, %c0_181], %254 {strides = array<i32>} : memref<4x32xf32, #tpu.memory_space<vmem>>, vector<1x32xf32>,
    %c0_182 = arith.constant 0 : index
    %c0_183 = arith.constant 0 : index
    %c4 = arith.constant 4 : index
    %c0_184 = arith.constant 0 : index
    %256 = vector.load %arg11[%c0_182, %c0_183, %c4, %c0_184] : memref<1x11x11x32xf32, #tpu.memory_space<vmem>>, vector<1x1x1x32xf32>
    %257 = vector.shape_cast %256 : vector<1x1x1x32xf32> to vector<1x32xf32>
    %c1_185 = arith.constant 1 : index
    %c0_186 = arith.constant 0 : index
    %258 = vector.load %arg12[%c1_185, %c0_186] : memref<4x32xf32, #tpu.memory_space<vmem>>, vector<1x32xf32>
    tpu.vector_store %arg12[%c1_185, %c0_186], %257 {strides = array<i32>} : memref<4x32xf32, #tpu.memory_space<vmem>>, vector<1x32xf32>,
    %c0_187 = arith.constant 0 : index
    %c2_188 = arith.constant 2 : index
    %c2_189 = arith.constant 2 : index
    %c0_190 = arith.constant 0 : index
    %259 = vector.load %arg11[%c0_187, %c2_188, %c2_189, %c0_190] : memref<1x11x11x32xf32, #tpu.memory_space<vmem>>, vector<1x1x1x32xf32>
    %260 = vector.shape_cast %259 : vector<1x1x1x32xf32> to vector<1x32xf32>
    %c2_191 = arith.constant 2 : index
    %c0_192 = arith.constant 0 : index
    %261 = vector.load %arg12[%c2_191, %c0_192] : memref<4x32xf32, #tpu.memory_space<vmem>>, vector<1x32xf32>
    tpu.vector_store %arg12[%c2_191, %c0_192], %260 {strides = array<i32>} : memref<4x32xf32, #tpu.memory_space<vmem>>, vector<1x32xf32>,
    %c0_193 = arith.constant 0 : index
    %c2_194 = arith.constant 2 : index
    %c4_195 = arith.constant 4 : index
    %c0_196 = arith.constant 0 : index
    %262 = vector.load %arg11[%c0_193, %c2_194, %c4_195, %c0_196] : memref<1x11x11x32xf32, #tpu.memory_space<vmem>>, vector<1x1x1x32xf32>
    %263 = vector.shape_cast %262 : vector<1x1x1x32xf32> to vector<1x32xf32>
    %c3_197 = arith.constant 3 : index
    %c0_198 = arith.constant 0 : index
    %264 = vector.load %arg12[%c3_197, %c0_198] : memref<4x32xf32, #tpu.memory_space<vmem>>, vector<1x32xf32>
    tpu.vector_store %arg12[%c3_197, %c0_198], %263 {strides = array<i32>} : memref<4x32xf32, #tpu.memory_space<vmem>>, vector<1x32xf32>,
    %c1_199 = arith.constant 1 : index
    %c0_200 = arith.constant 0 : index
    %c0_201 = arith.constant 0 : index
    %265 = vector.load %arg4[%c1_199, %c0_200, %c0_201] : memref<25x32x64xf32, #tpu.memory_space<vmem>>, vector<1x32x64xf32>
    %266 = vector.shape_cast %265 : vector<1x32x64xf32> to vector<32x64xf32>
    %c0_202 = arith.constant 0 : index
    %c0_203 = arith.constant 0 : index
    %267 = vector.load %arg12[%c0_202, %c0_203] : memref<4x32xf32, #tpu.memory_space<vmem>>, vector<4x32xf32>
    %cst_204 = arith.constant dense<0.000000e+00> : vector<4x64xf32>
    %268 = tpu.matmul %267, %266, %cst_204 {dimension_numbers = #tpu.dot_dimension_numbers<[1], [0], [0], [1], [0, 0, 1, 1], [], []>} : vector<4x32xf32>, vector<32x64xf32>, vector<4x64xf32> -> vector<4x64xf32>
    %269 = arith.addf %252, %268 : vector<4x64xf32>
    %c0_205 = arith.constant 0 : index
    %c0_206 = arith.constant 0 : index
    %c4_207 = arith.constant 4 : index
    %c0_208 = arith.constant 0 : index
    %270 = vector.load %arg11[%c0_205, %c0_206, %c4_207, %c0_208] : memref<1x11x11x32xf32, #tpu.memory_space<vmem>>, vector<1x1x1x32xf32>
    %271 = vector.shape_cast %270 : vector<1x1x1x32xf32> to vector<1x32xf32>
    %c0_209 = arith.constant 0 : index
    %c0_210 = arith.constant 0 : index
    %272 = vector.load %arg12[%c0_209, %c0_210] : memref<4x32xf32, #tpu.memory_space<vmem>>, vector<1x32xf32>
    tpu.vector_store %arg12[%c0_209, %c0_210], %271 {strides = array<i32>} : memref<4x32xf32, #tpu.memory_space<vmem>>, vector<1x32xf32>,
    %c0_211 = arith.constant 0 : index
    %c0_212 = arith.constant 0 : index
    %c6 = arith.constant 6 : index
    %c0_213 = arith.constant 0 : index
    %273 = vector.load %arg11[%c0_211, %c0_212, %c6, %c0_213] : memref<1x11x11x32xf32, #tpu.memory_space<vmem>>, vector<1x1x1x32xf32>
    %274 = vector.shape_cast %273 : vector<1x1x1x32xf32> to vector<1x32xf32>
    %c1_214 = arith.constant 1 : index
    %c0_215 = arith.constant 0 : index
    %275 = vector.load %arg12[%c1_214, %c0_215] : memref<4x32xf32, #tpu.memory_space<vmem>>, vector<1x32xf32>
    tpu.vector_store %arg12[%c1_214, %c0_215], %274 {strides = array<i32>} : memref<4x32xf32, #tpu.memory_space<vmem>>, vector<1x32xf32>,
    %c0_216 = arith.constant 0 : index
    %c2_217 = arith.constant 2 : index
    %c4_218 = arith.constant 4 : index
    %c0_219 = arith.constant 0 : index
    %276 = vector.load %arg11[%c0_216, %c2_217, %c4_218, %c0_219] : memref<1x11x11x32xf32, #tpu.memory_space<vmem>>, vector<1x1x1x32xf32>
    %277 = vector.shape_cast %276 : vector<1x1x1x32xf32> to vector<1x32xf32>
    %c2_220 = arith.constant 2 : index
    %c0_221 = arith.constant 0 : index
    %278 = vector.load %arg12[%c2_220, %c0_221] : memref<4x32xf32, #tpu.memory_space<vmem>>, vector<1x32xf32>
    tpu.vector_store %arg12[%c2_220, %c0_221], %277 {strides = array<i32>} : memref<4x32xf32, #tpu.memory_space<vmem>>, vector<1x32xf32>,
    %c0_222 = arith.constant 0 : index
    %c2_223 = arith.constant 2 : index
    %c6_224 = arith.constant 6 : index
    %c0_225 = arith.constant 0 : index
    %279 = vector.load %arg11[%c0_222, %c2_223, %c6_224, %c0_225] : memref<1x11x11x32xf32, #tpu.memory_space<vmem>>, vector<1x1x1x32xf32>
    %280 = vector.shape_cast %279 : vector<1x1x1x32xf32> to vector<1x32xf32>
    %c3_226 = arith.constant 3 : index
    %c0_227 = arith.constant 0 : index
    %281 = vector.load %arg12[%c3_226, %c0_227] : memref<4x32xf32, #tpu.memory_space<vmem>>, vector<1x32xf32>
    tpu.vector_store %arg12[%c3_226, %c0_227], %280 {strides = array<i32>} : memref<4x32xf32, #tpu.memory_space<vmem>>, vector<1x32xf32>,
    %c2_228 = arith.constant 2 : index
    %c0_229 = arith.constant 0 : index
    %c0_230 = arith.constant 0 : index
    %282 = vector.load %arg4[%c2_228, %c0_229, %c0_230] : memref<25x32x64xf32, #tpu.memory_space<vmem>>, vector<1x32x64xf32>
    %283 = vector.shape_cast %282 : vector<1x32x64xf32> to vector<32x64xf32>
    %c0_231 = arith.constant 0 : index
    %c0_232 = arith.constant 0 : index
    %284 = vector.load %arg12[%c0_231, %c0_232] : memref<4x32xf32, #tpu.memory_space<vmem>>, vector<4x32xf32>
    %cst_233 = arith.constant dense<0.000000e+00> : vector<4x64xf32>
    %285 = tpu.matmul %284, %283, %cst_233 {dimension_numbers = #tpu.dot_dimension_numbers<[1], [0], [0], [1], [0, 0, 1, 1], [], []>} : vector<4x32xf32>, vector<32x64xf32>, vector<4x64xf32> -> vector<4x64xf32>
    %286 = arith.addf %269, %285 : vector<4x64xf32>
    %c0_234 = arith.constant 0 : index
    %c0_235 = arith.constant 0 : index
    %c6_236 = arith.constant 6 : index
    %c0_237 = arith.constant 0 : index
    %287 = vector.load %arg11[%c0_234, %c0_235, %c6_236, %c0_237] : memref<1x11x11x32xf32, #tpu.memory_space<vmem>>, vector<1x1x1x32xf32>
    %288 = vector.shape_cast %287 : vector<1x1x1x32xf32> to vector<1x32xf32>
    %c0_238 = arith.constant 0 : index
    %c0_239 = arith.constant 0 : index
    %289 = vector.load %arg12[%c0_238, %c0_239] : memref<4x32xf32, #tpu.memory_space<vmem>>, vector<1x32xf32>
    tpu.vector_store %arg12[%c0_238, %c0_239], %288 {strides = array<i32>} : memref<4x32xf32, #tpu.memory_space<vmem>>, vector<1x32xf32>,
    %c0_240 = arith.constant 0 : index
    %c0_241 = arith.constant 0 : index
    %c8 = arith.constant 8 : index
    %c0_242 = arith.constant 0 : index
    %290 = vector.load %arg11[%c0_240, %c0_241, %c8, %c0_242] : memref<1x11x11x32xf32, #tpu.memory_space<vmem>>, vector<1x1x1x32xf32>
    %291 = vector.shape_cast %290 : vector<1x1x1x32xf32> to vector<1x32xf32>
    %c1_243 = arith.constant 1 : index
    %c0_244 = arith.constant 0 : index
    %292 = vector.load %arg12[%c1_243, %c0_244] : memref<4x32xf32, #tpu.memory_space<vmem>>, vector<1x32xf32>
    tpu.vector_store %arg12[%c1_243, %c0_244], %291 {strides = array<i32>} : memref<4x32xf32, #tpu.memory_space<vmem>>, vector<1x32xf32>,
    %c0_245 = arith.constant 0 : index
    %c2_246 = arith.constant 2 : index
    %c6_247 = arith.constant 6 : index
    %c0_248 = arith.constant 0 : index
    %293 = vector.load %arg11[%c0_245, %c2_246, %c6_247, %c0_248] : memref<1x11x11x32xf32, #tpu.memory_space<vmem>>, vector<1x1x1x32xf32>
    %294 = vector.shape_cast %293 : vector<1x1x1x32xf32> to vector<1x32xf32>
    %c2_249 = arith.constant 2 : index
    %c0_250 = arith.constant 0 : index
    %295 = vector.load %arg12[%c2_249, %c0_250] : memref<4x32xf32, #tpu.memory_space<vmem>>, vector<1x32xf32>
    tpu.vector_store %arg12[%c2_249, %c0_250], %294 {strides = array<i32>} : memref<4x32xf32, #tpu.memory_space<vmem>>, vector<1x32xf32>,
    %c0_251 = arith.constant 0 : index
    %c2_252 = arith.constant 2 : index
    %c8_253 = arith.constant 8 : index
    %c0_254 = arith.constant 0 : index
    %296 = vector.load %arg11[%c0_251, %c2_252, %c8_253, %c0_254] : memref<1x11x11x32xf32, #tpu.memory_space<vmem>>, vector<1x1x1x32xf32>
    %297 = vector.shape_cast %296 : vector<1x1x1x32xf32> to vector<1x32xf32>
    %c3_255 = arith.constant 3 : index
    %c0_256 = arith.constant 0 : index
    %298 = vector.load %arg12[%c3_255, %c0_256] : memref<4x32xf32, #tpu.memory_space<vmem>>, vector<1x32xf32>
    tpu.vector_store %arg12[%c3_255, %c0_256], %297 {strides = array<i32>} : memref<4x32xf32, #tpu.memory_space<vmem>>, vector<1x32xf32>,
    %c3_257 = arith.constant 3 : index
    %c0_258 = arith.constant 0 : index
    %c0_259 = arith.constant 0 : index
    %299 = vector.load %arg4[%c3_257, %c0_258, %c0_259] : memref<25x32x64xf32, #tpu.memory_space<vmem>>, vector<1x32x64xf32>
    %300 = vector.shape_cast %299 : vector<1x32x64xf32> to vector<32x64xf32>
    %c0_260 = arith.constant 0 : index
    %c0_261 = arith.constant 0 : index
    %301 = vector.load %arg12[%c0_260, %c0_261] : memref<4x32xf32, #tpu.memory_space<vmem>>, vector<4x32xf32>
    %cst_262 = arith.constant dense<0.000000e+00> : vector<4x64xf32>
    %302 = tpu.matmul %301, %300, %cst_262 {dimension_numbers = #tpu.dot_dimension_numbers<[1], [0], [0], [1], [0, 0, 1, 1], [], []>} : vector<4x32xf32>, vector<32x64xf32>, vector<4x64xf32> -> vector<4x64xf32>
    %303 = arith.addf %286, %302 : vector<4x64xf32>
    %c0_263 = arith.constant 0 : index
    %c0_264 = arith.constant 0 : index
    %c8_265 = arith.constant 8 : index
    %c0_266 = arith.constant 0 : index
    %304 = vector.load %arg11[%c0_263, %c0_264, %c8_265, %c0_266] : memref<1x11x11x32xf32, #tpu.memory_space<vmem>>, vector<1x1x1x32xf32>
    %305 = vector.shape_cast %304 : vector<1x1x1x32xf32> to vector<1x32xf32>
    %c0_267 = arith.constant 0 : index
    %c0_268 = arith.constant 0 : index
    %306 = vector.load %arg12[%c0_267, %c0_268] : memref<4x32xf32, #tpu.memory_space<vmem>>, vector<1x32xf32>
    tpu.vector_store %arg12[%c0_267, %c0_268], %305 {strides = array<i32>} : memref<4x32xf32, #tpu.memory_space<vmem>>, vector<1x32xf32>,
    %c0_269 = arith.constant 0 : index
    %c0_270 = arith.constant 0 : index
    %c10 = arith.constant 10 : index
    %c0_271 = arith.constant 0 : index
    %307 = vector.load %arg11[%c0_269, %c0_270, %c10, %c0_271] : memref<1x11x11x32xf32, #tpu.memory_space<vmem>>, vector<1x1x1x32xf32>
    %308 = vector.shape_cast %307 : vector<1x1x1x32xf32> to vector<1x32xf32>
    %c1_272 = arith.constant 1 : index
    %c0_273 = arith.constant 0 : index
    %309 = vector.load %arg12[%c1_272, %c0_273] : memref<4x32xf32, #tpu.memory_space<vmem>>, vector<1x32xf32>
    tpu.vector_store %arg12[%c1_272, %c0_273], %308 {strides = array<i32>} : memref<4x32xf32, #tpu.memory_space<vmem>>, vector<1x32xf32>,
    %c0_274 = arith.constant 0 : index
    %c2_275 = arith.constant 2 : index
    %c8_276 = arith.constant 8 : index
    %c0_277 = arith.constant 0 : index
    %310 = vector.load %arg11[%c0_274, %c2_275, %c8_276, %c0_277] : memref<1x11x11x32xf32, #tpu.memory_space<vmem>>, vector<1x1x1x32xf32>
    %311 = vector.shape_cast %310 : vector<1x1x1x32xf32> to vector<1x32xf32>
    %c2_278 = arith.constant 2 : index
    %c0_279 = arith.constant 0 : index
    %312 = vector.load %arg12[%c2_278, %c0_279] : memref<4x32xf32, #tpu.memory_space<vmem>>, vector<1x32xf32>
    tpu.vector_store %arg12[%c2_278, %c0_279], %311 {strides = array<i32>} : memref<4x32xf32, #tpu.memory_space<vmem>>, vector<1x32xf32>,
    %c0_280 = arith.constant 0 : index
    %c2_281 = arith.constant 2 : index
    %c10_282 = arith.constant 10 : index
    %c0_283 = arith.constant 0 : index
    %313 = vector.load %arg11[%c0_280, %c2_281, %c10_282, %c0_283] : memref<1x11x11x32xf32, #tpu.memory_space<vmem>>, vector<1x1x1x32xf32>
    %314 = vector.shape_cast %313 : vector<1x1x1x32xf32> to vector<1x32xf32>
    %c3_284 = arith.constant 3 : index
    %c0_285 = arith.constant 0 : index
    %315 = vector.load %arg12[%c3_284, %c0_285] : memref<4x32xf32, #tpu.memory_space<vmem>>, vector<1x32xf32>
    tpu.vector_store %arg12[%c3_284, %c0_285], %314 {strides = array<i32>} : memref<4x32xf32, #tpu.memory_space<vmem>>, vector<1x32xf32>,
    %c4_286 = arith.constant 4 : index
    %c0_287 = arith.constant 0 : index
    %c0_288 = arith.constant 0 : index
    %316 = vector.load %arg4[%c4_286, %c0_287, %c0_288] : memref<25x32x64xf32, #tpu.memory_space<vmem>>, vector<1x32x64xf32>
    %317 = vector.shape_cast %316 : vector<1x32x64xf32> to vector<32x64xf32>
    %c0_289 = arith.constant 0 : index
    %c0_290 = arith.constant 0 : index
    %318 = vector.load %arg12[%c0_289, %c0_290] : memref<4x32xf32, #tpu.memory_space<vmem>>, vector<4x32xf32>
    %cst_291 = arith.constant dense<0.000000e+00> : vector<4x64xf32>
    %319 = tpu.matmul %318, %317, %cst_291 {dimension_numbers = #tpu.dot_dimension_numbers<[1], [0], [0], [1], [0, 0, 1, 1], [], []>} : vector<4x32xf32>, vector<32x64xf32>, vector<4x64xf32> -> vector<4x64xf32>
    %320 = arith.addf %303, %319 : vector<4x64xf32>
    %c0_292 = arith.constant 0 : index
    %c2_293 = arith.constant 2 : index
    %c0_294 = arith.constant 0 : index
    %c0_295 = arith.constant 0 : index
    %321 = vector.load %arg11[%c0_292, %c2_293, %c0_294, %c0_295] : memref<1x11x11x32xf32, #tpu.memory_space<vmem>>, vector<1x1x1x32xf32>
    %322 = vector.shape_cast %321 : vector<1x1x1x32xf32> to vector<1x32xf32>
    %c0_296 = arith.constant 0 : index
    %c0_297 = arith.constant 0 : index
    %323 = vector.load %arg12[%c0_296, %c0_297] : memref<4x32xf32, #tpu.memory_space<vmem>>, vector<1x32xf32>
    tpu.vector_store %arg12[%c0_296, %c0_297], %322 {strides = array<i32>} : memref<4x32xf32, #tpu.memory_space<vmem>>, vector<1x32xf32>,
    %c0_298 = arith.constant 0 : index
    %c2_299 = arith.constant 2 : index
    %c2_300 = arith.constant 2 : index
    %c0_301 = arith.constant 0 : index
    %324 = vector.load %arg11[%c0_298, %c2_299, %c2_300, %c0_301] : memref<1x11x11x32xf32, #tpu.memory_space<vmem>>, vector<1x1x1x32xf32>
    %325 = vector.shape_cast %324 : vector<1x1x1x32xf32> to vector<1x32xf32>
    %c1_302 = arith.constant 1 : index
    %c0_303 = arith.constant 0 : index
    %326 = vector.load %arg12[%c1_302, %c0_303] : memref<4x32xf32, #tpu.memory_space<vmem>>, vector<1x32xf32>
    tpu.vector_store %arg12[%c1_302, %c0_303], %325 {strides = array<i32>} : memref<4x32xf32, #tpu.memory_space<vmem>>, vector<1x32xf32>,
    %c0_304 = arith.constant 0 : index
    %c4_305 = arith.constant 4 : index
    %c0_306 = arith.constant 0 : index
    %c0_307 = arith.constant 0 : index
    %327 = vector.load %arg11[%c0_304, %c4_305, %c0_306, %c0_307] : memref<1x11x11x32xf32, #tpu.memory_space<vmem>>, vector<1x1x1x32xf32>
    %328 = vector.shape_cast %327 : vector<1x1x1x32xf32> to vector<1x32xf32>
    %c2_308 = arith.constant 2 : index
    %c0_309 = arith.constant 0 : index
    %329 = vector.load %arg12[%c2_308, %c0_309] : memref<4x32xf32, #tpu.memory_space<vmem>>, vector<1x32xf32>
    tpu.vector_store %arg12[%c2_308, %c0_309], %328 {strides = array<i32>} : memref<4x32xf32, #tpu.memory_space<vmem>>, vector<1x32xf32>,
    %c0_310 = arith.constant 0 : index
    %c4_311 = arith.constant 4 : index
    %c2_312 = arith.constant 2 : index
    %c0_313 = arith.constant 0 : index
    %330 = vector.load %arg11[%c0_310, %c4_311, %c2_312, %c0_313] : memref<1x11x11x32xf32, #tpu.memory_space<vmem>>, vector<1x1x1x32xf32>
    %331 = vector.shape_cast %330 : vector<1x1x1x32xf32> to vector<1x32xf32>
    %c3_314 = arith.constant 3 : index
    %c0_315 = arith.constant 0 : index
    %332 = vector.load %arg12[%c3_314, %c0_315] : memref<4x32xf32, #tpu.memory_space<vmem>>, vector<1x32xf32>
    tpu.vector_store %arg12[%c3_314, %c0_315], %331 {strides = array<i32>} : memref<4x32xf32, #tpu.memory_space<vmem>>, vector<1x32xf32>,
    %c5 = arith.constant 5 : index
    %c0_316 = arith.constant 0 : index
    %c0_317 = arith.constant 0 : index
    %333 = vector.load %arg4[%c5, %c0_316, %c0_317] : memref<25x32x64xf32, #tpu.memory_space<vmem>>, vector<1x32x64xf32>
    %334 = vector.shape_cast %333 : vector<1x32x64xf32> to vector<32x64xf32>
    %c0_318 = arith.constant 0 : index
    %c0_319 = arith.constant 0 : index
    %335 = vector.load %arg12[%c0_318, %c0_319] : memref<4x32xf32, #tpu.memory_space<vmem>>, vector<4x32xf32>
    %cst_320 = arith.constant dense<0.000000e+00> : vector<4x64xf32>
    %336 = tpu.matmul %335, %334, %cst_320 {dimension_numbers = #tpu.dot_dimension_numbers<[1], [0], [0], [1], [0, 0, 1, 1], [], []>} : vector<4x32xf32>, vector<32x64xf32>, vector<4x64xf32> -> vector<4x64xf32>
    %337 = arith.addf %320, %336 : vector<4x64xf32>
    %c0_321 = arith.constant 0 : index
    %c2_322 = arith.constant 2 : index
    %c2_323 = arith.constant 2 : index
    %c0_324 = arith.constant 0 : index
    %338 = vector.load %arg11[%c0_321, %c2_322, %c2_323, %c0_324] : memref<1x11x11x32xf32, #tpu.memory_space<vmem>>, vector<1x1x1x32xf32>
    %339 = vector.shape_cast %338 : vector<1x1x1x32xf32> to vector<1x32xf32>
    %c0_325 = arith.constant 0 : index
    %c0_326 = arith.constant 0 : index
    %340 = vector.load %arg12[%c0_325, %c0_326] : memref<4x32xf32, #tpu.memory_space<vmem>>, vector<1x32xf32>
    tpu.vector_store %arg12[%c0_325, %c0_326], %339 {strides = array<i32>} : memref<4x32xf32, #tpu.memory_space<vmem>>, vector<1x32xf32>,
    %c0_327 = arith.constant 0 : index
    %c2_328 = arith.constant 2 : index
    %c4_329 = arith.constant 4 : index
    %c0_330 = arith.constant 0 : index
    %341 = vector.load %arg11[%c0_327, %c2_328, %c4_329, %c0_330] : memref<1x11x11x32xf32, #tpu.memory_space<vmem>>, vector<1x1x1x32xf32>
    %342 = vector.shape_cast %341 : vector<1x1x1x32xf32> to vector<1x32xf32>
    %c1_331 = arith.constant 1 : index
    %c0_332 = arith.constant 0 : index
    %343 = vector.load %arg12[%c1_331, %c0_332] : memref<4x32xf32, #tpu.memory_space<vmem>>, vector<1x32xf32>
    tpu.vector_store %arg12[%c1_331, %c0_332], %342 {strides = array<i32>} : memref<4x32xf32, #tpu.memory_space<vmem>>, vector<1x32xf32>,
    %c0_333 = arith.constant 0 : index
    %c4_334 = arith.constant 4 : index
    %c2_335 = arith.constant 2 : index
    %c0_336 = arith.constant 0 : index
    %344 = vector.load %arg11[%c0_333, %c4_334, %c2_335, %c0_336] : memref<1x11x11x32xf32, #tpu.memory_space<vmem>>, vector<1x1x1x32xf32>
    %345 = vector.shape_cast %344 : vector<1x1x1x32xf32> to vector<1x32xf32>
    %c2_337 = arith.constant 2 : index
    %c0_338 = arith.constant 0 : index
    %346 = vector.load %arg12[%c2_337, %c0_338] : memref<4x32xf32, #tpu.memory_space<vmem>>, vector<1x32xf32>
    tpu.vector_store %arg12[%c2_337, %c0_338], %345 {strides = array<i32>} : memref<4x32xf32, #tpu.memory_space<vmem>>, vector<1x32xf32>,
    %c0_339 = arith.constant 0 : index
    %c4_340 = arith.constant 4 : index
    %c4_341 = arith.constant 4 : index
    %c0_342 = arith.constant 0 : index
    %347 = vector.load %arg11[%c0_339, %c4_340, %c4_341, %c0_342] : memref<1x11x11x32xf32, #tpu.memory_space<vmem>>, vector<1x1x1x32xf32>
    %348 = vector.shape_cast %347 : vector<1x1x1x32xf32> to vector<1x32xf32>
    %c3_343 = arith.constant 3 : index
    %c0_344 = arith.constant 0 : index
    %349 = vector.load %arg12[%c3_343, %c0_344] : memref<4x32xf32, #tpu.memory_space<vmem>>, vector<1x32xf32>
    tpu.vector_store %arg12[%c3_343, %c0_344], %348 {strides = array<i32>} : memref<4x32xf32, #tpu.memory_space<vmem>>, vector<1x32xf32>,
    %c6_345 = arith.constant 6 : index
    %c0_346 = arith.constant 0 : index
    %c0_347 = arith.constant 0 : index
    %350 = vector.load %arg4[%c6_345, %c0_346, %c0_347] : memref<25x32x64xf32, #tpu.memory_space<vmem>>, vector<1x32x64xf32>
    %351 = vector.shape_cast %350 : vector<1x32x64xf32> to vector<32x64xf32>
    %c0_348 = arith.constant 0 : index
    %c0_349 = arith.constant 0 : index
    %352 = vector.load %arg12[%c0_348, %c0_349] : memref<4x32xf32, #tpu.memory_space<vmem>>, vector<4x32xf32>
    %cst_350 = arith.constant dense<0.000000e+00> : vector<4x64xf32>
    %353 = tpu.matmul %352, %351, %cst_350 {dimension_numbers = #tpu.dot_dimension_numbers<[1], [0], [0], [1], [0, 0, 1, 1], [], []>} : vector<4x32xf32>, vector<32x64xf32>, vector<4x64xf32> -> vector<4x64xf32>
    %354 = arith.addf %337, %353 : vector<4x64xf32>
    %c0_351 = arith.constant 0 : index
    %c2_352 = arith.constant 2 : index
    %c4_353 = arith.constant 4 : index
    %c0_354 = arith.constant 0 : index
    %355 = vector.load %arg11[%c0_351, %c2_352, %c4_353, %c0_354] : memref<1x11x11x32xf32, #tpu.memory_space<vmem>>, vector<1x1x1x32xf32>
    %356 = vector.shape_cast %355 : vector<1x1x1x32xf32> to vector<1x32xf32>
    %c0_355 = arith.constant 0 : index
    %c0_356 = arith.constant 0 : index
    %357 = vector.load %arg12[%c0_355, %c0_356] : memref<4x32xf32, #tpu.memory_space<vmem>>, vector<1x32xf32>
    tpu.vector_store %arg12[%c0_355, %c0_356], %356 {strides = array<i32>} : memref<4x32xf32, #tpu.memory_space<vmem>>, vector<1x32xf32>,
    %c0_357 = arith.constant 0 : index
    %c2_358 = arith.constant 2 : index
    %c6_359 = arith.constant 6 : index
    %c0_360 = arith.constant 0 : index
    %358 = vector.load %arg11[%c0_357, %c2_358, %c6_359, %c0_360] : memref<1x11x11x32xf32, #tpu.memory_space<vmem>>, vector<1x1x1x32xf32>
    %359 = vector.shape_cast %358 : vector<1x1x1x32xf32> to vector<1x32xf32>
    %c1_361 = arith.constant 1 : index
    %c0_362 = arith.constant 0 : index
    %360 = vector.load %arg12[%c1_361, %c0_362] : memref<4x32xf32, #tpu.memory_space<vmem>>, vector<1x32xf32>
    tpu.vector_store %arg12[%c1_361, %c0_362], %359 {strides = array<i32>} : memref<4x32xf32, #tpu.memory_space<vmem>>, vector<1x32xf32>,
    %c0_363 = arith.constant 0 : index
    %c4_364 = arith.constant 4 : index
    %c4_365 = arith.constant 4 : index
    %c0_366 = arith.constant 0 : index
    %361 = vector.load %arg11[%c0_363, %c4_364, %c4_365, %c0_366] : memref<1x11x11x32xf32, #tpu.memory_space<vmem>>, vector<1x1x1x32xf32>
    %362 = vector.shape_cast %361 : vector<1x1x1x32xf32> to vector<1x32xf32>
    %c2_367 = arith.constant 2 : index
    %c0_368 = arith.constant 0 : index
    %363 = vector.load %arg12[%c2_367, %c0_368] : memref<4x32xf32, #tpu.memory_space<vmem>>, vector<1x32xf32>
    tpu.vector_store %arg12[%c2_367, %c0_368], %362 {strides = array<i32>} : memref<4x32xf32, #tpu.memory_space<vmem>>, vector<1x32xf32>,
    %c0_369 = arith.constant 0 : index
    %c4_370 = arith.constant 4 : index
    %c6_371 = arith.constant 6 : index
    %c0_372 = arith.constant 0 : index
    %364 = vector.load %arg11[%c0_369, %c4_370, %c6_371, %c0_372] : memref<1x11x11x32xf32, #tpu.memory_space<vmem>>, vector<1x1x1x32xf32>
    %365 = vector.shape_cast %364 : vector<1x1x1x32xf32> to vector<1x32xf32>
    %c3_373 = arith.constant 3 : index
    %c0_374 = arith.constant 0 : index
    %366 = vector.load %arg12[%c3_373, %c0_374] : memref<4x32xf32, #tpu.memory_space<vmem>>, vector<1x32xf32>
    tpu.vector_store %arg12[%c3_373, %c0_374], %365 {strides = array<i32>} : memref<4x32xf32, #tpu.memory_space<vmem>>, vector<1x32xf32>,
    %c7 = arith.constant 7 : index
    %c0_375 = arith.constant 0 : index
    %c0_376 = arith.constant 0 : index
    %367 = vector.load %arg4[%c7, %c0_375, %c0_376] : memref<25x32x64xf32, #tpu.memory_space<vmem>>, vector<1x32x64xf32>
    %368 = vector.shape_cast %367 : vector<1x32x64xf32> to vector<32x64xf32>
    %c0_377 = arith.constant 0 : index
    %c0_378 = arith.constant 0 : index
    %369 = vector.load %arg12[%c0_377, %c0_378] : memref<4x32xf32, #tpu.memory_space<vmem>>, vector<4x32xf32>
    %cst_379 = arith.constant dense<0.000000e+00> : vector<4x64xf32>
    %370 = tpu.matmul %369, %368, %cst_379 {dimension_numbers = #tpu.dot_dimension_numbers<[1], [0], [0], [1], [0, 0, 1, 1], [], []>} : vector<4x32xf32>, vector<32x64xf32>, vector<4x64xf32> -> vector<4x64xf32>
    %371 = arith.addf %354, %370 : vector<4x64xf32>
    %c0_380 = arith.constant 0 : index
    %c2_381 = arith.constant 2 : index
    %c6_382 = arith.constant 6 : index
    %c0_383 = arith.constant 0 : index
    %372 = vector.load %arg11[%c0_380, %c2_381, %c6_382, %c0_383] : memref<1x11x11x32xf32, #tpu.memory_space<vmem>>, vector<1x1x1x32xf32>
    %373 = vector.shape_cast %372 : vector<1x1x1x32xf32> to vector<1x32xf32>
    %c0_384 = arith.constant 0 : index
    %c0_385 = arith.constant 0 : index
    %374 = vector.load %arg12[%c0_384, %c0_385] : memref<4x32xf32, #tpu.memory_space<vmem>>, vector<1x32xf32>
    tpu.vector_store %arg12[%c0_384, %c0_385], %373 {strides = array<i32>} : memref<4x32xf32, #tpu.memory_space<vmem>>, vector<1x32xf32>,
    %c0_386 = arith.constant 0 : index
    %c2_387 = arith.constant 2 : index
    %c8_388 = arith.constant 8 : index
    %c0_389 = arith.constant 0 : index
    %375 = vector.load %arg11[%c0_386, %c2_387, %c8_388, %c0_389] : memref<1x11x11x32xf32, #tpu.memory_space<vmem>>, vector<1x1x1x32xf32>
    %376 = vector.shape_cast %375 : vector<1x1x1x32xf32> to vector<1x32xf32>
    %c1_390 = arith.constant 1 : index
    %c0_391 = arith.constant 0 : index
    %377 = vector.load %arg12[%c1_390, %c0_391] : memref<4x32xf32, #tpu.memory_space<vmem>>, vector<1x32xf32>
    tpu.vector_store %arg12[%c1_390, %c0_391], %376 {strides = array<i32>} : memref<4x32xf32, #tpu.memory_space<vmem>>, vector<1x32xf32>,
    %c0_392 = arith.constant 0 : index
    %c4_393 = arith.constant 4 : index
    %c6_394 = arith.constant 6 : index
    %c0_395 = arith.constant 0 : index
    %378 = vector.load %arg11[%c0_392, %c4_393, %c6_394, %c0_395] : memref<1x11x11x32xf32, #tpu.memory_space<vmem>>, vector<1x1x1x32xf32>
    %379 = vector.shape_cast %378 : vector<1x1x1x32xf32> to vector<1x32xf32>
    %c2_396 = arith.constant 2 : index
    %c0_397 = arith.constant 0 : index
    %380 = vector.load %arg12[%c2_396, %c0_397] : memref<4x32xf32, #tpu.memory_space<vmem>>, vector<1x32xf32>
    tpu.vector_store %arg12[%c2_396, %c0_397], %379 {strides = array<i32>} : memref<4x32xf32, #tpu.memory_space<vmem>>, vector<1x32xf32>,
    %c0_398 = arith.constant 0 : index
    %c4_399 = arith.constant 4 : index
    %c8_400 = arith.constant 8 : index
    %c0_401 = arith.constant 0 : index
    %381 = vector.load %arg11[%c0_398, %c4_399, %c8_400, %c0_401] : memref<1x11x11x32xf32, #tpu.memory_space<vmem>>, vector<1x1x1x32xf32>
    %382 = vector.shape_cast %381 : vector<1x1x1x32xf32> to vector<1x32xf32>
    %c3_402 = arith.constant 3 : index
    %c0_403 = arith.constant 0 : index
    %383 = vector.load %arg12[%c3_402, %c0_403] : memref<4x32xf32, #tpu.memory_space<vmem>>, vector<1x32xf32>
    tpu.vector_store %arg12[%c3_402, %c0_403], %382 {strides = array<i32>} : memref<4x32xf32, #tpu.memory_space<vmem>>, vector<1x32xf32>,
    %c8_404 = arith.constant 8 : index
    %c0_405 = arith.constant 0 : index
    %c0_406 = arith.constant 0 : index
    %384 = vector.load %arg4[%c8_404, %c0_405, %c0_406] : memref<25x32x64xf32, #tpu.memory_space<vmem>>, vector<1x32x64xf32>
    %385 = vector.shape_cast %384 : vector<1x32x64xf32> to vector<32x64xf32>
    %c0_407 = arith.constant 0 : index
    %c0_408 = arith.constant 0 : index
    %386 = vector.load %arg12[%c0_407, %c0_408] : memref<4x32xf32, #tpu.memory_space<vmem>>, vector<4x32xf32>
    %cst_409 = arith.constant dense<0.000000e+00> : vector<4x64xf32>
    %387 = tpu.matmul %386, %385, %cst_409 {dimension_numbers = #tpu.dot_dimension_numbers<[1], [0], [0], [1], [0, 0, 1, 1], [], []>} : vector<4x32xf32>, vector<32x64xf32>, vector<4x64xf32> -> vector<4x64xf32>
    %388 = arith.addf %371, %387 : vector<4x64xf32>
    %c0_410 = arith.constant 0 : index
    %c2_411 = arith.constant 2 : index
    %c8_412 = arith.constant 8 : index
    %c0_413 = arith.constant 0 : index
    %389 = vector.load %arg11[%c0_410, %c2_411, %c8_412, %c0_413] : memref<1x11x11x32xf32, #tpu.memory_space<vmem>>, vector<1x1x1x32xf32>
    %390 = vector.shape_cast %389 : vector<1x1x1x32xf32> to vector<1x32xf32>
    %c0_414 = arith.constant 0 : index
    %c0_415 = arith.constant 0 : index
    %391 = vector.load %arg12[%c0_414, %c0_415] : memref<4x32xf32, #tpu.memory_space<vmem>>, vector<1x32xf32>
    tpu.vector_store %arg12[%c0_414, %c0_415], %390 {strides = array<i32>} : memref<4x32xf32, #tpu.memory_space<vmem>>, vector<1x32xf32>,
    %c0_416 = arith.constant 0 : index
    %c2_417 = arith.constant 2 : index
    %c10_418 = arith.constant 10 : index
    %c0_419 = arith.constant 0 : index
    %392 = vector.load %arg11[%c0_416, %c2_417, %c10_418, %c0_419] : memref<1x11x11x32xf32, #tpu.memory_space<vmem>>, vector<1x1x1x32xf32>
    %393 = vector.shape_cast %392 : vector<1x1x1x32xf32> to vector<1x32xf32>
    %c1_420 = arith.constant 1 : index
    %c0_421 = arith.constant 0 : index
    %394 = vector.load %arg12[%c1_420, %c0_421] : memref<4x32xf32, #tpu.memory_space<vmem>>, vector<1x32xf32>
    tpu.vector_store %arg12[%c1_420, %c0_421], %393 {strides = array<i32>} : memref<4x32xf32, #tpu.memory_space<vmem>>, vector<1x32xf32>,
    %c0_422 = arith.constant 0 : index
    %c4_423 = arith.constant 4 : index
    %c8_424 = arith.constant 8 : index
    %c0_425 = arith.constant 0 : index
    %395 = vector.load %arg11[%c0_422, %c4_423, %c8_424, %c0_425] : memref<1x11x11x32xf32, #tpu.memory_space<vmem>>, vector<1x1x1x32xf32>
    %396 = vector.shape_cast %395 : vector<1x1x1x32xf32> to vector<1x32xf32>
    %c2_426 = arith.constant 2 : index
    %c0_427 = arith.constant 0 : index
    %397 = vector.load %arg12[%c2_426, %c0_427] : memref<4x32xf32, #tpu.memory_space<vmem>>, vector<1x32xf32>
    tpu.vector_store %arg12[%c2_426, %c0_427], %396 {strides = array<i32>} : memref<4x32xf32, #tpu.memory_space<vmem>>, vector<1x32xf32>,
    %c0_428 = arith.constant 0 : index
    %c4_429 = arith.constant 4 : index
    %c10_430 = arith.constant 10 : index
    %c0_431 = arith.constant 0 : index
    %398 = vector.load %arg11[%c0_428, %c4_429, %c10_430, %c0_431] : memref<1x11x11x32xf32, #tpu.memory_space<vmem>>, vector<1x1x1x32xf32>
    %399 = vector.shape_cast %398 : vector<1x1x1x32xf32> to vector<1x32xf32>
    %c3_432 = arith.constant 3 : index
    %c0_433 = arith.constant 0 : index
    %400 = vector.load %arg12[%c3_432, %c0_433] : memref<4x32xf32, #tpu.memory_space<vmem>>, vector<1x32xf32>
    tpu.vector_store %arg12[%c3_432, %c0_433], %399 {strides = array<i32>} : memref<4x32xf32, #tpu.memory_space<vmem>>, vector<1x32xf32>,
    %c9 = arith.constant 9 : index
    %c0_434 = arith.constant 0 : index
    %c0_435 = arith.constant 0 : index
    %401 = vector.load %arg4[%c9, %c0_434, %c0_435] : memref<25x32x64xf32, #tpu.memory_space<vmem>>, vector<1x32x64xf32>
    %402 = vector.shape_cast %401 : vector<1x32x64xf32> to vector<32x64xf32>
    %c0_436 = arith.constant 0 : index
    %c0_437 = arith.constant 0 : index
    %403 = vector.load %arg12[%c0_436, %c0_437] : memref<4x32xf32, #tpu.memory_space<vmem>>, vector<4x32xf32>
    %cst_438 = arith.constant dense<0.000000e+00> : vector<4x64xf32>
    %404 = tpu.matmul %403, %402, %cst_438 {dimension_numbers = #tpu.dot_dimension_numbers<[1], [0], [0], [1], [0, 0, 1, 1], [], []>} : vector<4x32xf32>, vector<32x64xf32>, vector<4x64xf32> -> vector<4x64xf32>
    %405 = arith.addf %388, %404 : vector<4x64xf32>
    %c0_439 = arith.constant 0 : index
    %c4_440 = arith.constant 4 : index
    %c0_441 = arith.constant 0 : index
    %c0_442 = arith.constant 0 : index
    %406 = vector.load %arg11[%c0_439, %c4_440, %c0_441, %c0_442] : memref<1x11x11x32xf32, #tpu.memory_space<vmem>>, vector<1x1x1x32xf32>
    %407 = vector.shape_cast %406 : vector<1x1x1x32xf32> to vector<1x32xf32>
    %c0_443 = arith.constant 0 : index
    %c0_444 = arith.constant 0 : index
    %408 = vector.load %arg12[%c0_443, %c0_444] : memref<4x32xf32, #tpu.memory_space<vmem>>, vector<1x32xf32>
    tpu.vector_store %arg12[%c0_443, %c0_444], %407 {strides = array<i32>} : memref<4x32xf32, #tpu.memory_space<vmem>>, vector<1x32xf32>,
    %c0_445 = arith.constant 0 : index
    %c4_446 = arith.constant 4 : index
    %c2_447 = arith.constant 2 : index
    %c0_448 = arith.constant 0 : index
    %409 = vector.load %arg11[%c0_445, %c4_446, %c2_447, %c0_448] : memref<1x11x11x32xf32, #tpu.memory_space<vmem>>, vector<1x1x1x32xf32>
    %410 = vector.shape_cast %409 : vector<1x1x1x32xf32> to vector<1x32xf32>
    %c1_449 = arith.constant 1 : index
    %c0_450 = arith.constant 0 : index
    %411 = vector.load %arg12[%c1_449, %c0_450] : memref<4x32xf32, #tpu.memory_space<vmem>>, vector<1x32xf32>
    tpu.vector_store %arg12[%c1_449, %c0_450], %410 {strides = array<i32>} : memref<4x32xf32, #tpu.memory_space<vmem>>, vector<1x32xf32>,
    %c0_451 = arith.constant 0 : index
    %c6_452 = arith.constant 6 : index
    %c0_453 = arith.constant 0 : index
    %c0_454 = arith.constant 0 : index
    %412 = vector.load %arg11[%c0_451, %c6_452, %c0_453, %c0_454] : memref<1x11x11x32xf32, #tpu.memory_space<vmem>>, vector<1x1x1x32xf32>
    %413 = vector.shape_cast %412 : vector<1x1x1x32xf32> to vector<1x32xf32>
    %c2_455 = arith.constant 2 : index
    %c0_456 = arith.constant 0 : index
    %414 = vector.load %arg12[%c2_455, %c0_456] : memref<4x32xf32, #tpu.memory_space<vmem>>, vector<1x32xf32>
    tpu.vector_store %arg12[%c2_455, %c0_456], %413 {strides = array<i32>} : memref<4x32xf32, #tpu.memory_space<vmem>>, vector<1x32xf32>,
    %c0_457 = arith.constant 0 : index
    %c6_458 = arith.constant 6 : index
    %c2_459 = arith.constant 2 : index
    %c0_460 = arith.constant 0 : index
    %415 = vector.load %arg11[%c0_457, %c6_458, %c2_459, %c0_460] : memref<1x11x11x32xf32, #tpu.memory_space<vmem>>, vector<1x1x1x32xf32>
    %416 = vector.shape_cast %415 : vector<1x1x1x32xf32> to vector<1x32xf32>
    %c3_461 = arith.constant 3 : index
    %c0_462 = arith.constant 0 : index
    %417 = vector.load %arg12[%c3_461, %c0_462] : memref<4x32xf32, #tpu.memory_space<vmem>>, vector<1x32xf32>
    tpu.vector_store %arg12[%c3_461, %c0_462], %416 {strides = array<i32>} : memref<4x32xf32, #tpu.memory_space<vmem>>, vector<1x32xf32>,
    %c10_463 = arith.constant 10 : index
    %c0_464 = arith.constant 0 : index
    %c0_465 = arith.constant 0 : index
    %418 = vector.load %arg4[%c10_463, %c0_464, %c0_465] : memref<25x32x64xf32, #tpu.memory_space<vmem>>, vector<1x32x64xf32>
    %419 = vector.shape_cast %418 : vector<1x32x64xf32> to vector<32x64xf32>
    %c0_466 = arith.constant 0 : index
    %c0_467 = arith.constant 0 : index
    %420 = vector.load %arg12[%c0_466, %c0_467] : memref<4x32xf32, #tpu.memory_space<vmem>>, vector<4x32xf32>
    %cst_468 = arith.constant dense<0.000000e+00> : vector<4x64xf32>
    %421 = tpu.matmul %420, %419, %cst_468 {dimension_numbers = #tpu.dot_dimension_numbers<[1], [0], [0], [1], [0, 0, 1, 1], [], []>} : vector<4x32xf32>, vector<32x64xf32>, vector<4x64xf32> -> vector<4x64xf32>
    %422 = arith.addf %405, %421 : vector<4x64xf32>
    %c0_469 = arith.constant 0 : index
    %c4_470 = arith.constant 4 : index
    %c2_471 = arith.constant 2 : index
    %c0_472 = arith.constant 0 : index
    %423 = vector.load %arg11[%c0_469, %c4_470, %c2_471, %c0_472] : memref<1x11x11x32xf32, #tpu.memory_space<vmem>>, vector<1x1x1x32xf32>
    %424 = vector.shape_cast %423 : vector<1x1x1x32xf32> to vector<1x32xf32>
    %c0_473 = arith.constant 0 : index
    %c0_474 = arith.constant 0 : index
    %425 = vector.load %arg12[%c0_473, %c0_474] : memref<4x32xf32, #tpu.memory_space<vmem>>, vector<1x32xf32>
    tpu.vector_store %arg12[%c0_473, %c0_474], %424 {strides = array<i32>} : memref<4x32xf32, #tpu.memory_space<vmem>>, vector<1x32xf32>,
    %c0_475 = arith.constant 0 : index
    %c4_476 = arith.constant 4 : index
    %c4_477 = arith.constant 4 : index
    %c0_478 = arith.constant 0 : index
    %426 = vector.load %arg11[%c0_475, %c4_476, %c4_477, %c0_478] : memref<1x11x11x32xf32, #tpu.memory_space<vmem>>, vector<1x1x1x32xf32>
    %427 = vector.shape_cast %426 : vector<1x1x1x32xf32> to vector<1x32xf32>
    %c1_479 = arith.constant 1 : index
    %c0_480 = arith.constant 0 : index
    %428 = vector.load %arg12[%c1_479, %c0_480] : memref<4x32xf32, #tpu.memory_space<vmem>>, vector<1x32xf32>
    tpu.vector_store %arg12[%c1_479, %c0_480], %427 {strides = array<i32>} : memref<4x32xf32, #tpu.memory_space<vmem>>, vector<1x32xf32>,
    %c0_481 = arith.constant 0 : index
    %c6_482 = arith.constant 6 : index
    %c2_483 = arith.constant 2 : index
    %c0_484 = arith.constant 0 : index
    %429 = vector.load %arg11[%c0_481, %c6_482, %c2_483, %c0_484] : memref<1x11x11x32xf32, #tpu.memory_space<vmem>>, vector<1x1x1x32xf32>
    %430 = vector.shape_cast %429 : vector<1x1x1x32xf32> to vector<1x32xf32>
    %c2_485 = arith.constant 2 : index
    %c0_486 = arith.constant 0 : index
    %431 = vector.load %arg12[%c2_485, %c0_486] : memref<4x32xf32, #tpu.memory_space<vmem>>, vector<1x32xf32>
    tpu.vector_store %arg12[%c2_485, %c0_486], %430 {strides = array<i32>} : memref<4x32xf32, #tpu.memory_space<vmem>>, vector<1x32xf32>,
    %c0_487 = arith.constant 0 : index
    %c6_488 = arith.constant 6 : index
    %c4_489 = arith.constant 4 : index
    %c0_490 = arith.constant 0 : index
    %432 = vector.load %arg11[%c0_487, %c6_488, %c4_489, %c0_490] : memref<1x11x11x32xf32, #tpu.memory_space<vmem>>, vector<1x1x1x32xf32>
    %433 = vector.shape_cast %432 : vector<1x1x1x32xf32> to vector<1x32xf32>
    %c3_491 = arith.constant 3 : index
    %c0_492 = arith.constant 0 : index
    %434 = vector.load %arg12[%c3_491, %c0_492] : memref<4x32xf32, #tpu.memory_space<vmem>>, vector<1x32xf32>
    tpu.vector_store %arg12[%c3_491, %c0_492], %433 {strides = array<i32>} : memref<4x32xf32, #tpu.memory_space<vmem>>, vector<1x32xf32>,
    %c11 = arith.constant 11 : index
    %c0_493 = arith.constant 0 : index
    %c0_494 = arith.constant 0 : index
    %435 = vector.load %arg4[%c11, %c0_493, %c0_494] : memref<25x32x64xf32, #tpu.memory_space<vmem>>, vector<1x32x64xf32>
    %436 = vector.shape_cast %435 : vector<1x32x64xf32> to vector<32x64xf32>
    %c0_495 = arith.constant 0 : index
    %c0_496 = arith.constant 0 : index
    %437 = vector.load %arg12[%c0_495, %c0_496] : memref<4x32xf32, #tpu.memory_space<vmem>>, vector<4x32xf32>
    %cst_497 = arith.constant dense<0.000000e+00> : vector<4x64xf32>
    %438 = tpu.matmul %437, %436, %cst_497 {dimension_numbers = #tpu.dot_dimension_numbers<[1], [0], [0], [1], [0, 0, 1, 1], [], []>} : vector<4x32xf32>, vector<32x64xf32>, vector<4x64xf32> -> vector<4x64xf32>
    %439 = arith.addf %422, %438 : vector<4x64xf32>
    %c0_498 = arith.constant 0 : index
    %c4_499 = arith.constant 4 : index
    %c4_500 = arith.constant 4 : index
    %c0_501 = arith.constant 0 : index
    %440 = vector.load %arg11[%c0_498, %c4_499, %c4_500, %c0_501] : memref<1x11x11x32xf32, #tpu.memory_space<vmem>>, vector<1x1x1x32xf32>
    %441 = vector.shape_cast %440 : vector<1x1x1x32xf32> to vector<1x32xf32>
    %c0_502 = arith.constant 0 : index
    %c0_503 = arith.constant 0 : index
    %442 = vector.load %arg12[%c0_502, %c0_503] : memref<4x32xf32, #tpu.memory_space<vmem>>, vector<1x32xf32>
    tpu.vector_store %arg12[%c0_502, %c0_503], %441 {strides = array<i32>} : memref<4x32xf32, #tpu.memory_space<vmem>>, vector<1x32xf32>,
    %c0_504 = arith.constant 0 : index
    %c4_505 = arith.constant 4 : index
    %c6_506 = arith.constant 6 : index
    %c0_507 = arith.constant 0 : index
    %443 = vector.load %arg11[%c0_504, %c4_505, %c6_506, %c0_507] : memref<1x11x11x32xf32, #tpu.memory_space<vmem>>, vector<1x1x1x32xf32>
    %444 = vector.shape_cast %443 : vector<1x1x1x32xf32> to vector<1x32xf32>
    %c1_508 = arith.constant 1 : index
    %c0_509 = arith.constant 0 : index
    %445 = vector.load %arg12[%c1_508, %c0_509] : memref<4x32xf32, #tpu.memory_space<vmem>>, vector<1x32xf32>
    tpu.vector_store %arg12[%c1_508, %c0_509], %444 {strides = array<i32>} : memref<4x32xf32, #tpu.memory_space<vmem>>, vector<1x32xf32>,
    %c0_510 = arith.constant 0 : index
    %c6_511 = arith.constant 6 : index
    %c4_512 = arith.constant 4 : index
    %c0_513 = arith.constant 0 : index
    %446 = vector.load %arg11[%c0_510, %c6_511, %c4_512, %c0_513] : memref<1x11x11x32xf32, #tpu.memory_space<vmem>>, vector<1x1x1x32xf32>
    %447 = vector.shape_cast %446 : vector<1x1x1x32xf32> to vector<1x32xf32>
    %c2_514 = arith.constant 2 : index
    %c0_515 = arith.constant 0 : index
    %448 = vector.load %arg12[%c2_514, %c0_515] : memref<4x32xf32, #tpu.memory_space<vmem>>, vector<1x32xf32>
    tpu.vector_store %arg12[%c2_514, %c0_515], %447 {strides = array<i32>} : memref<4x32xf32, #tpu.memory_space<vmem>>, vector<1x32xf32>,
    %c0_516 = arith.constant 0 : index
    %c6_517 = arith.constant 6 : index
    %c6_518 = arith.constant 6 : index
    %c0_519 = arith.constant 0 : index
    %449 = vector.load %arg11[%c0_516, %c6_517, %c6_518, %c0_519] : memref<1x11x11x32xf32, #tpu.memory_space<vmem>>, vector<1x1x1x32xf32>
    %450 = vector.shape_cast %449 : vector<1x1x1x32xf32> to vector<1x32xf32>
    %c3_520 = arith.constant 3 : index
    %c0_521 = arith.constant 0 : index
    %451 = vector.load %arg12[%c3_520, %c0_521] : memref<4x32xf32, #tpu.memory_space<vmem>>, vector<1x32xf32>
    tpu.vector_store %arg12[%c3_520, %c0_521], %450 {strides = array<i32>} : memref<4x32xf32, #tpu.memory_space<vmem>>, vector<1x32xf32>,
    %c12 = arith.constant 12 : index
    %c0_522 = arith.constant 0 : index
    %c0_523 = arith.constant 0 : index
    %452 = vector.load %arg4[%c12, %c0_522, %c0_523] : memref<25x32x64xf32, #tpu.memory_space<vmem>>, vector<1x32x64xf32>
    %453 = vector.shape_cast %452 : vector<1x32x64xf32> to vector<32x64xf32>
    %c0_524 = arith.constant 0 : index
    %c0_525 = arith.constant 0 : index
    %454 = vector.load %arg12[%c0_524, %c0_525] : memref<4x32xf32, #tpu.memory_space<vmem>>, vector<4x32xf32>
    %cst_526 = arith.constant dense<0.000000e+00> : vector<4x64xf32>
    %455 = tpu.matmul %454, %453, %cst_526 {dimension_numbers = #tpu.dot_dimension_numbers<[1], [0], [0], [1], [0, 0, 1, 1], [], []>} : vector<4x32xf32>, vector<32x64xf32>, vector<4x64xf32> -> vector<4x64xf32>
    %456 = arith.addf %439, %455 : vector<4x64xf32>
    %c0_527 = arith.constant 0 : index
    %c4_528 = arith.constant 4 : index
    %c6_529 = arith.constant 6 : index
    %c0_530 = arith.constant 0 : index
    %457 = vector.load %arg11[%c0_527, %c4_528, %c6_529, %c0_530] : memref<1x11x11x32xf32, #tpu.memory_space<vmem>>, vector<1x1x1x32xf32>
    %458 = vector.shape_cast %457 : vector<1x1x1x32xf32> to vector<1x32xf32>
    %c0_531 = arith.constant 0 : index
    %c0_532 = arith.constant 0 : index
    %459 = vector.load %arg12[%c0_531, %c0_532] : memref<4x32xf32, #tpu.memory_space<vmem>>, vector<1x32xf32>
    tpu.vector_store %arg12[%c0_531, %c0_532], %458 {strides = array<i32>} : memref<4x32xf32, #tpu.memory_space<vmem>>, vector<1x32xf32>,
    %c0_533 = arith.constant 0 : index
    %c4_534 = arith.constant 4 : index
    %c8_535 = arith.constant 8 : index
    %c0_536 = arith.constant 0 : index
    %460 = vector.load %arg11[%c0_533, %c4_534, %c8_535, %c0_536] : memref<1x11x11x32xf32, #tpu.memory_space<vmem>>, vector<1x1x1x32xf32>
    %461 = vector.shape_cast %460 : vector<1x1x1x32xf32> to vector<1x32xf32>
    %c1_537 = arith.constant 1 : index
    %c0_538 = arith.constant 0 : index
    %462 = vector.load %arg12[%c1_537, %c0_538] : memref<4x32xf32, #tpu.memory_space<vmem>>, vector<1x32xf32>
    tpu.vector_store %arg12[%c1_537, %c0_538], %461 {strides = array<i32>} : memref<4x32xf32, #tpu.memory_space<vmem>>, vector<1x32xf32>,
    %c0_539 = arith.constant 0 : index
    %c6_540 = arith.constant 6 : index
    %c6_541 = arith.constant 6 : index
    %c0_542 = arith.constant 0 : index
    %463 = vector.load %arg11[%c0_539, %c6_540, %c6_541, %c0_542] : memref<1x11x11x32xf32, #tpu.memory_space<vmem>>, vector<1x1x1x32xf32>
    %464 = vector.shape_cast %463 : vector<1x1x1x32xf32> to vector<1x32xf32>
    %c2_543 = arith.constant 2 : index
    %c0_544 = arith.constant 0 : index
    %465 = vector.load %arg12[%c2_543, %c0_544] : memref<4x32xf32, #tpu.memory_space<vmem>>, vector<1x32xf32>
    tpu.vector_store %arg12[%c2_543, %c0_544], %464 {strides = array<i32>} : memref<4x32xf32, #tpu.memory_space<vmem>>, vector<1x32xf32>,
    %c0_545 = arith.constant 0 : index
    %c6_546 = arith.constant 6 : index
    %c8_547 = arith.constant 8 : index
    %c0_548 = arith.constant 0 : index
    %466 = vector.load %arg11[%c0_545, %c6_546, %c8_547, %c0_548] : memref<1x11x11x32xf32, #tpu.memory_space<vmem>>, vector<1x1x1x32xf32>
    %467 = vector.shape_cast %466 : vector<1x1x1x32xf32> to vector<1x32xf32>
    %c3_549 = arith.constant 3 : index
    %c0_550 = arith.constant 0 : index
    %468 = vector.load %arg12[%c3_549, %c0_550] : memref<4x32xf32, #tpu.memory_space<vmem>>, vector<1x32xf32>
    tpu.vector_store %arg12[%c3_549, %c0_550], %467 {strides = array<i32>} : memref<4x32xf32, #tpu.memory_space<vmem>>, vector<1x32xf32>,
    %c13 = arith.constant 13 : index
    %c0_551 = arith.constant 0 : index
    %c0_552 = arith.constant 0 : index
    %469 = vector.load %arg4[%c13, %c0_551, %c0_552] : memref<25x32x64xf32, #tpu.memory_space<vmem>>, vector<1x32x64xf32>
    %470 = vector.shape_cast %469 : vector<1x32x64xf32> to vector<32x64xf32>
    %c0_553 = arith.constant 0 : index
    %c0_554 = arith.constant 0 : index
    %471 = vector.load %arg12[%c0_553, %c0_554] : memref<4x32xf32, #tpu.memory_space<vmem>>, vector<4x32xf32>
    %cst_555 = arith.constant dense<0.000000e+00> : vector<4x64xf32>
    %472 = tpu.matmul %471, %470, %cst_555 {dimension_numbers = #tpu.dot_dimension_numbers<[1], [0], [0], [1], [0, 0, 1, 1], [], []>} : vector<4x32xf32>, vector<32x64xf32>, vector<4x64xf32> -> vector<4x64xf32>
    %473 = arith.addf %456, %472 : vector<4x64xf32>
    %c0_556 = arith.constant 0 : index
    %c4_557 = arith.constant 4 : index
    %c8_558 = arith.constant 8 : index
    %c0_559 = arith.constant 0 : index
    %474 = vector.load %arg11[%c0_556, %c4_557, %c8_558, %c0_559] : memref<1x11x11x32xf32, #tpu.memory_space<vmem>>, vector<1x1x1x32xf32>
    %475 = vector.shape_cast %474 : vector<1x1x1x32xf32> to vector<1x32xf32>
    %c0_560 = arith.constant 0 : index
    %c0_561 = arith.constant 0 : index
    %476 = vector.load %arg12[%c0_560, %c0_561] : memref<4x32xf32, #tpu.memory_space<vmem>>, vector<1x32xf32>
    tpu.vector_store %arg12[%c0_560, %c0_561], %475 {strides = array<i32>} : memref<4x32xf32, #tpu.memory_space<vmem>>, vector<1x32xf32>,
    %c0_562 = arith.constant 0 : index
    %c4_563 = arith.constant 4 : index
    %c10_564 = arith.constant 10 : index
    %c0_565 = arith.constant 0 : index
    %477 = vector.load %arg11[%c0_562, %c4_563, %c10_564, %c0_565] : memref<1x11x11x32xf32, #tpu.memory_space<vmem>>, vector<1x1x1x32xf32>
    %478 = vector.shape_cast %477 : vector<1x1x1x32xf32> to vector<1x32xf32>
    %c1_566 = arith.constant 1 : index
    %c0_567 = arith.constant 0 : index
    %479 = vector.load %arg12[%c1_566, %c0_567] : memref<4x32xf32, #tpu.memory_space<vmem>>, vector<1x32xf32>
    tpu.vector_store %arg12[%c1_566, %c0_567], %478 {strides = array<i32>} : memref<4x32xf32, #tpu.memory_space<vmem>>, vector<1x32xf32>,
    %c0_568 = arith.constant 0 : index
    %c6_569 = arith.constant 6 : index
    %c8_570 = arith.constant 8 : index
    %c0_571 = arith.constant 0 : index
    %480 = vector.load %arg11[%c0_568, %c6_569, %c8_570, %c0_571] : memref<1x11x11x32xf32, #tpu.memory_space<vmem>>, vector<1x1x1x32xf32>
    %481 = vector.shape_cast %480 : vector<1x1x1x32xf32> to vector<1x32xf32>
    %c2_572 = arith.constant 2 : index
    %c0_573 = arith.constant 0 : index
    %482 = vector.load %arg12[%c2_572, %c0_573] : memref<4x32xf32, #tpu.memory_space<vmem>>, vector<1x32xf32>
    tpu.vector_store %arg12[%c2_572, %c0_573], %481 {strides = array<i32>} : memref<4x32xf32, #tpu.memory_space<vmem>>, vector<1x32xf32>,
    %c0_574 = arith.constant 0 : index
    %c6_575 = arith.constant 6 : index
    %c10_576 = arith.constant 10 : index
    %c0_577 = arith.constant 0 : index
    %483 = vector.load %arg11[%c0_574, %c6_575, %c10_576, %c0_577] : memref<1x11x11x32xf32, #tpu.memory_space<vmem>>, vector<1x1x1x32xf32>
    %484 = vector.shape_cast %483 : vector<1x1x1x32xf32> to vector<1x32xf32>
    %c3_578 = arith.constant 3 : index
    %c0_579 = arith.constant 0 : index
    %485 = vector.load %arg12[%c3_578, %c0_579] : memref<4x32xf32, #tpu.memory_space<vmem>>, vector<1x32xf32>
    tpu.vector_store %arg12[%c3_578, %c0_579], %484 {strides = array<i32>} : memref<4x32xf32, #tpu.memory_space<vmem>>, vector<1x32xf32>,
    %c14 = arith.constant 14 : index
    %c0_580 = arith.constant 0 : index
    %c0_581 = arith.constant 0 : index
    %486 = vector.load %arg4[%c14, %c0_580, %c0_581] : memref<25x32x64xf32, #tpu.memory_space<vmem>>, vector<1x32x64xf32>
    %487 = vector.shape_cast %486 : vector<1x32x64xf32> to vector<32x64xf32>
    %c0_582 = arith.constant 0 : index
    %c0_583 = arith.constant 0 : index
    %488 = vector.load %arg12[%c0_582, %c0_583] : memref<4x32xf32, #tpu.memory_space<vmem>>, vector<4x32xf32>
    %cst_584 = arith.constant dense<0.000000e+00> : vector<4x64xf32>
    %489 = tpu.matmul %488, %487, %cst_584 {dimension_numbers = #tpu.dot_dimension_numbers<[1], [0], [0], [1], [0, 0, 1, 1], [], []>} : vector<4x32xf32>, vector<32x64xf32>, vector<4x64xf32> -> vector<4x64xf32>
    %490 = arith.addf %473, %489 : vector<4x64xf32>
    %c0_585 = arith.constant 0 : index
    %c6_586 = arith.constant 6 : index
    %c0_587 = arith.constant 0 : index
    %c0_588 = arith.constant 0 : index
    %491 = vector.load %arg11[%c0_585, %c6_586, %c0_587, %c0_588] : memref<1x11x11x32xf32, #tpu.memory_space<vmem>>, vector<1x1x1x32xf32>
    %492 = vector.shape_cast %491 : vector<1x1x1x32xf32> to vector<1x32xf32>
    %c0_589 = arith.constant 0 : index
    %c0_590 = arith.constant 0 : index
    %493 = vector.load %arg12[%c0_589, %c0_590] : memref<4x32xf32, #tpu.memory_space<vmem>>, vector<1x32xf32>
    tpu.vector_store %arg12[%c0_589, %c0_590], %492 {strides = array<i32>} : memref<4x32xf32, #tpu.memory_space<vmem>>, vector<1x32xf32>,
    %c0_591 = arith.constant 0 : index
    %c6_592 = arith.constant 6 : index
    %c2_593 = arith.constant 2 : index
    %c0_594 = arith.constant 0 : index
    %494 = vector.load %arg11[%c0_591, %c6_592, %c2_593, %c0_594] : memref<1x11x11x32xf32, #tpu.memory_space<vmem>>, vector<1x1x1x32xf32>
    %495 = vector.shape_cast %494 : vector<1x1x1x32xf32> to vector<1x32xf32>
    %c1_595 = arith.constant 1 : index
    %c0_596 = arith.constant 0 : index
    %496 = vector.load %arg12[%c1_595, %c0_596] : memref<4x32xf32, #tpu.memory_space<vmem>>, vector<1x32xf32>
    tpu.vector_store %arg12[%c1_595, %c0_596], %495 {strides = array<i32>} : memref<4x32xf32, #tpu.memory_space<vmem>>, vector<1x32xf32>,
    %c0_597 = arith.constant 0 : index
    %c8_598 = arith.constant 8 : index
    %c0_599 = arith.constant 0 : index
    %c0_600 = arith.constant 0 : index
    %497 = vector.load %arg11[%c0_597, %c8_598, %c0_599, %c0_600] : memref<1x11x11x32xf32, #tpu.memory_space<vmem>>, vector<1x1x1x32xf32>
    %498 = vector.shape_cast %497 : vector<1x1x1x32xf32> to vector<1x32xf32>
    %c2_601 = arith.constant 2 : index
    %c0_602 = arith.constant 0 : index
    %499 = vector.load %arg12[%c2_601, %c0_602] : memref<4x32xf32, #tpu.memory_space<vmem>>, vector<1x32xf32>
    tpu.vector_store %arg12[%c2_601, %c0_602], %498 {strides = array<i32>} : memref<4x32xf32, #tpu.memory_space<vmem>>, vector<1x32xf32>,
    %c0_603 = arith.constant 0 : index
    %c8_604 = arith.constant 8 : index
    %c2_605 = arith.constant 2 : index
    %c0_606 = arith.constant 0 : index
    %500 = vector.load %arg11[%c0_603, %c8_604, %c2_605, %c0_606] : memref<1x11x11x32xf32, #tpu.memory_space<vmem>>, vector<1x1x1x32xf32>
    %501 = vector.shape_cast %500 : vector<1x1x1x32xf32> to vector<1x32xf32>
    %c3_607 = arith.constant 3 : index
    %c0_608 = arith.constant 0 : index
    %502 = vector.load %arg12[%c3_607, %c0_608] : memref<4x32xf32, #tpu.memory_space<vmem>>, vector<1x32xf32>
    tpu.vector_store %arg12[%c3_607, %c0_608], %501 {strides = array<i32>} : memref<4x32xf32, #tpu.memory_space<vmem>>, vector<1x32xf32>,
    %c15 = arith.constant 15 : index
    %c0_609 = arith.constant 0 : index
    %c0_610 = arith.constant 0 : index
    %503 = vector.load %arg4[%c15, %c0_609, %c0_610] : memref<25x32x64xf32, #tpu.memory_space<vmem>>, vector<1x32x64xf32>
    %504 = vector.shape_cast %503 : vector<1x32x64xf32> to vector<32x64xf32>
    %c0_611 = arith.constant 0 : index
    %c0_612 = arith.constant 0 : index
    %505 = vector.load %arg12[%c0_611, %c0_612] : memref<4x32xf32, #tpu.memory_space<vmem>>, vector<4x32xf32>
    %cst_613 = arith.constant dense<0.000000e+00> : vector<4x64xf32>
    %506 = tpu.matmul %505, %504, %cst_613 {dimension_numbers = #tpu.dot_dimension_numbers<[1], [0], [0], [1], [0, 0, 1, 1], [], []>} : vector<4x32xf32>, vector<32x64xf32>, vector<4x64xf32> -> vector<4x64xf32>
    %507 = arith.addf %490, %506 : vector<4x64xf32>
    %c0_614 = arith.constant 0 : index
    %c6_615 = arith.constant 6 : index
    %c2_616 = arith.constant 2 : index
    %c0_617 = arith.constant 0 : index
    %508 = vector.load %arg11[%c0_614, %c6_615, %c2_616, %c0_617] : memref<1x11x11x32xf32, #tpu.memory_space<vmem>>, vector<1x1x1x32xf32>
    %509 = vector.shape_cast %508 : vector<1x1x1x32xf32> to vector<1x32xf32>
    %c0_618 = arith.constant 0 : index
    %c0_619 = arith.constant 0 : index
    %510 = vector.load %arg12[%c0_618, %c0_619] : memref<4x32xf32, #tpu.memory_space<vmem>>, vector<1x32xf32>
    tpu.vector_store %arg12[%c0_618, %c0_619], %509 {strides = array<i32>} : memref<4x32xf32, #tpu.memory_space<vmem>>, vector<1x32xf32>,
    %c0_620 = arith.constant 0 : index
    %c6_621 = arith.constant 6 : index
    %c4_622 = arith.constant 4 : index
    %c0_623 = arith.constant 0 : index
    %511 = vector.load %arg11[%c0_620, %c6_621, %c4_622, %c0_623] : memref<1x11x11x32xf32, #tpu.memory_space<vmem>>, vector<1x1x1x32xf32>
    %512 = vector.shape_cast %511 : vector<1x1x1x32xf32> to vector<1x32xf32>
    %c1_624 = arith.constant 1 : index
    %c0_625 = arith.constant 0 : index
    %513 = vector.load %arg12[%c1_624, %c0_625] : memref<4x32xf32, #tpu.memory_space<vmem>>, vector<1x32xf32>
    tpu.vector_store %arg12[%c1_624, %c0_625], %512 {strides = array<i32>} : memref<4x32xf32, #tpu.memory_space<vmem>>, vector<1x32xf32>,
    %c0_626 = arith.constant 0 : index
    %c8_627 = arith.constant 8 : index
    %c2_628 = arith.constant 2 : index
    %c0_629 = arith.constant 0 : index
    %514 = vector.load %arg11[%c0_626, %c8_627, %c2_628, %c0_629] : memref<1x11x11x32xf32, #tpu.memory_space<vmem>>, vector<1x1x1x32xf32>
    %515 = vector.shape_cast %514 : vector<1x1x1x32xf32> to vector<1x32xf32>
    %c2_630 = arith.constant 2 : index
    %c0_631 = arith.constant 0 : index
    %516 = vector.load %arg12[%c2_630, %c0_631] : memref<4x32xf32, #tpu.memory_space<vmem>>, vector<1x32xf32>
    tpu.vector_store %arg12[%c2_630, %c0_631], %515 {strides = array<i32>} : memref<4x32xf32, #tpu.memory_space<vmem>>, vector<1x32xf32>,
    %c0_632 = arith.constant 0 : index
    %c8_633 = arith.constant 8 : index
    %c4_634 = arith.constant 4 : index
    %c0_635 = arith.constant 0 : index
    %517 = vector.load %arg11[%c0_632, %c8_633, %c4_634, %c0_635] : memref<1x11x11x32xf32, #tpu.memory_space<vmem>>, vector<1x1x1x32xf32>
    %518 = vector.shape_cast %517 : vector<1x1x1x32xf32> to vector<1x32xf32>
    %c3_636 = arith.constant 3 : index
    %c0_637 = arith.constant 0 : index
    %519 = vector.load %arg12[%c3_636, %c0_637] : memref<4x32xf32, #tpu.memory_space<vmem>>, vector<1x32xf32>
    tpu.vector_store %arg12[%c3_636, %c0_637], %518 {strides = array<i32>} : memref<4x32xf32, #tpu.memory_space<vmem>>, vector<1x32xf32>,
    %c16 = arith.constant 16 : index
    %c0_638 = arith.constant 0 : index
    %c0_639 = arith.constant 0 : index
    %520 = vector.load %arg4[%c16, %c0_638, %c0_639] : memref<25x32x64xf32, #tpu.memory_space<vmem>>, vector<1x32x64xf32>
    %521 = vector.shape_cast %520 : vector<1x32x64xf32> to vector<32x64xf32>
    %c0_640 = arith.constant 0 : index
    %c0_641 = arith.constant 0 : index
    %522 = vector.load %arg12[%c0_640, %c0_641] : memref<4x32xf32, #tpu.memory_space<vmem>>, vector<4x32xf32>
    %cst_642 = arith.constant dense<0.000000e+00> : vector<4x64xf32>
    %523 = tpu.matmul %522, %521, %cst_642 {dimension_numbers = #tpu.dot_dimension_numbers<[1], [0], [0], [1], [0, 0, 1, 1], [], []>} : vector<4x32xf32>, vector<32x64xf32>, vector<4x64xf32> -> vector<4x64xf32>
    %524 = arith.addf %507, %523 : vector<4x64xf32>
    %c0_643 = arith.constant 0 : index
    %c6_644 = arith.constant 6 : index
    %c4_645 = arith.constant 4 : index
    %c0_646 = arith.constant 0 : index
    %525 = vector.load %arg11[%c0_643, %c6_644, %c4_645, %c0_646] : memref<1x11x11x32xf32, #tpu.memory_space<vmem>>, vector<1x1x1x32xf32>
    %526 = vector.shape_cast %525 : vector<1x1x1x32xf32> to vector<1x32xf32>
    %c0_647 = arith.constant 0 : index
    %c0_648 = arith.constant 0 : index
    %527 = vector.load %arg12[%c0_647, %c0_648] : memref<4x32xf32, #tpu.memory_space<vmem>>, vector<1x32xf32>
    tpu.vector_store %arg12[%c0_647, %c0_648], %526 {strides = array<i32>} : memref<4x32xf32, #tpu.memory_space<vmem>>, vector<1x32xf32>,
    %c0_649 = arith.constant 0 : index
    %c6_650 = arith.constant 6 : index
    %c6_651 = arith.constant 6 : index
    %c0_652 = arith.constant 0 : index
    %528 = vector.load %arg11[%c0_649, %c6_650, %c6_651, %c0_652] : memref<1x11x11x32xf32, #tpu.memory_space<vmem>>, vector<1x1x1x32xf32>
    %529 = vector.shape_cast %528 : vector<1x1x1x32xf32> to vector<1x32xf32>
    %c1_653 = arith.constant 1 : index
    %c0_654 = arith.constant 0 : index
    %530 = vector.load %arg12[%c1_653, %c0_654] : memref<4x32xf32, #tpu.memory_space<vmem>>, vector<1x32xf32>
    tpu.vector_store %arg12[%c1_653, %c0_654], %529 {strides = array<i32>} : memref<4x32xf32, #tpu.memory_space<vmem>>, vector<1x32xf32>,
    %c0_655 = arith.constant 0 : index
    %c8_656 = arith.constant 8 : index
    %c4_657 = arith.constant 4 : index
    %c0_658 = arith.constant 0 : index
    %531 = vector.load %arg11[%c0_655, %c8_656, %c4_657, %c0_658] : memref<1x11x11x32xf32, #tpu.memory_space<vmem>>, vector<1x1x1x32xf32>
    %532 = vector.shape_cast %531 : vector<1x1x1x32xf32> to vector<1x32xf32>
    %c2_659 = arith.constant 2 : index
    %c0_660 = arith.constant 0 : index
    %533 = vector.load %arg12[%c2_659, %c0_660] : memref<4x32xf32, #tpu.memory_space<vmem>>, vector<1x32xf32>
    tpu.vector_store %arg12[%c2_659, %c0_660], %532 {strides = array<i32>} : memref<4x32xf32, #tpu.memory_space<vmem>>, vector<1x32xf32>,
    %c0_661 = arith.constant 0 : index
    %c8_662 = arith.constant 8 : index
    %c6_663 = arith.constant 6 : index
    %c0_664 = arith.constant 0 : index
    %534 = vector.load %arg11[%c0_661, %c8_662, %c6_663, %c0_664] : memref<1x11x11x32xf32, #tpu.memory_space<vmem>>, vector<1x1x1x32xf32>
    %535 = vector.shape_cast %534 : vector<1x1x1x32xf32> to vector<1x32xf32>
    %c3_665 = arith.constant 3 : index
    %c0_666 = arith.constant 0 : index
    %536 = vector.load %arg12[%c3_665, %c0_666] : memref<4x32xf32, #tpu.memory_space<vmem>>, vector<1x32xf32>
    tpu.vector_store %arg12[%c3_665, %c0_666], %535 {strides = array<i32>} : memref<4x32xf32, #tpu.memory_space<vmem>>, vector<1x32xf32>,
    %c17 = arith.constant 17 : index
    %c0_667 = arith.constant 0 : index
    %c0_668 = arith.constant 0 : index
    %537 = vector.load %arg4[%c17, %c0_667, %c0_668] : memref<25x32x64xf32, #tpu.memory_space<vmem>>, vector<1x32x64xf32>
    %538 = vector.shape_cast %537 : vector<1x32x64xf32> to vector<32x64xf32>
    %c0_669 = arith.constant 0 : index
    %c0_670 = arith.constant 0 : index
    %539 = vector.load %arg12[%c0_669, %c0_670] : memref<4x32xf32, #tpu.memory_space<vmem>>, vector<4x32xf32>
    %cst_671 = arith.constant dense<0.000000e+00> : vector<4x64xf32>
    %540 = tpu.matmul %539, %538, %cst_671 {dimension_numbers = #tpu.dot_dimension_numbers<[1], [0], [0], [1], [0, 0, 1, 1], [], []>} : vector<4x32xf32>, vector<32x64xf32>, vector<4x64xf32> -> vector<4x64xf32>
    %541 = arith.addf %524, %540 : vector<4x64xf32>
    %c0_672 = arith.constant 0 : index
    %c6_673 = arith.constant 6 : index
    %c6_674 = arith.constant 6 : index
    %c0_675 = arith.constant 0 : index
    %542 = vector.load %arg11[%c0_672, %c6_673, %c6_674, %c0_675] : memref<1x11x11x32xf32, #tpu.memory_space<vmem>>, vector<1x1x1x32xf32>
    %543 = vector.shape_cast %542 : vector<1x1x1x32xf32> to vector<1x32xf32>
    %c0_676 = arith.constant 0 : index
    %c0_677 = arith.constant 0 : index
    %544 = vector.load %arg12[%c0_676, %c0_677] : memref<4x32xf32, #tpu.memory_space<vmem>>, vector<1x32xf32>
    tpu.vector_store %arg12[%c0_676, %c0_677], %543 {strides = array<i32>} : memref<4x32xf32, #tpu.memory_space<vmem>>, vector<1x32xf32>,
    %c0_678 = arith.constant 0 : index
    %c6_679 = arith.constant 6 : index
    %c8_680 = arith.constant 8 : index
    %c0_681 = arith.constant 0 : index
    %545 = vector.load %arg11[%c0_678, %c6_679, %c8_680, %c0_681] : memref<1x11x11x32xf32, #tpu.memory_space<vmem>>, vector<1x1x1x32xf32>
    %546 = vector.shape_cast %545 : vector<1x1x1x32xf32> to vector<1x32xf32>
    %c1_682 = arith.constant 1 : index
    %c0_683 = arith.constant 0 : index
    %547 = vector.load %arg12[%c1_682, %c0_683] : memref<4x32xf32, #tpu.memory_space<vmem>>, vector<1x32xf32>
    tpu.vector_store %arg12[%c1_682, %c0_683], %546 {strides = array<i32>} : memref<4x32xf32, #tpu.memory_space<vmem>>, vector<1x32xf32>,
    %c0_684 = arith.constant 0 : index
    %c8_685 = arith.constant 8 : index
    %c6_686 = arith.constant 6 : index
    %c0_687 = arith.constant 0 : index
    %548 = vector.load %arg11[%c0_684, %c8_685, %c6_686, %c0_687] : memref<1x11x11x32xf32, #tpu.memory_space<vmem>>, vector<1x1x1x32xf32>
    %549 = vector.shape_cast %548 : vector<1x1x1x32xf32> to vector<1x32xf32>
    %c2_688 = arith.constant 2 : index
    %c0_689 = arith.constant 0 : index
    %550 = vector.load %arg12[%c2_688, %c0_689] : memref<4x32xf32, #tpu.memory_space<vmem>>, vector<1x32xf32>
    tpu.vector_store %arg12[%c2_688, %c0_689], %549 {strides = array<i32>} : memref<4x32xf32, #tpu.memory_space<vmem>>, vector<1x32xf32>,
    %c0_690 = arith.constant 0 : index
    %c8_691 = arith.constant 8 : index
    %c8_692 = arith.constant 8 : index
    %c0_693 = arith.constant 0 : index
    %551 = vector.load %arg11[%c0_690, %c8_691, %c8_692, %c0_693] : memref<1x11x11x32xf32, #tpu.memory_space<vmem>>, vector<1x1x1x32xf32>
    %552 = vector.shape_cast %551 : vector<1x1x1x32xf32> to vector<1x32xf32>
    %c3_694 = arith.constant 3 : index
    %c0_695 = arith.constant 0 : index
    %553 = vector.load %arg12[%c3_694, %c0_695] : memref<4x32xf32, #tpu.memory_space<vmem>>, vector<1x32xf32>
    tpu.vector_store %arg12[%c3_694, %c0_695], %552 {strides = array<i32>} : memref<4x32xf32, #tpu.memory_space<vmem>>, vector<1x32xf32>,
    %c18 = arith.constant 18 : index
    %c0_696 = arith.constant 0 : index
    %c0_697 = arith.constant 0 : index
    %554 = vector.load %arg4[%c18, %c0_696, %c0_697] : memref<25x32x64xf32, #tpu.memory_space<vmem>>, vector<1x32x64xf32>
    %555 = vector.shape_cast %554 : vector<1x32x64xf32> to vector<32x64xf32>
    %c0_698 = arith.constant 0 : index
    %c0_699 = arith.constant 0 : index
    %556 = vector.load %arg12[%c0_698, %c0_699] : memref<4x32xf32, #tpu.memory_space<vmem>>, vector<4x32xf32>
    %cst_700 = arith.constant dense<0.000000e+00> : vector<4x64xf32>
    %557 = tpu.matmul %556, %555, %cst_700 {dimension_numbers = #tpu.dot_dimension_numbers<[1], [0], [0], [1], [0, 0, 1, 1], [], []>} : vector<4x32xf32>, vector<32x64xf32>, vector<4x64xf32> -> vector<4x64xf32>
    %558 = arith.addf %541, %557 : vector<4x64xf32>
    %c0_701 = arith.constant 0 : index
    %c6_702 = arith.constant 6 : index
    %c8_703 = arith.constant 8 : index
    %c0_704 = arith.constant 0 : index
    %559 = vector.load %arg11[%c0_701, %c6_702, %c8_703, %c0_704] : memref<1x11x11x32xf32, #tpu.memory_space<vmem>>, vector<1x1x1x32xf32>
    %560 = vector.shape_cast %559 : vector<1x1x1x32xf32> to vector<1x32xf32>
    %c0_705 = arith.constant 0 : index
    %c0_706 = arith.constant 0 : index
    %561 = vector.load %arg12[%c0_705, %c0_706] : memref<4x32xf32, #tpu.memory_space<vmem>>, vector<1x32xf32>
    tpu.vector_store %arg12[%c0_705, %c0_706], %560 {strides = array<i32>} : memref<4x32xf32, #tpu.memory_space<vmem>>, vector<1x32xf32>,
    %c0_707 = arith.constant 0 : index
    %c6_708 = arith.constant 6 : index
    %c10_709 = arith.constant 10 : index
    %c0_710 = arith.constant 0 : index
    %562 = vector.load %arg11[%c0_707, %c6_708, %c10_709, %c0_710] : memref<1x11x11x32xf32, #tpu.memory_space<vmem>>, vector<1x1x1x32xf32>
    %563 = vector.shape_cast %562 : vector<1x1x1x32xf32> to vector<1x32xf32>
    %c1_711 = arith.constant 1 : index
    %c0_712 = arith.constant 0 : index
    %564 = vector.load %arg12[%c1_711, %c0_712] : memref<4x32xf32, #tpu.memory_space<vmem>>, vector<1x32xf32>
    tpu.vector_store %arg12[%c1_711, %c0_712], %563 {strides = array<i32>} : memref<4x32xf32, #tpu.memory_space<vmem>>, vector<1x32xf32>,
    %c0_713 = arith.constant 0 : index
    %c8_714 = arith.constant 8 : index
    %c8_715 = arith.constant 8 : index
    %c0_716 = arith.constant 0 : index
    %565 = vector.load %arg11[%c0_713, %c8_714, %c8_715, %c0_716] : memref<1x11x11x32xf32, #tpu.memory_space<vmem>>, vector<1x1x1x32xf32>
    %566 = vector.shape_cast %565 : vector<1x1x1x32xf32> to vector<1x32xf32>
    %c2_717 = arith.constant 2 : index
    %c0_718 = arith.constant 0 : index
    %567 = vector.load %arg12[%c2_717, %c0_718] : memref<4x32xf32, #tpu.memory_space<vmem>>, vector<1x32xf32>
    tpu.vector_store %arg12[%c2_717, %c0_718], %566 {strides = array<i32>} : memref<4x32xf32, #tpu.memory_space<vmem>>, vector<1x32xf32>,
    %c0_719 = arith.constant 0 : index
    %c8_720 = arith.constant 8 : index
    %c10_721 = arith.constant 10 : index
    %c0_722 = arith.constant 0 : index
    %568 = vector.load %arg11[%c0_719, %c8_720, %c10_721, %c0_722] : memref<1x11x11x32xf32, #tpu.memory_space<vmem>>, vector<1x1x1x32xf32>
    %569 = vector.shape_cast %568 : vector<1x1x1x32xf32> to vector<1x32xf32>
    %c3_723 = arith.constant 3 : index
    %c0_724 = arith.constant 0 : index
    %570 = vector.load %arg12[%c3_723, %c0_724] : memref<4x32xf32, #tpu.memory_space<vmem>>, vector<1x32xf32>
    tpu.vector_store %arg12[%c3_723, %c0_724], %569 {strides = array<i32>} : memref<4x32xf32, #tpu.memory_space<vmem>>, vector<1x32xf32>,
    %c19 = arith.constant 19 : index
    %c0_725 = arith.constant 0 : index
    %c0_726 = arith.constant 0 : index
    %571 = vector.load %arg4[%c19, %c0_725, %c0_726] : memref<25x32x64xf32, #tpu.memory_space<vmem>>, vector<1x32x64xf32>
    %572 = vector.shape_cast %571 : vector<1x32x64xf32> to vector<32x64xf32>
    %c0_727 = arith.constant 0 : index
    %c0_728 = arith.constant 0 : index
    %573 = vector.load %arg12[%c0_727, %c0_728] : memref<4x32xf32, #tpu.memory_space<vmem>>, vector<4x32xf32>
    %cst_729 = arith.constant dense<0.000000e+00> : vector<4x64xf32>
    %574 = tpu.matmul %573, %572, %cst_729 {dimension_numbers = #tpu.dot_dimension_numbers<[1], [0], [0], [1], [0, 0, 1, 1], [], []>} : vector<4x32xf32>, vector<32x64xf32>, vector<4x64xf32> -> vector<4x64xf32>
    %575 = arith.addf %558, %574 : vector<4x64xf32>
    %c0_730 = arith.constant 0 : index
    %c8_731 = arith.constant 8 : index
    %c0_732 = arith.constant 0 : index
    %c0_733 = arith.constant 0 : index
    %576 = vector.load %arg11[%c0_730, %c8_731, %c0_732, %c0_733] : memref<1x11x11x32xf32, #tpu.memory_space<vmem>>, vector<1x1x1x32xf32>
    %577 = vector.shape_cast %576 : vector<1x1x1x32xf32> to vector<1x32xf32>
    %c0_734 = arith.constant 0 : index
    %c0_735 = arith.constant 0 : index
    %578 = vector.load %arg12[%c0_734, %c0_735] : memref<4x32xf32, #tpu.memory_space<vmem>>, vector<1x32xf32>
    tpu.vector_store %arg12[%c0_734, %c0_735], %577 {strides = array<i32>} : memref<4x32xf32, #tpu.memory_space<vmem>>, vector<1x32xf32>,
    %c0_736 = arith.constant 0 : index
    %c8_737 = arith.constant 8 : index
    %c2_738 = arith.constant 2 : index
    %c0_739 = arith.constant 0 : index
    %579 = vector.load %arg11[%c0_736, %c8_737, %c2_738, %c0_739] : memref<1x11x11x32xf32, #tpu.memory_space<vmem>>, vector<1x1x1x32xf32>
    %580 = vector.shape_cast %579 : vector<1x1x1x32xf32> to vector<1x32xf32>
    %c1_740 = arith.constant 1 : index
    %c0_741 = arith.constant 0 : index
    %581 = vector.load %arg12[%c1_740, %c0_741] : memref<4x32xf32, #tpu.memory_space<vmem>>, vector<1x32xf32>
    tpu.vector_store %arg12[%c1_740, %c0_741], %580 {strides = array<i32>} : memref<4x32xf32, #tpu.memory_space<vmem>>, vector<1x32xf32>,
    %c0_742 = arith.constant 0 : index
    %c10_743 = arith.constant 10 : index
    %c0_744 = arith.constant 0 : index
    %c0_745 = arith.constant 0 : index
    %582 = vector.load %arg11[%c0_742, %c10_743, %c0_744, %c0_745] : memref<1x11x11x32xf32, #tpu.memory_space<vmem>>, vector<1x1x1x32xf32>
    %583 = vector.shape_cast %582 : vector<1x1x1x32xf32> to vector<1x32xf32>
    %c2_746 = arith.constant 2 : index
    %c0_747 = arith.constant 0 : index
    %584 = vector.load %arg12[%c2_746, %c0_747] : memref<4x32xf32, #tpu.memory_space<vmem>>, vector<1x32xf32>
    tpu.vector_store %arg12[%c2_746, %c0_747], %583 {strides = array<i32>} : memref<4x32xf32, #tpu.memory_space<vmem>>, vector<1x32xf32>,
    %c0_748 = arith.constant 0 : index
    %c10_749 = arith.constant 10 : index
    %c2_750 = arith.constant 2 : index
    %c0_751 = arith.constant 0 : index
    %585 = vector.load %arg11[%c0_748, %c10_749, %c2_750, %c0_751] : memref<1x11x11x32xf32, #tpu.memory_space<vmem>>, vector<1x1x1x32xf32>
    %586 = vector.shape_cast %585 : vector<1x1x1x32xf32> to vector<1x32xf32>
    %c3_752 = arith.constant 3 : index
    %c0_753 = arith.constant 0 : index
    %587 = vector.load %arg12[%c3_752, %c0_753] : memref<4x32xf32, #tpu.memory_space<vmem>>, vector<1x32xf32>
    tpu.vector_store %arg12[%c3_752, %c0_753], %586 {strides = array<i32>} : memref<4x32xf32, #tpu.memory_space<vmem>>, vector<1x32xf32>,
    %c20 = arith.constant 20 : index
    %c0_754 = arith.constant 0 : index
    %c0_755 = arith.constant 0 : index
    %588 = vector.load %arg4[%c20, %c0_754, %c0_755] : memref<25x32x64xf32, #tpu.memory_space<vmem>>, vector<1x32x64xf32>
    %589 = vector.shape_cast %588 : vector<1x32x64xf32> to vector<32x64xf32>
    %c0_756 = arith.constant 0 : index
    %c0_757 = arith.constant 0 : index
    %590 = vector.load %arg12[%c0_756, %c0_757] : memref<4x32xf32, #tpu.memory_space<vmem>>, vector<4x32xf32>
    %cst_758 = arith.constant dense<0.000000e+00> : vector<4x64xf32>
    %591 = tpu.matmul %590, %589, %cst_758 {dimension_numbers = #tpu.dot_dimension_numbers<[1], [0], [0], [1], [0, 0, 1, 1], [], []>} : vector<4x32xf32>, vector<32x64xf32>, vector<4x64xf32> -> vector<4x64xf32>
    %592 = arith.addf %575, %591 : vector<4x64xf32>
    %c0_759 = arith.constant 0 : index
    %c8_760 = arith.constant 8 : index
    %c2_761 = arith.constant 2 : index
    %c0_762 = arith.constant 0 : index
    %593 = vector.load %arg11[%c0_759, %c8_760, %c2_761, %c0_762] : memref<1x11x11x32xf32, #tpu.memory_space<vmem>>, vector<1x1x1x32xf32>
    %594 = vector.shape_cast %593 : vector<1x1x1x32xf32> to vector<1x32xf32>
    %c0_763 = arith.constant 0 : index
    %c0_764 = arith.constant 0 : index
    %595 = vector.load %arg12[%c0_763, %c0_764] : memref<4x32xf32, #tpu.memory_space<vmem>>, vector<1x32xf32>
    tpu.vector_store %arg12[%c0_763, %c0_764], %594 {strides = array<i32>} : memref<4x32xf32, #tpu.memory_space<vmem>>, vector<1x32xf32>,
    %c0_765 = arith.constant 0 : index
    %c8_766 = arith.constant 8 : index
    %c4_767 = arith.constant 4 : index
    %c0_768 = arith.constant 0 : index
    %596 = vector.load %arg11[%c0_765, %c8_766, %c4_767, %c0_768] : memref<1x11x11x32xf32, #tpu.memory_space<vmem>>, vector<1x1x1x32xf32>
    %597 = vector.shape_cast %596 : vector<1x1x1x32xf32> to vector<1x32xf32>
    %c1_769 = arith.constant 1 : index
    %c0_770 = arith.constant 0 : index
    %598 = vector.load %arg12[%c1_769, %c0_770] : memref<4x32xf32, #tpu.memory_space<vmem>>, vector<1x32xf32>
    tpu.vector_store %arg12[%c1_769, %c0_770], %597 {strides = array<i32>} : memref<4x32xf32, #tpu.memory_space<vmem>>, vector<1x32xf32>,
    %c0_771 = arith.constant 0 : index
    %c10_772 = arith.constant 10 : index
    %c2_773 = arith.constant 2 : index
    %c0_774 = arith.constant 0 : index
    %599 = vector.load %arg11[%c0_771, %c10_772, %c2_773, %c0_774] : memref<1x11x11x32xf32, #tpu.memory_space<vmem>>, vector<1x1x1x32xf32>
    %600 = vector.shape_cast %599 : vector<1x1x1x32xf32> to vector<1x32xf32>
    %c2_775 = arith.constant 2 : index
    %c0_776 = arith.constant 0 : index
    %601 = vector.load %arg12[%c2_775, %c0_776] : memref<4x32xf32, #tpu.memory_space<vmem>>, vector<1x32xf32>
    tpu.vector_store %arg12[%c2_775, %c0_776], %600 {strides = array<i32>} : memref<4x32xf32, #tpu.memory_space<vmem>>, vector<1x32xf32>,
    %c0_777 = arith.constant 0 : index
    %c10_778 = arith.constant 10 : index
    %c4_779 = arith.constant 4 : index
    %c0_780 = arith.constant 0 : index
    %602 = vector.load %arg11[%c0_777, %c10_778, %c4_779, %c0_780] : memref<1x11x11x32xf32, #tpu.memory_space<vmem>>, vector<1x1x1x32xf32>
    %603 = vector.shape_cast %602 : vector<1x1x1x32xf32> to vector<1x32xf32>
    %c3_781 = arith.constant 3 : index
    %c0_782 = arith.constant 0 : index
    %604 = vector.load %arg12[%c3_781, %c0_782] : memref<4x32xf32, #tpu.memory_space<vmem>>, vector<1x32xf32>
    tpu.vector_store %arg12[%c3_781, %c0_782], %603 {strides = array<i32>} : memref<4x32xf32, #tpu.memory_space<vmem>>, vector<1x32xf32>,
    %c21 = arith.constant 21 : index
    %c0_783 = arith.constant 0 : index
    %c0_784 = arith.constant 0 : index
    %605 = vector.load %arg4[%c21, %c0_783, %c0_784] : memref<25x32x64xf32, #tpu.memory_space<vmem>>, vector<1x32x64xf32>
    %606 = vector.shape_cast %605 : vector<1x32x64xf32> to vector<32x64xf32>
    %c0_785 = arith.constant 0 : index
    %c0_786 = arith.constant 0 : index
    %607 = vector.load %arg12[%c0_785, %c0_786] : memref<4x32xf32, #tpu.memory_space<vmem>>, vector<4x32xf32>
    %cst_787 = arith.constant dense<0.000000e+00> : vector<4x64xf32>
    %608 = tpu.matmul %607, %606, %cst_787 {dimension_numbers = #tpu.dot_dimension_numbers<[1], [0], [0], [1], [0, 0, 1, 1], [], []>} : vector<4x32xf32>, vector<32x64xf32>, vector<4x64xf32> -> vector<4x64xf32>
    %609 = arith.addf %592, %608 : vector<4x64xf32>
    %c0_788 = arith.constant 0 : index
    %c8_789 = arith.constant 8 : index
    %c4_790 = arith.constant 4 : index
    %c0_791 = arith.constant 0 : index
    %610 = vector.load %arg11[%c0_788, %c8_789, %c4_790, %c0_791] : memref<1x11x11x32xf32, #tpu.memory_space<vmem>>, vector<1x1x1x32xf32>
    %611 = vector.shape_cast %610 : vector<1x1x1x32xf32> to vector<1x32xf32>
    %c0_792 = arith.constant 0 : index
    %c0_793 = arith.constant 0 : index
    %612 = vector.load %arg12[%c0_792, %c0_793] : memref<4x32xf32, #tpu.memory_space<vmem>>, vector<1x32xf32>
    tpu.vector_store %arg12[%c0_792, %c0_793], %611 {strides = array<i32>} : memref<4x32xf32, #tpu.memory_space<vmem>>, vector<1x32xf32>,
    %c0_794 = arith.constant 0 : index
    %c8_795 = arith.constant 8 : index
    %c6_796 = arith.constant 6 : index
    %c0_797 = arith.constant 0 : index
    %613 = vector.load %arg11[%c0_794, %c8_795, %c6_796, %c0_797] : memref<1x11x11x32xf32, #tpu.memory_space<vmem>>, vector<1x1x1x32xf32>
    %614 = vector.shape_cast %613 : vector<1x1x1x32xf32> to vector<1x32xf32>
    %c1_798 = arith.constant 1 : index
    %c0_799 = arith.constant 0 : index
    %615 = vector.load %arg12[%c1_798, %c0_799] : memref<4x32xf32, #tpu.memory_space<vmem>>, vector<1x32xf32>
    tpu.vector_store %arg12[%c1_798, %c0_799], %614 {strides = array<i32>} : memref<4x32xf32, #tpu.memory_space<vmem>>, vector<1x32xf32>,
    %c0_800 = arith.constant 0 : index
    %c10_801 = arith.constant 10 : index
    %c4_802 = arith.constant 4 : index
    %c0_803 = arith.constant 0 : index
    %616 = vector.load %arg11[%c0_800, %c10_801, %c4_802, %c0_803] : memref<1x11x11x32xf32, #tpu.memory_space<vmem>>, vector<1x1x1x32xf32>
    %617 = vector.shape_cast %616 : vector<1x1x1x32xf32> to vector<1x32xf32>
    %c2_804 = arith.constant 2 : index
    %c0_805 = arith.constant 0 : index
    %618 = vector.load %arg12[%c2_804, %c0_805] : memref<4x32xf32, #tpu.memory_space<vmem>>, vector<1x32xf32>
    tpu.vector_store %arg12[%c2_804, %c0_805], %617 {strides = array<i32>} : memref<4x32xf32, #tpu.memory_space<vmem>>, vector<1x32xf32>,
    %c0_806 = arith.constant 0 : index
    %c10_807 = arith.constant 10 : index
    %c6_808 = arith.constant 6 : index
    %c0_809 = arith.constant 0 : index
    %619 = vector.load %arg11[%c0_806, %c10_807, %c6_808, %c0_809] : memref<1x11x11x32xf32, #tpu.memory_space<vmem>>, vector<1x1x1x32xf32>
    %620 = vector.shape_cast %619 : vector<1x1x1x32xf32> to vector<1x32xf32>
    %c3_810 = arith.constant 3 : index
    %c0_811 = arith.constant 0 : index
    %621 = vector.load %arg12[%c3_810, %c0_811] : memref<4x32xf32, #tpu.memory_space<vmem>>, vector<1x32xf32>
    tpu.vector_store %arg12[%c3_810, %c0_811], %620 {strides = array<i32>} : memref<4x32xf32, #tpu.memory_space<vmem>>, vector<1x32xf32>,
    %c22 = arith.constant 22 : index
    %c0_812 = arith.constant 0 : index
    %c0_813 = arith.constant 0 : index
    %622 = vector.load %arg4[%c22, %c0_812, %c0_813] : memref<25x32x64xf32, #tpu.memory_space<vmem>>, vector<1x32x64xf32>
    %623 = vector.shape_cast %622 : vector<1x32x64xf32> to vector<32x64xf32>
    %c0_814 = arith.constant 0 : index
    %c0_815 = arith.constant 0 : index
    %624 = vector.load %arg12[%c0_814, %c0_815] : memref<4x32xf32, #tpu.memory_space<vmem>>, vector<4x32xf32>
    %cst_816 = arith.constant dense<0.000000e+00> : vector<4x64xf32>
    %625 = tpu.matmul %624, %623, %cst_816 {dimension_numbers = #tpu.dot_dimension_numbers<[1], [0], [0], [1], [0, 0, 1, 1], [], []>} : vector<4x32xf32>, vector<32x64xf32>, vector<4x64xf32> -> vector<4x64xf32>
    %626 = arith.addf %609, %625 : vector<4x64xf32>
    %c0_817 = arith.constant 0 : index
    %c8_818 = arith.constant 8 : index
    %c6_819 = arith.constant 6 : index
    %c0_820 = arith.constant 0 : index
    %627 = vector.load %arg11[%c0_817, %c8_818, %c6_819, %c0_820] : memref<1x11x11x32xf32, #tpu.memory_space<vmem>>, vector<1x1x1x32xf32>
    %628 = vector.shape_cast %627 : vector<1x1x1x32xf32> to vector<1x32xf32>
    %c0_821 = arith.constant 0 : index
    %c0_822 = arith.constant 0 : index
    %629 = vector.load %arg12[%c0_821, %c0_822] : memref<4x32xf32, #tpu.memory_space<vmem>>, vector<1x32xf32>
    tpu.vector_store %arg12[%c0_821, %c0_822], %628 {strides = array<i32>} : memref<4x32xf32, #tpu.memory_space<vmem>>, vector<1x32xf32>,
    %c0_823 = arith.constant 0 : index
    %c8_824 = arith.constant 8 : index
    %c8_825 = arith.constant 8 : index
    %c0_826 = arith.constant 0 : index
    %630 = vector.load %arg11[%c0_823, %c8_824, %c8_825, %c0_826] : memref<1x11x11x32xf32, #tpu.memory_space<vmem>>, vector<1x1x1x32xf32>
    %631 = vector.shape_cast %630 : vector<1x1x1x32xf32> to vector<1x32xf32>
    %c1_827 = arith.constant 1 : index
    %c0_828 = arith.constant 0 : index
    %632 = vector.load %arg12[%c1_827, %c0_828] : memref<4x32xf32, #tpu.memory_space<vmem>>, vector<1x32xf32>
    tpu.vector_store %arg12[%c1_827, %c0_828], %631 {strides = array<i32>} : memref<4x32xf32, #tpu.memory_space<vmem>>, vector<1x32xf32>,
    %c0_829 = arith.constant 0 : index
    %c10_830 = arith.constant 10 : index
    %c6_831 = arith.constant 6 : index
    %c0_832 = arith.constant 0 : index
    %633 = vector.load %arg11[%c0_829, %c10_830, %c6_831, %c0_832] : memref<1x11x11x32xf32, #tpu.memory_space<vmem>>, vector<1x1x1x32xf32>
    %634 = vector.shape_cast %633 : vector<1x1x1x32xf32> to vector<1x32xf32>
    %c2_833 = arith.constant 2 : index
    %c0_834 = arith.constant 0 : index
    %635 = vector.load %arg12[%c2_833, %c0_834] : memref<4x32xf32, #tpu.memory_space<vmem>>, vector<1x32xf32>
    tpu.vector_store %arg12[%c2_833, %c0_834], %634 {strides = array<i32>} : memref<4x32xf32, #tpu.memory_space<vmem>>, vector<1x32xf32>,
    %c0_835 = arith.constant 0 : index
    %c10_836 = arith.constant 10 : index
    %c8_837 = arith.constant 8 : index
    %c0_838 = arith.constant 0 : index
    %636 = vector.load %arg11[%c0_835, %c10_836, %c8_837, %c0_838] : memref<1x11x11x32xf32, #tpu.memory_space<vmem>>, vector<1x1x1x32xf32>
    %637 = vector.shape_cast %636 : vector<1x1x1x32xf32> to vector<1x32xf32>
    %c3_839 = arith.constant 3 : index
    %c0_840 = arith.constant 0 : index
    %638 = vector.load %arg12[%c3_839, %c0_840] : memref<4x32xf32, #tpu.memory_space<vmem>>, vector<1x32xf32>
    tpu.vector_store %arg12[%c3_839, %c0_840], %637 {strides = array<i32>} : memref<4x32xf32, #tpu.memory_space<vmem>>, vector<1x32xf32>,
    %c23 = arith.constant 23 : index
    %c0_841 = arith.constant 0 : index
    %c0_842 = arith.constant 0 : index
    %639 = vector.load %arg4[%c23, %c0_841, %c0_842] : memref<25x32x64xf32, #tpu.memory_space<vmem>>, vector<1x32x64xf32>
    %640 = vector.shape_cast %639 : vector<1x32x64xf32> to vector<32x64xf32>
    %c0_843 = arith.constant 0 : index
    %c0_844 = arith.constant 0 : index
    %641 = vector.load %arg12[%c0_843, %c0_844] : memref<4x32xf32, #tpu.memory_space<vmem>>, vector<4x32xf32>
    %cst_845 = arith.constant dense<0.000000e+00> : vector<4x64xf32>
    %642 = tpu.matmul %641, %640, %cst_845 {dimension_numbers = #tpu.dot_dimension_numbers<[1], [0], [0], [1], [0, 0, 1, 1], [], []>} : vector<4x32xf32>, vector<32x64xf32>, vector<4x64xf32> -> vector<4x64xf32>
    %643 = arith.addf %626, %642 : vector<4x64xf32>
    %c0_846 = arith.constant 0 : index
    %c8_847 = arith.constant 8 : index
    %c8_848 = arith.constant 8 : index
    %c0_849 = arith.constant 0 : index
    %644 = vector.load %arg11[%c0_846, %c8_847, %c8_848, %c0_849] : memref<1x11x11x32xf32, #tpu.memory_space<vmem>>, vector<1x1x1x32xf32>
    %645 = vector.shape_cast %644 : vector<1x1x1x32xf32> to vector<1x32xf32>
    %c0_850 = arith.constant 0 : index
    %c0_851 = arith.constant 0 : index
    %646 = vector.load %arg12[%c0_850, %c0_851] : memref<4x32xf32, #tpu.memory_space<vmem>>, vector<1x32xf32>
    tpu.vector_store %arg12[%c0_850, %c0_851], %645 {strides = array<i32>} : memref<4x32xf32, #tpu.memory_space<vmem>>, vector<1x32xf32>,
    %c0_852 = arith.constant 0 : index
    %c8_853 = arith.constant 8 : index
    %c10_854 = arith.constant 10 : index
    %c0_855 = arith.constant 0 : index
    %647 = vector.load %arg11[%c0_852, %c8_853, %c10_854, %c0_855] : memref<1x11x11x32xf32, #tpu.memory_space<vmem>>, vector<1x1x1x32xf32>
    %648 = vector.shape_cast %647 : vector<1x1x1x32xf32> to vector<1x32xf32>
    %c1_856 = arith.constant 1 : index
    %c0_857 = arith.constant 0 : index
    %649 = vector.load %arg12[%c1_856, %c0_857] : memref<4x32xf32, #tpu.memory_space<vmem>>, vector<1x32xf32>
    tpu.vector_store %arg12[%c1_856, %c0_857], %648 {strides = array<i32>} : memref<4x32xf32, #tpu.memory_space<vmem>>, vector<1x32xf32>,
    %c0_858 = arith.constant 0 : index
    %c10_859 = arith.constant 10 : index
    %c8_860 = arith.constant 8 : index
    %c0_861 = arith.constant 0 : index
    %650 = vector.load %arg11[%c0_858, %c10_859, %c8_860, %c0_861] : memref<1x11x11x32xf32, #tpu.memory_space<vmem>>, vector<1x1x1x32xf32>
    %651 = vector.shape_cast %650 : vector<1x1x1x32xf32> to vector<1x32xf32>
    %c2_862 = arith.constant 2 : index
    %c0_863 = arith.constant 0 : index
    %652 = vector.load %arg12[%c2_862, %c0_863] : memref<4x32xf32, #tpu.memory_space<vmem>>, vector<1x32xf32>
    tpu.vector_store %arg12[%c2_862, %c0_863], %651 {strides = array<i32>} : memref<4x32xf32, #tpu.memory_space<vmem>>, vector<1x32xf32>,
    %c0_864 = arith.constant 0 : index
    %c10_865 = arith.constant 10 : index
    %c10_866 = arith.constant 10 : index
    %c0_867 = arith.constant 0 : index
    %653 = vector.load %arg11[%c0_864, %c10_865, %c10_866, %c0_867] : memref<1x11x11x32xf32, #tpu.memory_space<vmem>>, vector<1x1x1x32xf32>
    %654 = vector.shape_cast %653 : vector<1x1x1x32xf32> to vector<1x32xf32>
    %c3_868 = arith.constant 3 : index
    %c0_869 = arith.constant 0 : index
    %655 = vector.load %arg12[%c3_868, %c0_869] : memref<4x32xf32, #tpu.memory_space<vmem>>, vector<1x32xf32>
    tpu.vector_store %arg12[%c3_868, %c0_869], %654 {strides = array<i32>} : memref<4x32xf32, #tpu.memory_space<vmem>>, vector<1x32xf32>,
    %c24 = arith.constant 24 : index
    %c0_870 = arith.constant 0 : index
    %c0_871 = arith.constant 0 : index
    %656 = vector.load %arg4[%c24, %c0_870, %c0_871] : memref<25x32x64xf32, #tpu.memory_space<vmem>>, vector<1x32x64xf32>
    %657 = vector.shape_cast %656 : vector<1x32x64xf32> to vector<32x64xf32>
    %c0_872 = arith.constant 0 : index
    %c0_873 = arith.constant 0 : index
    %658 = vector.load %arg12[%c0_872, %c0_873] : memref<4x32xf32, #tpu.memory_space<vmem>>, vector<4x32xf32>
    %cst_874 = arith.constant dense<0.000000e+00> : vector<4x64xf32>
    %659 = tpu.matmul %658, %657, %cst_874 {dimension_numbers = #tpu.dot_dimension_numbers<[1], [0], [0], [1], [0, 0, 1, 1], [], []>} : vector<4x32xf32>, vector<32x64xf32>, vector<4x64xf32> -> vector<4x64xf32>
    %660 = arith.addf %643, %659 : vector<4x64xf32>
    %661 = vector.extract_strided_slice %660 {offsets = [0, 0], sizes = [1, 64], strides = [1, 1]} : vector<4x64xf32> to vector<1x64xf32>
    %662 = vector.extract_strided_slice %660 {offsets = [1, 0], sizes = [1, 64], strides = [1, 1]} : vector<4x64xf32> to vector<1x64xf32>
    %663 = arith.maximumf %661, %662 : vector<1x64xf32>
    %664 = vector.extract_strided_slice %660 {offsets = [2, 0], sizes = [1, 64], strides = [1, 1]} : vector<4x64xf32> to vector<1x64xf32>
    %665 = vector.extract_strided_slice %660 {offsets = [3, 0], sizes = [1, 64], strides = [1, 1]} : vector<4x64xf32> to vector<1x64xf32>
    %666 = arith.maximumf %664, %665 : vector<1x64xf32>
    %667 = arith.maximumf %663, %666 : vector<1x64xf32>
    %c0_875 = arith.constant 0 : index
    %c0_876 = arith.constant 0 : index
    %668 = vector.load %arg5[%c0_875, %c0_876] : memref<1x64xf32, #tpu.memory_space<vmem>>, vector<1x64xf32>
    %669 = arith.addf %667, %668 : vector<1x64xf32>
    %c0_877 = arith.constant 0 : index
    %c0_878 = arith.constant 0 : index
    %670 = vector.load %arg6[%c0_877, %c0_878] : memref<64x32xf32, #tpu.memory_space<vmem>>, vector<64x32xf32>
    %cst_879 = arith.constant dense<0.000000e+00> : vector<1x32xf32>
    %671 = tpu.matmul %669, %670, %cst_879 {dimension_numbers = #tpu.dot_dimension_numbers<[1], [0], [0], [1], [0, 0, 1, 1], [], []>} : vector<1x64xf32>, vector<64x32xf32>, vector<1x32xf32> -> vector<1x32xf32>
    %c0_880 = arith.constant 0 : index
    %c0_881 = arith.constant 0 : index
    %672 = vector.load %arg7[%c0_880, %c0_881] : memref<1x32xf32, #tpu.memory_space<vmem>>, vector<1x32xf32>
    %673 = arith.addf %671, %672 : vector<1x32xf32>
    %cst_882 = arith.constant 0.000000e+00 : f32
    %674 = vector.broadcast %cst_882 : f32 to vector<1x32xf32>
    %675 = arith.maximumf %673, %674 : vector<1x32xf32>
    %c0_883 = arith.constant 0 : index
    %c0_884 = arith.constant 0 : index
    %676 = vector.load %arg8[%c0_883, %c0_884] : memref<32x1xf32, #tpu.memory_space<vmem>>, vector<32x1xf32>
    %cst_885 = arith.constant dense<0.000000e+00> : vector<1x1xf32>
    %677 = tpu.matmul %675, %676, %cst_885 {dimension_numbers = #tpu.dot_dimension_numbers<[1], [0], [0], [1], [0, 0, 1, 1], [], []>} : vector<1x32xf32>, vector<32x1xf32>, vector<1x1xf32> -> vector<1x1xf32>
    %c0_886 = arith.constant 0 : index
    %c0_887 = arith.constant 0 : index
    %678 = vector.load %arg9[%c0_886, %c0_887] : memref<1x1xf32, #tpu.memory_space<vmem>>, vector<1x1xf32>
    %679 = arith.addf %677, %678 : vector<1x1xf32>
    %680 = arith.negf %679 : vector<1x1xf32>
    %681 = math.exp %680 : vector<1x1xf32>
    %cst_888 = arith.constant 1.000000e+00 : f32
    %682 = vector.broadcast %cst_888 : f32 to vector<1x1xf32>
    %683 = arith.addf %682, %681 : vector<1x1xf32>
    %684 = arith.divf %682, %683 : vector<1x1xf32>
    %c0_889 = arith.constant 0 : index
    %c0_890 = arith.constant 0 : index
    %c0_891 = arith.constant 0 : index
    %685 = vector.load %arg10[%c0_889, %c0_890, %c0_891] : memref<1x1x1xf32, #tpu.memory_space<vmem>>, vector<1x1x1xf32>
    %686 = vector.shape_cast %685 : vector<1x1x1xf32> to vector<1x1xf32>
    %687 = vector.shape_cast %684 : vector<1x1xf32> to vector<1x1x1xf32>
    tpu.vector_store %arg10[%c0_889, %c0_890, %c0_891], %687 {strides = array<i32>} : memref<1x1x1xf32, #tpu.memory_space<vmem>>, vector<1x1x1xf32>,
    return
  }
  func.func @transform_0(%arg0: i32) -> (i32, i32, i32, i32) {
    %c0_i32 = arith.constant 0 : i32
    %c0_i32_0 = arith.constant 0 : i32
    %c0_i32_1 = arith.constant 0 : i32
    %c0_i32_2 = arith.constant 0 : i32
    return %arg0, %c0_i32, %c0_i32_0, %c0_i32_1 : i32, i32, i32, i32
  }
  func.func @transform_1(%arg0: i32) -> (i32, i32, i32, i32) {
    %c0_i32 = arith.constant 0 : i32
    %c0_i32_0 = arith.constant 0 : i32
    %c0_i32_1 = arith.constant 0 : i32
    %c0_i32_2 = arith.constant 0 : i32
    %c0_i32_3 = arith.constant 0 : i32
    return %c0_i32, %c0_i32_0, %c0_i32_1, %c0_i32_2 : i32, i32, i32, i32
  }
  func.func @transform_2(%arg0: i32) -> (i32, i32) {
    %c0_i32 = arith.constant 0 : i32
    %c0_i32_0 = arith.constant 0 : i32
    %c0_i32_1 = arith.constant 0 : i32
    return %c0_i32, %c0_i32_0 : i32, i32
  }
  func.func @transform_3(%arg0: i32) -> (i32, i32, i32) {
    %c0_i32 = arith.constant 0 : i32
    %c0_i32_0 = arith.constant 0 : i32
    %c0_i32_1 = arith.constant 0 : i32
    %c0_i32_2 = arith.constant 0 : i32
    return %c0_i32, %c0_i32_0, %c0_i32_1 : i32, i32, i32
  }
  func.func @transform_4(%arg0: i32) -> (i32, i32) {
    %c0_i32 = arith.constant 0 : i32
    %c0_i32_0 = arith.constant 0 : i32
    %c0_i32_1 = arith.constant 0 : i32
    return %c0_i32, %c0_i32_0 : i32, i32
  }
  func.func @transform_5(%arg0: i32) -> (i32, i32) {
    %c0_i32 = arith.constant 0 : i32
    %c0_i32_0 = arith.constant 0 : i32
    %c0_i32_1 = arith.constant 0 : i32
    return %c0_i32, %c0_i32_0 : i32, i32
  }
  func.func @transform_6(%arg0: i32) -> (i32, i32) {
    %c0_i32 = arith.constant 0 : i32
    %c0_i32_0 = arith.constant 0 : i32
    %c0_i32_1 = arith.constant 0 : i32
    return %c0_i32, %c0_i32_0 : i32, i32
  }
  func.func @transform_7(%arg0: i32) -> (i32, i32) {
    %c0_i32 = arith.constant 0 : i32
    %c0_i32_0 = arith.constant 0 : i32
    %c0_i32_1 = arith.constant 0 : i32
    return %c0_i32, %c0_i32_0 : i32, i32
  }
  func.func @transform_8(%arg0: i32) -> (i32, i32) {
    %c0_i32 = arith.constant 0 : i32
    %c0_i32_0 = arith.constant 0 : i32
    %c0_i32_1 = arith.constant 0 : i32
    return %c0_i32, %c0_i32_0 : i32, i32
  }
  func.func @transform_9(%arg0: i32) -> (i32, i32, i32) {
    %c0_i32 = arith.constant 0 : i32
    %c0_i32_0 = arith.constant 0 : i32
    %c0_i32_1 = arith.constant 0 : i32
    return %arg0, %c0_i32, %c0_i32_0 : i32, i32, i32
  }
}

</mosaic_0001>

<llo_original>
// kernel: net_forward.1
$region0: #{net_forward.1}
  #allocation0 [shape = 'u32[]', space=smem, size = 0x4, offset = 0x4, fixed_abs, tag = 'smem constant byte address 0x4 - core index']
  #allocation1 [shape = 'u32[144,128]{1,0:T(1,128)}', space=vmem, size = 0x12000, scoped, tag = 'internal scratch']
  #allocation2 [shape = 'f32[1,11,11,32]{3,2,1,0:T(8,128)}', space=vmem, size = 0x16000, scoped, tag = 'scratch operand']
  #allocation3 [shape = 'f32[4,32]{1,0:T(4,128)}', space=vmem, size = 0x800, scoped, tag = 'scratch operand']
  #allocation4 [shape = 'f32[1,1]{1,0:T(1,128)S(1)}', space=vmem, size = 0x200, scoped, tag = 'scoped memory for net_forward.1']
  %s0 = inlined_call_operand.vmem [shape: f32[2,16,16,3], index: 0, kind: input, shape index: {}]
  %s1 = inlined_call_operand.vmem [shape: f32[3,3,3,32], index: 1, kind: input, shape index: {}]
  %s2 = inlined_call_operand.vmem [shape: f32[1,32], index: 2, kind: input, shape index: {}]
  %s3 = inlined_call_operand.hbm [shape: f32[25,32,64], index: 3, kind: input, shape index: {}]
  %s4 = inlined_call_operand.vmem [shape: f32[1,64], index: 4, kind: input, shape index: {}]
  %s5 = inlined_call_operand.vmem [shape: f32[64,32], index: 5, kind: input, shape index: {}]
  %s6 = inlined_call_operand.vmem [shape: f32[1,32], index: 6, kind: input, shape index: {}]
  %s7 = inlined_call_operand.vmem [shape: f32[32,1], index: 7, kind: input, shape index: {}]
  %s8 = inlined_call_operand.<no memory space> [shape: f32[1,1], index: 8, kind: input, shape index: {}]
  %s9 = inlined_call_operand.vmem [shape: f32[2,1,1], index: 9, kind: output, shape index: {}]
  %s10 = sld [smem:[#allocation0]]
  $region73: #{net_forward.1} parent=0
    _
  %s12 = ssub.s32 1, %s10
  %s13 = scalar_select 0, %s12, %s10
  %v14 = vstv %s8
  %15 = vst [vmem:[#allocation4] sm:$0x1] %v14
  $region1: #{net_forward.1} parent=0
    #allocation5 [shape = 'u8[409600]{0}', space=vmem, size = 0x64000, scoped, tag = 'input window, operand 3, single buffered']
    #allocation6 [shape = 's32[2]{0}', space=sflag, size = 0x8, scoped, tag = 'scoped memory for net_forward.1']
    %16 = vsyncpa [#allocation6], 0
    loop: start=0, step=1, limit=4
    $region2: #{net_forward.1} parent=1 // loop_pre_header
      _
    $region3: #{net_forward.1} parent=1 // loop_header
      %s18 = sphi 0, %s22
      %p19 = scmp.ge.s32.totalorder %s18, 4
      %s28 = sphi 0, %s30
      %s31 = sphi 0, %s28
      %s32 = sphi 0, %s31
      %s48 = sphi 0, %s32
      %s52 = sphi 0, %s52
      %s54 = sphi 0, %s52
      %s55 = sphi 0, %s54
      %s69 = sphi 0, %s55
      %s73 = sphi 0, %s73
      %s75 = sphi 0, %s73
      %s76 = sphi 0, %s75
      %s90 = sphi 0, %s76
      %s94 = sphi 0, %s94
      %s96 = sphi 0, %s94
      %s97 = sphi 0, %s96
      %s111 = sphi 0, %s97
      %s115 = sphi 0, %s115
      %s117 = sphi 0, %s115
      %s118 = sphi 0, %s117
      %s132 = sphi 0, %s118
      %s136 = sphi 0, %s136
      %s138 = sphi 0, %s136
      %s139 = sphi 0, %s138
      %s153 = sphi 0, %s139
      %s157 = sphi 0, %s157
      %s159 = sphi 0, %s157
      %s160 = sphi 0, %s159
      %s174 = sphi 0, %s160
      %s178 = sphi 0, %s178
      %s180 = sphi 0, %s178
      %s181 = sphi 0, %s180
      %s195 = sphi 0, %s181
      %s199 = sphi 0, %s199
      %s201 = sphi 0, %s199
      %s202 = sphi 0, %s201
      %s216 = sphi 0, %s202
      %s222 = sphi 0, %s224
      %s225 = sphi 0, %s222
      %s226 = sphi 0, %s225
      %s242 = sphi 0, %s226
    $region4: #{net_forward.1} parent=1 // loop_header_branch
      %21 = sbr.rel (%p19) target = $region8
    $region5: #{net_forward.1} parent=1 // loop_body
      %s23 = ssub.s32 %s18, 1
      %s24 = ssub.s32 %s18, 2
      %s25 = sadd.s32 %s18, 1
      %s26 = ssub.s32 %s18, %s25
      %p27 = scmp.eq.s32.totalorder %s26, 0
      %s29 = sadd.s32 %s28, 1
      %s30 = scalar_select %p27, %s28, %s29
      %p33 = pneg %p27
      %p34 = scmp.eq.s32.totalorder %s18, 1
      %p35 = por %p33, %p34
      %p36 = scmp.ne.s32.totalorder %s28, %s31
      %p37 = scmp.eq.s32.totalorder %s18, 0
      %p38 = por %p36, %p37
      %p39 = scmp.ne.s32.totalorder %s28, %s31
      %p40 = scmp.eq.s32.totalorder %s23, 1
      %p41 = por %p39, %p40
      %p42 = scmp.ne.s32.totalorder %s31, %s32
      %p43 = scmp.eq.s32.totalorder %s23, 0
      %p44 = por %p42, %p43
      %p45 = scmp.ne.s32.totalorder %s31, %s32
      %p46 = scmp.eq.s32.totalorder %s24, 1
      %p47 = por %p45, %p46
      %p49 = scmp.ne.s32.totalorder %s32, %s48
      %p50 = scmp.eq.s32.totalorder %s24, 0
      %p51 = por %p49, %p50
      %s53 = sadd.s32 %s52, 1
      %p56 = scmp.eq.s32.totalorder %s18, 1
      %p57 = scmp.ne.s32.totalorder %s52, %s54
      %p58 = scmp.eq.s32.totalorder %s18, 0
      %p59 = por %p57, %p58
      %p60 = scmp.ne.s32.totalorder %s52, %s54
      %p61 = scmp.eq.s32.totalorder %s23, 1
      %p62 = por %p60, %p61
      %p63 = scmp.ne.s32.totalorder %s54, %s55
      %p64 = scmp.eq.s32.totalorder %s23, 0
      %p65 = por %p63, %p64
      %p66 = scmp.ne.s32.totalorder %s54, %s55
      %p67 = scmp.eq.s32.totalorder %s24, 1
      %p68 = por %p66, %p67
      %p70 = scmp.ne.s32.totalorder %s55, %s69
      %p71 = scmp.eq.s32.totalorder %s24, 0
      %p72 = por %p70, %p71
      %s74 = sadd.s32 %s73, 1
      %p77 = scmp.eq.s32.totalorder %s18, 1
      %p78 = scmp.ne.s32.totalorder %s73, %s75
      %p79 = scmp.eq.s32.totalorder %s18, 0
      %p80 = por %p78, %p79
      %p81 = scmp.ne.s32.totalorder %s73, %s75
      %p82 = scmp.eq.s32.totalorder %s23, 1
      %p83 = por %p81, %p82
      %p84 = scmp.ne.s32.totalorder %s75, %s76
      %p85 = scmp.eq.s32.totalorder %s23, 0
      %p86 = por %p84, %p85
      %p87 = scmp.ne.s32.totalorder %s75, %s76
      %p88 = scmp.eq.s32.totalorder %s24, 1
      %p89 = por %p87, %p88
      %p91 = scmp.ne.s32.totalorder %s76, %s90
      %p92 = scmp.eq.s32.totalorder %s24, 0
      %p93 = por %p91, %p92
      %s95 = sadd.s32 %s94, 1
      %p98 = scmp.eq.s32.totalorder %s18, 1
      %p99 = scmp.ne.s32.totalorder %s94, %s96
      %p100 = scmp.eq.s32.totalorder %s18, 0
      %p101 = por %p99, %p100
      %p102 = scmp.ne.s32.totalorder %s94, %s96
      %p103 = scmp.eq.s32.totalorder %s23, 1
      %p104 = por %p102, %p103
      %p105 = scmp.ne.s32.totalorder %s96, %s97
      %p106 = scmp.eq.s32.totalorder %s23, 0
      %p107 = por %p105, %p106
      %p108 = scmp.ne.s32.totalorder %s96, %s97
      %p109 = scmp.eq.s32.totalorder %s24, 1
      %p110 = por %p108, %p109
      %p112 = scmp.ne.s32.totalorder %s97, %s111
      %p113 = scmp.eq.s32.totalorder %s24, 0
      %p114 = por %p112, %p113
      %s116 = sadd.s32 %s115, 1
      %p119 = scmp.eq.s32.totalorder %s18, 1
      %p120 = scmp.ne.s32.totalorder %s115, %s117
      %p121 = scmp.eq.s32.totalorder %s18, 0
      %p122 = por %p120, %p121
      %p123 = scmp.ne.s32.totalorder %s115, %s117
      %p124 = scmp.eq.s32.totalorder %s23, 1
      %p125 = por %p123, %p124
      %p126 = scmp.ne.s32.totalorder %s117, %s118
      %p127 = scmp.eq.s32.totalorder %s23, 0
      %p128 = por %p126, %p127
      %p129 = scmp.ne.s32.totalorder %s117, %s118
      %p130 = scmp.eq.s32.totalorder %s24, 1
      %p131 = por %p129, %p130
      %p133 = scmp.ne.s32.totalorder %s118, %s132
      %p134 = scmp.eq.s32.totalorder %s24, 0
      %p135 = por %p133, %p134
      %s137 = sadd.s32 %s136, 1
      %p140 = scmp.eq.s32.totalorder %s18, 1
      %p141 = scmp.ne.s32.totalorder %s136, %s138
      %p142 = scmp.eq.s32.totalorder %s18, 0
      %p143 = por %p141, %p142
      %p144 = scmp.ne.s32.totalorder %s136, %s138
      %p145 = scmp.eq.s32.totalorder %s23, 1
      %p146 = por %p144, %p145
      %p147 = scmp.ne.s32.totalorder %s138, %s139
      %p148 = scmp.eq.s32.totalorder %s23, 0
      %p149 = por %p147, %p148
      %p150 = scmp.ne.s32.totalorder %s138, %s139
      %p151 = scmp.eq.s32.totalorder %s24, 1
      %p152 = por %p150, %p151
      %p154 = scmp.ne.s32.totalorder %s139, %s153
      %p155 = scmp.eq.s32.totalorder %s24, 0
      %p156 = por %p154, %p155
      %s158 = sadd.s32 %s157, 1
      %p161 = scmp.eq.s32.totalorder %s18, 1
      %p162 = scmp.ne.s32.totalorder %s157, %s159
      %p163 = scmp.eq.s32.totalorder %s18, 0
      %p164 = por %p162, %p163
      %p165 = scmp.ne.s32.totalorder %s157, %s159
      %p166 = scmp.eq.s32.totalorder %s23, 1
      %p167 = por %p165, %p166
      %p168 = scmp.ne.s32.totalorder %s159, %s160
      %p169 = scmp.eq.s32.totalorder %s23, 0
      %p170 = por %p168, %p169
      %p171 = scmp.ne.s32.totalorder %s159, %s160
      %p172 = scmp.eq.s32.totalorder %s24, 1
      %p173 = por %p171, %p172
      %p175 = scmp.ne.s32.totalorder %s160, %s174
      %p176 = scmp.eq.s32.totalorder %s24, 0
      %p177 = por %p175, %p176
      %s179 = sadd.s32 %s178, 1
      %p182 = scmp.eq.s32.totalorder %s18, 1
      %p183 = scmp.ne.s32.totalorder %s178, %s180
      %p184 = scmp.eq.s32.totalorder %s18, 0
      %p185 = por %p183, %p184
      %p186 = scmp.ne.s32.totalorder %s178, %s180
      %p187 = scmp.eq.s32.totalorder %s23, 1
      %p188 = por %p186, %p187
      %p189 = scmp.ne.s32.totalorder %s180, %s181
      %p190 = scmp.eq.s32.totalorder %s23, 0
      %p191 = por %p189, %p190
      %p192 = scmp.ne.s32.totalorder %s180, %s181
      %p193 = scmp.eq.s32.totalorder %s24, 1
      %p194 = por %p192, %p193
      %p196 = scmp.ne.s32.totalorder %s181, %s195
      %p197 = scmp.eq.s32.totalorder %s24, 0
      %p198 = por %p196, %p197
      %s200 = sadd.s32 %s199, 1
      %p203 = scmp.eq.s32.totalorder %s18, 1
      %p204 = scmp.ne.s32.totalorder %s199, %s201
      %p205 = scmp.eq.s32.totalorder %s18, 0
      %p206 = por %p204, %p205
      %p207 = scmp.ne.s32.totalorder %s199, %s201
      %p208 = scmp.eq.s32.totalorder %s23, 1
      %p209 = por %p207, %p208
      %p210 = scmp.ne.s32.totalorder %s201, %s202
      %p211 = scmp.eq.s32.totalorder %s23, 0
      %p212 = por %p210, %p211
      %p213 = scmp.ne.s32.totalorder %s201, %s202
      %p214 = scmp.eq.s32.totalorder %s24, 1
      %p215 = por %p213, %p214
      %p217 = scmp.ne.s32.totalorder %s202, %s216
      %p218 = scmp.eq.s32.totalorder %s24, 0
      %p219 = por %p217, %p218
      %s220 = ssub.s32 %s18, %s25
      %p221 = scmp.eq.s32.totalorder %s220, 0
      %s223 = sadd.s32 %s222, 1
      %s224 = scalar_select %p221, %s222, %s223
      %p227 = pneg %p221
      %p228 = scmp.eq.s32.totalorder %s18, 1
      %p229 = por %p227, %p228
      %p230 = scmp.ne.s32.totalorder %s222, %s225
      %p231 = scmp.eq.s32.totalorder %s18, 0
      %p232 = por %p230, %p231
      %p233 = scmp.ne.s32.totalorder %s222, %s225
      %p234 = scmp.eq.s32.totalorder %s23, 1
      %p235 = por %p233, %p234
      %p236 = scmp.ne.s32.totalorder %s225, %s226
      %p237 = scmp.eq.s32.totalorder %s23, 0
      %p238 = por %p236, %p237
      %p239 = scmp.ne.s32.totalorder %s225, %s226
      %p240 = scmp.eq.s32.totalorder %s24, 1
      %p241 = por %p239, %p240
      %p243 = scmp.ne.s32.totalorder %s226, %s242
      %p244 = scmp.eq.s32.totalorder %s24, 0
      %p245 = por %p243, %p244
      %p246 = scmp.le.s32.totalorder 1, %s18
      %p247 = scmp.lt.s32.totalorder %s18, 3
      %p248 = pnand %p246, %p247
      %p249 = pneg %p248
      // Predicated region
      $region9: #{net_forward.1} parent=5 // pred_check
        _
      $region10: #{net_forward.1} parent=5 // pred_check_branch
        %251 = sbr.rel (%p248) target = $region12
      $region11: #{net_forward.1} parent=5 // pred_region
        %s252 = ssub.s32 %s18, 1
        // Predicated region
        $region13: #{net_forward.1} parent=11 // pred_check
          %p253 = pneg %p65
        $region14: #{net_forward.1} parent=11 // pred_check_branch
          %255 = sbr.rel (%p253) target = $region16
        $region15: #{net_forward.1} parent=11 // pred_region
          _
        $region16: #{net_forward.1} parent=11 // pred_fallthru
          _
        // Predicated region
        $region17: #{net_forward.1} parent=11 // pred_check
          %p256 = pneg %p86
        $region18: #{net_forward.1} parent=11 // pred_check_branch
          %258 = sbr.rel (%p256) target = $region20
        $region19: #{net_forward.1} parent=11 // pred_region
          _
        $region20: #{net_forward.1} parent=11 // pred_fallthru
          _
        // Predicated region
        $region21: #{net_forward.1} parent=11 // pred_check
          %p259 = pneg %p107
        $region22: #{net_forward.1} parent=11 // pred_check_branch
          %261 = sbr.rel (%p259) target = $region24
        $region23: #{net_forward.1} parent=11 // pred_region
          %s263 = ssub.s32 12800, 12800
          %264 = vsyncadd [#allocation6], %s263
          %s265 = sshll.u32 [#allocation5], 4
          %s266 = int_to_ptr.vmem [resolvable:$true] %s265
          %271 = dma.hbm_to_vmem [thread:$0]  %s3, 12800, %s266, [#allocation6], 128, 128, 8
        $region24: #{net_forward.1} parent=11 // pred_fallthru
          _
        // Predicated region
        $region25: #{net_forward.1} parent=11 // pred_check
          %p272 = pneg %p128
        $region26: #{net_forward.1} parent=11 // pred_check_branch
          %274 = sbr.rel (%p272) target = $region28
        $region27: #{net_forward.1} parent=11 // pred_region
          _
        $region28: #{net_forward.1} parent=11 // pred_fallthru
          _
        // Predicated region
        $region29: #{net_forward.1} parent=11 // pred_check
          %p275 = pneg %p149
        $region30: #{net_forward.1} parent=11 // pred_check_branch
          %277 = sbr.rel (%p275) target = $region32
        $region31: #{net_forward.1} parent=11 // pred_region
          _
        $region32: #{net_forward.1} parent=11 // pred_fallthru
          _
        // Predicated region
        $region33: #{net_forward.1} parent=11 // pred_check
          %p278 = pneg %p170
        $region34: #{net_forward.1} parent=11 // pred_check_branch
          %280 = sbr.rel (%p278) target = $region36
        $region35: #{net_forward.1} parent=11 // pred_region
          _
        $region36: #{net_forward.1} parent=11 // pred_fallthru
          _
        // Predicated region
        $region37: #{net_forward.1} parent=11 // pred_check
          %p281 = pneg %p191
        $region38: #{net_forward.1} parent=11 // pred_check_branch
          %283 = sbr.rel (%p281) target = $region40
        $region39: #{net_forward.1} parent=11 // pred_region
          _
        $region40: #{net_forward.1} parent=11 // pred_fallthru
          _
        // Predicated region
        $region41: #{net_forward.1} parent=11 // pred_check
          %p284 = pneg %p212
        $region42: #{net_forward.1} parent=11 // pred_check_branch
          %286 = sbr.rel (%p284) target = $region44
        $region43: #{net_forward.1} parent=11 // pred_region
          _
        $region44: #{net_forward.1} parent=11 // pred_fallthru
          _
      $region12: #{net_forward.1} parent=5 // pred_fallthru
        _
      %p287 = scmp.lt.s32.totalorder %s18, 2
      // Predicated region
      $region45: #{net_forward.1} parent=5 // pred_check
        %p288 = pneg %p287
      $region46: #{net_forward.1} parent=5 // pred_check_branch
        %290 = sbr.rel (%p288) target = $region48
      $region47: #{net_forward.1} parent=5 // pred_region
        // Predicated region
        $region49: #{net_forward.1} parent=47 // pred_check
          %p291 = pneg %p38
        $region50: #{net_forward.1} parent=47 // pred_check_branch
          %293 = sbr.rel (%p291) target = $region52
        $region51: #{net_forward.1} parent=47 // pred_region
          %p294 = scmp.lt.s32.totalorder %s18, 1
          %s295 = scalar_select %p294, %s18, 1
          %s296 = smul.addr %s295, 32
          %s297 = smul.addr %s296, 8
          %s298 = scalar_lea.vmem %s0, %s297
        $region52: #{net_forward.1} parent=47 // pred_fallthru
          _
      $region48: #{net_forward.1} parent=5 // pred_fallthru
        _
      %p299 = scmp.le.s32.totalorder 1, %s18
      %p300 = scmp.lt.s32.totalorder %s18, 3
      %p301 = pnand %p299, %p300
      %p302 = pneg %p301
      // Predicated region
      $region53: #{net_forward.1} parent=5 // pred_check
        _
      $region54: #{net_forward.1} parent=5 // pred_check_branch
        %304 = sbr.rel (%p301) target = $region56
      $region55: #{net_forward.1} parent=5 // pred_region
        %s305 = ssub.s32 %s18, 1
        // Predicated region
        $region57: #{net_forward.1} parent=55 // pred_check
          %p306 = pneg %p107
        $region58: #{net_forward.1} parent=55 // pred_check_branch
          %308 = sbr.rel (%p306) target = $region60
        $region59: #{net_forward.1} parent=55 // pred_region
          %309 = dma.done [#allocation6], 12800
        $region60: #{net_forward.1} parent=55 // pred_fallthru
          _
        %p310 = scmp.lt.s32.totalorder %s23, 1
        %s311 = scalar_select %p310, %s23, 1
        %s312 = smul.addr %s311, 32
        %s313 = smul.addr %s312, 8
        %s314 = scalar_lea.vmem %s0, %s313
        %p315 = pneg %p44
        %p316 = pneg %p41
        %p317 = pneg %p65
        %p318 = pneg %p62
        %p319 = pneg %p86
        %p320 = pneg %p83
        %p321 = pneg %p107
        %p322 = pneg %p104
        %p323 = pneg %p128
        %p324 = pneg %p125
        %p325 = pneg %p149
        %p326 = pneg %p146
        %p327 = pneg %p170
        %p328 = pneg %p167
        %p329 = pneg %p191
        %p330 = pneg %p188
        %p331 = pneg %p212
        %p332 = pneg %p209
        %p333 = pneg %p238
        %p334 = pneg %p235
        %p335 = scmp.lt.s32.totalorder %s23, 1
        %s336 = scalar_select %p335, %s23, 1
        %s337 = scalar_lea.vmem %s9, %s336
        %p338 = scmp.lt.s32.totalorder %s23, 1
        %s339 = scalar_select %p338, %s23, 1
        %s340 = smul.addr %s339, 32
        %s341 = smul.addr %s340, 8
        %s342 = scalar_lea.vmem %s0, %s341
        %p343 = scmp.lt.s32.totalorder %s23, 1
        %s344 = scalar_select %p343, %s23, 1
        %s345 = scalar_lea.vmem %s9, %s344
        %v346 = vld [vmem:[%s342] sm:$0xff]
        %v347 = vld [vmem:[%s342 + $0x8] sm:$0xf]
        %v348 = vld [vmem:[%s342 + $0x10] sm:$0xff]
        %v349 = vld [vmem:[%s342 + $0x18] sm:$0xf]
        %v350 = vld [vmem:[%s342 + $0x20] sm:$0xff]
        %v351 = vld [vmem:[%s342 + $0x28] sm:$0xf]
        %v352 = vld [vmem:[%s342 + $0x30] sm:$0xff]
        %v353 = vld [vmem:[%s342 + $0x38] sm:$0xf]
        %v354 = vld [vmem:[%s342 + $0x40] sm:$0xff]
        %v355 = vld [vmem:[%s342 + $0x48] sm:$0xf]
        %v356 = vld [vmem:[%s342 + $0x50] sm:$0xff]
        %v357 = vld [vmem:[%s342 + $0x58] sm:$0xf]
        %v358 = vld [vmem:[%s342 + $0x60] sm:$0xff]
        %v359 = vld [vmem:[%s342 + $0x68] sm:$0xf]
        %v360 = vld [vmem:[%s342 + $0x70] sm:$0xff]
        %v361 = vld [vmem:[%s342 + $0x78] sm:$0xf]
        %v362 = vld [vmem:[%s342 + $0x80] sm:$0xff]
        %v363 = vld [vmem:[%s342 + $0x88] sm:$0xf]
        %v364 = vld [vmem:[%s342 + $0x90] sm:$0xff]
        %v365 = vld [vmem:[%s342 + $0x98] sm:$0xf]
        %v366 = vld [vmem:[%s342 + $0xa0] sm:$0xff]
        %v367 = vld [vmem:[%s342 + $0xa8] sm:$0xf]
        %v368 = vld [vmem:[%s342 + $0xb0] sm:$0xff]
        %v369 = vld [vmem:[%s342 + $0xb8] sm:$0xf]
        %v370 = vld [vmem:[%s1] sm:$0x1]
        %372 = vset.pattern.permute.xlu0 0
        %373 = vperm.xlu0 %372, %v346
        %v374 = vpop.permute.xlu0 %373
        %377 = vset.pattern.permute.xlu0 0
        %378 = vperm.xlu0 %377, %v347
        %v379 = vpop.permute.xlu0 %378
        %382 = vset.pattern.permute.xlu0 0
        %383 = vperm.xlu0 %382, %v348
        %v384 = vpop.permute.xlu0 %383
        %387 = vset.pattern.permute.xlu0 0
        %388 = vperm.xlu0 %387, %v349
        %v389 = vpop.permute.xlu0 %388
        %392 = vset.pattern.permute.xlu0 0
        %393 = vperm.xlu0 %392, %v350
        %v394 = vpop.permute.xlu0 %393
        %397 = vset.pattern.permute.xlu0 0
        %398 = vperm.xlu0 %397, %v351
        %v399 = vpop.permute.xlu0 %398
        %402 = vset.pattern.permute.xlu0 0
        %403 = vperm.xlu0 %402, %v352
        %v404 = vpop.permute.xlu0 %403
        %407 = vset.pattern.permute.xlu0 0
        %408 = vperm.xlu0 %407, %v353
        %v409 = vpop.permute.xlu0 %408
        %412 = vset.pattern.permute.xlu0 0
        %413 = vperm.xlu0 %412, %v354
        %v414 = vpop.permute.xlu0 %413
        %417 = vset.pattern.permute.xlu0 0
        %418 = vperm.xlu0 %417, %v355
        %v419 = vpop.permute.xlu0 %418
        %422 = vset.pattern.permute.xlu0 0
        %423 = vperm.xlu0 %422, %v356
        %v424 = vpop.permute.xlu0 %423
        %427 = vset.pattern.permute.xlu0 0
        %428 = vperm.xlu0 %427, %v357
        %v429 = vpop.permute.xlu0 %428
        %432 = vset.pattern.permute.xlu0 0
        %433 = vperm.xlu0 %432, %v358
        %v434 = vpop.permute.xlu0 %433
        %437 = vset.pattern.permute.xlu0 0
        %438 = vperm.xlu0 %437, %v359
        %v439 = vpop.permute.xlu0 %438
        %442 = vset.pattern.permute.xlu0 0
        %443 = vperm.xlu0 %442, %v360
        %v444 = vpop.permute.xlu0 %443
        %447 = vset.pattern.permute.xlu0 0
        %448 = vperm.xlu0 %447, %v361
        %v449 = vpop.permute.xlu0 %448
        %452 = vset.pattern.permute.xlu0 0
        %453 = vperm.xlu0 %452, %v362
        %v454 = vpop.permute.xlu0 %453
        %457 = vset.pattern.permute.xlu0 0
        %458 = vperm.xlu0 %457, %v363
        %v459 = vpop.permute.xlu0 %458
        %462 = vset.pattern.permute.xlu0 0
        %463 = vperm.xlu0 %462, %v364
        %v464 = vpop.permute.xlu0 %463
        %467 = vset.pattern.permute.xlu0 0
        %468 = vperm.xlu0 %467, %v365
        %v469 = vpop.permute.xlu0 %468
        %472 = vset.pattern.permute.xlu0 0
        %473 = vperm.xlu0 %472, %v366
        %v474 = vpop.permute.xlu0 %473
        %477 = vset.pattern.permute.xlu0 0
        %478 = vperm.xlu0 %477, %v367
        %v479 = vpop.permute.xlu0 %478
        %482 = vset.pattern.permute.xlu0 0
        %483 = vperm.xlu0 %482, %v368
        %v484 = vpop.permute.xlu0 %483
        %487 = vset.pattern.permute.xlu0 0
        %488 = vperm.xlu0 %487, %v369
        %v489 = vpop.permute.xlu0 %488
        %v491 = vlaneseq
        %v492 = vshrl.u32 %v491, 7
        %v493 = vsub.s32 0, %v492
        %v494 = vrot.slane %v370, %v493
        %v495 = vmul.f32 %v374, %v494
        %v496 = vmul.f32 %v379, %v494
        %v497 = vmul.f32 %v384, %v494
        %v498 = vmul.f32 %v389, %v494
        %v499 = vmul.f32 %v394, %v494
        %v500 = vmul.f32 %v399, %v494
        %v501 = vmul.f32 %v404, %v494
        %v502 = vmul.f32 %v409, %v494
        %v503 = vmul.f32 %v414, %v494
        %v504 = vmul.f32 %v419, %v494
        %v505 = vmul.f32 %v424, %v494
        %v506 = vmul.f32 %v429, %v494
        %v507 = vmul.f32 %v434, %v494
        %v508 = vmul.f32 %v439, %v494
        %v509 = vmul.f32 %v444, %v494
        %v510 = vmul.f32 %v449, %v494
        %v511 = vmul.f32 %v454, %v494
        %v512 = vmul.f32 %v459, %v494
        %v513 = vmul.f32 %v464, %v494
        %v514 = vmul.f32 %v469, %v494
        %v515 = vmul.f32 %v474, %v494
        %v516 = vmul.f32 %v479, %v494
        %v517 = vmul.f32 %v484, %v494
        %v518 = vmul.f32 %v489, %v494
        %v519 = vld [vmem:[%s1 + $0x1] sm:$0x1]
        %520 = vset.pattern.permute.xlu0 1
        %521 = vperm.xlu0 %520, %v346
        %v522 = vpop.permute.xlu0 %521
        %524 = vset.pattern.permute.xlu0 1
        %525 = vperm.xlu0 %524, %v347
        %v526 = vpop.permute.xlu0 %525
        %528 = vset.pattern.permute.xlu0 1
        %529 = vperm.xlu0 %528, %v348
        %v530 = vpop.permute.xlu0 %529
        %532 = vset.pattern.permute.xlu0 1
        %533 = vperm.xlu0 %532, %v349
        %v534 = vpop.permute.xlu0 %533
        %536 = vset.pattern.permute.xlu0 1
        %537 = vperm.xlu0 %536, %v350
        %v538 = vpop.permute.xlu0 %537
        %540 = vset.pattern.permute.xlu0 1
        %541 = vperm.xlu0 %540, %v351
        %v542 = vpop.permute.xlu0 %541
        %544 = vset.pattern.permute.xlu0 1
        %545 = vperm.xlu0 %544, %v352
        %v546 = vpop.permute.xlu0 %545
        %548 = vset.pattern.permute.xlu0 1
        %549 = vperm.xlu0 %548, %v353
        %v550 = vpop.permute.xlu0 %549
        %552 = vset.pattern.permute.xlu0 1
        %553 = vperm.xlu0 %552, %v354
        %v554 = vpop.permute.xlu0 %553
        %556 = vset.pattern.permute.xlu0 1
        %557 = vperm.xlu0 %556, %v355
        %v558 = vpop.permute.xlu0 %557
        %560 = vset.pattern.permute.xlu0 1
        %561 = vperm.xlu0 %560, %v356
        %v562 = vpop.permute.xlu0 %561
        %564 = vset.pattern.permute.xlu0 1
        %565 = vperm.xlu0 %564, %v357
        %v566 = vpop.permute.xlu0 %565
        %568 = vset.pattern.permute.xlu0 1
        %569 = vperm.xlu0 %568, %v358
        %v570 = vpop.permute.xlu0 %569
        %572 = vset.pattern.permute.xlu0 1
        %573 = vperm.xlu0 %572, %v359
        %v574 = vpop.permute.xlu0 %573
        %576 = vset.pattern.permute.xlu0 1
        %577 = vperm.xlu0 %576, %v360
        %v578 = vpop.permute.xlu0 %577
        %580 = vset.pattern.permute.xlu0 1
        %581 = vperm.xlu0 %580, %v361
        %v582 = vpop.permute.xlu0 %581
        %584 = vset.pattern.permute.xlu0 1
        %585 = vperm.xlu0 %584, %v362
        %v586 = vpop.permute.xlu0 %585
        %588 = vset.pattern.permute.xlu0 1
        %589 = vperm.xlu0 %588, %v363
        %v590 = vpop.permute.xlu0 %589
        %592 = vset.pattern.permute.xlu0 1
        %593 = vperm.xlu0 %592, %v364
        %v594 = vpop.permute.xlu0 %593
        %596 = vset.pattern.permute.xlu0 1
        %597 = vperm.xlu0 %596, %v365
        %v598 = vpop.permute.xlu0 %597
        %600 = vset.pattern.permute.xlu0 1
        %601 = vperm.xlu0 %600, %v366
        %v602 = vpop.permute.xlu0 %601
        %604 = vset.pattern.permute.xlu0 1
        %605 = vperm.xlu0 %604, %v367
        %v606 = vpop.permute.xlu0 %605
        %608 = vset.pattern.permute.xlu0 1
        %609 = vperm.xlu0 %608, %v368
        %v610 = vpop.permute.xlu0 %609
        %612 = vset.pattern.permute.xlu0 1
        %613 = vperm.xlu0 %612, %v369
        %v614 = vpop.permute.xlu0 %613
        %v616 = vlaneseq
        %v617 = vshrl.u32 %v616, 7
        %v618 = vsub.s32 0, %v617
        %v619 = vrot.slane %v519, %v618
        %v620 = vmul.f32 %v522, %v619
        %v621 = vmul.f32 %v526, %v619
        %v622 = vmul.f32 %v530, %v619
        %v623 = vmul.f32 %v534, %v619
        %v624 = vmul.f32 %v538, %v619
        %v625 = vmul.f32 %v542, %v619
        %v626 = vmul.f32 %v546, %v619
        %v627 = vmul.f32 %v550, %v619
        %v628 = vmul.f32 %v554, %v619
        %v629 = vmul.f32 %v558, %v619
        %v630 = vmul.f32 %v562, %v619
        %v631 = vmul.f32 %v566, %v619
        %v632 = vmul.f32 %v570, %v619
        %v633 = vmul.f32 %v574, %v619
        %v634 = vmul.f32 %v578, %v619
        %v635 = vmul.f32 %v582, %v619
        %v636 = vmul.f32 %v586, %v619
        %v637 = vmul.f32 %v590, %v619
        %v638 = vmul.f32 %v594, %v619
        %v639 = vmul.f32 %v598, %v619
        %v640 = vmul.f32 %v602, %v619
        %v641 = vmul.f32 %v606, %v619
        %v642 = vmul.f32 %v610, %v619
        %v643 = vmul.f32 %v614, %v619
        %v644 = vadd.f32 %v495, %v620
        %v645 = vadd.f32 %v496, %v621
        %v646 = vadd.f32 %v497, %v622
        %v647 = vadd.f32 %v498, %v623
        %v648 = vadd.f32 %v499, %v624
        %v649 = vadd.f32 %v500, %v625
        %v650 = vadd.f32 %v501, %v626
        %v651 = vadd.f32 %v502, %v627
        %v652 = vadd.f32 %v503, %v628
        %v653 = vadd.f32 %v504, %v629
        %v654 = vadd.f32 %v505, %v630
        %v655 = vadd.f32 %v506, %v631
        %v656 = vadd.f32 %v507, %v632
        %v657 = vadd.f32 %v508, %v633
        %v658 = vadd.f32 %v509, %v634
        %v659 = vadd.f32 %v510, %v635
        %v660 = vadd.f32 %v511, %v636
        %v661 = vadd.f32 %v512, %v637
        %v662 = vadd.f32 %v513, %v638
        %v663 = vadd.f32 %v514, %v639
        %v664 = vadd.f32 %v515, %v640
        %v665 = vadd.f32 %v516, %v641
        %v666 = vadd.f32 %v517, %v642
        %v667 = vadd.f32 %v518, %v643
        %v668 = vld [vmem:[%s1 + $0x2] sm:$0x1]
        %669 = vset.pattern.permute.xlu0 2
        %670 = vperm.xlu0 %669, %v346
        %v671 = vpop.permute.xlu0 %670
        %673 = vset.pattern.permute.xlu0 2
        %674 = vperm.xlu0 %673, %v347
        %v675 = vpop.permute.xlu0 %674
        %677 = vset.pattern.permute.xlu0 2
        %678 = vperm.xlu0 %677, %v348
        %v679 = vpop.permute.xlu0 %678
        %681 = vset.pattern.permute.xlu0 2
        %682 = vperm.xlu0 %681, %v349
        %v683 = vpop.permute.xlu0 %682
        %685 = vset.pattern.permute.xlu0 2
        %686 = vperm.xlu0 %685, %v350
        %v687 = vpop.permute.xlu0 %686
        %689 = vset.pattern.permute.xlu0 2
        %690 = vperm.xlu0 %689, %v351
        %v691 = vpop.permute.xlu0 %690
        %693 = vset.pattern.permute.xlu0 2
        %694 = vperm.xlu0 %693, %v352
        %v695 = vpop.permute.xlu0 %694
        %697 = vset.pattern.permute.xlu0 2
        %698 = vperm.xlu0 %697, %v353
        %v699 = vpop.permute.xlu0 %698
        %701 = vset.pattern.permute.xlu0 2
        %702 = vperm.xlu0 %701, %v354
        %v703 = vpop.permute.xlu0 %702
        %705 = vset.pattern.permute.xlu0 2
        %706 = vperm.xlu0 %705, %v355
        %v707 = vpop.permute.xlu0 %706
        %709 = vset.pattern.permute.xlu0 2
        %710 = vperm.xlu0 %709, %v356
        %v711 = vpop.permute.xlu0 %710
        %713 = vset.pattern.permute.xlu0 2
        %714 = vperm.xlu0 %713, %v357
        %v715 = vpop.permute.xlu0 %714
        %717 = vset.pattern.permute.xlu0 2
        %718 = vperm.xlu0 %717, %v358
        %v719 = vpop.permute.xlu0 %718
        %721 = vset.pattern.permute.xlu0 2
        %722 = vperm.xlu0 %721, %v359
        %v723 = vpop.permute.xlu0 %722
        %725 = vset.pattern.permute.xlu0 2
        %726 = vperm.xlu0 %725, %v360
        %v727 = vpop.permute.xlu0 %726
        %729 = vset.pattern.permute.xlu0 2
        %730 = vperm.xlu0 %729, %v361
        %v731 = vpop.permute.xlu0 %730
        %733 = vset.pattern.permute.xlu0 2
        %734 = vperm.xlu0 %733, %v362
        %v735 = vpop.permute.xlu0 %734
        %737 = vset.pattern.permute.xlu0 2
        %738 = vperm.xlu0 %737, %v363
        %v739 = vpop.permute.xlu0 %738
        %741 = vset.pattern.permute.xlu0 2
        %742 = vperm.xlu0 %741, %v364
        %v743 = vpop.permute.xlu0 %742
        %745 = vset.pattern.permute.xlu0 2
        %746 = vperm.xlu0 %745, %v365
        %v747 = vpop.permute.xlu0 %746
        %749 = vset.pattern.permute.xlu0 2
        %750 = vperm.xlu0 %749, %v366
        %v751 = vpop.permute.xlu0 %750
        %753 = vset.pattern.permute.xlu0 2
        %754 = vperm.xlu0 %753, %v367
        %v755 = vpop.permute.xlu0 %754
        %757 = vset.pattern.permute.xlu0 2
        %758 = vperm.xlu0 %757, %v368
        %v759 = vpop.permute.xlu0 %758
        %761 = vset.pattern.permute.xlu0 2
        %762 = vperm.xlu0 %761, %v369
        %v763 = vpop.permute.xlu0 %762
        %v765 = vlaneseq
        %v766 = vshrl.u32 %v765, 7
        %v767 = vsub.s32 0, %v766
        %v768 = vrot.slane %v668, %v767
        %v769 = vmul.f32 %v671, %v768
        %v770 = vmul.f32 %v675, %v768
        %v771 = vmul.f32 %v679, %v768
        %v772 = vmul.f32 %v683, %v768
        %v773 = vmul.f32 %v687, %v768
        %v774 = vmul.f32 %v691, %v768
        %v775 = vmul.f32 %v695, %v768
        %v776 = vmul.f32 %v699, %v768
        %v777 = vmul.f32 %v703, %v768
        %v778 = vmul.f32 %v707, %v768
        %v779 = vmul.f32 %v711, %v768
        %v780 = vmul.f32 %v715, %v768
        %v781 = vmul.f32 %v719, %v768
        %v782 = vmul.f32 %v723, %v768
        %v783 = vmul.f32 %v727, %v768
        %v784 = vmul.f32 %v731, %v768
        %v785 = vmul.f32 %v735, %v768
        %v786 = vmul.f32 %v739, %v768
        %v787 = vmul.f32 %v743, %v768
        %v788 = vmul.f32 %v747, %v768
        %v789 = vmul.f32 %v751, %v768
        %v790 = vmul.f32 %v755, %v768
        %v791 = vmul.f32 %v759, %v768
        %v792 = vmul.f32 %v763, %v768
        %v793 = vadd.f32 %v644, %v769
        %v794 = vadd.f32 %v645, %v770
        %v795 = vadd.f32 %v646, %v771
        %v796 = vadd.f32 %v647, %v772
        %v797 = vadd.f32 %v648, %v773
        %v798 = vadd.f32 %v649, %v774
        %v799 = vadd.f32 %v650, %v775
        %v800 = vadd.f32 %v651, %v776
        %v801 = vadd.f32 %v652, %v777
        %v802 = vadd.f32 %v653, %v778
        %v803 = vadd.f32 %v654, %v779
        %v804 = vadd.f32 %v655, %v780
        %v805 = vadd.f32 %v656, %v781
        %v806 = vadd.f32 %v657, %v782
        %v807 = vadd.f32 %v658, %v783
        %v808 = vadd.f32 %v659, %v784
        %v809 = vadd.f32 %v660, %v785
        %v810 = vadd.f32 %v661, %v786
        %v811 = vadd.f32 %v662, %v787
        %v812 = vadd.f32 %v663, %v788
        %v813 = vadd.f32 %v664, %v789
        %v814 = vadd.f32 %v665, %v790
        %v815 = vadd.f32 %v666, %v791
        %v816 = vadd.f32 %v667, %v792
        %v817 = vld [vmem:[%s342 + $0x1] sm:$0xff]
        %v818 = vld [vmem:[%s342 + $0x9] sm:$0xf]
        %v819 = vld [vmem:[%s342 + $0x11] sm:$0xff]
        %v820 = vld [vmem:[%s342 + $0x19] sm:$0xf]
        %v821 = vld [vmem:[%s342 + $0x21] sm:$0xff]
        %v822 = vld [vmem:[%s342 + $0x29] sm:$0xf]
        %v823 = vld [vmem:[%s342 + $0x31] sm:$0xff]
        %v824 = vld [vmem:[%s342 + $0x39] sm:$0xf]
        %v825 = vld [vmem:[%s342 + $0x41] sm:$0xff]
        %v826 = vld [vmem:[%s342 + $0x49] sm:$0xf]
        %v827 = vld [vmem:[%s342 + $0x51] sm:$0xff]
        %v828 = vld [vmem:[%s342 + $0x59] sm:$0xf]
        %v829 = vld [vmem:[%s342 + $0x61] sm:$0xff]
        %v830 = vld [vmem:[%s342 + $0x69] sm:$0xf]
        %v831 = vld [vmem:[%s342 + $0x71] sm:$0xff]
        %v832 = vld [vmem:[%s342 + $0x79] sm:$0xf]
        %v833 = vld [vmem:[%s342 + $0x81] sm:$0xff]
        %v834 = vld [vmem:[%s342 + $0x89] sm:$0xf]
        %v835 = vld [vmem:[%s342 + $0x91] sm:$0xff]
        %v836 = vld [vmem:[%s342 + $0x99] sm:$0xf]
        %v837 = vld [vmem:[%s342 + $0xa1] sm:$0xff]
        %v838 = vld [vmem:[%s342 + $0xa9] sm:$0xf]
        %v839 = vld [vmem:[%s342 + $0xb1] sm:$0xff]
        %v840 = vld [vmem:[%s342 + $0xb9] sm:$0xf]
        %s841 = scalar_lea.vmem %s1, 4
        %v842 = vld [vmem:[%s841] sm:$0x1]
        %844 = vset.pattern.permute.xlu0 0
        %845 = vperm.xlu0 %844, %v817
        %v846 = vpop.permute.xlu0 %845
        %849 = vset.pattern.permute.xlu0 0
        %850 = vperm.xlu0 %849, %v818
        %v851 = vpop.permute.xlu0 %850
        %854 = vset.pattern.permute.xlu0 0
        %855 = vperm.xlu0 %854, %v819
        %v856 = vpop.permute.xlu0 %855
        %859 = vset.pattern.permute.xlu0 0
        %860 = vperm.xlu0 %859, %v820
        %v861 = vpop.permute.xlu0 %860
        %864 = vset.pattern.permute.xlu0 0
        %865 = vperm.xlu0 %864, %v821
        %v866 = vpop.permute.xlu0 %865
        %869 = vset.pattern.permute.xlu0 0
        %870 = vperm.xlu0 %869, %v822
        %v871 = vpop.permute.xlu0 %870
        %874 = vset.pattern.permute.xlu0 0
        %875 = vperm.xlu0 %874, %v823
        %v876 = vpop.permute.xlu0 %875
        %879 = vset.pattern.permute.xlu0 0
        %880 = vperm.xlu0 %879, %v824
        %v881 = vpop.permute.xlu0 %880
        %884 = vset.pattern.permute.xlu0 0
        %885 = vperm.xlu0 %884, %v825
        %v886 = vpop.permute.xlu0 %885
        %889 = vset.pattern.permute.xlu0 0
        %890 = vperm.xlu0 %889, %v826
        %v891 = vpop.permute.xlu0 %890
        %894 = vset.pattern.permute.xlu0 0
        %895 = vperm.xlu0 %894, %v827
        %v896 = vpop.permute.xlu0 %895
        %899 = vset.pattern.permute.xlu0 0
        %900 = vperm.xlu0 %899, %v828
        %v901 = vpop.permute.xlu0 %900
        %904 = vset.pattern.permute.xlu0 0
        %905 = vperm.xlu0 %904, %v829
        %v906 = vpop.permute.xlu0 %905
        %909 = vset.pattern.permute.xlu0 0
        %910 = vperm.xlu0 %909, %v830
        %v911 = vpop.permute.xlu0 %910
        %914 = vset.pattern.permute.xlu0 0
        %915 = vperm.xlu0 %914, %v831
        %v916 = vpop.permute.xlu0 %915
        %919 = vset.pattern.permute.xlu0 0
        %920 = vperm.xlu0 %919, %v832
        %v921 = vpop.permute.xlu0 %920
        %924 = vset.pattern.permute.xlu0 0
        %925 = vperm.xlu0 %924, %v833
        %v926 = vpop.permute.xlu0 %925
        %929 = vset.pattern.permute.xlu0 0
        %930 = vperm.xlu0 %929, %v834
        %v931 = vpop.permute.xlu0 %930
        %934 = vset.pattern.permute.xlu0 0
        %935 = vperm.xlu0 %934, %v835
        %v936 = vpop.permute.xlu0 %935
        %939 = vset.pattern.permute.xlu0 0
        %940 = vperm.xlu0 %939, %v836
        %v941 = vpop.permute.xlu0 %940
        %944 = vset.pattern.permute.xlu0 0
        %945 = vperm.xlu0 %944, %v837
        %v946 = vpop.permute.xlu0 %945
        %949 = vset.pattern.permute.xlu0 0
        %950 = vperm.xlu0 %949, %v838
        %v951 = vpop.permute.xlu0 %950
        %954 = vset.pattern.permute.xlu0 0
        %955 = vperm.xlu0 %954, %v839
        %v956 = vpop.permute.xlu0 %955
        %959 = vset.pattern.permute.xlu0 0
        %960 = vperm.xlu0 %959, %v840
        %v961 = vpop.permute.xlu0 %960
        %v963 = vlaneseq
        %v964 = vshrl.u32 %v963, 7
        %v965 = vsub.s32 0, %v964
        %v966 = vrot.slane %v842, %v965
        %v967 = vmul.f32 %v846, %v966
        %v968 = vmul.f32 %v851, %v966
        %v969 = vmul.f32 %v856, %v966
        %v970 = vmul.f32 %v861, %v966
        %v971 = vmul.f32 %v866, %v966
        %v972 = vmul.f32 %v871, %v966
        %v973 = vmul.f32 %v876, %v966
        %v974 = vmul.f32 %v881, %v966
        %v975 = vmul.f32 %v886, %v966
        %v976 = vmul.f32 %v891, %v966
        %v977 = vmul.f32 %v896, %v966
        %v978 = vmul.f32 %v901, %v966
        %v979 = vmul.f32 %v906, %v966
        %v980 = vmul.f32 %v911, %v966
        %v981 = vmul.f32 %v916, %v966
        %v982 = vmul.f32 %v921, %v966
        %v983 = vmul.f32 %v926, %v966
        %v984 = vmul.f32 %v931, %v966
        %v985 = vmul.f32 %v936, %v966
        %v986 = vmul.f32 %v941, %v966
        %v987 = vmul.f32 %v946, %v966
        %v988 = vmul.f32 %v951, %v966
        %v989 = vmul.f32 %v956, %v966
        %v990 = vmul.f32 %v961, %v966
        %v991 = vld [vmem:[%s841 + $0x1] sm:$0x1]
        %992 = vset.pattern.permute.xlu0 1
        %993 = vperm.xlu0 %992, %v817
        %v994 = vpop.permute.xlu0 %993
        %996 = vset.pattern.permute.xlu0 1
        %997 = vperm.xlu0 %996, %v818
        %v998 = vpop.permute.xlu0 %997
        %1000 = vset.pattern.permute.xlu0 1
        %1001 = vperm.xlu0 %1000, %v819
        %v1002 = vpop.permute.xlu0 %1001
        %1004 = vset.pattern.permute.xlu0 1
        %1005 = vperm.xlu0 %1004, %v820
        %v1006 = vpop.permute.xlu0 %1005
        %1008 = vset.pattern.permute.xlu0 1
        %1009 = vperm.xlu0 %1008, %v821
        %v1010 = vpop.permute.xlu0 %1009
        %1012 = vset.pattern.permute.xlu0 1
        %1013 = vperm.xlu0 %1012, %v822
        %v1014 = vpop.permute.xlu0 %1013
        %1016 = vset.pattern.permute.xlu0 1
        %1017 = vperm.xlu0 %1016, %v823
        %v1018 = vpop.permute.xlu0 %1017
        %1020 = vset.pattern.permute.xlu0 1
        %1021 = vperm.xlu0 %1020, %v824
        %v1022 = vpop.permute.xlu0 %1021
        %1024 = vset.pattern.permute.xlu0 1
        %1025 = vperm.xlu0 %1024, %v825
        %v1026 = vpop.permute.xlu0 %1025
        %1028 = vset.pattern.permute.xlu0 1
        %1029 = vperm.xlu0 %1028, %v826
        %v1030 = vpop.permute.xlu0 %1029
        %1032 = vset.pattern.permute.xlu0 1
        %1033 = vperm.xlu0 %1032, %v827
        %v1034 = vpop.permute.xlu0 %1033
        %1036 = vset.pattern.permute.xlu0 1
        %1037 = vperm.xlu0 %1036, %v828
        %v1038 = vpop.permute.xlu0 %1037
        %1040 = vset.pattern.permute.xlu0 1
        %1041 = vperm.xlu0 %1040, %v829
        %v1042 = vpop.permute.xlu0 %1041
        %1044 = vset.pattern.permute.xlu0 1
        %1045 = vperm.xlu0 %1044, %v830
        %v1046 = vpop.permute.xlu0 %1045
        %1048 = vset.pattern.permute.xlu0 1
        %1049 = vperm.xlu0 %1048, %v831
        %v1050 = vpop.permute.xlu0 %1049
        %1052 = vset.pattern.permute.xlu0 1
        %1053 = vperm.xlu0 %1052, %v832
        %v1054 = vpop.permute.xlu0 %1053
        %1056 = vset.pattern.permute.xlu0 1
        %1057 = vperm.xlu0 %1056, %v833
        %v1058 = vpop.permute.xlu0 %1057
        %1060 = vset.pattern.permute.xlu0 1
        %1061 = vperm.xlu0 %1060, %v834
        %v1062 = vpop.permute.xlu0 %1061
        %1064 = vset.pattern.permute.xlu0 1
        %1065 = vperm.xlu0 %1064, %v835
        %v1066 = vpop.permute.xlu0 %1065
        %1068 = vset.pattern.permute.xlu0 1
        %1069 = vperm.xlu0 %1068, %v836
        %v1070 = vpop.permute.xlu0 %1069
        %1072 = vset.pattern.permute.xlu0 1
        %1073 = vperm.xlu0 %1072, %v837
        %v1074 = vpop.permute.xlu0 %1073
        %1076 = vset.pattern.permute.xlu0 1
        %1077 = vperm.xlu0 %1076, %v838
        %v1078 = vpop.permute.xlu0 %1077
        %1080 = vset.pattern.permute.xlu0 1
        %1081 = vperm.xlu0 %1080, %v839
        %v1082 = vpop.permute.xlu0 %1081
        %1084 = vset.pattern.permute.xlu0 1
        %1085 = vperm.xlu0 %1084, %v840
        %v1086 = vpop.permute.xlu0 %1085
        %v1088 = vlaneseq
        %v1089 = vshrl.u32 %v1088, 7
        %v1090 = vsub.s32 0, %v1089
        %v1091 = vrot.slane %v991, %v1090
        %v1092 = vmul.f32 %v994, %v1091
        %v1093 = vmul.f32 %v998, %v1091
        %v1094 = vmul.f32 %v1002, %v1091
        %v1095 = vmul.f32 %v1006, %v1091
        %v1096 = vmul.f32 %v1010, %v1091
        %v1097 = vmul.f32 %v1014, %v1091
        %v1098 = vmul.f32 %v1018, %v1091
        %v1099 = vmul.f32 %v1022, %v1091
        %v1100 = vmul.f32 %v1026, %v1091
        %v1101 = vmul.f32 %v1030, %v1091
        %v1102 = vmul.f32 %v1034, %v1091
        %v1103 = vmul.f32 %v1038, %v1091
        %v1104 = vmul.f32 %v1042, %v1091
        %v1105 = vmul.f32 %v1046, %v1091
        %v1106 = vmul.f32 %v1050, %v1091
        %v1107 = vmul.f32 %v1054, %v1091
        %v1108 = vmul.f32 %v1058, %v1091
        %v1109 = vmul.f32 %v1062, %v1091
        %v1110 = vmul.f32 %v1066, %v1091
        %v1111 = vmul.f32 %v1070, %v1091
        %v1112 = vmul.f32 %v1074, %v1091
        %v1113 = vmul.f32 %v1078, %v1091
        %v1114 = vmul.f32 %v1082, %v1091
        %v1115 = vmul.f32 %v1086, %v1091
        %v1116 = vadd.f32 %v967, %v1092
        %v1117 = vadd.f32 %v968, %v1093
        %v1118 = vadd.f32 %v969, %v1094
        %v1119 = vadd.f32 %v970, %v1095
        %v1120 = vadd.f32 %v971, %v1096
        %v1121 = vadd.f32 %v972, %v1097
        %v1122 = vadd.f32 %v973, %v1098
        %v1123 = vadd.f32 %v974, %v1099
        %v1124 = vadd.f32 %v975, %v1100
        %v1125 = vadd.f32 %v976, %v1101
        %v1126 = vadd.f32 %v977, %v1102
        %v1127 = vadd.f32 %v978, %v1103
        %v1128 = vadd.f32 %v979, %v1104
        %v1129 = vadd.f32 %v980, %v1105
        %v1130 = vadd.f32 %v981, %v1106
        %v1131 = vadd.f32 %v982, %v1107
        %v1132 = vadd.f32 %v983, %v1108
        %v1133 = vadd.f32 %v984, %v1109
        %v1134 = vadd.f32 %v985, %v1110
        %v1135 = vadd.f32 %v986, %v1111
        %v1136 = vadd.f32 %v987, %v1112
        %v1137 = vadd.f32 %v988, %v1113
        %v1138 = vadd.f32 %v989, %v1114
        %v1139 = vadd.f32 %v990, %v1115
        %v1140 = vld [vmem:[%s841 + $0x2] sm:$0x1]
        %1141 = vset.pattern.permute.xlu0 2
        %1142 = vperm.xlu0 %1141, %v817
        %v1143 = vpop.permute.xlu0 %1142
        %1145 = vset.pattern.permute.xlu0 2
        %1146 = vperm.xlu0 %1145, %v818
        %v1147 = vpop.permute.xlu0 %1146
        %1149 = vset.pattern.permute.xlu0 2
        %1150 = vperm.xlu0 %1149, %v819
        %v1151 = vpop.permute.xlu0 %1150
        %1153 = vset.pattern.permute.xlu0 2
        %1154 = vperm.xlu0 %1153, %v820
        %v1155 = vpop.permute.xlu0 %1154
        %1157 = vset.pattern.permute.xlu0 2
        %1158 = vperm.xlu0 %1157, %v821
        %v1159 = vpop.permute.xlu0 %1158
        %1161 = vset.pattern.permute.xlu0 2
        %1162 = vperm.xlu0 %1161, %v822
        %v1163 = vpop.permute.xlu0 %1162
        %1165 = vset.pattern.permute.xlu0 2
        %1166 = vperm.xlu0 %1165, %v823
        %v1167 = vpop.permute.xlu0 %1166
        %1169 = vset.pattern.permute.xlu0 2
        %1170 = vperm.xlu0 %1169, %v824
        %v1171 = vpop.permute.xlu0 %1170
        %1173 = vset.pattern.permute.xlu0 2
        %1174 = vperm.xlu0 %1173, %v825
        %v1175 = vpop.permute.xlu0 %1174
        %1177 = vset.pattern.permute.xlu0 2
        %1178 = vperm.xlu0 %1177, %v826
        %v1179 = vpop.permute.xlu0 %1178
        %1181 = vset.pattern.permute.xlu0 2
        %1182 = vperm.xlu0 %1181, %v827
        %v1183 = vpop.permute.xlu0 %1182
        %1185 = vset.pattern.permute.xlu0 2
        %1186 = vperm.xlu0 %1185, %v828
        %v1187 = vpop.permute.xlu0 %1186
        %1189 = vset.pattern.permute.xlu0 2
        %1190 = vperm.xlu0 %1189, %v829
        %v1191 = vpop.permute.xlu0 %1190
        %1193 = vset.pattern.permute.xlu0 2
        %1194 = vperm.xlu0 %1193, %v830
        %v1195 = vpop.permute.xlu0 %1194
        %1197 = vset.pattern.permute.xlu0 2
        %1198 = vperm.xlu0 %1197, %v831
        %v1199 = vpop.permute.xlu0 %1198
        %1201 = vset.pattern.permute.xlu0 2
        %1202 = vperm.xlu0 %1201, %v832
        %v1203 = vpop.permute.xlu0 %1202
        %1205 = vset.pattern.permute.xlu0 2
        %1206 = vperm.xlu0 %1205, %v833
        %v1207 = vpop.permute.xlu0 %1206
        %1209 = vset.pattern.permute.xlu0 2
        %1210 = vperm.xlu0 %1209, %v834
        %v1211 = vpop.permute.xlu0 %1210
        %1213 = vset.pattern.permute.xlu0 2
        %1214 = vperm.xlu0 %1213, %v835
        %v1215 = vpop.permute.xlu0 %1214
        %1217 = vset.pattern.permute.xlu0 2
        %1218 = vperm.xlu0 %1217, %v836
        %v1219 = vpop.permute.xlu0 %1218
        %1221 = vset.pattern.permute.xlu0 2
        %1222 = vperm.xlu0 %1221, %v837
        %v1223 = vpop.permute.xlu0 %1222
        %1225 = vset.pattern.permute.xlu0 2
        %1226 = vperm.xlu0 %1225, %v838
        %v1227 = vpop.permute.xlu0 %1226
        %1229 = vset.pattern.permute.xlu0 2
        %1230 = vperm.xlu0 %1229, %v839
        %v1231 = vpop.permute.xlu0 %1230
        %1233 = vset.pattern.permute.xlu0 2
        %1234 = vperm.xlu0 %1233, %v840
        %v1235 = vpop.permute.xlu0 %1234
        %v1237 = vlaneseq
        %v1238 = vshrl.u32 %v1237, 7
        %v1239 = vsub.s32 0, %v1238
        %v1240 = vrot.slane %v1140, %v1239
        %v1241 = vmul.f32 %v1143, %v1240
        %v1242 = vmul.f32 %v1147, %v1240
        %v1243 = vmul.f32 %v1151, %v1240
        %v1244 = vmul.f32 %v1155, %v1240
        %v1245 = vmul.f32 %v1159, %v1240
        %v1246 = vmul.f32 %v1163, %v1240
        %v1247 = vmul.f32 %v1167, %v1240
        %v1248 = vmul.f32 %v1171, %v1240
        %v1249 = vmul.f32 %v1175, %v1240
        %v1250 = vmul.f32 %v1179, %v1240
        %v1251 = vmul.f32 %v1183, %v1240
        %v1252 = vmul.f32 %v1187, %v1240
        %v1253 = vmul.f32 %v1191, %v1240
        %v1254 = vmul.f32 %v1195, %v1240
        %v1255 = vmul.f32 %v1199, %v1240
        %v1256 = vmul.f32 %v1203, %v1240
        %v1257 = vmul.f32 %v1207, %v1240
        %v1258 = vmul.f32 %v1211, %v1240
        %v1259 = vmul.f32 %v1215, %v1240
        %v1260 = vmul.f32 %v1219, %v1240
        %v1261 = vmul.f32 %v1223, %v1240
        %v1262 = vmul.f32 %v1227, %v1240
        %v1263 = vmul.f32 %v1231, %v1240
        %v1264 = vmul.f32 %v1235, %v1240
        %v1265 = vadd.f32 %v1116, %v1241
        %v1266 = vadd.f32 %v1117, %v1242
        %v1267 = vadd.f32 %v1118, %v1243
        %v1268 = vadd.f32 %v1119, %v1244
        %v1269 = vadd.f32 %v1120, %v1245
        %v1270 = vadd.f32 %v1121, %v1246
        %v1271 = vadd.f32 %v1122, %v1247
        %v1272 = vadd.f32 %v1123, %v1248
        %v1273 = vadd.f32 %v1124, %v1249
        %v1274 = vadd.f32 %v1125, %v1250
        %v1275 = vadd.f32 %v1126, %v1251
        %v1276 = vadd.f32 %v1127, %v1252
        %v1277 = vadd.f32 %v1128, %v1253
        %v1278 = vadd.f32 %v1129, %v1254
        %v1279 = vadd.f32 %v1130, %v1255
        %v1280 = vadd.f32 %v1131, %v1256
        %v1281 = vadd.f32 %v1132, %v1257
        %v1282 = vadd.f32 %v1133, %v1258
        %v1283 = vadd.f32 %v1134, %v1259
        %v1284 = vadd.f32 %v1135, %v1260
        %v1285 = vadd.f32 %v1136, %v1261
        %v1286 = vadd.f32 %v1137, %v1262
        %v1287 = vadd.f32 %v1138, %v1263
        %v1288 = vadd.f32 %v1139, %v1264
        %v1289 = vadd.f32 %v793, %v1265
        %v1290 = vadd.f32 %v794, %v1266
        %v1291 = vadd.f32 %v795, %v1267
        %v1292 = vadd.f32 %v796, %v1268
        %v1293 = vadd.f32 %v797, %v1269
        %v1294 = vadd.f32 %v798, %v1270
        %v1295 = vadd.f32 %v799, %v1271
        %v1296 = vadd.f32 %v800, %v1272
        %v1297 = vadd.f32 %v801, %v1273
        %v1298 = vadd.f32 %v802, %v1274
        %v1299 = vadd.f32 %v803, %v1275
        %v1300 = vadd.f32 %v804, %v1276
        %v1301 = vadd.f32 %v805, %v1277
        %v1302 = vadd.f32 %v806, %v1278
        %v1303 = vadd.f32 %v807, %v1279
        %v1304 = vadd.f32 %v808, %v1280
        %v1305 = vadd.f32 %v809, %v1281
        %v1306 = vadd.f32 %v810, %v1282
        %v1307 = vadd.f32 %v811, %v1283
        %v1308 = vadd.f32 %v812, %v1284
        %v1309 = vadd.f32 %v813, %v1285
        %v1310 = vadd.f32 %v814, %v1286
        %v1311 = vadd.f32 %v815, %v1287
        %v1312 = vadd.f32 %v816, %v1288
        %v1313 = vld [vmem:[%s342 + $0x2] sm:$0xff]
        %v1314 = vld [vmem:[%s342 + $0xa] sm:$0xf]
        %v1315 = vld [vmem:[%s342 + $0x12] sm:$0xff]
        %v1316 = vld [vmem:[%s342 + $0x1a] sm:$0xf]
        %v1317 = vld [vmem:[%s342 + $0x22] sm:$0xff]
        %v1318 = vld [vmem:[%s342 + $0x2a] sm:$0xf]
        %v1319 = vld [vmem:[%s342 + $0x32] sm:$0xff]
        %v1320 = vld [vmem:[%s342 + $0x3a] sm:$0xf]
        %v1321 = vld [vmem:[%s342 + $0x42] sm:$0xff]
        %v1322 = vld [vmem:[%s342 + $0x4a] sm:$0xf]
        %v1323 = vld [vmem:[%s342 + $0x52] sm:$0xff]
        %v1324 = vld [vmem:[%s342 + $0x5a] sm:$0xf]
        %v1325 = vld [vmem:[%s342 + $0x62] sm:$0xff]
        %v1326 = vld [vmem:[%s342 + $0x6a] sm:$0xf]
        %v1327 = vld [vmem:[%s342 + $0x72] sm:$0xff]
        %v1328 = vld [vmem:[%s342 + $0x7a] sm:$0xf]
        %v1329 = vld [vmem:[%s342 + $0x82] sm:$0xff]
        %v1330 = vld [vmem:[%s342 + $0x8a] sm:$0xf]
        %v1331 = vld [vmem:[%s342 + $0x92] sm:$0xff]
        %v1332 = vld [vmem:[%s342 + $0x9a] sm:$0xf]
        %v1333 = vld [vmem:[%s342 + $0xa2] sm:$0xff]
        %v1334 = vld [vmem:[%s342 + $0xaa] sm:$0xf]
        %v1335 = vld [vmem:[%s342 + $0xb2] sm:$0xff]
        %v1336 = vld [vmem:[%s342 + $0xba] sm:$0xf]
        %s1337 = scalar_lea.vmem %s1, 8
        %v1338 = vld [vmem:[%s1337] sm:$0x1]
        %1340 = vset.pattern.permute.xlu0 0
        %1341 = vperm.xlu0 %1340, %v1313
        %v1342 = vpop.permute.xlu0 %1341
        %1345 = vset.pattern.permute.xlu0 0
        %1346 = vperm.xlu0 %1345, %v1314
        %v1347 = vpop.permute.xlu0 %1346
        %1350 = vset.pattern.permute.xlu0 0
        %1351 = vperm.xlu0 %1350, %v1315
        %v1352 = vpop.permute.xlu0 %1351
        %1355 = vset.pattern.permute.xlu0 0
        %1356 = vperm.xlu0 %1355, %v1316
        %v1357 = vpop.permute.xlu0 %1356
        %1360 = vset.pattern.permute.xlu0 0
        %1361 = vperm.xlu0 %1360, %v1317
        %v1362 = vpop.permute.xlu0 %1361
        %1365 = vset.pattern.permute.xlu0 0
        %1366 = vperm.xlu0 %1365, %v1318
        %v1367 = vpop.permute.xlu0 %1366
        %1370 = vset.pattern.permute.xlu0 0
        %1371 = vperm.xlu0 %1370, %v1319
        %v1372 = vpop.permute.xlu0 %1371
        %1375 = vset.pattern.permute.xlu0 0
        %1376 = vperm.xlu0 %1375, %v1320
        %v1377 = vpop.permute.xlu0 %1376
        %1380 = vset.pattern.permute.xlu0 0
        %1381 = vperm.xlu0 %1380, %v1321
        %v1382 = vpop.permute.xlu0 %1381
        %1385 = vset.pattern.permute.xlu0 0
        %1386 = vperm.xlu0 %1385, %v1322
        %v1387 = vpop.permute.xlu0 %1386
        %1390 = vset.pattern.permute.xlu0 0
        %1391 = vperm.xlu0 %1390, %v1323
        %v1392 = vpop.permute.xlu0 %1391
        %1395 = vset.pattern.permute.xlu0 0
        %1396 = vperm.xlu0 %1395, %v1324
        %v1397 = vpop.permute.xlu0 %1396
        %1400 = vset.pattern.permute.xlu0 0
        %1401 = vperm.xlu0 %1400, %v1325
        %v1402 = vpop.permute.xlu0 %1401
        %1405 = vset.pattern.permute.xlu0 0
        %1406 = vperm.xlu0 %1405, %v1326
        %v1407 = vpop.permute.xlu0 %1406
        %1410 = vset.pattern.permute.xlu0 0
        %1411 = vperm.xlu0 %1410, %v1327
        %v1412 = vpop.permute.xlu0 %1411
        %1415 = vset.pattern.permute.xlu0 0
        %1416 = vperm.xlu0 %1415, %v1328
        %v1417 = vpop.permute.xlu0 %1416
        %1420 = vset.pattern.permute.xlu0 0
        %1421 = vperm.xlu0 %1420, %v1329
        %v1422 = vpop.permute.xlu0 %1421
        %1425 = vset.pattern.permute.xlu0 0
        %1426 = vperm.xlu0 %1425, %v1330
        %v1427 = vpop.permute.xlu0 %1426
        %1430 = vset.pattern.permute.xlu0 0
        %1431 = vperm.xlu0 %1430, %v1331
        %v1432 = vpop.permute.xlu0 %1431
        %1435 = vset.pattern.permute.xlu0 0
        %1436 = vperm.xlu0 %1435, %v1332
        %v1437 = vpop.permute.xlu0 %1436
        %1440 = vset.pattern.permute.xlu0 0
        %1441 = vperm.xlu0 %1440, %v1333
        %v1442 = vpop.permute.xlu0 %1441
        %1445 = vset.pattern.permute.xlu0 0
        %1446 = vperm.xlu0 %1445, %v1334
        %v1447 = vpop.permute.xlu0 %1446
        %1450 = vset.pattern.permute.xlu0 0
        %1451 = vperm.xlu0 %1450, %v1335
        %v1452 = vpop.permute.xlu0 %1451
        %1455 = vset.pattern.permute.xlu0 0
        %1456 = vperm.xlu0 %1455, %v1336
        %v1457 = vpop.permute.xlu0 %1456
        %v1459 = vlaneseq
        %v1460 = vshrl.u32 %v1459, 7
        %v1461 = vsub.s32 0, %v1460
        %v1462 = vrot.slane %v1338, %v1461
        %v1463 = vmul.f32 %v1342, %v1462
        %v1464 = vmul.f32 %v1347, %v1462
        %v1465 = vmul.f32 %v1352, %v1462
        %v1466 = vmul.f32 %v1357, %v1462
        %v1467 = vmul.f32 %v1362, %v1462
        %v1468 = vmul.f32 %v1367, %v1462
        %v1469 = vmul.f32 %v1372, %v1462
        %v1470 = vmul.f32 %v1377, %v1462
        %v1471 = vmul.f32 %v1382, %v1462
        %v1472 = vmul.f32 %v1387, %v1462
        %v1473 = vmul.f32 %v1392, %v1462
        %v1474 = vmul.f32 %v1397, %v1462
        %v1475 = vmul.f32 %v1402, %v1462
        %v1476 = vmul.f32 %v1407, %v1462
        %v1477 = vmul.f32 %v1412, %v1462
        %v1478 = vmul.f32 %v1417, %v1462
        %v1479 = vmul.f32 %v1422, %v1462
        %v1480 = vmul.f32 %v1427, %v1462
        %v1481 = vmul.f32 %v1432, %v1462
        %v1482 = vmul.f32 %v1437, %v1462
        %v1483 = vmul.f32 %v1442, %v1462
        %v1484 = vmul.f32 %v1447, %v1462
        %v1485 = vmul.f32 %v1452, %v1462
        %v1486 = vmul.f32 %v1457, %v1462
        %v1487 = vld [vmem:[%s1337 + $0x1] sm:$0x1]
        %1488 = vset.pattern.permute.xlu0 1
        %1489 = vperm.xlu0 %1488, %v1313
        %v1490 = vpop.permute.xlu0 %1489
        %1492 = vset.pattern.permute.xlu0 1
        %1493 = vperm.xlu0 %1492, %v1314
        %v1494 = vpop.permute.xlu0 %1493
        %1496 = vset.pattern.permute.xlu0 1
        %1497 = vperm.xlu0 %1496, %v1315
        %v1498 = vpop.permute.xlu0 %1497
        %1500 = vset.pattern.permute.xlu0 1
        %1501 = vperm.xlu0 %1500, %v1316
        %v1502 = vpop.permute.xlu0 %1501
        %1504 = vset.pattern.permute.xlu0 1
        %1505 = vperm.xlu0 %1504, %v1317
        %v1506 = vpop.permute.xlu0 %1505
        %1508 = vset.pattern.permute.xlu0 1
        %1509 = vperm.xlu0 %1508, %v1318
        %v1510 = vpop.permute.xlu0 %1509
        %1512 = vset.pattern.permute.xlu0 1
        %1513 = vperm.xlu0 %1512, %v1319
        %v1514 = vpop.permute.xlu0 %1513
        %1516 = vset.pattern.permute.xlu0 1
        %1517 = vperm.xlu0 %1516, %v1320
        %v1518 = vpop.permute.xlu0 %1517
        %1520 = vset.pattern.permute.xlu0 1
        %1521 = vperm.xlu0 %1520, %v1321
        %v1522 = vpop.permute.xlu0 %1521
        %1524 = vset.pattern.permute.xlu0 1
        %1525 = vperm.xlu0 %1524, %v1322
        %v1526 = vpop.permute.xlu0 %1525
        %1528 = vset.pattern.permute.xlu0 1
        %1529 = vperm.xlu0 %1528, %v1323
        %v1530 = vpop.permute.xlu0 %1529
        %1532 = vset.pattern.permute.xlu0 1
        %1533 = vperm.xlu0 %1532, %v1324
        %v1534 = vpop.permute.xlu0 %1533
        %1536 = vset.pattern.permute.xlu0 1
        %1537 = vperm.xlu0 %1536, %v1325
        %v1538 = vpop.permute.xlu0 %1537
        %1540 = vset.pattern.permute.xlu0 1
        %1541 = vperm.xlu0 %1540, %v1326
        %v1542 = vpop.permute.xlu0 %1541
        %1544 = vset.pattern.permute.xlu0 1
        %1545 = vperm.xlu0 %1544, %v1327
        %v1546 = vpop.permute.xlu0 %1545
        %1548 = vset.pattern.permute.xlu0 1
        %1549 = vperm.xlu0 %1548, %v1328
        %v1550 = vpop.permute.xlu0 %1549
        %1552 = vset.pattern.permute.xlu0 1
        %1553 = vperm.xlu0 %1552, %v1329
        %v1554 = vpop.permute.xlu0 %1553
        %1556 = vset.pattern.permute.xlu0 1
        %1557 = vperm.xlu0 %1556, %v1330
        %v1558 = vpop.permute.xlu0 %1557
        %1560 = vset.pattern.permute.xlu0 1
        %1561 = vperm.xlu0 %1560, %v1331
        %v1562 = vpop.permute.xlu0 %1561
        %1564 = vset.pattern.permute.xlu0 1
        %1565 = vperm.xlu0 %1564, %v1332
        %v1566 = vpop.permute.xlu0 %1565
        %1568 = vset.pattern.permute.xlu0 1
        %1569 = vperm.xlu0 %1568, %v1333
        %v1570 = vpop.permute.xlu0 %1569
        %1572 = vset.pattern.permute.xlu0 1
        %1573 = vperm.xlu0 %1572, %v1334
        %v1574 = vpop.permute.xlu0 %1573
        %1576 = vset.pattern.permute.xlu0 1
        %1577 = vperm.xlu0 %1576, %v1335
        %v1578 = vpop.permute.xlu0 %1577
        %1580 = vset.pattern.permute.xlu0 1
        %1581 = vperm.xlu0 %1580, %v1336
        %v1582 = vpop.permute.xlu0 %1581
        %v1584 = vlaneseq
        %v1585 = vshrl.u32 %v1584, 7
        %v1586 = vsub.s32 0, %v1585
        %v1587 = vrot.slane %v1487, %v1586
        %v1588 = vmul.f32 %v1490, %v1587
        %v1589 = vmul.f32 %v1494, %v1587
        %v1590 = vmul.f32 %v1498, %v1587
        %v1591 = vmul.f32 %v1502, %v1587
        %v1592 = vmul.f32 %v1506, %v1587
        %v1593 = vmul.f32 %v1510, %v1587
        %v1594 = vmul.f32 %v1514, %v1587
        %v1595 = vmul.f32 %v1518, %v1587
        %v1596 = vmul.f32 %v1522, %v1587
        %v1597 = vmul.f32 %v1526, %v1587
        %v1598 = vmul.f32 %v1530, %v1587
        %v1599 = vmul.f32 %v1534, %v1587
        %v1600 = vmul.f32 %v1538, %v1587
        %v1601 = vmul.f32 %v1542, %v1587
        %v1602 = vmul.f32 %v1546, %v1587
        %v1603 = vmul.f32 %v1550, %v1587
        %v1604 = vmul.f32 %v1554, %v1587
        %v1605 = vmul.f32 %v1558, %v1587
        %v1606 = vmul.f32 %v1562, %v1587
        %v1607 = vmul.f32 %v1566, %v1587
        %v1608 = vmul.f32 %v1570, %v1587
        %v1609 = vmul.f32 %v1574, %v1587
        %v1610 = vmul.f32 %v1578, %v1587
        %v1611 = vmul.f32 %v1582, %v1587
        %v1612 = vadd.f32 %v1463, %v1588
        %v1613 = vadd.f32 %v1464, %v1589
        %v1614 = vadd.f32 %v1465, %v1590
        %v1615 = vadd.f32 %v1466, %v1591
        %v1616 = vadd.f32 %v1467, %v1592
        %v1617 = vadd.f32 %v1468, %v1593
        %v1618 = vadd.f32 %v1469, %v1594
        %v1619 = vadd.f32 %v1470, %v1595
        %v1620 = vadd.f32 %v1471, %v1596
        %v1621 = vadd.f32 %v1472, %v1597
        %v1622 = vadd.f32 %v1473, %v1598
        %v1623 = vadd.f32 %v1474, %v1599
        %v1624 = vadd.f32 %v1475, %v1600
        %v1625 = vadd.f32 %v1476, %v1601
        %v1626 = vadd.f32 %v1477, %v1602
        %v1627 = vadd.f32 %v1478, %v1603
        %v1628 = vadd.f32 %v1479, %v1604
        %v1629 = vadd.f32 %v1480, %v1605
        %v1630 = vadd.f32 %v1481, %v1606
        %v1631 = vadd.f32 %v1482, %v1607
        %v1632 = vadd.f32 %v1483, %v1608
        %v1633 = vadd.f32 %v1484, %v1609
        %v1634 = vadd.f32 %v1485, %v1610
        %v1635 = vadd.f32 %v1486, %v1611
        %v1636 = vld [vmem:[%s1337 + $0x2] sm:$0x1]
        %1637 = vset.pattern.permute.xlu0 2
        %1638 = vperm.xlu0 %1637, %v1313
        %v1639 = vpop.permute.xlu0 %1638
        %1641 = vset.pattern.permute.xlu0 2
        %1642 = vperm.xlu0 %1641, %v1314
        %v1643 = vpop.permute.xlu0 %1642
        %1645 = vset.pattern.permute.xlu0 2
        %1646 = vperm.xlu0 %1645, %v1315
        %v1647 = vpop.permute.xlu0 %1646
        %1649 = vset.pattern.permute.xlu0 2
        %1650 = vperm.xlu0 %1649, %v1316
        %v1651 = vpop.permute.xlu0 %1650
        %1653 = vset.pattern.permute.xlu0 2
        %1654 = vperm.xlu0 %1653, %v1317
        %v1655 = vpop.permute.xlu0 %1654
        %1657 = vset.pattern.permute.xlu0 2
        %1658 = vperm.xlu0 %1657, %v1318
        %v1659 = vpop.permute.xlu0 %1658
        %1661 = vset.pattern.permute.xlu0 2
        %1662 = vperm.xlu0 %1661, %v1319
        %v1663 = vpop.permute.xlu0 %1662
        %1665 = vset.pattern.permute.xlu0 2
        %1666 = vperm.xlu0 %1665, %v1320
        %v1667 = vpop.permute.xlu0 %1666
        %1669 = vset.pattern.permute.xlu0 2
        %1670 = vperm.xlu0 %1669, %v1321
        %v1671 = vpop.permute.xlu0 %1670
        %1673 = vset.pattern.permute.xlu0 2
        %1674 = vperm.xlu0 %1673, %v1322
        %v1675 = vpop.permute.xlu0 %1674
        %1677 = vset.pattern.permute.xlu0 2
        %1678 = vperm.xlu0 %1677, %v1323
        %v1679 = vpop.permute.xlu0 %1678
        %1681 = vset.pattern.permute.xlu0 2
        %1682 = vperm.xlu0 %1681, %v1324
        %v1683 = vpop.permute.xlu0 %1682
        %1685 = vset.pattern.permute.xlu0 2
        %1686 = vperm.xlu0 %1685, %v1325
        %v1687 = vpop.permute.xlu0 %1686
        %1689 = vset.pattern.permute.xlu0 2
        %1690 = vperm.xlu0 %1689, %v1326
        %v1691 = vpop.permute.xlu0 %1690
        %1693 = vset.pattern.permute.xlu0 2
        %1694 = vperm.xlu0 %1693, %v1327
        %v1695 = vpop.permute.xlu0 %1694
        %1697 = vset.pattern.permute.xlu0 2
        %1698 = vperm.xlu0 %1697, %v1328
        %v1699 = vpop.permute.xlu0 %1698
        %1701 = vset.pattern.permute.xlu0 2
        %1702 = vperm.xlu0 %1701, %v1329
        %v1703 = vpop.permute.xlu0 %1702
        %1705 = vset.pattern.permute.xlu0 2
        %1706 = vperm.xlu0 %1705, %v1330
        %v1707 = vpop.permute.xlu0 %1706
        %1709 = vset.pattern.permute.xlu0 2
        %1710 = vperm.xlu0 %1709, %v1331
        %v1711 = vpop.permute.xlu0 %1710
        %1713 = vset.pattern.permute.xlu0 2
        %1714 = vperm.xlu0 %1713, %v1332
        %v1715 = vpop.permute.xlu0 %1714
        %1717 = vset.pattern.permute.xlu0 2
        %1718 = vperm.xlu0 %1717, %v1333
        %v1719 = vpop.permute.xlu0 %1718
        %1721 = vset.pattern.permute.xlu0 2
        %1722 = vperm.xlu0 %1721, %v1334
        %v1723 = vpop.permute.xlu0 %1722
        %1725 = vset.pattern.permute.xlu0 2
        %1726 = vperm.xlu0 %1725, %v1335
        %v1727 = vpop.permute.xlu0 %1726
        %1729 = vset.pattern.permute.xlu0 2
        %1730 = vperm.xlu0 %1729, %v1336
        %v1731 = vpop.permute.xlu0 %1730
        %v1733 = vlaneseq
        %v1734 = vshrl.u32 %v1733, 7
        %v1735 = vsub.s32 0, %v1734
        %v1736 = vrot.slane %v1636, %v1735
        %v1737 = vmul.f32 %v1639, %v1736
        %v1738 = vmul.f32 %v1643, %v1736
        %v1739 = vmul.f32 %v1647, %v1736
        %v1740 = vmul.f32 %v1651, %v1736
        %v1741 = vmul.f32 %v1655, %v1736
        %v1742 = vmul.f32 %v1659, %v1736
        %v1743 = vmul.f32 %v1663, %v1736
        %v1744 = vmul.f32 %v1667, %v1736
        %v1745 = vmul.f32 %v1671, %v1736
        %v1746 = vmul.f32 %v1675, %v1736
        %v1747 = vmul.f32 %v1679, %v1736
        %v1748 = vmul.f32 %v1683, %v1736
        %v1749 = vmul.f32 %v1687, %v1736
        %v1750 = vmul.f32 %v1691, %v1736
        %v1751 = vmul.f32 %v1695, %v1736
        %v1752 = vmul.f32 %v1699, %v1736
        %v1753 = vmul.f32 %v1703, %v1736
        %v1754 = vmul.f32 %v1707, %v1736
        %v1755 = vmul.f32 %v1711, %v1736
        %v1756 = vmul.f32 %v1715, %v1736
        %v1757 = vmul.f32 %v1719, %v1736
        %v1758 = vmul.f32 %v1723, %v1736
        %v1759 = vmul.f32 %v1727, %v1736
        %v1760 = vmul.f32 %v1731, %v1736
        %v1761 = vadd.f32 %v1612, %v1737
        %v1762 = vadd.f32 %v1613, %v1738
        %v1763 = vadd.f32 %v1614, %v1739
        %v1764 = vadd.f32 %v1615, %v1740
        %v1765 = vadd.f32 %v1616, %v1741
        %v1766 = vadd.f32 %v1617, %v1742
        %v1767 = vadd.f32 %v1618, %v1743
        %v1768 = vadd.f32 %v1619, %v1744
        %v1769 = vadd.f32 %v1620, %v1745
        %v1770 = vadd.f32 %v1621, %v1746
        %v1771 = vadd.f32 %v1622, %v1747
        %v1772 = vadd.f32 %v1623, %v1748
        %v1773 = vadd.f32 %v1624, %v1749
        %v1774 = vadd.f32 %v1625, %v1750
        %v1775 = vadd.f32 %v1626, %v1751
        %v1776 = vadd.f32 %v1627, %v1752
        %v1777 = vadd.f32 %v1628, %v1753
        %v1778 = vadd.f32 %v1629, %v1754
        %v1779 = vadd.f32 %v1630, %v1755
        %v1780 = vadd.f32 %v1631, %v1756
        %v1781 = vadd.f32 %v1632, %v1757
        %v1782 = vadd.f32 %v1633, %v1758
        %v1783 = vadd.f32 %v1634, %v1759
        %v1784 = vadd.f32 %v1635, %v1760
        %v1785 = vadd.f32 %v1289, %v1761
        %v1786 = vadd.f32 %v1290, %v1762
        %v1787 = vadd.f32 %v1291, %v1763
        %v1788 = vadd.f32 %v1292, %v1764
        %v1789 = vadd.f32 %v1293, %v1765
        %v1790 = vadd.f32 %v1294, %v1766
        %v1791 = vadd.f32 %v1295, %v1767
        %v1792 = vadd.f32 %v1296, %v1768
        %v1793 = vadd.f32 %v1297, %v1769
        %v1794 = vadd.f32 %v1298, %v1770
        %v1795 = vadd.f32 %v1299, %v1771
        %v1796 = vadd.f32 %v1300, %v1772
        %v1797 = vadd.f32 %v1301, %v1773
        %v1798 = vadd.f32 %v1302, %v1774
        %v1799 = vadd.f32 %v1303, %v1775
        %v1800 = vadd.f32 %v1304, %v1776
        %v1801 = vadd.f32 %v1305, %v1777
        %v1802 = vadd.f32 %v1306, %v1778
        %v1803 = vadd.f32 %v1307, %v1779
        %v1804 = vadd.f32 %v1308, %v1780
        %v1805 = vadd.f32 %v1309, %v1781
        %v1806 = vadd.f32 %v1310, %v1782
        %v1807 = vadd.f32 %v1311, %v1783
        %v1808 = vadd.f32 %v1312, %v1784
        %s1809 = scalar_lea.vmem %s342, 16
        %v1810 = vld [vmem:[%s1809] sm:$0xff]
        %v1811 = vld [vmem:[%s1809 + $0x8] sm:$0xf]
        %v1812 = vld [vmem:[%s1809 + $0x10] sm:$0xff]
        %v1813 = vld [vmem:[%s1809 + $0x18] sm:$0xf]
        %v1814 = vld [vmem:[%s1809 + $0x20] sm:$0xff]
        %v1815 = vld [vmem:[%s1809 + $0x28] sm:$0xf]
        %v1816 = vld [vmem:[%s1809 + $0x30] sm:$0xff]
        %v1817 = vld [vmem:[%s1809 + $0x38] sm:$0xf]
        %v1818 = vld [vmem:[%s1809 + $0x40] sm:$0xff]
        %v1819 = vld [vmem:[%s1809 + $0x48] sm:$0xf]
        %v1820 = vld [vmem:[%s1809 + $0x50] sm:$0xff]
        %v1821 = vld [vmem:[%s1809 + $0x58] sm:$0xf]
        %v1822 = vld [vmem:[%s1809 + $0x60] sm:$0xff]
        %v1823 = vld [vmem:[%s1809 + $0x68] sm:$0xf]
        %v1824 = vld [vmem:[%s1809 + $0x70] sm:$0xff]
        %v1825 = vld [vmem:[%s1809 + $0x78] sm:$0xf]
        %v1826 = vld [vmem:[%s1809 + $0x80] sm:$0xff]
        %v1827 = vld [vmem:[%s1809 + $0x88] sm:$0xf]
        %v1828 = vld [vmem:[%s1809 + $0x90] sm:$0xff]
        %v1829 = vld [vmem:[%s1809 + $0x98] sm:$0xf]
        %v1830 = vld [vmem:[%s1809 + $0xa0] sm:$0xff]
        %v1831 = vld [vmem:[%s1809 + $0xa8] sm:$0xf]
        %v1832 = vld [vmem:[%s1809 + $0xb0] sm:$0xff]
        %v1833 = vld [vmem:[%s1809 + $0xb8] sm:$0xf]
        %s1834 = scalar_lea.vmem %s1, 12
        %v1835 = vld [vmem:[%s1834] sm:$0x1]
        %1837 = vset.pattern.permute.xlu0 0
        %1838 = vperm.xlu0 %1837, %v1810
        %v1839 = vpop.permute.xlu0 %1838
        %1842 = vset.pattern.permute.xlu0 0
        %1843 = vperm.xlu0 %1842, %v1811
        %v1844 = vpop.permute.xlu0 %1843
        %1847 = vset.pattern.permute.xlu0 0
        %1848 = vperm.xlu0 %1847, %v1812
        %v1849 = vpop.permute.xlu0 %1848
        %1852 = vset.pattern.permute.xlu0 0
        %1853 = vperm.xlu0 %1852, %v1813
        %v1854 = vpop.permute.xlu0 %1853
        %1857 = vset.pattern.permute.xlu0 0
        %1858 = vperm.xlu0 %1857, %v1814
        %v1859 = vpop.permute.xlu0 %1858
        %1862 = vset.pattern.permute.xlu0 0
        %1863 = vperm.xlu0 %1862, %v1815
        %v1864 = vpop.permute.xlu0 %1863
        %1867 = vset.pattern.permute.xlu0 0
        %1868 = vperm.xlu0 %1867, %v1816
        %v1869 = vpop.permute.xlu0 %1868
        %1872 = vset.pattern.permute.xlu0 0
        %1873 = vperm.xlu0 %1872, %v1817
        %v1874 = vpop.permute.xlu0 %1873
        %1877 = vset.pattern.permute.xlu0 0
        %1878 = vperm.xlu0 %1877, %v1818
        %v1879 = vpop.permute.xlu0 %1878
        %1882 = vset.pattern.permute.xlu0 0
        %1883 = vperm.xlu0 %1882, %v1819
        %v1884 = vpop.permute.xlu0 %1883
        %1887 = vset.pattern.permute.xlu0 0
        %1888 = vperm.xlu0 %1887, %v1820
        %v1889 = vpop.permute.xlu0 %1888
        %1892 = vset.pattern.permute.xlu0 0
        %1893 = vperm.xlu0 %1892, %v1821
        %v1894 = vpop.permute.xlu0 %1893
        %1897 = vset.pattern.permute.xlu0 0
        %1898 = vperm.xlu0 %1897, %v1822
        %v1899 = vpop.permute.xlu0 %1898
        %1902 = vset.pattern.permute.xlu0 0
        %1903 = vperm.xlu0 %1902, %v1823
        %v1904 = vpop.permute.xlu0 %1903
        %1907 = vset.pattern.permute.xlu0 0
        %1908 = vperm.xlu0 %1907, %v1824
        %v1909 = vpop.permute.xlu0 %1908
        %1912 = vset.pattern.permute.xlu0 0
        %1913 = vperm.xlu0 %1912, %v1825
        %v1914 = vpop.permute.xlu0 %1913
        %1917 = vset.pattern.permute.xlu0 0
        %1918 = vperm.xlu0 %1917, %v1826
        %v1919 = vpop.permute.xlu0 %1918
        %1922 = vset.pattern.permute.xlu0 0
        %1923 = vperm.xlu0 %1922, %v1827
        %v1924 = vpop.permute.xlu0 %1923
        %1927 = vset.pattern.permute.xlu0 0
        %1928 = vperm.xlu0 %1927, %v1828
        %v1929 = vpop.permute.xlu0 %1928
        %1932 = vset.pattern.permute.xlu0 0
        %1933 = vperm.xlu0 %1932, %v1829
        %v1934 = vpop.permute.xlu0 %1933
        %1937 = vset.pattern.permute.xlu0 0
        %1938 = vperm.xlu0 %1937, %v1830
        %v1939 = vpop.permute.xlu0 %1938
        %1942 = vset.pattern.permute.xlu0 0
        %1943 = vperm.xlu0 %1942, %v1831
        %v1944 = vpop.permute.xlu0 %1943
        %1947 = vset.pattern.permute.xlu0 0
        %1948 = vperm.xlu0 %1947, %v1832
        %v1949 = vpop.permute.xlu0 %1948
        %1952 = vset.pattern.permute.xlu0 0
        %1953 = vperm.xlu0 %1952, %v1833
        %v1954 = vpop.permute.xlu0 %1953
        %v1956 = vlaneseq
        %v1957 = vshrl.u32 %v1956, 7
        %v1958 = vsub.s32 0, %v1957
        %v1959 = vrot.slane %v1835, %v1958
        %v1960 = vmul.f32 %v1839, %v1959
        %v1961 = vmul.f32 %v1844, %v1959
        %v1962 = vmul.f32 %v1849, %v1959
        %v1963 = vmul.f32 %v1854, %v1959
        %v1964 = vmul.f32 %v1859, %v1959
        %v1965 = vmul.f32 %v1864, %v1959
        %v1966 = vmul.f32 %v1869, %v1959
        %v1967 = vmul.f32 %v1874, %v1959
        %v1968 = vmul.f32 %v1879, %v1959
        %v1969 = vmul.f32 %v1884, %v1959
        %v1970 = vmul.f32 %v1889, %v1959
        %v1971 = vmul.f32 %v1894, %v1959
        %v1972 = vmul.f32 %v1899, %v1959
        %v1973 = vmul.f32 %v1904, %v1959
        %v1974 = vmul.f32 %v1909, %v1959
        %v1975 = vmul.f32 %v1914, %v1959
        %v1976 = vmul.f32 %v1919, %v1959
        %v1977 = vmul.f32 %v1924, %v1959
        %v1978 = vmul.f32 %v1929, %v1959
        %v1979 = vmul.f32 %v1934, %v1959
        %v1980 = vmul.f32 %v1939, %v1959
        %v1981 = vmul.f32 %v1944, %v1959
        %v1982 = vmul.f32 %v1949, %v1959
        %v1983 = vmul.f32 %v1954, %v1959
        %v1984 = vld [vmem:[%s1834 + $0x1] sm:$0x1]
        %1985 = vset.pattern.permute.xlu0 1
        %1986 = vperm.xlu0 %1985, %v1810
        %v1987 = vpop.permute.xlu0 %1986
        %1989 = vset.pattern.permute.xlu0 1
        %1990 = vperm.xlu0 %1989, %v1811
        %v1991 = vpop.permute.xlu0 %1990
        %1993 = vset.pattern.permute.xlu0 1
        %1994 = vperm.xlu0 %1993, %v1812
        %v1995 = vpop.permute.xlu0 %1994
        %1997 = vset.pattern.permute.xlu0 1
        %1998 = vperm.xlu0 %1997, %v1813
        %v1999 = vpop.permute.xlu0 %1998
        %2001 = vset.pattern.permute.xlu0 1
        %2002 = vperm.xlu0 %2001, %v1814
        %v2003 = vpop.permute.xlu0 %2002
        %2005 = vset.pattern.permute.xlu0 1
        %2006 = vperm.xlu0 %2005, %v1815
        %v2007 = vpop.permute.xlu0 %2006
        %2009 = vset.pattern.permute.xlu0 1
        %2010 = vperm.xlu0 %2009, %v1816
        %v2011 = vpop.permute.xlu0 %2010
        %2013 = vset.pattern.permute.xlu0 1
        %2014 = vperm.xlu0 %2013, %v1817
        %v2015 = vpop.permute.xlu0 %2014
        %2017 = vset.pattern.permute.xlu0 1
        %2018 = vperm.xlu0 %2017, %v1818
        %v2019 = vpop.permute.xlu0 %2018
        %2021 = vset.pattern.permute.xlu0 1
        %2022 = vperm.xlu0 %2021, %v1819
        %v2023 = vpop.permute.xlu0 %2022
        %2025 = vset.pattern.permute.xlu0 1
        %2026 = vperm.xlu0 %2025, %v1820
        %v2027 = vpop.permute.xlu0 %2026
        %2029 = vset.pattern.permute.xlu0 1
        %2030 = vperm.xlu0 %2029, %v1821
        %v2031 = vpop.permute.xlu0 %2030
        %2033 = vset.pattern.permute.xlu0 1
        %2034 = vperm.xlu0 %2033, %v1822
        %v2035 = vpop.permute.xlu0 %2034
        %2037 = vset.pattern.permute.xlu0 1
        %2038 = vperm.xlu0 %2037, %v1823
        %v2039 = vpop.permute.xlu0 %2038
        %2041 = vset.pattern.permute.xlu0 1
        %2042 = vperm.xlu0 %2041, %v1824
        %v2043 = vpop.permute.xlu0 %2042
        %2045 = vset.pattern.permute.xlu0 1
        %2046 = vperm.xlu0 %2045, %v1825
        %v2047 = vpop.permute.xlu0 %2046
        %2049 = vset.pattern.permute.xlu0 1
        %2050 = vperm.xlu0 %2049, %v1826
        %v2051 = vpop.permute.xlu0 %2050
        %2053 = vset.pattern.permute.xlu0 1
        %2054 = vperm.xlu0 %2053, %v1827
        %v2055 = vpop.permute.xlu0 %2054
        %2057 = vset.pattern.permute.xlu0 1
        %2058 = vperm.xlu0 %2057, %v1828
        %v2059 = vpop.permute.xlu0 %2058
        %2061 = vset.pattern.permute.xlu0 1
        %2062 = vperm.xlu0 %2061, %v1829
        %v2063 = vpop.permute.xlu0 %2062
        %2065 = vset.pattern.permute.xlu0 1
        %2066 = vperm.xlu0 %2065, %v1830
        %v2067 = vpop.permute.xlu0 %2066
        %2069 = vset.pattern.permute.xlu0 1
        %2070 = vperm.xlu0 %2069, %v1831
        %v2071 = vpop.permute.xlu0 %2070
        %2073 = vset.pattern.permute.xlu0 1
        %2074 = vperm.xlu0 %2073, %v1832
        %v2075 = vpop.permute.xlu0 %2074
        %2077 = vset.pattern.permute.xlu0 1
        %2078 = vperm.xlu0 %2077, %v1833
        %v2079 = vpop.permute.xlu0 %2078
        %v2081 = vlaneseq
        %v2082 = vshrl.u32 %v2081, 7
        %v2083 = vsub.s32 0, %v2082
        %v2084 = vrot.slane %v1984, %v2083
        %v2085 = vmul.f32 %v1987, %v2084
        %v2086 = vmul.f32 %v1991, %v2084
        %v2087 = vmul.f32 %v1995, %v2084
        %v2088 = vmul.f32 %v1999, %v2084
        %v2089 = vmul.f32 %v2003, %v2084
        %v2090 = vmul.f32 %v2007, %v2084
        %v2091 = vmul.f32 %v2011, %v2084
        %v2092 = vmul.f32 %v2015, %v2084
        %v2093 = vmul.f32 %v2019, %v2084
        %v2094 = vmul.f32 %v2023, %v2084
        %v2095 = vmul.f32 %v2027, %v2084
        %v2096 = vmul.f32 %v2031, %v2084
        %v2097 = vmul.f32 %v2035, %v2084
        %v2098 = vmul.f32 %v2039, %v2084
        %v2099 = vmul.f32 %v2043, %v2084
        %v2100 = vmul.f32 %v2047, %v2084
        %v2101 = vmul.f32 %v2051, %v2084
        %v2102 = vmul.f32 %v2055, %v2084
        %v2103 = vmul.f32 %v2059, %v2084
        %v2104 = vmul.f32 %v2063, %v2084
        %v2105 = vmul.f32 %v2067, %v2084
        %v2106 = vmul.f32 %v2071, %v2084
        %v2107 = vmul.f32 %v2075, %v2084
        %v2108 = vmul.f32 %v2079, %v2084
        %v2109 = vadd.f32 %v1960, %v2085
        %v2110 = vadd.f32 %v1961, %v2086
        %v2111 = vadd.f32 %v1962, %v2087
        %v2112 = vadd.f32 %v1963, %v2088
        %v2113 = vadd.f32 %v1964, %v2089
        %v2114 = vadd.f32 %v1965, %v2090
        %v2115 = vadd.f32 %v1966, %v2091
        %v2116 = vadd.f32 %v1967, %v2092
        %v2117 = vadd.f32 %v1968, %v2093
        %v2118 = vadd.f32 %v1969, %v2094
        %v2119 = vadd.f32 %v1970, %v2095
        %v2120 = vadd.f32 %v1971, %v2096
        %v2121 = vadd.f32 %v1972, %v2097
        %v2122 = vadd.f32 %v1973, %v2098
        %v2123 = vadd.f32 %v1974, %v2099
        %v2124 = vadd.f32 %v1975, %v2100
        %v2125 = vadd.f32 %v1976, %v2101
        %v2126 = vadd.f32 %v1977, %v2102
        %v2127 = vadd.f32 %v1978, %v2103
        %v2128 = vadd.f32 %v1979, %v2104
        %v2129 = vadd.f32 %v1980, %v2105
        %v2130 = vadd.f32 %v1981, %v2106
        %v2131 = vadd.f32 %v1982, %v2107
        %v2132 = vadd.f32 %v1983, %v2108
        %v2133 = vld [vmem:[%s1834 + $0x2] sm:$0x1]
        %2134 = vset.pattern.permute.xlu0 2
        %2135 = vperm.xlu0 %2134, %v1810
        %v2136 = vpop.permute.xlu0 %2135
        %2138 = vset.pattern.permute.xlu0 2
        %2139 = vperm.xlu0 %2138, %v1811
        %v2140 = vpop.permute.xlu0 %2139
        %2142 = vset.pattern.permute.xlu0 2
        %2143 = vperm.xlu0 %2142, %v1812
        %v2144 = vpop.permute.xlu0 %2143
        %2146 = vset.pattern.permute.xlu0 2
        %2147 = vperm.xlu0 %2146, %v1813
        %v2148 = vpop.permute.xlu0 %2147
        %2150 = vset.pattern.permute.xlu0 2
        %2151 = vperm.xlu0 %2150, %v1814
        %v2152 = vpop.permute.xlu0 %2151
        %2154 = vset.pattern.permute.xlu0 2
        %2155 = vperm.xlu0 %2154, %v1815
        %v2156 = vpop.permute.xlu0 %2155
        %2158 = vset.pattern.permute.xlu0 2
        %2159 = vperm.xlu0 %2158, %v1816
        %v2160 = vpop.permute.xlu0 %2159
        %2162 = vset.pattern.permute.xlu0 2
        %2163 = vperm.xlu0 %2162, %v1817
        %v2164 = vpop.permute.xlu0 %2163
        %2166 = vset.pattern.permute.xlu0 2
        %2167 = vperm.xlu0 %2166, %v1818
        %v2168 = vpop.permute.xlu0 %2167
        %2170 = vset.pattern.permute.xlu0 2
        %2171 = vperm.xlu0 %2170, %v1819
        %v2172 = vpop.permute.xlu0 %2171
        %2174 = vset.pattern.permute.xlu0 2
        %2175 = vperm.xlu0 %2174, %v1820
        %v2176 = vpop.permute.xlu0 %2175
        %2178 = vset.pattern.permute.xlu0 2
        %2179 = vperm.xlu0 %2178, %v1821
        %v2180 = vpop.permute.xlu0 %2179
        %2182 = vset.pattern.permute.xlu0 2
        %2183 = vperm.xlu0 %2182, %v1822
        %v2184 = vpop.permute.xlu0 %2183
        %2186 = vset.pattern.permute.xlu0 2
        %2187 = vperm.xlu0 %2186, %v1823
        %v2188 = vpop.permute.xlu0 %2187
        %2190 = vset.pattern.permute.xlu0 2
        %2191 = vperm.xlu0 %2190, %v1824
        %v2192 = vpop.permute.xlu0 %2191
        %2194 = vset.pattern.permute.xlu0 2
        %2195 = vperm.xlu0 %2194, %v1825
        %v2196 = vpop.permute.xlu0 %2195
        %2198 = vset.pattern.permute.xlu0 2
        %2199 = vperm.xlu0 %2198, %v1826
        %v2200 = vpop.permute.xlu0 %2199
        %2202 = vset.pattern.permute.xlu0 2
        %2203 = vperm.xlu0 %2202, %v1827
        %v2204 = vpop.permute.xlu0 %2203
        %2206 = vset.pattern.permute.xlu0 2
        %2207 = vperm.xlu0 %2206, %v1828
        %v2208 = vpop.permute.xlu0 %2207
        %2210 = vset.pattern.permute.xlu0 2
        %2211 = vperm.xlu0 %2210, %v1829
        %v2212 = vpop.permute.xlu0 %2211
        %2214 = vset.pattern.permute.xlu0 2
        %2215 = vperm.xlu0 %2214, %v1830
        %v2216 = vpop.permute.xlu0 %2215
        %2218 = vset.pattern.permute.xlu0 2
        %2219 = vperm.xlu0 %2218, %v1831
        %v2220 = vpop.permute.xlu0 %2219
        %2222 = vset.pattern.permute.xlu0 2
        %2223 = vperm.xlu0 %2222, %v1832
        %v2224 = vpop.permute.xlu0 %2223
        %2226 = vset.pattern.permute.xlu0 2
        %2227 = vperm.xlu0 %2226, %v1833
        %v2228 = vpop.permute.xlu0 %2227
        %v2230 = vlaneseq
        %v2231 = vshrl.u32 %v2230, 7
        %v2232 = vsub.s32 0, %v2231
        %v2233 = vrot.slane %v2133, %v2232
        %v2234 = vmul.f32 %v2136, %v2233
        %v2235 = vmul.f32 %v2140, %v2233
        %v2236 = vmul.f32 %v2144, %v2233
        %v2237 = vmul.f32 %v2148, %v2233
        %v2238 = vmul.f32 %v2152, %v2233
        %v2239 = vmul.f32 %v2156, %v2233
        %v2240 = vmul.f32 %v2160, %v2233
        %v2241 = vmul.f32 %v2164, %v2233
        %v2242 = vmul.f32 %v2168, %v2233
        %v2243 = vmul.f32 %v2172, %v2233
        %v2244 = vmul.f32 %v2176, %v2233
        %v2245 = vmul.f32 %v2180, %v2233
        %v2246 = vmul.f32 %v2184, %v2233
        %v2247 = vmul.f32 %v2188, %v2233
        %v2248 = vmul.f32 %v2192, %v2233
        %v2249 = vmul.f32 %v2196, %v2233
        %v2250 = vmul.f32 %v2200, %v2233
        %v2251 = vmul.f32 %v2204, %v2233
        %v2252 = vmul.f32 %v2208, %v2233
        %v2253 = vmul.f32 %v2212, %v2233
        %v2254 = vmul.f32 %v2216, %v2233
        %v2255 = vmul.f32 %v2220, %v2233
        %v2256 = vmul.f32 %v2224, %v2233
        %v2257 = vmul.f32 %v2228, %v2233
        %v2258 = vadd.f32 %v2109, %v2234
        %v2259 = vadd.f32 %v2110, %v2235
        %v2260 = vadd.f32 %v2111, %v2236
        %v2261 = vadd.f32 %v2112, %v2237
        %v2262 = vadd.f32 %v2113, %v2238
        %v2263 = vadd.f32 %v2114, %v2239
        %v2264 = vadd.f32 %v2115, %v2240
        %v2265 = vadd.f32 %v2116, %v2241
        %v2266 = vadd.f32 %v2117, %v2242
        %v2267 = vadd.f32 %v2118, %v2243
        %v2268 = vadd.f32 %v2119, %v2244
        %v2269 = vadd.f32 %v2120, %v2245
        %v2270 = vadd.f32 %v2121, %v2246
        %v2271 = vadd.f32 %v2122, %v2247
        %v2272 = vadd.f32 %v2123, %v2248
        %v2273 = vadd.f32 %v2124, %v2249
        %v2274 = vadd.f32 %v2125, %v2250
        %v2275 = vadd.f32 %v2126, %v2251
        %v2276 = vadd.f32 %v2127, %v2252
        %v2277 = vadd.f32 %v2128, %v2253
        %v2278 = vadd.f32 %v2129, %v2254
        %v2279 = vadd.f32 %v2130, %v2255
        %v2280 = vadd.f32 %v2131, %v2256
        %v2281 = vadd.f32 %v2132, %v2257
        %v2282 = vadd.f32 %v1785, %v2258
        %v2283 = vadd.f32 %v1786, %v2259
        %v2284 = vadd.f32 %v1787, %v2260
        %v2285 = vadd.f32 %v1788, %v2261
        %v2286 = vadd.f32 %v1789, %v2262
        %v2287 = vadd.f32 %v1790, %v2263
        %v2288 = vadd.f32 %v1791, %v2264
        %v2289 = vadd.f32 %v1792, %v2265
        %v2290 = vadd.f32 %v1793, %v2266
        %v2291 = vadd.f32 %v1794, %v2267
        %v2292 = vadd.f32 %v1795, %v2268
        %v2293 = vadd.f32 %v1796, %v2269
        %v2294 = vadd.f32 %v1797, %v2270
        %v2295 = vadd.f32 %v1798, %v2271
        %v2296 = vadd.f32 %v1799, %v2272
        %v2297 = vadd.f32 %v1800, %v2273
        %v2298 = vadd.f32 %v1801, %v2274
        %v2299 = vadd.f32 %v1802, %v2275
        %v2300 = vadd.f32 %v1803, %v2276
        %v2301 = vadd.f32 %v1804, %v2277
        %v2302 = vadd.f32 %v1805, %v2278
        %v2303 = vadd.f32 %v1806, %v2279
        %v2304 = vadd.f32 %v1807, %v2280
        %v2305 = vadd.f32 %v1808, %v2281
        %v2306 = vld [vmem:[%s1809 + $0x1] sm:$0xff]
        %v2307 = vld [vmem:[%s1809 + $0x9] sm:$0xf]
        %v2308 = vld [vmem:[%s1809 + $0x11] sm:$0xff]
        %v2309 = vld [vmem:[%s1809 + $0x19] sm:$0xf]
        %v2310 = vld [vmem:[%s1809 + $0x21] sm:$0xff]
        %v2311 = vld [vmem:[%s1809 + $0x29] sm:$0xf]
        %v2312 = vld [vmem:[%s1809 + $0x31] sm:$0xff]
        %v2313 = vld [vmem:[%s1809 + $0x39] sm:$0xf]
        %v2314 = vld [vmem:[%s1809 + $0x41] sm:$0xff]
        %v2315 = vld [vmem:[%s1809 + $0x49] sm:$0xf]
        %v2316 = vld [vmem:[%s1809 + $0x51] sm:$0xff]
        %v2317 = vld [vmem:[%s1809 + $0x59] sm:$0xf]
        %v2318 = vld [vmem:[%s1809 + $0x61] sm:$0xff]
        %v2319 = vld [vmem:[%s1809 + $0x69] sm:$0xf]
        %v2320 = vld [vmem:[%s1809 + $0x71] sm:$0xff]
        %v2321 = vld [vmem:[%s1809 + $0x79] sm:$0xf]
        %v2322 = vld [vmem:[%s1809 + $0x81] sm:$0xff]
        %v2323 = vld [vmem:[%s1809 + $0x89] sm:$0xf]
        %v2324 = vld [vmem:[%s1809 + $0x91] sm:$0xff]
        %v2325 = vld [vmem:[%s1809 + $0x99] sm:$0xf]
        %v2326 = vld [vmem:[%s1809 + $0xa1] sm:$0xff]
        %v2327 = vld [vmem:[%s1809 + $0xa9] sm:$0xf]
        %v2328 = vld [vmem:[%s1809 + $0xb1] sm:$0xff]
        %v2329 = vld [vmem:[%s1809 + $0xb9] sm:$0xf]
        %s2330 = scalar_lea.vmem %s1, 16
        %v2331 = vld [vmem:[%s2330] sm:$0x1]
        %2333 = vset.pattern.permute.xlu0 0
        %2334 = vperm.xlu0 %2333, %v2306
        %v2335 = vpop.permute.xlu0 %2334
        %2338 = vset.pattern.permute.xlu0 0
        %2339 = vperm.xlu0 %2338, %v2307
        %v2340 = vpop.permute.xlu0 %2339
        %2343 = vset.pattern.permute.xlu0 0
        %2344 = vperm.xlu0 %2343, %v2308
        %v2345 = vpop.permute.xlu0 %2344
        %2348 = vset.pattern.permute.xlu0 0
        %2349 = vperm.xlu0 %2348, %v2309
        %v2350 = vpop.permute.xlu0 %2349
        %2353 = vset.pattern.permute.xlu0 0
        %2354 = vperm.xlu0 %2353, %v2310
        %v2355 = vpop.permute.xlu0 %2354
        %2358 = vset.pattern.permute.xlu0 0
        %2359 = vperm.xlu0 %2358, %v2311
        %v2360 = vpop.permute.xlu0 %2359
        %2363 = vset.pattern.permute.xlu0 0
        %2364 = vperm.xlu0 %2363, %v2312
        %v2365 = vpop.permute.xlu0 %2364
        %2368 = vset.pattern.permute.xlu0 0
        %2369 = vperm.xlu0 %2368, %v2313
        %v2370 = vpop.permute.xlu0 %2369
        %2373 = vset.pattern.permute.xlu0 0
        %2374 = vperm.xlu0 %2373, %v2314
        %v2375 = vpop.permute.xlu0 %2374
        %2378 = vset.pattern.permute.xlu0 0
        %2379 = vperm.xlu0 %2378, %v2315
        %v2380 = vpop.permute.xlu0 %2379
        %2383 = vset.pattern.permute.xlu0 0
        %2384 = vperm.xlu0 %2383, %v2316
        %v2385 = vpop.permute.xlu0 %2384
        %2388 = vset.pattern.permute.xlu0 0
        %2389 = vperm.xlu0 %2388, %v2317
        %v2390 = vpop.permute.xlu0 %2389
        %2393 = vset.pattern.permute.xlu0 0
        %2394 = vperm.xlu0 %2393, %v2318
        %v2395 = vpop.permute.xlu0 %2394
        %2398 = vset.pattern.permute.xlu0 0
        %2399 = vperm.xlu0 %2398, %v2319
        %v2400 = vpop.permute.xlu0 %2399
        %2403 = vset.pattern.permute.xlu0 0
        %2404 = vperm.xlu0 %2403, %v2320
        %v2405 = vpop.permute.xlu0 %2404
        %2408 = vset.pattern.permute.xlu0 0
        %2409 = vperm.xlu0 %2408, %v2321
        %v2410 = vpop.permute.xlu0 %2409
        %2413 = vset.pattern.permute.xlu0 0
        %2414 = vperm.xlu0 %2413, %v2322
        %v2415 = vpop.permute.xlu0 %2414
        %2418 = vset.pattern.permute.xlu0 0
        %2419 = vperm.xlu0 %2418, %v2323
        %v2420 = vpop.permute.xlu0 %2419
        %2423 = vset.pattern.permute.xlu0 0
        %2424 = vperm.xlu0 %2423, %v2324
        %v2425 = vpop.permute.xlu0 %2424
        %2428 = vset.pattern.permute.xlu0 0
        %2429 = vperm.xlu0 %2428, %v2325
        %v2430 = vpop.permute.xlu0 %2429
        %2433 = vset.pattern.permute.xlu0 0
        %2434 = vperm.xlu0 %2433, %v2326
        %v2435 = vpop.permute.xlu0 %2434
        %2438 = vset.pattern.permute.xlu0 0
        %2439 = vperm.xlu0 %2438, %v2327
        %v2440 = vpop.permute.xlu0 %2439
        %2443 = vset.pattern.permute.xlu0 0
        %2444 = vperm.xlu0 %2443, %v2328
        %v2445 = vpop.permute.xlu0 %2444
        %2448 = vset.pattern.permute.xlu0 0
        %2449 = vperm.xlu0 %2448, %v2329
        %v2450 = vpop.permute.xlu0 %2449
        %v2452 = vlaneseq
        %v2453 = vshrl.u32 %v2452, 7
        %v2454 = vsub.s32 0, %v2453
        %v2455 = vrot.slane %v2331, %v2454
        %v2456 = vmul.f32 %v2335, %v2455
        %v2457 = vmul.f32 %v2340, %v2455
        %v2458 = vmul.f32 %v2345, %v2455
        %v2459 = vmul.f32 %v2350, %v2455
        %v2460 = vmul.f32 %v2355, %v2455
        %v2461 = vmul.f32 %v2360, %v2455
        %v2462 = vmul.f32 %v2365, %v2455
        %v2463 = vmul.f32 %v2370, %v2455
        %v2464 = vmul.f32 %v2375, %v2455
        %v2465 = vmul.f32 %v2380, %v2455
        %v2466 = vmul.f32 %v2385, %v2455
        %v2467 = vmul.f32 %v2390, %v2455
        %v2468 = vmul.f32 %v2395, %v2455
        %v2469 = vmul.f32 %v2400, %v2455
        %v2470 = vmul.f32 %v2405, %v2455
        %v2471 = vmul.f32 %v2410, %v2455
        %v2472 = vmul.f32 %v2415, %v2455
        %v2473 = vmul.f32 %v2420, %v2455
        %v2474 = vmul.f32 %v2425, %v2455
        %v2475 = vmul.f32 %v2430, %v2455
        %v2476 = vmul.f32 %v2435, %v2455
        %v2477 = vmul.f32 %v2440, %v2455
        %v2478 = vmul.f32 %v2445, %v2455
        %v2479 = vmul.f32 %v2450, %v2455
        %v2480 = vld [vmem:[%s2330 + $0x1] sm:$0x1]
        %2481 = vset.pattern.permute.xlu0 1
        %2482 = vperm.xlu0 %2481, %v2306
        %v2483 = vpop.permute.xlu0 %2482
        %2485 = vset.pattern.permute.xlu0 1
        %2486 = vperm.xlu0 %2485, %v2307
        %v2487 = vpop.permute.xlu0 %2486
        %2489 = vset.pattern.permute.xlu0 1
        %2490 = vperm.xlu0 %2489, %v2308
        %v2491 = vpop.permute.xlu0 %2490
        %2493 = vset.pattern.permute.xlu0 1
        %2494 = vperm.xlu0 %2493, %v2309
        %v2495 = vpop.permute.xlu0 %2494
        %2497 = vset.pattern.permute.xlu0 1
        %2498 = vperm.xlu0 %2497, %v2310
        %v2499 = vpop.permute.xlu0 %2498
        %2501 = vset.pattern.permute.xlu0 1
        %2502 = vperm.xlu0 %2501, %v2311
        %v2503 = vpop.permute.xlu0 %2502
        %2505 = vset.pattern.permute.xlu0 1
        %2506 = vperm.xlu0 %2505, %v2312
        %v2507 = vpop.permute.xlu0 %2506
        %2509 = vset.pattern.permute.xlu0 1
        %2510 = vperm.xlu0 %2509, %v2313
        %v2511 = vpop.permute.xlu0 %2510
        %2513 = vset.pattern.permute.xlu0 1
        %2514 = vperm.xlu0 %2513, %v2314
        %v2515 = vpop.permute.xlu0 %2514
        %2517 = vset.pattern.permute.xlu0 1
        %2518 = vperm.xlu0 %2517, %v2315
        %v2519 = vpop.permute.xlu0 %2518
        %2521 = vset.pattern.permute.xlu0 1
        %2522 = vperm.xlu0 %2521, %v2316
        %v2523 = vpop.permute.xlu0 %2522
        %2525 = vset.pattern.permute.xlu0 1
        %2526 = vperm.xlu0 %2525, %v2317
        %v2527 = vpop.permute.xlu0 %2526
        %2529 = vset.pattern.permute.xlu0 1
        %2530 = vperm.xlu0 %2529, %v2318
        %v2531 = vpop.permute.xlu0 %2530
        %2533 = vset.pattern.permute.xlu0 1
        %2534 = vperm.xlu0 %2533, %v2319
        %v2535 = vpop.permute.xlu0 %2534
        %2537 = vset.pattern.permute.xlu0 1
        %2538 = vperm.xlu0 %2537, %v2320
        %v2539 = vpop.permute.xlu0 %2538
        %2541 = vset.pattern.permute.xlu0 1
        %2542 = vperm.xlu0 %2541, %v2321
        %v2543 = vpop.permute.xlu0 %2542
        %2545 = vset.pattern.permute.xlu0 1
        %2546 = vperm.xlu0 %2545, %v2322
        %v2547 = vpop.permute.xlu0 %2546
        %2549 = vset.pattern.permute.xlu0 1
        %2550 = vperm.xlu0 %2549, %v2323
        %v2551 = vpop.permute.xlu0 %2550
        %2553 = vset.pattern.permute.xlu0 1
        %2554 = vperm.xlu0 %2553, %v2324
        %v2555 = vpop.permute.xlu0 %2554
        %2557 = vset.pattern.permute.xlu0 1
        %2558 = vperm.xlu0 %2557, %v2325
        %v2559 = vpop.permute.xlu0 %2558
        %2561 = vset.pattern.permute.xlu0 1
        %2562 = vperm.xlu0 %2561, %v2326
        %v2563 = vpop.permute.xlu0 %2562
        %2565 = vset.pattern.permute.xlu0 1
        %2566 = vperm.xlu0 %2565, %v2327
        %v2567 = vpop.permute.xlu0 %2566
        %2569 = vset.pattern.permute.xlu0 1
        %2570 = vperm.xlu0 %2569, %v2328
        %v2571 = vpop.permute.xlu0 %2570
        %2573 = vset.pattern.permute.xlu0 1
        %2574 = vperm.xlu0 %2573, %v2329
        %v2575 = vpop.permute.xlu0 %2574
        %v2577 = vlaneseq
        %v2578 = vshrl.u32 %v2577, 7
        %v2579 = vsub.s32 0, %v2578
        %v2580 = vrot.slane %v2480, %v2579
        %v2581 = vmul.f32 %v2483, %v2580
        %v2582 = vmul.f32 %v2487, %v2580
        %v2583 = vmul.f32 %v2491, %v2580
        %v2584 = vmul.f32 %v2495, %v2580
        %v2585 = vmul.f32 %v2499, %v2580
        %v2586 = vmul.f32 %v2503, %v2580
        %v2587 = vmul.f32 %v2507, %v2580
        %v2588 = vmul.f32 %v2511, %v2580
        %v2589 = vmul.f32 %v2515, %v2580
        %v2590 = vmul.f32 %v2519, %v2580
        %v2591 = vmul.f32 %v2523, %v2580
        %v2592 = vmul.f32 %v2527, %v2580
        %v2593 = vmul.f32 %v2531, %v2580
        %v2594 = vmul.f32 %v2535, %v2580
        %v2595 = vmul.f32 %v2539, %v2580
        %v2596 = vmul.f32 %v2543, %v2580
        %v2597 = vmul.f32 %v2547, %v2580
        %v2598 = vmul.f32 %v2551, %v2580
        %v2599 = vmul.f32 %v2555, %v2580
        %v2600 = vmul.f32 %v2559, %v2580
        %v2601 = vmul.f32 %v2563, %v2580
        %v2602 = vmul.f32 %v2567, %v2580
        %v2603 = vmul.f32 %v2571, %v2580
        %v2604 = vmul.f32 %v2575, %v2580
        %v2605 = vadd.f32 %v2456, %v2581
        %v2606 = vadd.f32 %v2457, %v2582
        %v2607 = vadd.f32 %v2458, %v2583
        %v2608 = vadd.f32 %v2459, %v2584
        %v2609 = vadd.f32 %v2460, %v2585
        %v2610 = vadd.f32 %v2461, %v2586
        %v2611 = vadd.f32 %v2462, %v2587
        %v2612 = vadd.f32 %v2463, %v2588
        %v2613 = vadd.f32 %v2464, %v2589
        %v2614 = vadd.f32 %v2465, %v2590
        %v2615 = vadd.f32 %v2466, %v2591
        %v2616 = vadd.f32 %v2467, %v2592
        %v2617 = vadd.f32 %v2468, %v2593
        %v2618 = vadd.f32 %v2469, %v2594
        %v2619 = vadd.f32 %v2470, %v2595
        %v2620 = vadd.f32 %v2471, %v2596
        %v2621 = vadd.f32 %v2472, %v2597
        %v2622 = vadd.f32 %v2473, %v2598
        %v2623 = vadd.f32 %v2474, %v2599
        %v2624 = vadd.f32 %v2475, %v2600
        %v2625 = vadd.f32 %v2476, %v2601
        %v2626 = vadd.f32 %v2477, %v2602
        %v2627 = vadd.f32 %v2478, %v2603
        %v2628 = vadd.f32 %v2479, %v2604
        %v2629 = vld [vmem:[%s2330 + $0x2] sm:$0x1]
        %2630 = vset.pattern.permute.xlu0 2
        %2631 = vperm.xlu0 %2630, %v2306
        %v2632 = vpop.permute.xlu0 %2631
        %2634 = vset.pattern.permute.xlu0 2
        %2635 = vperm.xlu0 %2634, %v2307
        %v2636 = vpop.permute.xlu0 %2635
        %2638 = vset.pattern.permute.xlu0 2
        %2639 = vperm.xlu0 %2638, %v2308
        %v2640 = vpop.permute.xlu0 %2639
        %2642 = vset.pattern.permute.xlu0 2
        %2643 = vperm.xlu0 %2642, %v2309
        %v2644 = vpop.permute.xlu0 %2643
        %2646 = vset.pattern.permute.xlu0 2
        %2647 = vperm.xlu0 %2646, %v2310
        %v2648 = vpop.permute.xlu0 %2647
        %2650 = vset.pattern.permute.xlu0 2
        %2651 = vperm.xlu0 %2650, %v2311
        %v2652 = vpop.permute.xlu0 %2651
        %2654 = vset.pattern.permute.xlu0 2
        %2655 = vperm.xlu0 %2654, %v2312
        %v2656 = vpop.permute.xlu0 %2655
        %2658 = vset.pattern.permute.xlu0 2
        %2659 = vperm.xlu0 %2658, %v2313
        %v2660 = vpop.permute.xlu0 %2659
        %2662 = vset.pattern.permute.xlu0 2
        %2663 = vperm.xlu0 %2662, %v2314
        %v2664 = vpop.permute.xlu0 %2663
        %2666 = vset.pattern.permute.xlu0 2
        %2667 = vperm.xlu0 %2666, %v2315
        %v2668 = vpop.permute.xlu0 %2667
        %2670 = vset.pattern.permute.xlu0 2
        %2671 = vperm.xlu0 %2670, %v2316
        %v2672 = vpop.permute.xlu0 %2671
        %2674 = vset.pattern.permute.xlu0 2
        %2675 = vperm.xlu0 %2674, %v2317
        %v2676 = vpop.permute.xlu0 %2675
        %2678 = vset.pattern.permute.xlu0 2
        %2679 = vperm.xlu0 %2678, %v2318
        %v2680 = vpop.permute.xlu0 %2679
        %2682 = vset.pattern.permute.xlu0 2
        %2683 = vperm.xlu0 %2682, %v2319
        %v2684 = vpop.permute.xlu0 %2683
        %2686 = vset.pattern.permute.xlu0 2
        %2687 = vperm.xlu0 %2686, %v2320
        %v2688 = vpop.permute.xlu0 %2687
        %2690 = vset.pattern.permute.xlu0 2
        %2691 = vperm.xlu0 %2690, %v2321
        %v2692 = vpop.permute.xlu0 %2691
        %2694 = vset.pattern.permute.xlu0 2
        %2695 = vperm.xlu0 %2694, %v2322
        %v2696 = vpop.permute.xlu0 %2695
        %2698 = vset.pattern.permute.xlu0 2
        %2699 = vperm.xlu0 %2698, %v2323
        %v2700 = vpop.permute.xlu0 %2699
        %2702 = vset.pattern.permute.xlu0 2
        %2703 = vperm.xlu0 %2702, %v2324
        %v2704 = vpop.permute.xlu0 %2703
        %2706 = vset.pattern.permute.xlu0 2
        %2707 = vperm.xlu0 %2706, %v2325
        %v2708 = vpop.permute.xlu0 %2707
        %2710 = vset.pattern.permute.xlu0 2
        %2711 = vperm.xlu0 %2710, %v2326
        %v2712 = vpop.permute.xlu0 %2711
        %2714 = vset.pattern.permute.xlu0 2
        %2715 = vperm.xlu0 %2714, %v2327
        %v2716 = vpop.permute.xlu0 %2715
        %2718 = vset.pattern.permute.xlu0 2
        %2719 = vperm.xlu0 %2718, %v2328
        %v2720 = vpop.permute.xlu0 %2719
        %2722 = vset.pattern.permute.xlu0 2
        %2723 = vperm.xlu0 %2722, %v2329
        %v2724 = vpop.permute.xlu0 %2723
        %v2726 = vlaneseq
        %v2727 = vshrl.u32 %v2726, 7
        %v2728 = vsub.s32 0, %v2727
        %v2729 = vrot.slane %v2629, %v2728
        %v2730 = vmul.f32 %v2632, %v2729
        %v2731 = vmul.f32 %v2636, %v2729
        %v2732 = vmul.f32 %v2640, %v2729
        %v2733 = vmul.f32 %v2644, %v2729
        %v2734 = vmul.f32 %v2648, %v2729
        %v2735 = vmul.f32 %v2652, %v2729
        %v2736 = vmul.f32 %v2656, %v2729
        %v2737 = vmul.f32 %v2660, %v2729
        %v2738 = vmul.f32 %v2664, %v2729
        %v2739 = vmul.f32 %v2668, %v2729
        %v2740 = vmul.f32 %v2672, %v2729
        %v2741 = vmul.f32 %v2676, %v2729
        %v2742 = vmul.f32 %v2680, %v2729
        %v2743 = vmul.f32 %v2684, %v2729
        %v2744 = vmul.f32 %v2688, %v2729
        %v2745 = vmul.f32 %v2692, %v2729
        %v2746 = vmul.f32 %v2696, %v2729
        %v2747 = vmul.f32 %v2700, %v2729
        %v2748 = vmul.f32 %v2704, %v2729
        %v2749 = vmul.f32 %v2708, %v2729
        %v2750 = vmul.f32 %v2712, %v2729
        %v2751 = vmul.f32 %v2716, %v2729
        %v2752 = vmul.f32 %v2720, %v2729
        %v2753 = vmul.f32 %v2724, %v2729
        %v2754 = vadd.f32 %v2605, %v2730
        %v2755 = vadd.f32 %v2606, %v2731
        %v2756 = vadd.f32 %v2607, %v2732
        %v2757 = vadd.f32 %v2608, %v2733
        %v2758 = vadd.f32 %v2609, %v2734
        %v2759 = vadd.f32 %v2610, %v2735
        %v2760 = vadd.f32 %v2611, %v2736
        %v2761 = vadd.f32 %v2612, %v2737
        %v2762 = vadd.f32 %v2613, %v2738
        %v2763 = vadd.f32 %v2614, %v2739
        %v2764 = vadd.f32 %v2615, %v2740
        %v2765 = vadd.f32 %v2616, %v2741
        %v2766 = vadd.f32 %v2617, %v2742
        %v2767 = vadd.f32 %v2618, %v2743
        %v2768 = vadd.f32 %v2619, %v2744
        %v2769 = vadd.f32 %v2620, %v2745
        %v2770 = vadd.f32 %v2621, %v2746
        %v2771 = vadd.f32 %v2622, %v2747
        %v2772 = vadd.f32 %v2623, %v2748
        %v2773 = vadd.f32 %v2624, %v2749
        %v2774 = vadd.f32 %v2625, %v2750
        %v2775 = vadd.f32 %v2626, %v2751
        %v2776 = vadd.f32 %v2627, %v2752
        %v2777 = vadd.f32 %v2628, %v2753
        %v2778 = vadd.f32 %v2282, %v2754
        %v2779 = vadd.f32 %v2283, %v2755
        %v2780 = vadd.f32 %v2284, %v2756
        %v2781 = vadd.f32 %v2285, %v2757
        %v2782 = vadd.f32 %v2286, %v2758
        %v2783 = vadd.f32 %v2287, %v2759
        %v2784 = vadd.f32 %v2288, %v2760
        %v2785 = vadd.f32 %v2289, %v2761
        %v2786 = vadd.f32 %v2290, %v2762
        %v2787 = vadd.f32 %v2291, %v2763
        %v2788 = vadd.f32 %v2292, %v2764
        %v2789 = vadd.f32 %v2293, %v2765
        %v2790 = vadd.f32 %v2294, %v2766
        %v2791 = vadd.f32 %v2295, %v2767
        %v2792 = vadd.f32 %v2296, %v2768
        %v2793 = vadd.f32 %v2297, %v2769
        %v2794 = vadd.f32 %v2298, %v2770
        %v2795 = vadd.f32 %v2299, %v2771
        %v2796 = vadd.f32 %v2300, %v2772
        %v2797 = vadd.f32 %v2301, %v2773
        %v2798 = vadd.f32 %v2302, %v2774
        %v2799 = vadd.f32 %v2303, %v2775
        %v2800 = vadd.f32 %v2304, %v2776
        %v2801 = vadd.f32 %v2305, %v2777
        %v2802 = vld [vmem:[%s1809 + $0x2] sm:$0xff]
        %v2803 = vld [vmem:[%s1809 + $0xa] sm:$0xf]
        %v2804 = vld [vmem:[%s1809 + $0x12] sm:$0xff]
        %v2805 = vld [vmem:[%s1809 + $0x1a] sm:$0xf]
        %v2806 = vld [vmem:[%s1809 + $0x22] sm:$0xff]
        %v2807 = vld [vmem:[%s1809 + $0x2a] sm:$0xf]
        %v2808 = vld [vmem:[%s1809 + $0x32] sm:$0xff]
        %v2809 = vld [vmem:[%s1809 + $0x3a] sm:$0xf]
        %v2810 = vld [vmem:[%s1809 + $0x42] sm:$0xff]
        %v2811 = vld [vmem:[%s1809 + $0x4a] sm:$0xf]
        %v2812 = vld [vmem:[%s1809 + $0x52] sm:$0xff]
        %v2813 = vld [vmem:[%s1809 + $0x5a] sm:$0xf]
        %v2814 = vld [vmem:[%s1809 + $0x62] sm:$0xff]
        %v2815 = vld [vmem:[%s1809 + $0x6a] sm:$0xf]
        %v2816 = vld [vmem:[%s1809 + $0x72] sm:$0xff]
        %v2817 = vld [vmem:[%s1809 + $0x7a] sm:$0xf]
        %v2818 = vld [vmem:[%s1809 + $0x82] sm:$0xff]
        %v2819 = vld [vmem:[%s1809 + $0x8a] sm:$0xf]
        %v2820 = vld [vmem:[%s1809 + $0x92] sm:$0xff]
        %v2821 = vld [vmem:[%s1809 + $0x9a] sm:$0xf]
        %v2822 = vld [vmem:[%s1809 + $0xa2] sm:$0xff]
        %v2823 = vld [vmem:[%s1809 + $0xaa] sm:$0xf]
        %v2824 = vld [vmem:[%s1809 + $0xb2] sm:$0xff]
        %v2825 = vld [vmem:[%s1809 + $0xba] sm:$0xf]
        %s2826 = scalar_lea.vmem %s1, 20
        %v2827 = vld [vmem:[%s2826] sm:$0x1]
        %2829 = vset.pattern.permute.xlu0 0
        %2830 = vperm.xlu0 %2829, %v2802
        %v2831 = vpop.permute.xlu0 %2830
        %2834 = vset.pattern.permute.xlu0 0
        %2835 = vperm.xlu0 %2834, %v2803
        %v2836 = vpop.permute.xlu0 %2835
        %2839 = vset.pattern.permute.xlu0 0
        %2840 = vperm.xlu0 %2839, %v2804
        %v2841 = vpop.permute.xlu0 %2840
        %2844 = vset.pattern.permute.xlu0 0
        %2845 = vperm.xlu0 %2844, %v2805
        %v2846 = vpop.permute.xlu0 %2845
        %2849 = vset.pattern.permute.xlu0 0
        %2850 = vperm.xlu0 %2849, %v2806
        %v2851 = vpop.permute.xlu0 %2850
        %2854 = vset.pattern.permute.xlu0 0
        %2855 = vperm.xlu0 %2854, %v2807
        %v2856 = vpop.permute.xlu0 %2855
        %2859 = vset.pattern.permute.xlu0 0
        %2860 = vperm.xlu0 %2859, %v2808
        %v2861 = vpop.permute.xlu0 %2860
        %2864 = vset.pattern.permute.xlu0 0
        %2865 = vperm.xlu0 %2864, %v2809
        %v2866 = vpop.permute.xlu0 %2865
        %2869 = vset.pattern.permute.xlu0 0
        %2870 = vperm.xlu0 %2869, %v2810
        %v2871 = vpop.permute.xlu0 %2870
        %2874 = vset.pattern.permute.xlu0 0
        %2875 = vperm.xlu0 %2874, %v2811
        %v2876 = vpop.permute.xlu0 %2875
        %2879 = vset.pattern.permute.xlu0 0
        %2880 = vperm.xlu0 %2879, %v2812
        %v2881 = vpop.permute.xlu0 %2880
        %2884 = vset.pattern.permute.xlu0 0
        %2885 = vperm.xlu0 %2884, %v2813
        %v2886 = vpop.permute.xlu0 %2885
        %2889 = vset.pattern.permute.xlu0 0
        %2890 = vperm.xlu0 %2889, %v2814
        %v2891 = vpop.permute.xlu0 %2890
        %2894 = vset.pattern.permute.xlu0 0
        %2895 = vperm.xlu0 %2894, %v2815
        %v2896 = vpop.permute.xlu0 %2895
        %2899 = vset.pattern.permute.xlu0 0
        %2900 = vperm.xlu0 %2899, %v2816
        %v2901 = vpop.permute.xlu0 %2900
        %2904 = vset.pattern.permute.xlu0 0
        %2905 = vperm.xlu0 %2904, %v2817
        %v2906 = vpop.permute.xlu0 %2905
        %2909 = vset.pattern.permute.xlu0 0
        %2910 = vperm.xlu0 %2909, %v2818
        %v2911 = vpop.permute.xlu0 %2910
        %2914 = vset.pattern.permute.xlu0 0
        %2915 = vperm.xlu0 %2914, %v2819
        %v2916 = vpop.permute.xlu0 %2915
        %2919 = vset.pattern.permute.xlu0 0
        %2920 = vperm.xlu0 %2919, %v2820
        %v2921 = vpop.permute.xlu0 %2920
        %2924 = vset.pattern.permute.xlu0 0
        %2925 = vperm.xlu0 %2924, %v2821
        %v2926 = vpop.permute.xlu0 %2925
        %2929 = vset.pattern.permute.xlu0 0
        %2930 = vperm.xlu0 %2929, %v2822
        %v2931 = vpop.permute.xlu0 %2930
        %2934 = vset.pattern.permute.xlu0 0
        %2935 = vperm.xlu0 %2934, %v2823
        %v2936 = vpop.permute.xlu0 %2935
        %2939 = vset.pattern.permute.xlu0 0
        %2940 = vperm.xlu0 %2939, %v2824
        %v2941 = vpop.permute.xlu0 %2940
        %2944 = vset.pattern.permute.xlu0 0
        %2945 = vperm.xlu0 %2944, %v2825
        %v2946 = vpop.permute.xlu0 %2945
        %v2948 = vlaneseq
        %v2949 = vshrl.u32 %v2948, 7
        %v2950 = vsub.s32 0, %v2949
        %v2951 = vrot.slane %v2827, %v2950
        %v2952 = vmul.f32 %v2831, %v2951
        %v2953 = vmul.f32 %v2836, %v2951
        %v2954 = vmul.f32 %v2841, %v2951
        %v2955 = vmul.f32 %v2846, %v2951
        %v2956 = vmul.f32 %v2851, %v2951
        %v2957 = vmul.f32 %v2856, %v2951
        %v2958 = vmul.f32 %v2861, %v2951
        %v2959 = vmul.f32 %v2866, %v2951
        %v2960 = vmul.f32 %v2871, %v2951
        %v2961 = vmul.f32 %v2876, %v2951
        %v2962 = vmul.f32 %v2881, %v2951
        %v2963 = vmul.f32 %v2886, %v2951
        %v2964 = vmul.f32 %v2891, %v2951
        %v2965 = vmul.f32 %v2896, %v2951
        %v2966 = vmul.f32 %v2901, %v2951
        %v2967 = vmul.f32 %v2906, %v2951
        %v2968 = vmul.f32 %v2911, %v2951
        %v2969 = vmul.f32 %v2916, %v2951
        %v2970 = vmul.f32 %v2921, %v2951
        %v2971 = vmul.f32 %v2926, %v2951
        %v2972 = vmul.f32 %v2931, %v2951
        %v2973 = vmul.f32 %v2936, %v2951
        %v2974 = vmul.f32 %v2941, %v2951
        %v2975 = vmul.f32 %v2946, %v2951
        %v2976 = vld [vmem:[%s2826 + $0x1] sm:$0x1]
        %2977 = vset.pattern.permute.xlu0 1
        %2978 = vperm.xlu0 %2977, %v2802
        %v2979 = vpop.permute.xlu0 %2978
        %2981 = vset.pattern.permute.xlu0 1
        %2982 = vperm.xlu0 %2981, %v2803
        %v2983 = vpop.permute.xlu0 %2982
        %2985 = vset.pattern.permute.xlu0 1
        %2986 = vperm.xlu0 %2985, %v2804
        %v2987 = vpop.permute.xlu0 %2986
        %2989 = vset.pattern.permute.xlu0 1
        %2990 = vperm.xlu0 %2989, %v2805
        %v2991 = vpop.permute.xlu0 %2990
        %2993 = vset.pattern.permute.xlu0 1
        %2994 = vperm.xlu0 %2993, %v2806
        %v2995 = vpop.permute.xlu0 %2994
        %2997 = vset.pattern.permute.xlu0 1
        %2998 = vperm.xlu0 %2997, %v2807
        %v2999 = vpop.permute.xlu0 %2998
        %3001 = vset.pattern.permute.xlu0 1
        %3002 = vperm.xlu0 %3001, %v2808
        %v3003 = vpop.permute.xlu0 %3002
        %3005 = vset.pattern.permute.xlu0 1
        %3006 = vperm.xlu0 %3005, %v2809
        %v3007 = vpop.permute.xlu0 %3006
        %3009 = vset.pattern.permute.xlu0 1
        %3010 = vperm.xlu0 %3009, %v2810
        %v3011 = vpop.permute.xlu0 %3010
        %3013 = vset.pattern.permute.xlu0 1
        %3014 = vperm.xlu0 %3013, %v2811
        %v3015 = vpop.permute.xlu0 %3014
        %3017 = vset.pattern.permute.xlu0 1
        %3018 = vperm.xlu0 %3017, %v2812
        %v3019 = vpop.permute.xlu0 %3018
        %3021 = vset.pattern.permute.xlu0 1
        %3022 = vperm.xlu0 %3021, %v2813
        %v3023 = vpop.permute.xlu0 %3022
        %3025 = vset.pattern.permute.xlu0 1
        %3026 = vperm.xlu0 %3025, %v2814
        %v3027 = vpop.permute.xlu0 %3026
        %3029 = vset.pattern.permute.xlu0 1
        %3030 = vperm.xlu0 %3029, %v2815
        %v3031 = vpop.permute.xlu0 %3030
        %3033 = vset.pattern.permute.xlu0 1
        %3034 = vperm.xlu0 %3033, %v2816
        %v3035 = vpop.permute.xlu0 %3034
        %3037 = vset.pattern.permute.xlu0 1
        %3038 = vperm.xlu0 %3037, %v2817
        %v3039 = vpop.permute.xlu0 %3038
        %3041 = vset.pattern.permute.xlu0 1
        %3042 = vperm.xlu0 %3041, %v2818
        %v3043 = vpop.permute.xlu0 %3042
        %3045 = vset.pattern.permute.xlu0 1
        %3046 = vperm.xlu0 %3045, %v2819
        %v3047 = vpop.permute.xlu0 %3046
        %3049 = vset.pattern.permute.xlu0 1
        %3050 = vperm.xlu0 %3049, %v2820
        %v3051 = vpop.permute.xlu0 %3050
        %3053 = vset.pattern.permute.xlu0 1
        %3054 = vperm.xlu0 %3053, %v2821
        %v3055 = vpop.permute.xlu0 %3054
        %3057 = vset.pattern.permute.xlu0 1
        %3058 = vperm.xlu0 %3057, %v2822
        %v3059 = vpop.permute.xlu0 %3058
        %3061 = vset.pattern.permute.xlu0 1
        %3062 = vperm.xlu0 %3061, %v2823
        %v3063 = vpop.permute.xlu0 %3062
        %3065 = vset.pattern.permute.xlu0 1
        %3066 = vperm.xlu0 %3065, %v2824
        %v3067 = vpop.permute.xlu0 %3066
        %3069 = vset.pattern.permute.xlu0 1
        %3070 = vperm.xlu0 %3069, %v2825
        %v3071 = vpop.permute.xlu0 %3070
        %v3073 = vlaneseq
        %v3074 = vshrl.u32 %v3073, 7
        %v3075 = vsub.s32 0, %v3074
        %v3076 = vrot.slane %v2976, %v3075
        %v3077 = vmul.f32 %v2979, %v3076
        %v3078 = vmul.f32 %v2983, %v3076
        %v3079 = vmul.f32 %v2987, %v3076
        %v3080 = vmul.f32 %v2991, %v3076
        %v3081 = vmul.f32 %v2995, %v3076
        %v3082 = vmul.f32 %v2999, %v3076
        %v3083 = vmul.f32 %v3003, %v3076
        %v3084 = vmul.f32 %v3007, %v3076
        %v3085 = vmul.f32 %v3011, %v3076
        %v3086 = vmul.f32 %v3015, %v3076
        %v3087 = vmul.f32 %v3019, %v3076
        %v3088 = vmul.f32 %v3023, %v3076
        %v3089 = vmul.f32 %v3027, %v3076
        %v3090 = vmul.f32 %v3031, %v3076
        %v3091 = vmul.f32 %v3035, %v3076
        %v3092 = vmul.f32 %v3039, %v3076
        %v3093 = vmul.f32 %v3043, %v3076
        %v3094 = vmul.f32 %v3047, %v3076
        %v3095 = vmul.f32 %v3051, %v3076
        %v3096 = vmul.f32 %v3055, %v3076
        %v3097 = vmul.f32 %v3059, %v3076
        %v3098 = vmul.f32 %v3063, %v3076
        %v3099 = vmul.f32 %v3067, %v3076
        %v3100 = vmul.f32 %v3071, %v3076
        %v3101 = vadd.f32 %v2952, %v3077
        %v3102 = vadd.f32 %v2953, %v3078
        %v3103 = vadd.f32 %v2954, %v3079
        %v3104 = vadd.f32 %v2955, %v3080
        %v3105 = vadd.f32 %v2956, %v3081
        %v3106 = vadd.f32 %v2957, %v3082
        %v3107 = vadd.f32 %v2958, %v3083
        %v3108 = vadd.f32 %v2959, %v3084
        %v3109 = vadd.f32 %v2960, %v3085
        %v3110 = vadd.f32 %v2961, %v3086
        %v3111 = vadd.f32 %v2962, %v3087
        %v3112 = vadd.f32 %v2963, %v3088
        %v3113 = vadd.f32 %v2964, %v3089
        %v3114 = vadd.f32 %v2965, %v3090
        %v3115 = vadd.f32 %v2966, %v3091
        %v3116 = vadd.f32 %v2967, %v3092
        %v3117 = vadd.f32 %v2968, %v3093
        %v3118 = vadd.f32 %v2969, %v3094
        %v3119 = vadd.f32 %v2970, %v3095
        %v3120 = vadd.f32 %v2971, %v3096
        %v3121 = vadd.f32 %v2972, %v3097
        %v3122 = vadd.f32 %v2973, %v3098
        %v3123 = vadd.f32 %v2974, %v3099
        %v3124 = vadd.f32 %v2975, %v3100
        %v3125 = vld [vmem:[%s2826 + $0x2] sm:$0x1]
        %3126 = vset.pattern.permute.xlu0 2
        %3127 = vperm.xlu0 %3126, %v2802
        %v3128 = vpop.permute.xlu0 %3127
        %3130 = vset.pattern.permute.xlu0 2
        %3131 = vperm.xlu0 %3130, %v2803
        %v3132 = vpop.permute.xlu0 %3131
        %3134 = vset.pattern.permute.xlu0 2
        %3135 = vperm.xlu0 %3134, %v2804
        %v3136 = vpop.permute.xlu0 %3135
        %3138 = vset.pattern.permute.xlu0 2
        %3139 = vperm.xlu0 %3138, %v2805
        %v3140 = vpop.permute.xlu0 %3139
        %3142 = vset.pattern.permute.xlu0 2
        %3143 = vperm.xlu0 %3142, %v2806
        %v3144 = vpop.permute.xlu0 %3143
        %3146 = vset.pattern.permute.xlu0 2
        %3147 = vperm.xlu0 %3146, %v2807
        %v3148 = vpop.permute.xlu0 %3147
        %3150 = vset.pattern.permute.xlu0 2
        %3151 = vperm.xlu0 %3150, %v2808
        %v3152 = vpop.permute.xlu0 %3151
        %3154 = vset.pattern.permute.xlu0 2
        %3155 = vperm.xlu0 %3154, %v2809
        %v3156 = vpop.permute.xlu0 %3155
        %3158 = vset.pattern.permute.xlu0 2
        %3159 = vperm.xlu0 %3158, %v2810
        %v3160 = vpop.permute.xlu0 %3159
        %3162 = vset.pattern.permute.xlu0 2
        %3163 = vperm.xlu0 %3162, %v2811
        %v3164 = vpop.permute.xlu0 %3163
        %3166 = vset.pattern.permute.xlu0 2
        %3167 = vperm.xlu0 %3166, %v2812
        %v3168 = vpop.permute.xlu0 %3167
        %3170 = vset.pattern.permute.xlu0 2
        %3171 = vperm.xlu0 %3170, %v2813
        %v3172 = vpop.permute.xlu0 %3171
        %3174 = vset.pattern.permute.xlu0 2
        %3175 = vperm.xlu0 %3174, %v2814
        %v3176 = vpop.permute.xlu0 %3175
        %3178 = vset.pattern.permute.xlu0 2
        %3179 = vperm.xlu0 %3178, %v2815
        %v3180 = vpop.permute.xlu0 %3179
        %3182 = vset.pattern.permute.xlu0 2
        %3183 = vperm.xlu0 %3182, %v2816
        %v3184 = vpop.permute.xlu0 %3183
        %3186 = vset.pattern.permute.xlu0 2
        %3187 = vperm.xlu0 %3186, %v2817
        %v3188 = vpop.permute.xlu0 %3187
        %3190 = vset.pattern.permute.xlu0 2
        %3191 = vperm.xlu0 %3190, %v2818
        %v3192 = vpop.permute.xlu0 %3191
        %3194 = vset.pattern.permute.xlu0 2
        %3195 = vperm.xlu0 %3194, %v2819
        %v3196 = vpop.permute.xlu0 %3195
        %3198 = vset.pattern.permute.xlu0 2
        %3199 = vperm.xlu0 %3198, %v2820
        %v3200 = vpop.permute.xlu0 %3199
        %3202 = vset.pattern.permute.xlu0 2
        %3203 = vperm.xlu0 %3202, %v2821
        %v3204 = vpop.permute.xlu0 %3203
        %3206 = vset.pattern.permute.xlu0 2
        %3207 = vperm.xlu0 %3206, %v2822
        %v3208 = vpop.permute.xlu0 %3207
        %3210 = vset.pattern.permute.xlu0 2
        %3211 = vperm.xlu0 %3210, %v2823
        %v3212 = vpop.permute.xlu0 %3211
        %3214 = vset.pattern.permute.xlu0 2
        %3215 = vperm.xlu0 %3214, %v2824
        %v3216 = vpop.permute.xlu0 %3215
        %3218 = vset.pattern.permute.xlu0 2
        %3219 = vperm.xlu0 %3218, %v2825
        %v3220 = vpop.permute.xlu0 %3219
        %v3222 = vlaneseq
        %v3223 = vshrl.u32 %v3222, 7
        %v3224 = vsub.s32 0, %v3223
        %v3225 = vrot.slane %v3125, %v3224
        %v3226 = vmul.f32 %v3128, %v3225
        %v3227 = vmul.f32 %v3132, %v3225
        %v3228 = vmul.f32 %v3136, %v3225
        %v3229 = vmul.f32 %v3140, %v3225
        %v3230 = vmul.f32 %v3144, %v3225
        %v3231 = vmul.f32 %v3148, %v3225
        %v3232 = vmul.f32 %v3152, %v3225
        %v3233 = vmul.f32 %v3156, %v3225
        %v3234 = vmul.f32 %v3160, %v3225
        %v3235 = vmul.f32 %v3164, %v3225
        %v3236 = vmul.f32 %v3168, %v3225
        %v3237 = vmul.f32 %v3172, %v3225
        %v3238 = vmul.f32 %v3176, %v3225
        %v3239 = vmul.f32 %v3180, %v3225
        %v3240 = vmul.f32 %v3184, %v3225
        %v3241 = vmul.f32 %v3188, %v3225
        %v3242 = vmul.f32 %v3192, %v3225
        %v3243 = vmul.f32 %v3196, %v3225
        %v3244 = vmul.f32 %v3200, %v3225
        %v3245 = vmul.f32 %v3204, %v3225
        %v3246 = vmul.f32 %v3208, %v3225
        %v3247 = vmul.f32 %v3212, %v3225
        %v3248 = vmul.f32 %v3216, %v3225
        %v3249 = vmul.f32 %v3220, %v3225
        %v3250 = vadd.f32 %v3101, %v3226
        %v3251 = vadd.f32 %v3102, %v3227
        %v3252 = vadd.f32 %v3103, %v3228
        %v3253 = vadd.f32 %v3104, %v3229
        %v3254 = vadd.f32 %v3105, %v3230
        %v3255 = vadd.f32 %v3106, %v3231
        %v3256 = vadd.f32 %v3107, %v3232
        %v3257 = vadd.f32 %v3108, %v3233
        %v3258 = vadd.f32 %v3109, %v3234
        %v3259 = vadd.f32 %v3110, %v3235
        %v3260 = vadd.f32 %v3111, %v3236
        %v3261 = vadd.f32 %v3112, %v3237
        %v3262 = vadd.f32 %v3113, %v3238
        %v3263 = vadd.f32 %v3114, %v3239
        %v3264 = vadd.f32 %v3115, %v3240
        %v3265 = vadd.f32 %v3116, %v3241
        %v3266 = vadd.f32 %v3117, %v3242
        %v3267 = vadd.f32 %v3118, %v3243
        %v3268 = vadd.f32 %v3119, %v3244
        %v3269 = vadd.f32 %v3120, %v3245
        %v3270 = vadd.f32 %v3121, %v3246
        %v3271 = vadd.f32 %v3122, %v3247
        %v3272 = vadd.f32 %v3123, %v3248
        %v3273 = vadd.f32 %v3124, %v3249
        %v3274 = vadd.f32 %v2778, %v3250
        %v3275 = vadd.f32 %v2779, %v3251
        %v3276 = vadd.f32 %v2780, %v3252
        %v3277 = vadd.f32 %v2781, %v3253
        %v3278 = vadd.f32 %v2782, %v3254
        %v3279 = vadd.f32 %v2783, %v3255
        %v3280 = vadd.f32 %v2784, %v3256
        %v3281 = vadd.f32 %v2785, %v3257
        %v3282 = vadd.f32 %v2786, %v3258
        %v3283 = vadd.f32 %v2787, %v3259
        %v3284 = vadd.f32 %v2788, %v3260
        %v3285 = vadd.f32 %v2789, %v3261
        %v3286 = vadd.f32 %v2790, %v3262
        %v3287 = vadd.f32 %v2791, %v3263
        %v3288 = vadd.f32 %v2792, %v3264
        %v3289 = vadd.f32 %v2793, %v3265
        %v3290 = vadd.f32 %v2794, %v3266
        %v3291 = vadd.f32 %v2795, %v3267
        %v3292 = vadd.f32 %v2796, %v3268
        %v3293 = vadd.f32 %v2797, %v3269
        %v3294 = vadd.f32 %v2798, %v3270
        %v3295 = vadd.f32 %v2799, %v3271
        %v3296 = vadd.f32 %v2800, %v3272
        %v3297 = vadd.f32 %v2801, %v3273
        %s3298 = scalar_lea.vmem %s342, 32
        %v3299 = vld [vmem:[%s3298] sm:$0xff]
        %v3300 = vld [vmem:[%s3298 + $0x8] sm:$0xf]
        %v3301 = vld [vmem:[%s3298 + $0x10] sm:$0xff]
        %v3302 = vld [vmem:[%s3298 + $0x18] sm:$0xf]
        %v3303 = vld [vmem:[%s3298 + $0x20] sm:$0xff]
        %v3304 = vld [vmem:[%s3298 + $0x28] sm:$0xf]
        %v3305 = vld [vmem:[%s3298 + $0x30] sm:$0xff]
        %v3306 = vld [vmem:[%s3298 + $0x38] sm:$0xf]
        %v3307 = vld [vmem:[%s3298 + $0x40] sm:$0xff]
        %v3308 = vld [vmem:[%s3298 + $0x48] sm:$0xf]
        %v3309 = vld [vmem:[%s3298 + $0x50] sm:$0xff]
        %v3310 = vld [vmem:[%s3298 + $0x58] sm:$0xf]
        %v3311 = vld [vmem:[%s3298 + $0x60] sm:$0xff]
        %v3312 = vld [vmem:[%s3298 + $0x68] sm:$0xf]
        %v3313 = vld [vmem:[%s3298 + $0x70] sm:$0xff]
        %v3314 = vld [vmem:[%s3298 + $0x78] sm:$0xf]
        %v3315 = vld [vmem:[%s3298 + $0x80] sm:$0xff]
        %v3316 = vld [vmem:[%s3298 + $0x88] sm:$0xf]
        %v3317 = vld [vmem:[%s3298 + $0x90] sm:$0xff]
        %v3318 = vld [vmem:[%s3298 + $0x98] sm:$0xf]
        %v3319 = vld [vmem:[%s3298 + $0xa0] sm:$0xff]
        %v3320 = vld [vmem:[%s3298 + $0xa8] sm:$0xf]
        %v3321 = vld [vmem:[%s3298 + $0xb0] sm:$0xff]
        %v3322 = vld [vmem:[%s3298 + $0xb8] sm:$0xf]
        %s3323 = scalar_lea.vmem %s1, 24
        %v3324 = vld [vmem:[%s3323] sm:$0x1]
        %3326 = vset.pattern.permute.xlu0 0
        %3327 = vperm.xlu0 %3326, %v3299
        %v3328 = vpop.permute.xlu0 %3327
        %3331 = vset.pattern.permute.xlu0 0
        %3332 = vperm.xlu0 %3331, %v3300
        %v3333 = vpop.permute.xlu0 %3332
        %3336 = vset.pattern.permute.xlu0 0
        %3337 = vperm.xlu0 %3336, %v3301
        %v3338 = vpop.permute.xlu0 %3337
        %3341 = vset.pattern.permute.xlu0 0
        %3342 = vperm.xlu0 %3341, %v3302
        %v3343 = vpop.permute.xlu0 %3342
        %3346 = vset.pattern.permute.xlu0 0
        %3347 = vperm.xlu0 %3346, %v3303
        %v3348 = vpop.permute.xlu0 %3347
        %3351 = vset.pattern.permute.xlu0 0
        %3352 = vperm.xlu0 %3351, %v3304
        %v3353 = vpop.permute.xlu0 %3352
        %3356 = vset.pattern.permute.xlu0 0
        %3357 = vperm.xlu0 %3356, %v3305
        %v3358 = vpop.permute.xlu0 %3357
        %3361 = vset.pattern.permute.xlu0 0
        %3362 = vperm.xlu0 %3361, %v3306
        %v3363 = vpop.permute.xlu0 %3362
        %3366 = vset.pattern.permute.xlu0 0
        %3367 = vperm.xlu0 %3366, %v3307
        %v3368 = vpop.permute.xlu0 %3367
        %3371 = vset.pattern.permute.xlu0 0
        %3372 = vperm.xlu0 %3371, %v3308
        %v3373 = vpop.permute.xlu0 %3372
        %3376 = vset.pattern.permute.xlu0 0
        %3377 = vperm.xlu0 %3376, %v3309
        %v3378 = vpop.permute.xlu0 %3377
        %3381 = vset.pattern.permute.xlu0 0
        %3382 = vperm.xlu0 %3381, %v3310
        %v3383 = vpop.permute.xlu0 %3382
        %3386 = vset.pattern.permute.xlu0 0
        %3387 = vperm.xlu0 %3386, %v3311
        %v3388 = vpop.permute.xlu0 %3387
        %3391 = vset.pattern.permute.xlu0 0
        %3392 = vperm.xlu0 %3391, %v3312
        %v3393 = vpop.permute.xlu0 %3392
        %3396 = vset.pattern.permute.xlu0 0
        %3397 = vperm.xlu0 %3396, %v3313
        %v3398 = vpop.permute.xlu0 %3397
        %3401 = vset.pattern.permute.xlu0 0
        %3402 = vperm.xlu0 %3401, %v3314
        %v3403 = vpop.permute.xlu0 %3402
        %3406 = vset.pattern.permute.xlu0 0
        %3407 = vperm.xlu0 %3406, %v3315
        %v3408 = vpop.permute.xlu0 %3407
        %3411 = vset.pattern.permute.xlu0 0
        %3412 = vperm.xlu0 %3411, %v3316
        %v3413 = vpop.permute.xlu0 %3412
        %3416 = vset.pattern.permute.xlu0 0
        %3417 = vperm.xlu0 %3416, %v3317
        %v3418 = vpop.permute.xlu0 %3417
        %3421 = vset.pattern.permute.xlu0 0
        %3422 = vperm.xlu0 %3421, %v3318
        %v3423 = vpop.permute.xlu0 %3422
        %3426 = vset.pattern.permute.xlu0 0
        %3427 = vperm.xlu0 %3426, %v3319
        %v3428 = vpop.permute.xlu0 %3427
        %3431 = vset.pattern.permute.xlu0 0
        %3432 = vperm.xlu0 %3431, %v3320
        %v3433 = vpop.permute.xlu0 %3432
        %3436 = vset.pattern.permute.xlu0 0
        %3437 = vperm.xlu0 %3436, %v3321
        %v3438 = vpop.permute.xlu0 %3437
        %3441 = vset.pattern.permute.xlu0 0
        %3442 = vperm.xlu0 %3441, %v3322
        %v3443 = vpop.permute.xlu0 %3442
        %v3445 = vlaneseq
        %v3446 = vshrl.u32 %v3445, 7
        %v3447 = vsub.s32 0, %v3446
        %v3448 = vrot.slane %v3324, %v3447
        %v3449 = vmul.f32 %v3328, %v3448
        %v3450 = vmul.f32 %v3333, %v3448
        %v3451 = vmul.f32 %v3338, %v3448
        %v3452 = vmul.f32 %v3343, %v3448
        %v3453 = vmul.f32 %v3348, %v3448
        %v3454 = vmul.f32 %v3353, %v3448
        %v3455 = vmul.f32 %v3358, %v3448
        %v3456 = vmul.f32 %v3363, %v3448
        %v3457 = vmul.f32 %v3368, %v3448
        %v3458 = vmul.f32 %v3373, %v3448
        %v3459 = vmul.f32 %v3378, %v3448
        %v3460 = vmul.f32 %v3383, %v3448
        %v3461 = vmul.f32 %v3388, %v3448
        %v3462 = vmul.f32 %v3393, %v3448
        %v3463 = vmul.f32 %v3398, %v3448
        %v3464 = vmul.f32 %v3403, %v3448
        %v3465 = vmul.f32 %v3408, %v3448
        %v3466 = vmul.f32 %v3413, %v3448
        %v3467 = vmul.f32 %v3418, %v3448
        %v3468 = vmul.f32 %v3423, %v3448
        %v3469 = vmul.f32 %v3428, %v3448
        %v3470 = vmul.f32 %v3433, %v3448
        %v3471 = vmul.f32 %v3438, %v3448
        %v3472 = vmul.f32 %v3443, %v3448
        %v3473 = vld [vmem:[%s3323 + $0x1] sm:$0x1]
        %3474 = vset.pattern.permute.xlu0 1
        %3475 = vperm.xlu0 %3474, %v3299
        %v3476 = vpop.permute.xlu0 %3475
        %3478 = vset.pattern.permute.xlu0 1
        %3479 = vperm.xlu0 %3478, %v3300
        %v3480 = vpop.permute.xlu0 %3479
        %3482 = vset.pattern.permute.xlu0 1
        %3483 = vperm.xlu0 %3482, %v3301
        %v3484 = vpop.permute.xlu0 %3483
        %3486 = vset.pattern.permute.xlu0 1
        %3487 = vperm.xlu0 %3486, %v3302
        %v3488 = vpop.permute.xlu0 %3487
        %3490 = vset.pattern.permute.xlu0 1
        %3491 = vperm.xlu0 %3490, %v3303
        %v3492 = vpop.permute.xlu0 %3491
        %3494 = vset.pattern.permute.xlu0 1
        %3495 = vperm.xlu0 %3494, %v3304
        %v3496 = vpop.permute.xlu0 %3495
        %3498 = vset.pattern.permute.xlu0 1
        %3499 = vperm.xlu0 %3498, %v3305
        %v3500 = vpop.permute.xlu0 %3499
        %3502 = vset.pattern.permute.xlu0 1
        %3503 = vperm.xlu0 %3502, %v3306
        %v3504 = vpop.permute.xlu0 %3503
        %3506 = vset.pattern.permute.xlu0 1
        %3507 = vperm.xlu0 %3506, %v3307
        %v3508 = vpop.permute.xlu0 %3507
        %3510 = vset.pattern.permute.xlu0 1
        %3511 = vperm.xlu0 %3510, %v3308
        %v3512 = vpop.permute.xlu0 %3511
        %3514 = vset.pattern.permute.xlu0 1
        %3515 = vperm.xlu0 %3514, %v3309
        %v3516 = vpop.permute.xlu0 %3515
        %3518 = vset.pattern.permute.xlu0 1
        %3519 = vperm.xlu0 %3518, %v3310
        %v3520 = vpop.permute.xlu0 %3519
        %3522 = vset.pattern.permute.xlu0 1
        %3523 = vperm.xlu0 %3522, %v3311
        %v3524 = vpop.permute.xlu0 %3523
        %3526 = vset.pattern.permute.xlu0 1
        %3527 = vperm.xlu0 %3526, %v3312
        %v3528 = vpop.permute.xlu0 %3527
        %3530 = vset.pattern.permute.xlu0 1
        %3531 = vperm.xlu0 %3530, %v3313
        %v3532 = vpop.permute.xlu0 %3531
        %3534 = vset.pattern.permute.xlu0 1
        %3535 = vperm.xlu0 %3534, %v3314
        %v3536 = vpop.permute.xlu0 %3535
        %3538 = vset.pattern.permute.xlu0 1
        %3539 = vperm.xlu0 %3538, %v3315
        %v3540 = vpop.permute.xlu0 %3539
        %3542 = vset.pattern.permute.xlu0 1
        %3543 = vperm.xlu0 %3542, %v3316
        %v3544 = vpop.permute.xlu0 %3543
        %3546 = vset.pattern.permute.xlu0 1
        %3547 = vperm.xlu0 %3546, %v3317
        %v3548 = vpop.permute.xlu0 %3547
        %3550 = vset.pattern.permute.xlu0 1
        %3551 = vperm.xlu0 %3550, %v3318
        %v3552 = vpop.permute.xlu0 %3551
        %3554 = vset.pattern.permute.xlu0 1
        %3555 = vperm.xlu0 %3554, %v3319
        %v3556 = vpop.permute.xlu0 %3555
        %3558 = vset.pattern.permute.xlu0 1
        %3559 = vperm.xlu0 %3558, %v3320
        %v3560 = vpop.permute.xlu0 %3559
        %3562 = vset.pattern.permute.xlu0 1
        %3563 = vperm.xlu0 %3562, %v3321
        %v3564 = vpop.permute.xlu0 %3563
        %3566 = vset.pattern.permute.xlu0 1
        %3567 = vperm.xlu0 %3566, %v3322
        %v3568 = vpop.permute.xlu0 %3567
        %v3570 = vlaneseq
        %v3571 = vshrl.u32 %v3570, 7
        %v3572 = vsub.s32 0, %v3571
        %v3573 = vrot.slane %v3473, %v3572
        %v3574 = vmul.f32 %v3476, %v3573
        %v3575 = vmul.f32 %v3480, %v3573
        %v3576 = vmul.f32 %v3484, %v3573
        %v3577 = vmul.f32 %v3488, %v3573
        %v3578 = vmul.f32 %v3492, %v3573
        %v3579 = vmul.f32 %v3496, %v3573
        %v3580 = vmul.f32 %v3500, %v3573
        %v3581 = vmul.f32 %v3504, %v3573
        %v3582 = vmul.f32 %v3508, %v3573
        %v3583 = vmul.f32 %v3512, %v3573
        %v3584 = vmul.f32 %v3516, %v3573
        %v3585 = vmul.f32 %v3520, %v3573
        %v3586 = vmul.f32 %v3524, %v3573
        %v3587 = vmul.f32 %v3528, %v3573
        %v3588 = vmul.f32 %v3532, %v3573
        %v3589 = vmul.f32 %v3536, %v3573
        %v3590 = vmul.f32 %v3540, %v3573
        %v3591 = vmul.f32 %v3544, %v3573
        %v3592 = vmul.f32 %v3548, %v3573
        %v3593 = vmul.f32 %v3552, %v3573
        %v3594 = vmul.f32 %v3556, %v3573
        %v3595 = vmul.f32 %v3560, %v3573
        %v3596 = vmul.f32 %v3564, %v3573
        %v3597 = vmul.f32 %v3568, %v3573
        %v3598 = vadd.f32 %v3449, %v3574
        %v3599 = vadd.f32 %v3450, %v3575
        %v3600 = vadd.f32 %v3451, %v3576
        %v3601 = vadd.f32 %v3452, %v3577
        %v3602 = vadd.f32 %v3453, %v3578
        %v3603 = vadd.f32 %v3454, %v3579
        %v3604 = vadd.f32 %v3455, %v3580
        %v3605 = vadd.f32 %v3456, %v3581
        %v3606 = vadd.f32 %v3457, %v3582
        %v3607 = vadd.f32 %v3458, %v3583
        %v3608 = vadd.f32 %v3459, %v3584
        %v3609 = vadd.f32 %v3460, %v3585
        %v3610 = vadd.f32 %v3461, %v3586
        %v3611 = vadd.f32 %v3462, %v3587
        %v3612 = vadd.f32 %v3463, %v3588
        %v3613 = vadd.f32 %v3464, %v3589
        %v3614 = vadd.f32 %v3465, %v3590
        %v3615 = vadd.f32 %v3466, %v3591
        %v3616 = vadd.f32 %v3467, %v3592
        %v3617 = vadd.f32 %v3468, %v3593
        %v3618 = vadd.f32 %v3469, %v3594
        %v3619 = vadd.f32 %v3470, %v3595
        %v3620 = vadd.f32 %v3471, %v3596
        %v3621 = vadd.f32 %v3472, %v3597
        %v3622 = vld [vmem:[%s3323 + $0x2] sm:$0x1]
        %3623 = vset.pattern.permute.xlu0 2
        %3624 = vperm.xlu0 %3623, %v3299
        %v3625 = vpop.permute.xlu0 %3624
        %3627 = vset.pattern.permute.xlu0 2
        %3628 = vperm.xlu0 %3627, %v3300
        %v3629 = vpop.permute.xlu0 %3628
        %3631 = vset.pattern.permute.xlu0 2
        %3632 = vperm.xlu0 %3631, %v3301
        %v3633 = vpop.permute.xlu0 %3632
        %3635 = vset.pattern.permute.xlu0 2
        %3636 = vperm.xlu0 %3635, %v3302
        %v3637 = vpop.permute.xlu0 %3636
        %3639 = vset.pattern.permute.xlu0 2
        %3640 = vperm.xlu0 %3639, %v3303
        %v3641 = vpop.permute.xlu0 %3640
        %3643 = vset.pattern.permute.xlu0 2
        %3644 = vperm.xlu0 %3643, %v3304
        %v3645 = vpop.permute.xlu0 %3644
        %3647 = vset.pattern.permute.xlu0 2
        %3648 = vperm.xlu0 %3647, %v3305
        %v3649 = vpop.permute.xlu0 %3648
        %3651 = vset.pattern.permute.xlu0 2
        %3652 = vperm.xlu0 %3651, %v3306
        %v3653 = vpop.permute.xlu0 %3652
        %3655 = vset.pattern.permute.xlu0 2
        %3656 = vperm.xlu0 %3655, %v3307
        %v3657 = vpop.permute.xlu0 %3656
        %3659 = vset.pattern.permute.xlu0 2
        %3660 = vperm.xlu0 %3659, %v3308
        %v3661 = vpop.permute.xlu0 %3660
        %3663 = vset.pattern.permute.xlu0 2
        %3664 = vperm.xlu0 %3663, %v3309
        %v3665 = vpop.permute.xlu0 %3664
        %3667 = vset.pattern.permute.xlu0 2
        %3668 = vperm.xlu0 %3667, %v3310
        %v3669 = vpop.permute.xlu0 %3668
        %3671 = vset.pattern.permute.xlu0 2
        %3672 = vperm.xlu0 %3671, %v3311
        %v3673 = vpop.permute.xlu0 %3672
        %3675 = vset.pattern.permute.xlu0 2
        %3676 = vperm.xlu0 %3675, %v3312
        %v3677 = vpop.permute.xlu0 %3676
        %3679 = vset.pattern.permute.xlu0 2
        %3680 = vperm.xlu0 %3679, %v3313
        %v3681 = vpop.permute.xlu0 %3680
        %3683 = vset.pattern.permute.xlu0 2
        %3684 = vperm.xlu0 %3683, %v3314
        %v3685 = vpop.permute.xlu0 %3684
        %3687 = vset.pattern.permute.xlu0 2
        %3688 = vperm.xlu0 %3687, %v3315
        %v3689 = vpop.permute.xlu0 %3688
        %3691 = vset.pattern.permute.xlu0 2
        %3692 = vperm.xlu0 %3691, %v3316
        %v3693 = vpop.permute.xlu0 %3692
        %3695 = vset.pattern.permute.xlu0 2
        %3696 = vperm.xlu0 %3695, %v3317
        %v3697 = vpop.permute.xlu0 %3696
        %3699 = vset.pattern.permute.xlu0 2
        %3700 = vperm.xlu0 %3699, %v3318
        %v3701 = vpop.permute.xlu0 %3700
        %3703 = vset.pattern.permute.xlu0 2
        %3704 = vperm.xlu0 %3703, %v3319
        %v3705 = vpop.permute.xlu0 %3704
        %3707 = vset.pattern.permute.xlu0 2
        %3708 = vperm.xlu0 %3707, %v3320
        %v3709 = vpop.permute.xlu0 %3708
        %3711 = vset.pattern.permute.xlu0 2
        %3712 = vperm.xlu0 %3711, %v3321
        %v3713 = vpop.permute.xlu0 %3712
        %3715 = vset.pattern.permute.xlu0 2
        %3716 = vperm.xlu0 %3715, %v3322
        %v3717 = vpop.permute.xlu0 %3716
        %v3719 = vlaneseq
        %v3720 = vshrl.u32 %v3719, 7
        %v3721 = vsub.s32 0, %v3720
        %v3722 = vrot.slane %v3622, %v3721
        %v3723 = vmul.f32 %v3625, %v3722
        %v3724 = vmul.f32 %v3629, %v3722
        %v3725 = vmul.f32 %v3633, %v3722
        %v3726 = vmul.f32 %v3637, %v3722
        %v3727 = vmul.f32 %v3641, %v3722
        %v3728 = vmul.f32 %v3645, %v3722
        %v3729 = vmul.f32 %v3649, %v3722
        %v3730 = vmul.f32 %v3653, %v3722
        %v3731 = vmul.f32 %v3657, %v3722
        %v3732 = vmul.f32 %v3661, %v3722
        %v3733 = vmul.f32 %v3665, %v3722
        %v3734 = vmul.f32 %v3669, %v3722
        %v3735 = vmul.f32 %v3673, %v3722
        %v3736 = vmul.f32 %v3677, %v3722
        %v3737 = vmul.f32 %v3681, %v3722
        %v3738 = vmul.f32 %v3685, %v3722
        %v3739 = vmul.f32 %v3689, %v3722
        %v3740 = vmul.f32 %v3693, %v3722
        %v3741 = vmul.f32 %v3697, %v3722
        %v3742 = vmul.f32 %v3701, %v3722
        %v3743 = vmul.f32 %v3705, %v3722
        %v3744 = vmul.f32 %v3709, %v3722
        %v3745 = vmul.f32 %v3713, %v3722
        %v3746 = vmul.f32 %v3717, %v3722
        %v3747 = vadd.f32 %v3598, %v3723
        %v3748 = vadd.f32 %v3599, %v3724
        %v3749 = vadd.f32 %v3600, %v3725
        %v3750 = vadd.f32 %v3601, %v3726
        %v3751 = vadd.f32 %v3602, %v3727
        %v3752 = vadd.f32 %v3603, %v3728
        %v3753 = vadd.f32 %v3604, %v3729
        %v3754 = vadd.f32 %v3605, %v3730
        %v3755 = vadd.f32 %v3606, %v3731
        %v3756 = vadd.f32 %v3607, %v3732
        %v3757 = vadd.f32 %v3608, %v3733
        %v3758 = vadd.f32 %v3609, %v3734
        %v3759 = vadd.f32 %v3610, %v3735
        %v3760 = vadd.f32 %v3611, %v3736
        %v3761 = vadd.f32 %v3612, %v3737
        %v3762 = vadd.f32 %v3613, %v3738
        %v3763 = vadd.f32 %v3614, %v3739
        %v3764 = vadd.f32 %v3615, %v3740
        %v3765 = vadd.f32 %v3616, %v3741
        %v3766 = vadd.f32 %v3617, %v3742
        %v3767 = vadd.f32 %v3618, %v3743
        %v3768 = vadd.f32 %v3619, %v3744
        %v3769 = vadd.f32 %v3620, %v3745
        %v3770 = vadd.f32 %v3621, %v3746
        %v3771 = vadd.f32 %v3274, %v3747
        %v3772 = vadd.f32 %v3275, %v3748
        %v3773 = vadd.f32 %v3276, %v3749
        %v3774 = vadd.f32 %v3277, %v3750
        %v3775 = vadd.f32 %v3278, %v3751
        %v3776 = vadd.f32 %v3279, %v3752
        %v3777 = vadd.f32 %v3280, %v3753
        %v3778 = vadd.f32 %v3281, %v3754
        %v3779 = vadd.f32 %v3282, %v3755
        %v3780 = vadd.f32 %v3283, %v3756
        %v3781 = vadd.f32 %v3284, %v3757
        %v3782 = vadd.f32 %v3285, %v3758
        %v3783 = vadd.f32 %v3286, %v3759
        %v3784 = vadd.f32 %v3287, %v3760
        %v3785 = vadd.f32 %v3288, %v3761
        %v3786 = vadd.f32 %v3289, %v3762
        %v3787 = vadd.f32 %v3290, %v3763
        %v3788 = vadd.f32 %v3291, %v3764
        %v3789 = vadd.f32 %v3292, %v3765
        %v3790 = vadd.f32 %v3293, %v3766
        %v3791 = vadd.f32 %v3294, %v3767
        %v3792 = vadd.f32 %v3295, %v3768
        %v3793 = vadd.f32 %v3296, %v3769
        %v3794 = vadd.f32 %v3297, %v3770
        %v3795 = vld [vmem:[%s3298 + $0x1] sm:$0xff]
        %v3796 = vld [vmem:[%s3298 + $0x9] sm:$0xf]
        %v3797 = vld [vmem:[%s3298 + $0x11] sm:$0xff]
        %v3798 = vld [vmem:[%s3298 + $0x19] sm:$0xf]
        %v3799 = vld [vmem:[%s3298 + $0x21] sm:$0xff]
        %v3800 = vld [vmem:[%s3298 + $0x29] sm:$0xf]
        %v3801 = vld [vmem:[%s3298 + $0x31] sm:$0xff]
        %v3802 = vld [vmem:[%s3298 + $0x39] sm:$0xf]
        %v3803 = vld [vmem:[%s3298 + $0x41] sm:$0xff]
        %v3804 = vld [vmem:[%s3298 + $0x49] sm:$0xf]
        %v3805 = vld [vmem:[%s3298 + $0x51] sm:$0xff]
        %v3806 = vld [vmem:[%s3298 + $0x59] sm:$0xf]
        %v3807 = vld [vmem:[%s3298 + $0x61] sm:$0xff]
        %v3808 = vld [vmem:[%s3298 + $0x69] sm:$0xf]
        %v3809 = vld [vmem:[%s3298 + $0x71] sm:$0xff]
        %v3810 = vld [vmem:[%s3298 + $0x79] sm:$0xf]
        %v3811 = vld [vmem:[%s3298 + $0x81] sm:$0xff]
        %v3812 = vld [vmem:[%s3298 + $0x89] sm:$0xf]
        %v3813 = vld [vmem:[%s3298 + $0x91] sm:$0xff]
        %v3814 = vld [vmem:[%s3298 + $0x99] sm:$0xf]
        %v3815 = vld [vmem:[%s3298 + $0xa1] sm:$0xff]
        %v3816 = vld [vmem:[%s3298 + $0xa9] sm:$0xf]
        %v3817 = vld [vmem:[%s3298 + $0xb1] sm:$0xff]
        %v3818 = vld [vmem:[%s3298 + $0xb9] sm:$0xf]
        %s3819 = scalar_lea.vmem %s1, 28
        %v3820 = vld [vmem:[%s3819] sm:$0x1]
        %3822 = vset.pattern.permute.xlu0 0
        %3823 = vperm.xlu0 %3822, %v3795
        %v3824 = vpop.permute.xlu0 %3823
        %3827 = vset.pattern.permute.xlu0 0
        %3828 = vperm.xlu0 %3827, %v3796
        %v3829 = vpop.permute.xlu0 %3828
        %3832 = vset.pattern.permute.xlu0 0
        %3833 = vperm.xlu0 %3832, %v3797
        %v3834 = vpop.permute.xlu0 %3833
        %3837 = vset.pattern.permute.xlu0 0
        %3838 = vperm.xlu0 %3837, %v3798
        %v3839 = vpop.permute.xlu0 %3838
        %3842 = vset.pattern.permute.xlu0 0
        %3843 = vperm.xlu0 %3842, %v3799
        %v3844 = vpop.permute.xlu0 %3843
        %3847 = vset.pattern.permute.xlu0 0
        %3848 = vperm.xlu0 %3847, %v3800
        %v3849 = vpop.permute.xlu0 %3848
        %3852 = vset.pattern.permute.xlu0 0
        %3853 = vperm.xlu0 %3852, %v3801
        %v3854 = vpop.permute.xlu0 %3853
        %3857 = vset.pattern.permute.xlu0 0
        %3858 = vperm.xlu0 %3857, %v3802
        %v3859 = vpop.permute.xlu0 %3858
        %3862 = vset.pattern.permute.xlu0 0
        %3863 = vperm.xlu0 %3862, %v3803
        %v3864 = vpop.permute.xlu0 %3863
        %3867 = vset.pattern.permute.xlu0 0
        %3868 = vperm.xlu0 %3867, %v3804
        %v3869 = vpop.permute.xlu0 %3868
        %3872 = vset.pattern.permute.xlu0 0
        %3873 = vperm.xlu0 %3872, %v3805
        %v3874 = vpop.permute.xlu0 %3873
        %3877 = vset.pattern.permute.xlu0 0
        %3878 = vperm.xlu0 %3877, %v3806
        %v3879 = vpop.permute.xlu0 %3878
        %3882 = vset.pattern.permute.xlu0 0
        %3883 = vperm.xlu0 %3882, %v3807
        %v3884 = vpop.permute.xlu0 %3883
        %3887 = vset.pattern.permute.xlu0 0
        %3888 = vperm.xlu0 %3887, %v3808
        %v3889 = vpop.permute.xlu0 %3888
        %3892 = vset.pattern.permute.xlu0 0
        %3893 = vperm.xlu0 %3892, %v3809
        %v3894 = vpop.permute.xlu0 %3893
        %3897 = vset.pattern.permute.xlu0 0
        %3898 = vperm.xlu0 %3897, %v3810
        %v3899 = vpop.permute.xlu0 %3898
        %3902 = vset.pattern.permute.xlu0 0
        %3903 = vperm.xlu0 %3902, %v3811
        %v3904 = vpop.permute.xlu0 %3903
        %3907 = vset.pattern.permute.xlu0 0
        %3908 = vperm.xlu0 %3907, %v3812
        %v3909 = vpop.permute.xlu0 %3908
        %3912 = vset.pattern.permute.xlu0 0
        %3913 = vperm.xlu0 %3912, %v3813
        %v3914 = vpop.permute.xlu0 %3913
        %3917 = vset.pattern.permute.xlu0 0
        %3918 = vperm.xlu0 %3917, %v3814
        %v3919 = vpop.permute.xlu0 %3918
        %3922 = vset.pattern.permute.xlu0 0
        %3923 = vperm.xlu0 %3922, %v3815
        %v3924 = vpop.permute.xlu0 %3923
        %3927 = vset.pattern.permute.xlu0 0
        %3928 = vperm.xlu0 %3927, %v3816
        %v3929 = vpop.permute.xlu0 %3928
        %3932 = vset.pattern.permute.xlu0 0
        %3933 = vperm.xlu0 %3932, %v3817
        %v3934 = vpop.permute.xlu0 %3933
        %3937 = vset.pattern.permute.xlu0 0
        %3938 = vperm.xlu0 %3937, %v3818
        %v3939 = vpop.permute.xlu0 %3938
        %v3941 = vlaneseq
        %v3942 = vshrl.u32 %v3941, 7
        %v3943 = vsub.s32 0, %v3942
        %v3944 = vrot.slane %v3820, %v3943
        %v3945 = vmul.f32 %v3824, %v3944
        %v3946 = vmul.f32 %v3829, %v3944
        %v3947 = vmul.f32 %v3834, %v3944
        %v3948 = vmul.f32 %v3839, %v3944
        %v3949 = vmul.f32 %v3844, %v3944
        %v3950 = vmul.f32 %v3849, %v3944
        %v3951 = vmul.f32 %v3854, %v3944
        %v3952 = vmul.f32 %v3859, %v3944
        %v3953 = vmul.f32 %v3864, %v3944
        %v3954 = vmul.f32 %v3869, %v3944
        %v3955 = vmul.f32 %v3874, %v3944
        %v3956 = vmul.f32 %v3879, %v3944
        %v3957 = vmul.f32 %v3884, %v3944
        %v3958 = vmul.f32 %v3889, %v3944
        %v3959 = vmul.f32 %v3894, %v3944
        %v3960 = vmul.f32 %v3899, %v3944
        %v3961 = vmul.f32 %v3904, %v3944
        %v3962 = vmul.f32 %v3909, %v3944
        %v3963 = vmul.f32 %v3914, %v3944
        %v3964 = vmul.f32 %v3919, %v3944
        %v3965 = vmul.f32 %v3924, %v3944
        %v3966 = vmul.f32 %v3929, %v3944
        %v3967 = vmul.f32 %v3934, %v3944
        %v3968 = vmul.f32 %v3939, %v3944
        %v3969 = vld [vmem:[%s3819 + $0x1] sm:$0x1]
        %3970 = vset.pattern.permute.xlu0 1
        %3971 = vperm.xlu0 %3970, %v3795
        %v3972 = vpop.permute.xlu0 %3971
        %3974 = vset.pattern.permute.xlu0 1
        %3975 = vperm.xlu0 %3974, %v3796
        %v3976 = vpop.permute.xlu0 %3975
        %3978 = vset.pattern.permute.xlu0 1
        %3979 = vperm.xlu0 %3978, %v3797
        %v3980 = vpop.permute.xlu0 %3979
        %3982 = vset.pattern.permute.xlu0 1
        %3983 = vperm.xlu0 %3982, %v3798
        %v3984 = vpop.permute.xlu0 %3983
        %3986 = vset.pattern.permute.xlu0 1
        %3987 = vperm.xlu0 %3986, %v3799
        %v3988 = vpop.permute.xlu0 %3987
        %3990 = vset.pattern.permute.xlu0 1
        %3991 = vperm.xlu0 %3990, %v3800
        %v3992 = vpop.permute.xlu0 %3991
        %3994 = vset.pattern.permute.xlu0 1
        %3995 = vperm.xlu0 %3994, %v3801
        %v3996 = vpop.permute.xlu0 %3995
        %3998 = vset.pattern.permute.xlu0 1
        %3999 = vperm.xlu0 %3998, %v3802
        %v4000 = vpop.permute.xlu0 %3999
        %4002 = vset.pattern.permute.xlu0 1
        %4003 = vperm.xlu0 %4002, %v3803
        %v4004 = vpop.permute.xlu0 %4003
        %4006 = vset.pattern.permute.xlu0 1
        %4007 = vperm.xlu0 %4006, %v3804
        %v4008 = vpop.permute.xlu0 %4007
        %4010 = vset.pattern.permute.xlu0 1
        %4011 = vperm.xlu0 %4010, %v3805
        %v4012 = vpop.permute.xlu0 %4011
        %4014 = vset.pattern.permute.xlu0 1
        %4015 = vperm.xlu0 %4014, %v3806
        %v4016 = vpop.permute.xlu0 %4015
        %4018 = vset.pattern.permute.xlu0 1
        %4019 = vperm.xlu0 %4018, %v3807
        %v4020 = vpop.permute.xlu0 %4019
        %4022 = vset.pattern.permute.xlu0 1
        %4023 = vperm.xlu0 %4022, %v3808
        %v4024 = vpop.permute.xlu0 %4023
        %4026 = vset.pattern.permute.xlu0 1
        %4027 = vperm.xlu0 %4026, %v3809
        %v4028 = vpop.permute.xlu0 %4027
        %4030 = vset.pattern.permute.xlu0 1
        %4031 = vperm.xlu0 %4030, %v3810
        %v4032 = vpop.permute.xlu0 %4031
        %4034 = vset.pattern.permute.xlu0 1
        %4035 = vperm.xlu0 %4034, %v3811
        %v4036 = vpop.permute.xlu0 %4035
        %4038 = vset.pattern.permute.xlu0 1
        %4039 = vperm.xlu0 %4038, %v3812
        %v4040 = vpop.permute.xlu0 %4039
        %4042 = vset.pattern.permute.xlu0 1
        %4043 = vperm.xlu0 %4042, %v3813
        %v4044 = vpop.permute.xlu0 %4043
        %4046 = vset.pattern.permute.xlu0 1
        %4047 = vperm.xlu0 %4046, %v3814
        %v4048 = vpop.permute.xlu0 %4047
        %4050 = vset.pattern.permute.xlu0 1
        %4051 = vperm.xlu0 %4050, %v3815
        %v4052 = vpop.permute.xlu0 %4051
        %4054 = vset.pattern.permute.xlu0 1
        %4055 = vperm.xlu0 %4054, %v3816
        %v4056 = vpop.permute.xlu0 %4055
        %4058 = vset.pattern.permute.xlu0 1
        %4059 = vperm.xlu0 %4058, %v3817
        %v4060 = vpop.permute.xlu0 %4059
        %4062 = vset.pattern.permute.xlu0 1
        %4063 = vperm.xlu0 %4062, %v3818
        %v4064 = vpop.permute.xlu0 %4063
        %v4066 = vlaneseq
        %v4067 = vshrl.u32 %v4066, 7
        %v4068 = vsub.s32 0, %v4067
        %v4069 = vrot.slane %v3969, %v4068
        %v4070 = vmul.f32 %v3972, %v4069
        %v4071 = vmul.f32 %v3976, %v4069
        %v4072 = vmul.f32 %v3980, %v4069
        %v4073 = vmul.f32 %v3984, %v4069
        %v4074 = vmul.f32 %v3988, %v4069
        %v4075 = vmul.f32 %v3992, %v4069
        %v4076 = vmul.f32 %v3996, %v4069
        %v4077 = vmul.f32 %v4000, %v4069
        %v4078 = vmul.f32 %v4004, %v4069
        %v4079 = vmul.f32 %v4008, %v4069
        %v4080 = vmul.f32 %v4012, %v4069
        %v4081 = vmul.f32 %v4016, %v4069
        %v4082 = vmul.f32 %v4020, %v4069
        %v4083 = vmul.f32 %v4024, %v4069
        %v4084 = vmul.f32 %v4028, %v4069
        %v4085 = vmul.f32 %v4032, %v4069
        %v4086 = vmul.f32 %v4036, %v4069
        %v4087 = vmul.f32 %v4040, %v4069
        %v4088 = vmul.f32 %v4044, %v4069
        %v4089 = vmul.f32 %v4048, %v4069
        %v4090 = vmul.f32 %v4052, %v4069
        %v4091 = vmul.f32 %v4056, %v4069
        %v4092 = vmul.f32 %v4060, %v4069
        %v4093 = vmul.f32 %v4064, %v4069
        %v4094 = vadd.f32 %v3945, %v4070
        %v4095 = vadd.f32 %v3946, %v4071
        %v4096 = vadd.f32 %v3947, %v4072
        %v4097 = vadd.f32 %v3948, %v4073
        %v4098 = vadd.f32 %v3949, %v4074
        %v4099 = vadd.f32 %v3950, %v4075
        %v4100 = vadd.f32 %v3951, %v4076
        %v4101 = vadd.f32 %v3952, %v4077
        %v4102 = vadd.f32 %v3953, %v4078
        %v4103 = vadd.f32 %v3954, %v4079
        %v4104 = vadd.f32 %v3955, %v4080
        %v4105 = vadd.f32 %v3956, %v4081
        %v4106 = vadd.f32 %v3957, %v4082
        %v4107 = vadd.f32 %v3958, %v4083
        %v4108 = vadd.f32 %v3959, %v4084
        %v4109 = vadd.f32 %v3960, %v4085
        %v4110 = vadd.f32 %v3961, %v4086
        %v4111 = vadd.f32 %v3962, %v4087
        %v4112 = vadd.f32 %v3963, %v4088
        %v4113 = vadd.f32 %v3964, %v4089
        %v4114 = vadd.f32 %v3965, %v4090
        %v4115 = vadd.f32 %v3966, %v4091
        %v4116 = vadd.f32 %v3967, %v4092
        %v4117 = vadd.f32 %v3968, %v4093
        %v4118 = vld [vmem:[%s3819 + $0x2] sm:$0x1]
        %4119 = vset.pattern.permute.xlu0 2
        %4120 = vperm.xlu0 %4119, %v3795
        %v4121 = vpop.permute.xlu0 %4120
        %4123 = vset.pattern.permute.xlu0 2
        %4124 = vperm.xlu0 %4123, %v3796
        %v4125 = vpop.permute.xlu0 %4124
        %4127 = vset.pattern.permute.xlu0 2
        %4128 = vperm.xlu0 %4127, %v3797
        %v4129 = vpop.permute.xlu0 %4128
        %4131 = vset.pattern.permute.xlu0 2
        %4132 = vperm.xlu0 %4131, %v3798
        %v4133 = vpop.permute.xlu0 %4132
        %4135 = vset.pattern.permute.xlu0 2
        %4136 = vperm.xlu0 %4135, %v3799
        %v4137 = vpop.permute.xlu0 %4136
        %4139 = vset.pattern.permute.xlu0 2
        %4140 = vperm.xlu0 %4139, %v3800
        %v4141 = vpop.permute.xlu0 %4140
        %4143 = vset.pattern.permute.xlu0 2
        %4144 = vperm.xlu0 %4143, %v3801
        %v4145 = vpop.permute.xlu0 %4144
        %4147 = vset.pattern.permute.xlu0 2
        %4148 = vperm.xlu0 %4147, %v3802
        %v4149 = vpop.permute.xlu0 %4148
        %4151 = vset.pattern.permute.xlu0 2
        %4152 = vperm.xlu0 %4151, %v3803
        %v4153 = vpop.permute.xlu0 %4152
        %4155 = vset.pattern.permute.xlu0 2
        %4156 = vperm.xlu0 %4155, %v3804
        %v4157 = vpop.permute.xlu0 %4156
        %4159 = vset.pattern.permute.xlu0 2
        %4160 = vperm.xlu0 %4159, %v3805
        %v4161 = vpop.permute.xlu0 %4160
        %4163 = vset.pattern.permute.xlu0 2
        %4164 = vperm.xlu0 %4163, %v3806
        %v4165 = vpop.permute.xlu0 %4164
        %4167 = vset.pattern.permute.xlu0 2
        %4168 = vperm.xlu0 %4167, %v3807
        %v4169 = vpop.permute.xlu0 %4168
        %4171 = vset.pattern.permute.xlu0 2
        %4172 = vperm.xlu0 %4171, %v3808
        %v4173 = vpop.permute.xlu0 %4172
        %4175 = vset.pattern.permute.xlu0 2
        %4176 = vperm.xlu0 %4175, %v3809
        %v4177 = vpop.permute.xlu0 %4176
        %4179 = vset.pattern.permute.xlu0 2
        %4180 = vperm.xlu0 %4179, %v3810
        %v4181 = vpop.permute.xlu0 %4180
        %4183 = vset.pattern.permute.xlu0 2
        %4184 = vperm.xlu0 %4183, %v3811
        %v4185 = vpop.permute.xlu0 %4184
        %4187 = vset.pattern.permute.xlu0 2
        %4188 = vperm.xlu0 %4187, %v3812
        %v4189 = vpop.permute.xlu0 %4188
        %4191 = vset.pattern.permute.xlu0 2
        %4192 = vperm.xlu0 %4191, %v3813
        %v4193 = vpop.permute.xlu0 %4192
        %4195 = vset.pattern.permute.xlu0 2
        %4196 = vperm.xlu0 %4195, %v3814
        %v4197 = vpop.permute.xlu0 %4196
        %4199 = vset.pattern.permute.xlu0 2
        %4200 = vperm.xlu0 %4199, %v3815
        %v4201 = vpop.permute.xlu0 %4200
        %4203 = vset.pattern.permute.xlu0 2
        %4204 = vperm.xlu0 %4203, %v3816
        %v4205 = vpop.permute.xlu0 %4204
        %4207 = vset.pattern.permute.xlu0 2
        %4208 = vperm.xlu0 %4207, %v3817
        %v4209 = vpop.permute.xlu0 %4208
        %4211 = vset.pattern.permute.xlu0 2
        %4212 = vperm.xlu0 %4211, %v3818
        %v4213 = vpop.permute.xlu0 %4212
        %v4215 = vlaneseq
        %v4216 = vshrl.u32 %v4215, 7
        %v4217 = vsub.s32 0, %v4216
        %v4218 = vrot.slane %v4118, %v4217
        %v4219 = vmul.f32 %v4121, %v4218
        %v4220 = vmul.f32 %v4125, %v4218
        %v4221 = vmul.f32 %v4129, %v4218
        %v4222 = vmul.f32 %v4133, %v4218
        %v4223 = vmul.f32 %v4137, %v4218
        %v4224 = vmul.f32 %v4141, %v4218
        %v4225 = vmul.f32 %v4145, %v4218
        %v4226 = vmul.f32 %v4149, %v4218
        %v4227 = vmul.f32 %v4153, %v4218
        %v4228 = vmul.f32 %v4157, %v4218
        %v4229 = vmul.f32 %v4161, %v4218
        %v4230 = vmul.f32 %v4165, %v4218
        %v4231 = vmul.f32 %v4169, %v4218
        %v4232 = vmul.f32 %v4173, %v4218
        %v4233 = vmul.f32 %v4177, %v4218
        %v4234 = vmul.f32 %v4181, %v4218
        %v4235 = vmul.f32 %v4185, %v4218
        %v4236 = vmul.f32 %v4189, %v4218
        %v4237 = vmul.f32 %v4193, %v4218
        %v4238 = vmul.f32 %v4197, %v4218
        %v4239 = vmul.f32 %v4201, %v4218
        %v4240 = vmul.f32 %v4205, %v4218
        %v4241 = vmul.f32 %v4209, %v4218
        %v4242 = vmul.f32 %v4213, %v4218
        %v4243 = vadd.f32 %v4094, %v4219
        %v4244 = vadd.f32 %v4095, %v4220
        %v4245 = vadd.f32 %v4096, %v4221
        %v4246 = vadd.f32 %v4097, %v4222
        %v4247 = vadd.f32 %v4098, %v4223
        %v4248 = vadd.f32 %v4099, %v4224
        %v4249 = vadd.f32 %v4100, %v4225
        %v4250 = vadd.f32 %v4101, %v4226
        %v4251 = vadd.f32 %v4102, %v4227
        %v4252 = vadd.f32 %v4103, %v4228
        %v4253 = vadd.f32 %v4104, %v4229
        %v4254 = vadd.f32 %v4105, %v4230
        %v4255 = vadd.f32 %v4106, %v4231
        %v4256 = vadd.f32 %v4107, %v4232
        %v4257 = vadd.f32 %v4108, %v4233
        %v4258 = vadd.f32 %v4109, %v4234
        %v4259 = vadd.f32 %v4110, %v4235
        %v4260 = vadd.f32 %v4111, %v4236
        %v4261 = vadd.f32 %v4112, %v4237
        %v4262 = vadd.f32 %v4113, %v4238
        %v4263 = vadd.f32 %v4114, %v4239
        %v4264 = vadd.f32 %v4115, %v4240
        %v4265 = vadd.f32 %v4116, %v4241
        %v4266 = vadd.f32 %v4117, %v4242
        %v4267 = vadd.f32 %v3771, %v4243
        %v4268 = vadd.f32 %v3772, %v4244
        %v4269 = vadd.f32 %v3773, %v4245
        %v4270 = vadd.f32 %v3774, %v4246
        %v4271 = vadd.f32 %v3775, %v4247
        %v4272 = vadd.f32 %v3776, %v4248
        %v4273 = vadd.f32 %v3777, %v4249
        %v4274 = vadd.f32 %v3778, %v4250
        %v4275 = vadd.f32 %v3779, %v4251
        %v4276 = vadd.f32 %v3780, %v4252
        %v4277 = vadd.f32 %v3781, %v4253
        %v4278 = vadd.f32 %v3782, %v4254
        %v4279 = vadd.f32 %v3783, %v4255
        %v4280 = vadd.f32 %v3784, %v4256
        %v4281 = vadd.f32 %v3785, %v4257
        %v4282 = vadd.f32 %v3786, %v4258
        %v4283 = vadd.f32 %v3787, %v4259
        %v4284 = vadd.f32 %v3788, %v4260
        %v4285 = vadd.f32 %v3789, %v4261
        %v4286 = vadd.f32 %v3790, %v4262
        %v4287 = vadd.f32 %v3791, %v4263
        %v4288 = vadd.f32 %v3792, %v4264
        %v4289 = vadd.f32 %v3793, %v4265
        %v4290 = vadd.f32 %v3794, %v4266
        %v4291 = vld [vmem:[%s3298 + $0x2] sm:$0xff]
        %v4292 = vld [vmem:[%s3298 + $0xa] sm:$0xf]
        %v4293 = vld [vmem:[%s3298 + $0x12] sm:$0xff]
        %v4294 = vld [vmem:[%s3298 + $0x1a] sm:$0xf]
        %v4295 = vld [vmem:[%s3298 + $0x22] sm:$0xff]
        %v4296 = vld [vmem:[%s3298 + $0x2a] sm:$0xf]
        %v4297 = vld [vmem:[%s3298 + $0x32] sm:$0xff]
        %v4298 = vld [vmem:[%s3298 + $0x3a] sm:$0xf]
        %v4299 = vld [vmem:[%s3298 + $0x42] sm:$0xff]
        %v4300 = vld [vmem:[%s3298 + $0x4a] sm:$0xf]
        %v4301 = vld [vmem:[%s3298 + $0x52] sm:$0xff]
        %v4302 = vld [vmem:[%s3298 + $0x5a] sm:$0xf]
        %v4303 = vld [vmem:[%s3298 + $0x62] sm:$0xff]
        %v4304 = vld [vmem:[%s3298 + $0x6a] sm:$0xf]
        %v4305 = vld [vmem:[%s3298 + $0x72] sm:$0xff]
        %v4306 = vld [vmem:[%s3298 + $0x7a] sm:$0xf]
        %v4307 = vld [vmem:[%s3298 + $0x82] sm:$0xff]
        %v4308 = vld [vmem:[%s3298 + $0x8a] sm:$0xf]
        %v4309 = vld [vmem:[%s3298 + $0x92] sm:$0xff]
        %v4310 = vld [vmem:[%s3298 + $0x9a] sm:$0xf]
        %v4311 = vld [vmem:[%s3298 + $0xa2] sm:$0xff]
        %v4312 = vld [vmem:[%s3298 + $0xaa] sm:$0xf]
        %v4313 = vld [vmem:[%s3298 + $0xb2] sm:$0xff]
        %v4314 = vld [vmem:[%s3298 + $0xba] sm:$0xf]
        %s4315 = scalar_lea.vmem %s1, 32
        %v4316 = vld [vmem:[%s4315] sm:$0x1]
        %4318 = vset.pattern.permute.xlu0 0
        %4319 = vperm.xlu0 %4318, %v4291
        %v4320 = vpop.permute.xlu0 %4319
        %4323 = vset.pattern.permute.xlu0 0
        %4324 = vperm.xlu0 %4323, %v4292
        %v4325 = vpop.permute.xlu0 %4324
        %4328 = vset.pattern.permute.xlu0 0
        %4329 = vperm.xlu0 %4328, %v4293
        %v4330 = vpop.permute.xlu0 %4329
        %4333 = vset.pattern.permute.xlu0 0
        %4334 = vperm.xlu0 %4333, %v4294
        %v4335 = vpop.permute.xlu0 %4334
        %4338 = vset.pattern.permute.xlu0 0
        %4339 = vperm.xlu0 %4338, %v4295
        %v4340 = vpop.permute.xlu0 %4339
        %4343 = vset.pattern.permute.xlu0 0
        %4344 = vperm.xlu0 %4343, %v4296
        %v4345 = vpop.permute.xlu0 %4344
        %4348 = vset.pattern.permute.xlu0 0
        %4349 = vperm.xlu0 %4348, %v4297
        %v4350 = vpop.permute.xlu0 %4349
        %4353 = vset.pattern.permute.xlu0 0
        %4354 = vperm.xlu0 %4353, %v4298
        %v4355 = vpop.permute.xlu0 %4354
        %4358 = vset.pattern.permute.xlu0 0
        %4359 = vperm.xlu0 %4358, %v4299
        %v4360 = vpop.permute.xlu0 %4359
        %4363 = vset.pattern.permute.xlu0 0
        %4364 = vperm.xlu0 %4363, %v4300
        %v4365 = vpop.permute.xlu0 %4364
        %4368 = vset.pattern.permute.xlu0 0
        %4369 = vperm.xlu0 %4368, %v4301
        %v4370 = vpop.permute.xlu0 %4369
        %4373 = vset.pattern.permute.xlu0 0
        %4374 = vperm.xlu0 %4373, %v4302
        %v4375 = vpop.permute.xlu0 %4374
        %4378 = vset.pattern.permute.xlu0 0
        %4379 = vperm.xlu0 %4378, %v4303
        %v4380 = vpop.permute.xlu0 %4379
        %4383 = vset.pattern.permute.xlu0 0
        %4384 = vperm.xlu0 %4383, %v4304
        %v4385 = vpop.permute.xlu0 %4384
        %4388 = vset.pattern.permute.xlu0 0
        %4389 = vperm.xlu0 %4388, %v4305
        %v4390 = vpop.permute.xlu0 %4389
        %4393 = vset.pattern.permute.xlu0 0
        %4394 = vperm.xlu0 %4393, %v4306
        %v4395 = vpop.permute.xlu0 %4394
        %4398 = vset.pattern.permute.xlu0 0
        %4399 = vperm.xlu0 %4398, %v4307
        %v4400 = vpop.permute.xlu0 %4399
        %4403 = vset.pattern.permute.xlu0 0
        %4404 = vperm.xlu0 %4403, %v4308
        %v4405 = vpop.permute.xlu0 %4404
        %4408 = vset.pattern.permute.xlu0 0
        %4409 = vperm.xlu0 %4408, %v4309
        %v4410 = vpop.permute.xlu0 %4409
        %4413 = vset.pattern.permute.xlu0 0
        %4414 = vperm.xlu0 %4413, %v4310
        %v4415 = vpop.permute.xlu0 %4414
        %4418 = vset.pattern.permute.xlu0 0
        %4419 = vperm.xlu0 %4418, %v4311
        %v4420 = vpop.permute.xlu0 %4419
        %4423 = vset.pattern.permute.xlu0 0
        %4424 = vperm.xlu0 %4423, %v4312
        %v4425 = vpop.permute.xlu0 %4424
        %4428 = vset.pattern.permute.xlu0 0
        %4429 = vperm.xlu0 %4428, %v4313
        %v4430 = vpop.permute.xlu0 %4429
        %4433 = vset.pattern.permute.xlu0 0
        %4434 = vperm.xlu0 %4433, %v4314
        %v4435 = vpop.permute.xlu0 %4434
        %v4437 = vlaneseq
        %v4438 = vshrl.u32 %v4437, 7
        %v4439 = vsub.s32 0, %v4438
        %v4440 = vrot.slane %v4316, %v4439
        %v4441 = vmul.f32 %v4320, %v4440
        %v4442 = vmul.f32 %v4325, %v4440
        %v4443 = vmul.f32 %v4330, %v4440
        %v4444 = vmul.f32 %v4335, %v4440
        %v4445 = vmul.f32 %v4340, %v4440
        %v4446 = vmul.f32 %v4345, %v4440
        %v4447 = vmul.f32 %v4350, %v4440
        %v4448 = vmul.f32 %v4355, %v4440
        %v4449 = vmul.f32 %v4360, %v4440
        %v4450 = vmul.f32 %v4365, %v4440
        %v4451 = vmul.f32 %v4370, %v4440
        %v4452 = vmul.f32 %v4375, %v4440
        %v4453 = vmul.f32 %v4380, %v4440
        %v4454 = vmul.f32 %v4385, %v4440
        %v4455 = vmul.f32 %v4390, %v4440
        %v4456 = vmul.f32 %v4395, %v4440
        %v4457 = vmul.f32 %v4400, %v4440
        %v4458 = vmul.f32 %v4405, %v4440
        %v4459 = vmul.f32 %v4410, %v4440
        %v4460 = vmul.f32 %v4415, %v4440
        %v4461 = vmul.f32 %v4420, %v4440
        %v4462 = vmul.f32 %v4425, %v4440
        %v4463 = vmul.f32 %v4430, %v4440
        %v4464 = vmul.f32 %v4435, %v4440
        %v4465 = vld [vmem:[%s4315 + $0x1] sm:$0x1]
        %4466 = vset.pattern.permute.xlu0 1
        %4467 = vperm.xlu0 %4466, %v4291
        %v4468 = vpop.permute.xlu0 %4467
        %4470 = vset.pattern.permute.xlu0 1
        %4471 = vperm.xlu0 %4470, %v4292
        %v4472 = vpop.permute.xlu0 %4471
        %4474 = vset.pattern.permute.xlu0 1
        %4475 = vperm.xlu0 %4474, %v4293
        %v4476 = vpop.permute.xlu0 %4475
        %4478 = vset.pattern.permute.xlu0 1
        %4479 = vperm.xlu0 %4478, %v4294
        %v4480 = vpop.permute.xlu0 %4479
        %4482 = vset.pattern.permute.xlu0 1
        %4483 = vperm.xlu0 %4482, %v4295
        %v4484 = vpop.permute.xlu0 %4483
        %4486 = vset.pattern.permute.xlu0 1
        %4487 = vperm.xlu0 %4486, %v4296
        %v4488 = vpop.permute.xlu0 %4487
        %4490 = vset.pattern.permute.xlu0 1
        %4491 = vperm.xlu0 %4490, %v4297
        %v4492 = vpop.permute.xlu0 %4491
        %4494 = vset.pattern.permute.xlu0 1
        %4495 = vperm.xlu0 %4494, %v4298
        %v4496 = vpop.permute.xlu0 %4495
        %4498 = vset.pattern.permute.xlu0 1
        %4499 = vperm.xlu0 %4498, %v4299
        %v4500 = vpop.permute.xlu0 %4499
        %4502 = vset.pattern.permute.xlu0 1
        %4503 = vperm.xlu0 %4502, %v4300
        %v4504 = vpop.permute.xlu0 %4503
        %4506 = vset.pattern.permute.xlu0 1
        %4507 = vperm.xlu0 %4506, %v4301
        %v4508 = vpop.permute.xlu0 %4507
        %4510 = vset.pattern.permute.xlu0 1
        %4511 = vperm.xlu0 %4510, %v4302
        %v4512 = vpop.permute.xlu0 %4511
        %4514 = vset.pattern.permute.xlu0 1
        %4515 = vperm.xlu0 %4514, %v4303
        %v4516 = vpop.permute.xlu0 %4515
        %4518 = vset.pattern.permute.xlu0 1
        %4519 = vperm.xlu0 %4518, %v4304
        %v4520 = vpop.permute.xlu0 %4519
        %4522 = vset.pattern.permute.xlu0 1
        %4523 = vperm.xlu0 %4522, %v4305
        %v4524 = vpop.permute.xlu0 %4523
        %4526 = vset.pattern.permute.xlu0 1
        %4527 = vperm.xlu0 %4526, %v4306
        %v4528 = vpop.permute.xlu0 %4527
        %4530 = vset.pattern.permute.xlu0 1
        %4531 = vperm.xlu0 %4530, %v4307
        %v4532 = vpop.permute.xlu0 %4531
        %4534 = vset.pattern.permute.xlu0 1
        %4535 = vperm.xlu0 %4534, %v4308
        %v4536 = vpop.permute.xlu0 %4535
        %4538 = vset.pattern.permute.xlu0 1
        %4539 = vperm.xlu0 %4538, %v4309
        %v4540 = vpop.permute.xlu0 %4539
        %4542 = vset.pattern.permute.xlu0 1
        %4543 = vperm.xlu0 %4542, %v4310
        %v4544 = vpop.permute.xlu0 %4543
        %4546 = vset.pattern.permute.xlu0 1
        %4547 = vperm.xlu0 %4546, %v4311
        %v4548 = vpop.permute.xlu0 %4547
        %4550 = vset.pattern.permute.xlu0 1
        %4551 = vperm.xlu0 %4550, %v4312
        %v4552 = vpop.permute.xlu0 %4551
        %4554 = vset.pattern.permute.xlu0 1
        %4555 = vperm.xlu0 %4554, %v4313
        %v4556 = vpop.permute.xlu0 %4555
        %4558 = vset.pattern.permute.xlu0 1
        %4559 = vperm.xlu0 %4558, %v4314
        %v4560 = vpop.permute.xlu0 %4559
        %v4562 = vlaneseq
        %v4563 = vshrl.u32 %v4562, 7
        %v4564 = vsub.s32 0, %v4563
        %v4565 = vrot.slane %v4465, %v4564
        %v4566 = vmul.f32 %v4468, %v4565
        %v4567 = vmul.f32 %v4472, %v4565
        %v4568 = vmul.f32 %v4476, %v4565
        %v4569 = vmul.f32 %v4480, %v4565
        %v4570 = vmul.f32 %v4484, %v4565
        %v4571 = vmul.f32 %v4488, %v4565
        %v4572 = vmul.f32 %v4492, %v4565
        %v4573 = vmul.f32 %v4496, %v4565
        %v4574 = vmul.f32 %v4500, %v4565
        %v4575 = vmul.f32 %v4504, %v4565
        %v4576 = vmul.f32 %v4508, %v4565
        %v4577 = vmul.f32 %v4512, %v4565
        %v4578 = vmul.f32 %v4516, %v4565
        %v4579 = vmul.f32 %v4520, %v4565
        %v4580 = vmul.f32 %v4524, %v4565
        %v4581 = vmul.f32 %v4528, %v4565
        %v4582 = vmul.f32 %v4532, %v4565
        %v4583 = vmul.f32 %v4536, %v4565
        %v4584 = vmul.f32 %v4540, %v4565
        %v4585 = vmul.f32 %v4544, %v4565
        %v4586 = vmul.f32 %v4548, %v4565
        %v4587 = vmul.f32 %v4552, %v4565
        %v4588 = vmul.f32 %v4556, %v4565
        %v4589 = vmul.f32 %v4560, %v4565
        %v4590 = vadd.f32 %v4441, %v4566
        %v4591 = vadd.f32 %v4442, %v4567
        %v4592 = vadd.f32 %v4443, %v4568
        %v4593 = vadd.f32 %v4444, %v4569
        %v4594 = vadd.f32 %v4445, %v4570
        %v4595 = vadd.f32 %v4446, %v4571
        %v4596 = vadd.f32 %v4447, %v4572
        %v4597 = vadd.f32 %v4448, %v4573
        %v4598 = vadd.f32 %v4449, %v4574
        %v4599 = vadd.f32 %v4450, %v4575
        %v4600 = vadd.f32 %v4451, %v4576
        %v4601 = vadd.f32 %v4452, %v4577
        %v4602 = vadd.f32 %v4453, %v4578
        %v4603 = vadd.f32 %v4454, %v4579
        %v4604 = vadd.f32 %v4455, %v4580
        %v4605 = vadd.f32 %v4456, %v4581
        %v4606 = vadd.f32 %v4457, %v4582
        %v4607 = vadd.f32 %v4458, %v4583
        %v4608 = vadd.f32 %v4459, %v4584
        %v4609 = vadd.f32 %v4460, %v4585
        %v4610 = vadd.f32 %v4461, %v4586
        %v4611 = vadd.f32 %v4462, %v4587
        %v4612 = vadd.f32 %v4463, %v4588
        %v4613 = vadd.f32 %v4464, %v4589
        %v4614 = vld [vmem:[%s4315 + $0x2] sm:$0x1]
        %4615 = vset.pattern.permute.xlu0 2
        %4616 = vperm.xlu0 %4615, %v4291
        %v4617 = vpop.permute.xlu0 %4616
        %4619 = vset.pattern.permute.xlu0 2
        %4620 = vperm.xlu0 %4619, %v4292
        %v4621 = vpop.permute.xlu0 %4620
        %4623 = vset.pattern.permute.xlu0 2
        %4624 = vperm.xlu0 %4623, %v4293
        %v4625 = vpop.permute.xlu0 %4624
        %4627 = vset.pattern.permute.xlu0 2
        %4628 = vperm.xlu0 %4627, %v4294
        %v4629 = vpop.permute.xlu0 %4628
        %4631 = vset.pattern.permute.xlu0 2
        %4632 = vperm.xlu0 %4631, %v4295
        %v4633 = vpop.permute.xlu0 %4632
        %4635 = vset.pattern.permute.xlu0 2
        %4636 = vperm.xlu0 %4635, %v4296
        %v4637 = vpop.permute.xlu0 %4636
        %4639 = vset.pattern.permute.xlu0 2
        %4640 = vperm.xlu0 %4639, %v4297
        %v4641 = vpop.permute.xlu0 %4640
        %4643 = vset.pattern.permute.xlu0 2
        %4644 = vperm.xlu0 %4643, %v4298
        %v4645 = vpop.permute.xlu0 %4644
        %4647 = vset.pattern.permute.xlu0 2
        %4648 = vperm.xlu0 %4647, %v4299
        %v4649 = vpop.permute.xlu0 %4648
        %4651 = vset.pattern.permute.xlu0 2
        %4652 = vperm.xlu0 %4651, %v4300
        %v4653 = vpop.permute.xlu0 %4652
        %4655 = vset.pattern.permute.xlu0 2
        %4656 = vperm.xlu0 %4655, %v4301
        %v4657 = vpop.permute.xlu0 %4656
        %4659 = vset.pattern.permute.xlu0 2
        %4660 = vperm.xlu0 %4659, %v4302
        %v4661 = vpop.permute.xlu0 %4660
        %4663 = vset.pattern.permute.xlu0 2
        %4664 = vperm.xlu0 %4663, %v4303
        %v4665 = vpop.permute.xlu0 %4664
        %4667 = vset.pattern.permute.xlu0 2
        %4668 = vperm.xlu0 %4667, %v4304
        %v4669 = vpop.permute.xlu0 %4668
        %4671 = vset.pattern.permute.xlu0 2
        %4672 = vperm.xlu0 %4671, %v4305
        %v4673 = vpop.permute.xlu0 %4672
        %4675 = vset.pattern.permute.xlu0 2
        %4676 = vperm.xlu0 %4675, %v4306
        %v4677 = vpop.permute.xlu0 %4676
        %4679 = vset.pattern.permute.xlu0 2
        %4680 = vperm.xlu0 %4679, %v4307
        %v4681 = vpop.permute.xlu0 %4680
        %4683 = vset.pattern.permute.xlu0 2
        %4684 = vperm.xlu0 %4683, %v4308
        %v4685 = vpop.permute.xlu0 %4684
        %4687 = vset.pattern.permute.xlu0 2
        %4688 = vperm.xlu0 %4687, %v4309
        %v4689 = vpop.permute.xlu0 %4688
        %4691 = vset.pattern.permute.xlu0 2
        %4692 = vperm.xlu0 %4691, %v4310
        %v4693 = vpop.permute.xlu0 %4692
        %4695 = vset.pattern.permute.xlu0 2
        %4696 = vperm.xlu0 %4695, %v4311
        %v4697 = vpop.permute.xlu0 %4696
        %4699 = vset.pattern.permute.xlu0 2
        %4700 = vperm.xlu0 %4699, %v4312
        %v4701 = vpop.permute.xlu0 %4700
        %4703 = vset.pattern.permute.xlu0 2
        %4704 = vperm.xlu0 %4703, %v4313
        %v4705 = vpop.permute.xlu0 %4704
        %4707 = vset.pattern.permute.xlu0 2
        %4708 = vperm.xlu0 %4707, %v4314
        %v4709 = vpop.permute.xlu0 %4708
        %v4711 = vlaneseq
        %v4712 = vshrl.u32 %v4711, 7
        %v4713 = vsub.s32 0, %v4712
        %v4714 = vrot.slane %v4614, %v4713
        %v4715 = vmul.f32 %v4617, %v4714
        %v4716 = vmul.f32 %v4621, %v4714
        %v4717 = vmul.f32 %v4625, %v4714
        %v4718 = vmul.f32 %v4629, %v4714
        %v4719 = vmul.f32 %v4633, %v4714
        %v4720 = vmul.f32 %v4637, %v4714
        %v4721 = vmul.f32 %v4641, %v4714
        %v4722 = vmul.f32 %v4645, %v4714
        %v4723 = vmul.f32 %v4649, %v4714
        %v4724 = vmul.f32 %v4653, %v4714
        %v4725 = vmul.f32 %v4657, %v4714
        %v4726 = vmul.f32 %v4661, %v4714
        %v4727 = vmul.f32 %v4665, %v4714
        %v4728 = vmul.f32 %v4669, %v4714
        %v4729 = vmul.f32 %v4673, %v4714
        %v4730 = vmul.f32 %v4677, %v4714
        %v4731 = vmul.f32 %v4681, %v4714
        %v4732 = vmul.f32 %v4685, %v4714
        %v4733 = vmul.f32 %v4689, %v4714
        %v4734 = vmul.f32 %v4693, %v4714
        %v4735 = vmul.f32 %v4697, %v4714
        %v4736 = vmul.f32 %v4701, %v4714
        %v4737 = vmul.f32 %v4705, %v4714
        %v4738 = vmul.f32 %v4709, %v4714
        %v4739 = vadd.f32 %v4590, %v4715
        %v4740 = vadd.f32 %v4591, %v4716
        %v4741 = vadd.f32 %v4592, %v4717
        %v4742 = vadd.f32 %v4593, %v4718
        %v4743 = vadd.f32 %v4594, %v4719
        %v4744 = vadd.f32 %v4595, %v4720
        %v4745 = vadd.f32 %v4596, %v4721
        %v4746 = vadd.f32 %v4597, %v4722
        %v4747 = vadd.f32 %v4598, %v4723
        %v4748 = vadd.f32 %v4599, %v4724
        %v4749 = vadd.f32 %v4600, %v4725
        %v4750 = vadd.f32 %v4601, %v4726
        %v4751 = vadd.f32 %v4602, %v4727
        %v4752 = vadd.f32 %v4603, %v4728
        %v4753 = vadd.f32 %v4604, %v4729
        %v4754 = vadd.f32 %v4605, %v4730
        %v4755 = vadd.f32 %v4606, %v4731
        %v4756 = vadd.f32 %v4607, %v4732
        %v4757 = vadd.f32 %v4608, %v4733
        %v4758 = vadd.f32 %v4609, %v4734
        %v4759 = vadd.f32 %v4610, %v4735
        %v4760 = vadd.f32 %v4611, %v4736
        %v4761 = vadd.f32 %v4612, %v4737
        %v4762 = vadd.f32 %v4613, %v4738
        %v4763 = vadd.f32 %v4267, %v4739
        %v4764 = vadd.f32 %v4268, %v4740
        %v4765 = vadd.f32 %v4269, %v4741
        %v4766 = vadd.f32 %v4270, %v4742
        %v4767 = vadd.f32 %v4271, %v4743
        %v4768 = vadd.f32 %v4272, %v4744
        %v4769 = vadd.f32 %v4273, %v4745
        %v4770 = vadd.f32 %v4274, %v4746
        %v4771 = vadd.f32 %v4275, %v4747
        %v4772 = vadd.f32 %v4276, %v4748
        %v4773 = vadd.f32 %v4277, %v4749
        %v4774 = vadd.f32 %v4278, %v4750
        %v4775 = vadd.f32 %v4279, %v4751
        %v4776 = vadd.f32 %v4280, %v4752
        %v4777 = vadd.f32 %v4281, %v4753
        %v4778 = vadd.f32 %v4282, %v4754
        %v4779 = vadd.f32 %v4283, %v4755
        %v4780 = vadd.f32 %v4284, %v4756
        %v4781 = vadd.f32 %v4285, %v4757
        %v4782 = vadd.f32 %v4286, %v4758
        %v4783 = vadd.f32 %v4287, %v4759
        %v4784 = vadd.f32 %v4288, %v4760
        %v4785 = vadd.f32 %v4289, %v4761
        %v4786 = vadd.f32 %v4290, %v4762
        %v4787 = vmax.f32 %v4763, %v4765
        %v4788 = vmax.f32 %v4764, %v4766
        %v4789 = vmax.f32 %v4765, %v4767
        %v4790 = vmax.f32 %v4766, %v4768
        %v4791 = vmax.f32 %v4767, %v4769
        %v4792 = vmax.f32 %v4768, %v4770
        %v4793 = vmax.f32 %v4769, %v4771
        %v4794 = vmax.f32 %v4770, %v4772
        %v4795 = vmax.f32 %v4771, %v4773
        %v4796 = vmax.f32 %v4772, %v4774
        %v4797 = vmax.f32 %v4773, %v4775
        %v4798 = vmax.f32 %v4774, %v4776
        %v4799 = vmax.f32 %v4775, %v4777
        %v4800 = vmax.f32 %v4776, %v4778
        %v4801 = vmax.f32 %v4777, %v4779
        %v4802 = vmax.f32 %v4778, %v4780
        %v4803 = vmax.f32 %v4779, %v4781
        %v4804 = vmax.f32 %v4780, %v4782
        %v4805 = vmax.f32 %v4781, %v4783
        %v4806 = vmax.f32 %v4782, %v4784
        %v4807 = vmax.f32 %v4783, %v4785
        %v4808 = vmax.f32 %v4784, %v4786
        %vm4831 = vcmask 1046528
        %v4832 = vrot.slane %v4787, 1
        %v4833 = vrot.slane %v4788, 1
        %v4834 = vsel %vm4831, %v4832, %v4833
        %v4835 = vrot.slane %v4789, 1
        %v4836 = vrot.slane %v4790, 1
        %v4837 = vsel %vm4831, %v4835, %v4836
        %v4838 = vrot.slane %v4791, 1
        %v4839 = vrot.slane %v4792, 1
        %v4840 = vsel %vm4831, %v4838, %v4839
        %v4841 = vrot.slane %v4793, 1
        %v4842 = vrot.slane %v4794, 1
        %v4843 = vsel %vm4831, %v4841, %v4842
        %v4844 = vrot.slane %v4795, 1
        %v4845 = vrot.slane %v4796, 1
        %v4846 = vsel %vm4831, %v4844, %v4845
        %v4847 = vrot.slane %v4797, 1
        %v4848 = vrot.slane %v4798, 1
        %v4849 = vsel %vm4831, %v4847, %v4848
        %v4850 = vrot.slane %v4799, 1
        %v4851 = vrot.slane %v4800, 1
        %v4852 = vsel %vm4831, %v4850, %v4851
        %v4853 = vrot.slane %v4801, 1
        %v4854 = vrot.slane %v4802, 1
        %v4855 = vsel %vm4831, %v4853, %v4854
        %v4856 = vrot.slane %v4803, 1
        %v4857 = vrot.slane %v4804, 1
        %v4858 = vsel %vm4831, %v4856, %v4857
        %v4859 = vrot.slane %v4805, 1
        %v4860 = vrot.slane %v4806, 1
        %v4861 = vsel %vm4831, %v4859, %v4860
        %v4862 = vrot.slane %v4807, 1
        %v4863 = vrot.slane %v4808, 1
        %v4864 = vsel %vm4831, %v4862, %v4863
        %v4887 = vmax.f32 %v4787, %v4834
        %v4888 = vmax.f32 %v4788, %v4833
        %v4889 = vmax.f32 %v4789, %v4837
        %v4890 = vmax.f32 %v4790, %v4836
        %v4891 = vmax.f32 %v4791, %v4840
        %v4892 = vmax.f32 %v4792, %v4839
        %v4893 = vmax.f32 %v4793, %v4843
        %v4894 = vmax.f32 %v4794, %v4842
        %v4895 = vmax.f32 %v4795, %v4846
        %v4896 = vmax.f32 %v4796, %v4845
        %v4897 = vmax.f32 %v4797, %v4849
        %v4898 = vmax.f32 %v4798, %v4848
        %v4899 = vmax.f32 %v4799, %v4852
        %v4900 = vmax.f32 %v4800, %v4851
        %v4901 = vmax.f32 %v4801, %v4855
        %v4902 = vmax.f32 %v4802, %v4854
        %v4903 = vmax.f32 %v4803, %v4858
        %v4904 = vmax.f32 %v4804, %v4857
        %v4905 = vmax.f32 %v4805, %v4861
        %v4906 = vmax.f32 %v4806, %v4860
        %v4907 = vmax.f32 %v4807, %v4864
        %v4908 = vmax.f32 %v4808, %v4863
        %v4909 = vld [vmem:[%s2] sm:$0x1]
        %v4911 = vlaneseq
        %v4912 = vshrl.u32 %v4911, 7
        %v4913 = vsub.s32 0, %v4912
        %v4914 = vrot.slane %v4909, %v4913
        %v4916 = vadd.f32 %v4887, %v4914
        %v4917 = vadd.f32 %v4888, %v4914
        %v4918 = vadd.f32 %v4889, %v4914
        %v4919 = vadd.f32 %v4890, %v4914
        %v4920 = vadd.f32 %v4891, %v4914
        %v4921 = vadd.f32 %v4892, %v4914
        %v4922 = vadd.f32 %v4893, %v4914
        %v4923 = vadd.f32 %v4894, %v4914
        %v4924 = vadd.f32 %v4895, %v4914
        %v4925 = vadd.f32 %v4896, %v4914
        %v4926 = vadd.f32 %v4897, %v4914
        %v4927 = vadd.f32 %v4898, %v4914
        %v4928 = vadd.f32 %v4899, %v4914
        %v4929 = vadd.f32 %v4900, %v4914
        %v4930 = vadd.f32 %v4901, %v4914
        %v4931 = vadd.f32 %v4902, %v4914
        %v4932 = vadd.f32 %v4903, %v4914
        %v4933 = vadd.f32 %v4904, %v4914
        %v4934 = vadd.f32 %v4905, %v4914
        %v4935 = vadd.f32 %v4906, %v4914
        %v4936 = vadd.f32 %v4907, %v4914
        %v4937 = vadd.f32 %v4908, %v4914
        %vm4938 = vcmask 261120
        %4939 = vst.msk [vmem:[#allocation2] sm:$0xff] %vm4938, %v4916
        %vm4940 = vcmask 256000
        %4941 = vst.msk [vmem:[#allocation2 + $0x8] sm:$0x7] %vm4940, %v4917
        %4942 = vst.msk [vmem:[#allocation2 + $0x10] sm:$0xff] %vm4938, %v4918
        %4943 = vst.msk [vmem:[#allocation2 + $0x18] sm:$0x7] %vm4940, %v4919
        %4944 = vst.msk [vmem:[#allocation2 + $0x20] sm:$0xff] %vm4938, %v4920
        %4945 = vst.msk [vmem:[#allocation2 + $0x28] sm:$0x7] %vm4940, %v4921
        %4946 = vst.msk [vmem:[#allocation2 + $0x30] sm:$0xff] %vm4938, %v4922
        %4947 = vst.msk [vmem:[#allocation2 + $0x38] sm:$0x7] %vm4940, %v4923
        %4948 = vst.msk [vmem:[#allocation2 + $0x40] sm:$0xff] %vm4938, %v4924
        %4949 = vst.msk [vmem:[#allocation2 + $0x48] sm:$0x7] %vm4940, %v4925
        %4950 = vst.msk [vmem:[#allocation2 + $0x50] sm:$0xff] %vm4938, %v4926
        %4951 = vst.msk [vmem:[#allocation2 + $0x58] sm:$0x7] %vm4940, %v4927
        %4952 = vst.msk [vmem:[#allocation2 + $0x60] sm:$0xff] %vm4938, %v4928
        %4953 = vst.msk [vmem:[#allocation2 + $0x68] sm:$0x7] %vm4940, %v4929
        %4954 = vst.msk [vmem:[#allocation2 + $0x70] sm:$0xff] %vm4938, %v4930
        %4955 = vst.msk [vmem:[#allocation2 + $0x78] sm:$0x7] %vm4940, %v4931
        %4956 = vst.msk [vmem:[#allocation2 + $0x80] sm:$0xff] %vm4938, %v4932
        %4957 = vst.msk [vmem:[#allocation2 + $0x88] sm:$0x7] %vm4940, %v4933
        %4958 = vst.msk [vmem:[#allocation2 + $0x90] sm:$0xff] %vm4938, %v4934
        %4959 = vst.msk [vmem:[#allocation2 + $0x98] sm:$0x7] %vm4940, %v4935
        %4960 = vst.msk [vmem:[#allocation2 + $0xa0] sm:$0xff] %vm4938, %v4936
        %4961 = vst.msk [vmem:[#allocation2 + $0xa8] sm:$0x7] %vm4940, %v4937
        %v4962 = vld [vmem:[#allocation2] sm:$0x1]
        %vm4963 = vcmask 253952
        %4964 = vst.msk [vmem:[#allocation3] sm:$0x1] %vm4963, %v4962
        %v4965 = vld [vmem:[#allocation2 + $0x2] sm:$0x1]
        %4966 = vst.msk [vmem:[#allocation3 + $0x1] sm:$0x1] %vm4963, %v4965
        %s4967 = scalar_lea.vmem [#allocation2], 32
        %v4968 = vld [vmem:[%s4967] sm:$0x1]
        %4969 = vst.msk [vmem:[#allocation3 + $0x2] sm:$0x1] %vm4963, %v4968
        %v4970 = vld [vmem:[%s4967 + $0x2] sm:$0x1]
        %4971 = vst.msk [vmem:[#allocation3 + $0x3] sm:$0x1] %vm4963, %v4970
        %v4972 = vld [vmem:[#allocation5] sm:$0xff]
        %v4973 = vld [vmem:[#allocation5 + $0x8] sm:$0xff]
        %v4974 = vld [vmem:[#allocation5 + $0x10] sm:$0xff]
        %v4975 = vld [vmem:[#allocation5 + $0x18] sm:$0xff]
        %v4976 = vld [vmem:[#allocation3] sm:$0xf]
        %v4977 = vld [vmem:[#allocation2 + $0x2] sm:$0x1]
        %4978 = vst.msk [vmem:[#allocation3] sm:$0x1] %vm4963, %v4977
        %v4979 = vld [vmem:[#allocation2 + $0x4] sm:$0x1]
        %4980 = vst.msk [vmem:[#allocation3 + $0x1] sm:$0x1] %vm4963, %v4979
        %v4981 = vld [vmem:[%s4967 + $0x2] sm:$0x1]
        %4982 = vst.msk [vmem:[#allocation3 + $0x2] sm:$0x1] %vm4963, %v4981
        %v4983 = vld [vmem:[%s4967 + $0x4] sm:$0x1]
        %4984 = vst.msk [vmem:[#allocation3 + $0x3] sm:$0x1] %vm4963, %v4983
        %s4985 = scalar_lea.vmem [#allocation5], 32
        %v4986 = vld [vmem:[%s4985] sm:$0xff]
        %v4987 = vld [vmem:[%s4985 + $0x8] sm:$0xff]
        %v4988 = vld [vmem:[%s4985 + $0x10] sm:$0xff]
        %v4989 = vld [vmem:[%s4985 + $0x18] sm:$0xff]
        %v4990 = vld [vmem:[#allocation3] sm:$0xf]
        %v4992 = vsel %vm4938, %v4990, 0
        %4994 = vmatprep.subr.mxu0 0.0
        %4995 = vmatpush1.msra.mxu0 %v4986
        %4996 = vmatprep.subr.mxu0 0.0
        %4997 = vmatpush1.msra.mxu0 %v4987
        %4998 = vmatprep.subr.mxu0 0.0
        %4999 = vmatpush1.msra.mxu0 %v4988
        %5000 = vmatprep.subr.mxu0 0.0
        %5001 = vmatpush1.msra.mxu0 %v4989
        %5002 = vmatprep.subr.mxu0 0.0
        %5003 = vmatpush1.msra.mxu0 0.0
        %5004 = vmatprep.subr.mxu0 0.0
        %5005 = vmatpush1.msra.mxu0 0.0
        %5006 = vmatprep.subr.mxu0 0.0
        %5007 = vmatpush1.msra.mxu0 0.0
        %5008 = vmatprep.subr.mxu0 0.0
        %5009 = vmatpush1.msra.mxu0 0.0
        %5010 = vmatprep.subr.mxu0 0.0
        %5011 = vmatpush1.msra.mxu0 0.0
        %5012 = vmatprep.subr.mxu0 0.0
        %5013 = vmatpush1.msra.mxu0 0.0
        %5014 = vmatprep.subr.mxu0 0.0
        %5015 = vmatpush1.msra.mxu0 0.0
        %5016 = vmatprep.subr.mxu0 0.0
        %5017 = vmatpush1.msra.mxu0 0.0
        %5018 = vmatprep.subr.mxu0 0.0
        %5019 = vmatpush1.msra.mxu0 0.0
        %5020 = vmatprep.subr.mxu0 0.0
        %5021 = vmatpush1.msra.mxu0 0.0
        %5022 = vmatprep.subr.mxu0 0.0
        %5023 = vmatpush1.msra.mxu0 0.0
        %5024 = vmatprep.subr.mxu0 0.0
        %5025 = vmatpush1.msra.mxu0 0.0
        %5026 = vmatprep.subr.mxu0 0.0
        %5027 = vmatpush1.msra.mxu0 0.0
        %5028 = vmatprep.subr.mxu0 0.0
        %5029 = vmatpush1.msra.mxu0 0.0
        %5030 = vmatprep.subr.mxu0 0.0
        %5031 = vmatpush1.msra.mxu0 0.0
        %5032 = vmatprep.subr.mxu0 0.0
        %5033 = vmatpush1.msra.mxu0 0.0
        %5034 = vmatprep.subr.mxu0 0.0
        %5035 = vmatpush1.msra.mxu0 0.0
        %5036 = vmatprep.subr.mxu0 0.0
        %5037 = vmatpush1.msra.mxu0 0.0
        %5038 = vmatprep.subr.mxu0 0.0
        %5039 = vmatpush1.msra.mxu0 0.0
        %5040 = vmatprep.subr.mxu0 0.0
        %5041 = vmatpush1.msra.mxu0 0.0
        %5042 = vmatprep.subr.mxu0 0.0
        %5043 = vmatpush1.msra.mxu0 0.0
        %5044 = vmatprep.subr.mxu0 0.0
        %5045 = vmatpush1.msra.mxu0 0.0
        %5046 = vmatprep.subr.mxu0 0.0
        %5047 = vmatpush1.msra.mxu0 0.0
        %5048 = vmatprep.subr.mxu0 0.0
        %5049 = vmatpush1.msra.mxu0 0.0
        %5050 = vmatprep.subr.mxu0 0.0
        %5051 = vmatpush1.msra.mxu0 0.0
        %5052 = vmatprep.subr.mxu0 0.0
        %5053 = vmatpush1.msra.mxu0 0.0
        %5054 = vmatprep.subr.mxu0 0.0
        %5055 = vmatpush1.msra.mxu0 0.0
        %5056 = vmatprep.subr.mxu0 0.0
        %5057 = vmatpush1.msra.mxu0 0.0
        %5058 = vmatprep.mubr.f32.mxu0 0.0
        %5059 = vmatmul.mubr.f32.gmra.mrb[0].mxu0 %v4992
        %v5060 = vpop.f32.mrb[0].mxu0
        %v5061 = vadd.f32 0.0, %v5060
        %v5062 = vpop.f32.mrb[0].mxu0
        %5063 = vdwg.mxu0
        %v5065 = vsel %vm4938, %v4976, 0
        %5067 = vmatprep.subr.mxu0 0.0
        %5068 = vmatpush1.msra.mxu0 %v4972
        %5069 = vmatprep.subr.mxu0 0.0
        %5070 = vmatpush1.msra.mxu0 %v4973
        %5071 = vmatprep.subr.mxu0 0.0
        %5072 = vmatpush1.msra.mxu0 %v4974
        %5073 = vmatprep.subr.mxu0 0.0
        %5074 = vmatpush1.msra.mxu0 %v4975
        %5075 = vmatprep.subr.mxu0 0.0
        %5076 = vmatpush1.msra.mxu0 0.0
        %5077 = vmatprep.subr.mxu0 0.0
        %5078 = vmatpush1.msra.mxu0 0.0
        %5079 = vmatprep.subr.mxu0 0.0
        %5080 = vmatpush1.msra.mxu0 0.0
        %5081 = vmatprep.subr.mxu0 0.0
        %5082 = vmatpush1.msra.mxu0 0.0
        %5083 = vmatprep.subr.mxu0 0.0
        %5084 = vmatpush1.msra.mxu0 0.0
        %5085 = vmatprep.subr.mxu0 0.0
        %5086 = vmatpush1.msra.mxu0 0.0
        %5087 = vmatprep.subr.mxu0 0.0
        %5088 = vmatpush1.msra.mxu0 0.0
        %5089 = vmatprep.subr.mxu0 0.0
        %5090 = vmatpush1.msra.mxu0 0.0
        %5091 = vmatprep.subr.mxu0 0.0
        %5092 = vmatpush1.msra.mxu0 0.0
        %5093 = vmatprep.subr.mxu0 0.0
        %5094 = vmatpush1.msra.mxu0 0.0
        %5095 = vmatprep.subr.mxu0 0.0
        %5096 = vmatpush1.msra.mxu0 0.0
        %5097 = vmatprep.subr.mxu0 0.0
        %5098 = vmatpush1.msra.mxu0 0.0
        %5099 = vmatprep.subr.mxu0 0.0
        %5100 = vmatpush1.msra.mxu0 0.0
        %5101 = vmatprep.subr.mxu0 0.0
        %5102 = vmatpush1.msra.mxu0 0.0
        %5103 = vmatprep.subr.mxu0 0.0
        %5104 = vmatpush1.msra.mxu0 0.0
        %5105 = vmatprep.subr.mxu0 0.0
        %5106 = vmatpush1.msra.mxu0 0.0
        %5107 = vmatprep.subr.mxu0 0.0
        %5108 = vmatpush1.msra.mxu0 0.0
        %5109 = vmatprep.subr.mxu0 0.0
        %5110 = vmatpush1.msra.mxu0 0.0
        %5111 = vmatprep.subr.mxu0 0.0
        %5112 = vmatpush1.msra.mxu0 0.0
        %5113 = vmatprep.subr.mxu0 0.0
        %5114 = vmatpush1.msra.mxu0 0.0
        %5115 = vmatprep.subr.mxu0 0.0
        %5116 = vmatpush1.msra.mxu0 0.0
        %5117 = vmatprep.subr.mxu0 0.0
        %5118 = vmatpush1.msra.mxu0 0.0
        %5119 = vmatprep.subr.mxu0 0.0
        %5120 = vmatpush1.msra.mxu0 0.0
        %5121 = vmatprep.subr.mxu0 0.0
        %5122 = vmatpush1.msra.mxu0 0.0
        %5123 = vmatprep.subr.mxu0 0.0
        %5124 = vmatpush1.msra.mxu0 0.0
        %5125 = vmatprep.subr.mxu0 0.0
        %5126 = vmatpush1.msra.mxu0 0.0
        %5127 = vmatprep.subr.mxu0 0.0
        %5128 = vmatpush1.msra.mxu0 0.0
        %5129 = vmatprep.subr.mxu0 0.0
        %5130 = vmatpush1.msra.mxu0 0.0
        %5131 = vmatprep.mubr.f32.mxu0 0.0
        %5132 = vmatmul.mubr.f32.gmra.mrb[0].mxu0 %v5065
        %v5133 = vpop.f32.mrb[0].mxu0
        %v5134 = vadd.f32 %v5061, %v5133
        %v5135 = vpop.f32.mrb[0].mxu0
        %5136 = vdwg.mxu0
        %v5137 = vld [vmem:[#allocation2 + $0x4] sm:$0x1]
        %5138 = vst.msk [vmem:[#allocation3] sm:$0x1] %vm4963, %v5137
        %v5139 = vld [vmem:[#allocation2 + $0x6] sm:$0x1]
        %5140 = vst.msk [vmem:[#allocation3 + $0x1] sm:$0x1] %vm4963, %v5139
        %v5141 = vld [vmem:[%s4967 + $0x4] sm:$0x1]
        %5142 = vst.msk [vmem:[#allocation3 + $0x2] sm:$0x1] %vm4963, %v5141
        %v5143 = vld [vmem:[%s4967 + $0x6] sm:$0x1]
        %5144 = vst.msk [vmem:[#allocation3 + $0x3] sm:$0x1] %vm4963, %v5143
        %s5145 = scalar_lea.vmem [#allocation5], 64
        %v5146 = vld [vmem:[%s5145] sm:$0xff]
        %v5147 = vld [vmem:[%s5145 + $0x8] sm:$0xff]
        %v5148 = vld [vmem:[%s5145 + $0x10] sm:$0xff]
        %v5149 = vld [vmem:[%s5145 + $0x18] sm:$0xff]
        %v5150 = vld [vmem:[#allocation3] sm:$0xf]
        %v5152 = vsel %vm4938, %v5150, 0
        %5154 = vmatprep.subr.mxu0 0.0
        %5155 = vmatpush1.msra.mxu0 %v5146
        %5156 = vmatprep.subr.mxu0 0.0
        %5157 = vmatpush1.msra.mxu0 %v5147
        %5158 = vmatprep.subr.mxu0 0.0
        %5159 = vmatpush1.msra.mxu0 %v5148
        %5160 = vmatprep.subr.mxu0 0.0
        %5161 = vmatpush1.msra.mxu0 %v5149
        %5162 = vmatprep.subr.mxu0 0.0
        %5163 = vmatpush1.msra.mxu0 0.0
        %5164 = vmatprep.subr.mxu0 0.0
        %5165 = vmatpush1.msra.mxu0 0.0
        %5166 = vmatprep.subr.mxu0 0.0
        %5167 = vmatpush1.msra.mxu0 0.0
        %5168 = vmatprep.subr.mxu0 0.0
        %5169 = vmatpush1.msra.mxu0 0.0
        %5170 = vmatprep.subr.mxu0 0.0
        %5171 = vmatpush1.msra.mxu0 0.0
        %5172 = vmatprep.subr.mxu0 0.0
        %5173 = vmatpush1.msra.mxu0 0.0
        %5174 = vmatprep.subr.mxu0 0.0
        %5175 = vmatpush1.msra.mxu0 0.0
        %5176 = vmatprep.subr.mxu0 0.0
        %5177 = vmatpush1.msra.mxu0 0.0
        %5178 = vmatprep.subr.mxu0 0.0
        %5179 = vmatpush1.msra.mxu0 0.0
        %5180 = vmatprep.subr.mxu0 0.0
        %5181 = vmatpush1.msra.mxu0 0.0
        %5182 = vmatprep.subr.mxu0 0.0
        %5183 = vmatpush1.msra.mxu0 0.0
        %5184 = vmatprep.subr.mxu0 0.0
        %5185 = vmatpush1.msra.mxu0 0.0
        %5186 = vmatprep.subr.mxu0 0.0
        %5187 = vmatpush1.msra.mxu0 0.0
        %5188 = vmatprep.subr.mxu0 0.0
        %5189 = vmatpush1.msra.mxu0 0.0
        %5190 = vmatprep.subr.mxu0 0.0
        %5191 = vmatpush1.msra.mxu0 0.0
        %5192 = vmatprep.subr.mxu0 0.0
        %5193 = vmatpush1.msra.mxu0 0.0
        %5194 = vmatprep.subr.mxu0 0.0
        %5195 = vmatpush1.msra.mxu0 0.0
        %5196 = vmatprep.subr.mxu0 0.0
        %5197 = vmatpush1.msra.mxu0 0.0
        %5198 = vmatprep.subr.mxu0 0.0
        %5199 = vmatpush1.msra.mxu0 0.0
        %5200 = vmatprep.subr.mxu0 0.0
        %5201 = vmatpush1.msra.mxu0 0.0
        %5202 = vmatprep.subr.mxu0 0.0
        %5203 = vmatpush1.msra.mxu0 0.0
        %5204 = vmatprep.subr.mxu0 0.0
        %5205 = vmatpush1.msra.mxu0 0.0
        %5206 = vmatprep.subr.mxu0 0.0
        %5207 = vmatpush1.msra.mxu0 0.0
        %5208 = vmatprep.subr.mxu0 0.0
        %5209 = vmatpush1.msra.mxu0 0.0
        %5210 = vmatprep.subr.mxu0 0.0
        %5211 = vmatpush1.msra.mxu0 0.0
        %5212 = vmatprep.subr.mxu0 0.0
        %5213 = vmatpush1.msra.mxu0 0.0
        %5214 = vmatprep.subr.mxu0 0.0
        %5215 = vmatpush1.msra.mxu0 0.0
        %5216 = vmatprep.subr.mxu0 0.0
        %5217 = vmatpush1.msra.mxu0 0.0
        %5218 = vmatprep.mubr.f32.mxu0 0.0
        %5219 = vmatmul.mubr.f32.gmra.mrb[0].mxu0 %v5152
        %v5220 = vpop.f32.mrb[0].mxu0
        %v5221 = vadd.f32 0.0, %v5220
        %v5222 = vpop.f32.mrb[0].mxu0
        %5223 = vdwg.mxu0
        %v5224 = vadd.f32 %v5134, %v5221
        %v5225 = vld [vmem:[#allocation2 + $0x6] sm:$0x1]
        %5226 = vst.msk [vmem:[#allocation3] sm:$0x1] %vm4963, %v5225
        %v5227 = vld [vmem:[#allocation2 + $0x8] sm:$0x1]
        %5228 = vst.msk [vmem:[#allocation3 + $0x1] sm:$0x1] %vm4963, %v5227
        %v5229 = vld [vmem:[%s4967 + $0x6] sm:$0x1]
        %5230 = vst.msk [vmem:[#allocation3 + $0x2] sm:$0x1] %vm4963, %v5229
        %v5231 = vld [vmem:[%s4967 + $0x8] sm:$0x1]
        %5232 = vst.msk [vmem:[#allocation3 + $0x3] sm:$0x1] %vm4963, %v5231
        %s5233 = scalar_lea.vmem [#allocation5], 96
        %v5234 = vld [vmem:[%s5233] sm:$0xff]
        %v5235 = vld [vmem:[%s5233 + $0x8] sm:$0xff]
        %v5236 = vld [vmem:[%s5233 + $0x10] sm:$0xff]
        %v5237 = vld [vmem:[%s5233 + $0x18] sm:$0xff]
        %v5238 = vld [vmem:[#allocation3] sm:$0xf]
        %v5240 = vsel %vm4938, %v5238, 0
        %5242 = vmatprep.subr.mxu0 0.0
        %5243 = vmatpush1.msra.mxu0 %v5234
        %5244 = vmatprep.subr.mxu0 0.0
        %5245 = vmatpush1.msra.mxu0 %v5235
        %5246 = vmatprep.subr.mxu0 0.0
        %5247 = vmatpush1.msra.mxu0 %v5236
        %5248 = vmatprep.subr.mxu0 0.0
        %5249 = vmatpush1.msra.mxu0 %v5237
        %5250 = vmatprep.subr.mxu0 0.0
        %5251 = vmatpush1.msra.mxu0 0.0
        %5252 = vmatprep.subr.mxu0 0.0
        %5253 = vmatpush1.msra.mxu0 0.0
        %5254 = vmatprep.subr.mxu0 0.0
        %5255 = vmatpush1.msra.mxu0 0.0
        %5256 = vmatprep.subr.mxu0 0.0
        %5257 = vmatpush1.msra.mxu0 0.0
        %5258 = vmatprep.subr.mxu0 0.0
        %5259 = vmatpush1.msra.mxu0 0.0
        %5260 = vmatprep.subr.mxu0 0.0
        %5261 = vmatpush1.msra.mxu0 0.0
        %5262 = vmatprep.subr.mxu0 0.0
        %5263 = vmatpush1.msra.mxu0 0.0
        %5264 = vmatprep.subr.mxu0 0.0
        %5265 = vmatpush1.msra.mxu0 0.0
        %5266 = vmatprep.subr.mxu0 0.0
        %5267 = vmatpush1.msra.mxu0 0.0
        %5268 = vmatprep.subr.mxu0 0.0
        %5269 = vmatpush1.msra.mxu0 0.0
        %5270 = vmatprep.subr.mxu0 0.0
        %5271 = vmatpush1.msra.mxu0 0.0
        %5272 = vmatprep.subr.mxu0 0.0
        %5273 = vmatpush1.msra.mxu0 0.0
        %5274 = vmatprep.subr.mxu0 0.0
        %5275 = vmatpush1.msra.mxu0 0.0
        %5276 = vmatprep.subr.mxu0 0.0
        %5277 = vmatpush1.msra.mxu0 0.0
        %5278 = vmatprep.subr.mxu0 0.0
        %5279 = vmatpush1.msra.mxu0 0.0
        %5280 = vmatprep.subr.mxu0 0.0
        %5281 = vmatpush1.msra.mxu0 0.0
        %5282 = vmatprep.subr.mxu0 0.0
        %5283 = vmatpush1.msra.mxu0 0.0
        %5284 = vmatprep.subr.mxu0 0.0
        %5285 = vmatpush1.msra.mxu0 0.0
        %5286 = vmatprep.subr.mxu0 0.0
        %5287 = vmatpush1.msra.mxu0 0.0
        %5288 = vmatprep.subr.mxu0 0.0
        %5289 = vmatpush1.msra.mxu0 0.0
        %5290 = vmatprep.subr.mxu0 0.0
        %5291 = vmatpush1.msra.mxu0 0.0
        %5292 = vmatprep.subr.mxu0 0.0
        %5293 = vmatpush1.msra.mxu0 0.0
        %5294 = vmatprep.subr.mxu0 0.0
        %5295 = vmatpush1.msra.mxu0 0.0
        %5296 = vmatprep.subr.mxu0 0.0
        %5297 = vmatpush1.msra.mxu0 0.0
        %5298 = vmatprep.subr.mxu0 0.0
        %5299 = vmatpush1.msra.mxu0 0.0
        %5300 = vmatprep.subr.mxu0 0.0
        %5301 = vmatpush1.msra.mxu0 0.0
        %5302 = vmatprep.subr.mxu0 0.0
        %5303 = vmatpush1.msra.mxu0 0.0
        %5304 = vmatprep.subr.mxu0 0.0
        %5305 = vmatpush1.msra.mxu0 0.0
        %5306 = vmatprep.mubr.f32.mxu0 0.0
        %5307 = vmatmul.mubr.f32.gmra.mrb[0].mxu0 %v5240
        %v5308 = vpop.f32.mrb[0].mxu0
        %v5309 = vadd.f32 0.0, %v5308
        %v5310 = vpop.f32.mrb[0].mxu0
        %5311 = vdwg.mxu0
        %v5312 = vadd.f32 %v5224, %v5309
        %v5313 = vld [vmem:[#allocation2 + $0x8] sm:$0x1]
        %5314 = vst.msk [vmem:[#allocation3] sm:$0x1] %vm4963, %v5313
        %v5315 = vld [vmem:[#allocation2 + $0xa] sm:$0x1]
        %5316 = vst.msk [vmem:[#allocation3 + $0x1] sm:$0x1] %vm4963, %v5315
        %v5317 = vld [vmem:[%s4967 + $0x8] sm:$0x1]
        %5318 = vst.msk [vmem:[#allocation3 + $0x2] sm:$0x1] %vm4963, %v5317
        %v5319 = vld [vmem:[%s4967 + $0xa] sm:$0x1]
        %5320 = vst.msk [vmem:[#allocation3 + $0x3] sm:$0x1] %vm4963, %v5319
        %s5321 = scalar_lea.vmem [#allocation5], 128
        %v5322 = vld [vmem:[%s5321] sm:$0xff]
        %v5323 = vld [vmem:[%s5321 + $0x8] sm:$0xff]
        %v5324 = vld [vmem:[%s5321 + $0x10] sm:$0xff]
        %v5325 = vld [vmem:[%s5321 + $0x18] sm:$0xff]
        %v5326 = vld [vmem:[#allocation3] sm:$0xf]
        %v5328 = vsel %vm4938, %v5326, 0
        %5330 = vmatprep.subr.mxu0 0.0
        %5331 = vmatpush1.msra.mxu0 %v5322
        %5332 = vmatprep.subr.mxu0 0.0
        %5333 = vmatpush1.msra.mxu0 %v5323
        %5334 = vmatprep.subr.mxu0 0.0
        %5335 = vmatpush1.msra.mxu0 %v5324
        %5336 = vmatprep.subr.mxu0 0.0
        %5337 = vmatpush1.msra.mxu0 %v5325
        %5338 = vmatprep.subr.mxu0 0.0
        %5339 = vmatpush1.msra.mxu0 0.0
        %5340 = vmatprep.subr.mxu0 0.0
        %5341 = vmatpush1.msra.mxu0 0.0
        %5342 = vmatprep.subr.mxu0 0.0
        %5343 = vmatpush1.msra.mxu0 0.0
        %5344 = vmatprep.subr.mxu0 0.0
        %5345 = vmatpush1.msra.mxu0 0.0
        %5346 = vmatprep.subr.mxu0 0.0
        %5347 = vmatpush1.msra.mxu0 0.0
        %5348 = vmatprep.subr.mxu0 0.0
        %5349 = vmatpush1.msra.mxu0 0.0
        %5350 = vmatprep.subr.mxu0 0.0
        %5351 = vmatpush1.msra.mxu0 0.0
        %5352 = vmatprep.subr.mxu0 0.0
        %5353 = vmatpush1.msra.mxu0 0.0
        %5354 = vmatprep.subr.mxu0 0.0
        %5355 = vmatpush1.msra.mxu0 0.0
        %5356 = vmatprep.subr.mxu0 0.0
        %5357 = vmatpush1.msra.mxu0 0.0
        %5358 = vmatprep.subr.mxu0 0.0
        %5359 = vmatpush1.msra.mxu0 0.0
        %5360 = vmatprep.subr.mxu0 0.0
        %5361 = vmatpush1.msra.mxu0 0.0
        %5362 = vmatprep.subr.mxu0 0.0
        %5363 = vmatpush1.msra.mxu0 0.0
        %5364 = vmatprep.subr.mxu0 0.0
        %5365 = vmatpush1.msra.mxu0 0.0
        %5366 = vmatprep.subr.mxu0 0.0
        %5367 = vmatpush1.msra.mxu0 0.0
        %5368 = vmatprep.subr.mxu0 0.0
        %5369 = vmatpush1.msra.mxu0 0.0
        %5370 = vmatprep.subr.mxu0 0.0
        %5371 = vmatpush1.msra.mxu0 0.0
        %5372 = vmatprep.subr.mxu0 0.0
        %5373 = vmatpush1.msra.mxu0 0.0
        %5374 = vmatprep.subr.mxu0 0.0
        %5375 = vmatpush1.msra.mxu0 0.0
        %5376 = vmatprep.subr.mxu0 0.0
        %5377 = vmatpush1.msra.mxu0 0.0
        %5378 = vmatprep.subr.mxu0 0.0
        %5379 = vmatpush1.msra.mxu0 0.0
        %5380 = vmatprep.subr.mxu0 0.0
        %5381 = vmatpush1.msra.mxu0 0.0
        %5382 = vmatprep.subr.mxu0 0.0
        %5383 = vmatpush1.msra.mxu0 0.0
        %5384 = vmatprep.subr.mxu0 0.0
        %5385 = vmatpush1.msra.mxu0 0.0
        %5386 = vmatprep.subr.mxu0 0.0
        %5387 = vmatpush1.msra.mxu0 0.0
        %5388 = vmatprep.subr.mxu0 0.0
        %5389 = vmatpush1.msra.mxu0 0.0
        %5390 = vmatprep.subr.mxu0 0.0
        %5391 = vmatpush1.msra.mxu0 0.0
        %5392 = vmatprep.subr.mxu0 0.0
        %5393 = vmatpush1.msra.mxu0 0.0
        %5394 = vmatprep.mubr.f32.mxu0 0.0
        %5395 = vmatmul.mubr.f32.gmra.mrb[0].mxu0 %v5328
        %v5396 = vpop.f32.mrb[0].mxu0
        %v5397 = vadd.f32 0.0, %v5396
        %v5398 = vpop.f32.mrb[0].mxu0
        %5399 = vdwg.mxu0
        %v5400 = vadd.f32 %v5312, %v5397
        %v5401 = vld [vmem:[%s4967] sm:$0x1]
        %5402 = vst.msk [vmem:[#allocation3] sm:$0x1] %vm4963, %v5401
        %v5403 = vld [vmem:[%s4967 + $0x2] sm:$0x1]
        %5404 = vst.msk [vmem:[#allocation3 + $0x1] sm:$0x1] %vm4963, %v5403
        %s5405 = scalar_lea.vmem [#allocation2], 64
        %v5406 = vld [vmem:[%s5405] sm:$0x1]
        %5407 = vst.msk [vmem:[#allocation3 + $0x2] sm:$0x1] %vm4963, %v5406
        %v5408 = vld [vmem:[%s5405 + $0x2] sm:$0x1]
        %5409 = vst.msk [vmem:[#allocation3 + $0x3] sm:$0x1] %vm4963, %v5408
        %s5410 = scalar_lea.vmem [#allocation5], 160
        %v5411 = vld [vmem:[%s5410] sm:$0xff]
        %v5412 = vld [vmem:[%s5410 + $0x8] sm:$0xff]
        %v5413 = vld [vmem:[%s5410 + $0x10] sm:$0xff]
        %v5414 = vld [vmem:[%s5410 + $0x18] sm:$0xff]
        %v5415 = vld [vmem:[#allocation3] sm:$0xf]
        %v5417 = vsel %vm4938, %v5415, 0
        %5419 = vmatprep.subr.mxu0 0.0
        %5420 = vmatpush1.msra.mxu0 %v5411
        %5421 = vmatprep.subr.mxu0 0.0
        %5422 = vmatpush1.msra.mxu0 %v5412
        %5423 = vmatprep.subr.mxu0 0.0
        %5424 = vmatpush1.msra.mxu0 %v5413
        %5425 = vmatprep.subr.mxu0 0.0
        %5426 = vmatpush1.msra.mxu0 %v5414
        %5427 = vmatprep.subr.mxu0 0.0
        %5428 = vmatpush1.msra.mxu0 0.0
        %5429 = vmatprep.subr.mxu0 0.0
        %5430 = vmatpush1.msra.mxu0 0.0
        %5431 = vmatprep.subr.mxu0 0.0
        %5432 = vmatpush1.msra.mxu0 0.0
        %5433 = vmatprep.subr.mxu0 0.0
        %5434 = vmatpush1.msra.mxu0 0.0
        %5435 = vmatprep.subr.mxu0 0.0
        %5436 = vmatpush1.msra.mxu0 0.0
        %5437 = vmatprep.subr.mxu0 0.0
        %5438 = vmatpush1.msra.mxu0 0.0
        %5439 = vmatprep.subr.mxu0 0.0
        %5440 = vmatpush1.msra.mxu0 0.0
        %5441 = vmatprep.subr.mxu0 0.0
        %5442 = vmatpush1.msra.mxu0 0.0
        %5443 = vmatprep.subr.mxu0 0.0
        %5444 = vmatpush1.msra.mxu0 0.0
        %5445 = vmatprep.subr.mxu0 0.0
        %5446 = vmatpush1.msra.mxu0 0.0
        %5447 = vmatprep.subr.mxu0 0.0
        %5448 = vmatpush1.msra.mxu0 0.0
        %5449 = vmatprep.subr.mxu0 0.0
        %5450 = vmatpush1.msra.mxu0 0.0
        %5451 = vmatprep.subr.mxu0 0.0
        %5452 = vmatpush1.msra.mxu0 0.0
        %5453 = vmatprep.subr.mxu0 0.0
        %5454 = vmatpush1.msra.mxu0 0.0
        %5455 = vmatprep.subr.mxu0 0.0
        %5456 = vmatpush1.msra.mxu0 0.0
        %5457 = vmatprep.subr.mxu0 0.0
        %5458 = vmatpush1.msra.mxu0 0.0
        %5459 = vmatprep.subr.mxu0 0.0
        %5460 = vmatpush1.msra.mxu0 0.0
        %5461 = vmatprep.subr.mxu0 0.0
        %5462 = vmatpush1.msra.mxu0 0.0
        %5463 = vmatprep.subr.mxu0 0.0
        %5464 = vmatpush1.msra.mxu0 0.0
        %5465 = vmatprep.subr.mxu0 0.0
        %5466 = vmatpush1.msra.mxu0 0.0
        %5467 = vmatprep.subr.mxu0 0.0
        %5468 = vmatpush1.msra.mxu0 0.0
        %5469 = vmatprep.subr.mxu0 0.0
        %5470 = vmatpush1.msra.mxu0 0.0
        %5471 = vmatprep.subr.mxu0 0.0
        %5472 = vmatpush1.msra.mxu0 0.0
        %5473 = vmatprep.subr.mxu0 0.0
        %5474 = vmatpush1.msra.mxu0 0.0
        %5475 = vmatprep.subr.mxu0 0.0
        %5476 = vmatpush1.msra.mxu0 0.0
        %5477 = vmatprep.subr.mxu0 0.0
        %5478 = vmatpush1.msra.mxu0 0.0
        %5479 = vmatprep.subr.mxu0 0.0
        %5480 = vmatpush1.msra.mxu0 0.0
        %5481 = vmatprep.subr.mxu0 0.0
        %5482 = vmatpush1.msra.mxu0 0.0
        %5483 = vmatprep.mubr.f32.mxu0 0.0
        %5484 = vmatmul.mubr.f32.gmra.mrb[0].mxu0 %v5417
        %v5485 = vpop.f32.mrb[0].mxu0
        %v5486 = vadd.f32 0.0, %v5485
        %v5487 = vpop.f32.mrb[0].mxu0
        %5488 = vdwg.mxu0
        %v5489 = vadd.f32 %v5400, %v5486
        %v5490 = vld [vmem:[%s4967 + $0x2] sm:$0x1]
        %5491 = vst.msk [vmem:[#allocation3] sm:$0x1] %vm4963, %v5490
        %v5492 = vld [vmem:[%s4967 + $0x4] sm:$0x1]
        %5493 = vst.msk [vmem:[#allocation3 + $0x1] sm:$0x1] %vm4963, %v5492
        %v5494 = vld [vmem:[%s5405 + $0x2] sm:$0x1]
        %5495 = vst.msk [vmem:[#allocation3 + $0x2] sm:$0x1] %vm4963, %v5494
        %v5496 = vld [vmem:[%s5405 + $0x4] sm:$0x1]
        %5497 = vst.msk [vmem:[#allocation3 + $0x3] sm:$0x1] %vm4963, %v5496
        %s5498 = scalar_lea.vmem [#allocation5], 192
        %v5499 = vld [vmem:[%s5498] sm:$0xff]
        %v5500 = vld [vmem:[%s5498 + $0x8] sm:$0xff]
        %v5501 = vld [vmem:[%s5498 + $0x10] sm:$0xff]
        %v5502 = vld [vmem:[%s5498 + $0x18] sm:$0xff]
        %v5503 = vld [vmem:[#allocation3] sm:$0xf]
        %v5505 = vsel %vm4938, %v5503, 0
        %5507 = vmatprep.subr.mxu0 0.0
        %5508 = vmatpush1.msra.mxu0 %v5499
        %5509 = vmatprep.subr.mxu0 0.0
        %5510 = vmatpush1.msra.mxu0 %v5500
        %5511 = vmatprep.subr.mxu0 0.0
        %5512 = vmatpush1.msra.mxu0 %v5501
        %5513 = vmatprep.subr.mxu0 0.0
        %5514 = vmatpush1.msra.mxu0 %v5502
        %5515 = vmatprep.subr.mxu0 0.0
        %5516 = vmatpush1.msra.mxu0 0.0
        %5517 = vmatprep.subr.mxu0 0.0
        %5518 = vmatpush1.msra.mxu0 0.0
        %5519 = vmatprep.subr.mxu0 0.0
        %5520 = vmatpush1.msra.mxu0 0.0
        %5521 = vmatprep.subr.mxu0 0.0
        %5522 = vmatpush1.msra.mxu0 0.0
        %5523 = vmatprep.subr.mxu0 0.0
        %5524 = vmatpush1.msra.mxu0 0.0
        %5525 = vmatprep.subr.mxu0 0.0
        %5526 = vmatpush1.msra.mxu0 0.0
        %5527 = vmatprep.subr.mxu0 0.0
        %5528 = vmatpush1.msra.mxu0 0.0
        %5529 = vmatprep.subr.mxu0 0.0
        %5530 = vmatpush1.msra.mxu0 0.0
        %5531 = vmatprep.subr.mxu0 0.0
        %5532 = vmatpush1.msra.mxu0 0.0
        %5533 = vmatprep.subr.mxu0 0.0
        %5534 = vmatpush1.msra.mxu0 0.0
        %5535 = vmatprep.subr.mxu0 0.0
        %5536 = vmatpush1.msra.mxu0 0.0
        %5537 = vmatprep.subr.mxu0 0.0
        %5538 = vmatpush1.msra.mxu0 0.0
        %5539 = vmatprep.subr.mxu0 0.0
        %5540 = vmatpush1.msra.mxu0 0.0
        %5541 = vmatprep.subr.mxu0 0.0
        %5542 = vmatpush1.msra.mxu0 0.0
        %5543 = vmatprep.subr.mxu0 0.0
        %5544 = vmatpush1.msra.mxu0 0.0
        %5545 = vmatprep.subr.mxu0 0.0
        %5546 = vmatpush1.msra.mxu0 0.0
        %5547 = vmatprep.subr.mxu0 0.0
        %5548 = vmatpush1.msra.mxu0 0.0
        %5549 = vmatprep.subr.mxu0 0.0
        %5550 = vmatpush1.msra.mxu0 0.0
        %5551 = vmatprep.subr.mxu0 0.0
        %5552 = vmatpush1.msra.mxu0 0.0
        %5553 = vmatprep.subr.mxu0 0.0
        %5554 = vmatpush1.msra.mxu0 0.0
        %5555 = vmatprep.subr.mxu0 0.0
        %5556 = vmatpush1.msra.mxu0 0.0
        %5557 = vmatprep.subr.mxu0 0.0
        %5558 = vmatpush1.msra.mxu0 0.0
        %5559 = vmatprep.subr.mxu0 0.0
        %5560 = vmatpush1.msra.mxu0 0.0
        %5561 = vmatprep.subr.mxu0 0.0
        %5562 = vmatpush1.msra.mxu0 0.0
        %5563 = vmatprep.subr.mxu0 0.0
        %5564 = vmatpush1.msra.mxu0 0.0
        %5565 = vmatprep.subr.mxu0 0.0
        %5566 = vmatpush1.msra.mxu0 0.0
        %5567 = vmatprep.subr.mxu0 0.0
        %5568 = vmatpush1.msra.mxu0 0.0
        %5569 = vmatprep.subr.mxu0 0.0
        %5570 = vmatpush1.msra.mxu0 0.0
        %5571 = vmatprep.mubr.f32.mxu0 0.0
        %5572 = vmatmul.mubr.f32.gmra.mrb[0].mxu0 %v5505
        %v5573 = vpop.f32.mrb[0].mxu0
        %v5574 = vadd.f32 0.0, %v5573
        %v5575 = vpop.f32.mrb[0].mxu0
        %5576 = vdwg.mxu0
        %v5577 = vadd.f32 %v5489, %v5574
        %v5578 = vld [vmem:[%s4967 + $0x4] sm:$0x1]
        %5579 = vst.msk [vmem:[#allocation3] sm:$0x1] %vm4963, %v5578
        %v5580 = vld [vmem:[%s4967 + $0x6] sm:$0x1]
        %5581 = vst.msk [vmem:[#allocation3 + $0x1] sm:$0x1] %vm4963, %v5580
        %v5582 = vld [vmem:[%s5405 + $0x4] sm:$0x1]
        %5583 = vst.msk [vmem:[#allocation3 + $0x2] sm:$0x1] %vm4963, %v5582
        %v5584 = vld [vmem:[%s5405 + $0x6] sm:$0x1]
        %5585 = vst.msk [vmem:[#allocation3 + $0x3] sm:$0x1] %vm4963, %v5584
        %s5586 = scalar_lea.vmem [#allocation5], 224
        %v5587 = vld [vmem:[%s5586] sm:$0xff]
        %v5588 = vld [vmem:[%s5586 + $0x8] sm:$0xff]
        %v5589 = vld [vmem:[%s5586 + $0x10] sm:$0xff]
        %v5590 = vld [vmem:[%s5586 + $0x18] sm:$0xff]
        %v5591 = vld [vmem:[#allocation3] sm:$0xf]
        %v5593 = vsel %vm4938, %v5591, 0
        %5595 = vmatprep.subr.mxu0 0.0
        %5596 = vmatpush1.msra.mxu0 %v5587
        %5597 = vmatprep.subr.mxu0 0.0
        %5598 = vmatpush1.msra.mxu0 %v5588
        %5599 = vmatprep.subr.mxu0 0.0
        %5600 = vmatpush1.msra.mxu0 %v5589
        %5601 = vmatprep.subr.mxu0 0.0
        %5602 = vmatpush1.msra.mxu0 %v5590
        %5603 = vmatprep.subr.mxu0 0.0
        %5604 = vmatpush1.msra.mxu0 0.0
        %5605 = vmatprep.subr.mxu0 0.0
        %5606 = vmatpush1.msra.mxu0 0.0
        %5607 = vmatprep.subr.mxu0 0.0
        %5608 = vmatpush1.msra.mxu0 0.0
        %5609 = vmatprep.subr.mxu0 0.0
        %5610 = vmatpush1.msra.mxu0 0.0
        %5611 = vmatprep.subr.mxu0 0.0
        %5612 = vmatpush1.msra.mxu0 0.0
        %5613 = vmatprep.subr.mxu0 0.0
        %5614 = vmatpush1.msra.mxu0 0.0
        %5615 = vmatprep.subr.mxu0 0.0
        %5616 = vmatpush1.msra.mxu0 0.0
        %5617 = vmatprep.subr.mxu0 0.0
        %5618 = vmatpush1.msra.mxu0 0.0
        %5619 = vmatprep.subr.mxu0 0.0
        %5620 = vmatpush1.msra.mxu0 0.0
        %5621 = vmatprep.subr.mxu0 0.0
        %5622 = vmatpush1.msra.mxu0 0.0
        %5623 = vmatprep.subr.mxu0 0.0
        %5624 = vmatpush1.msra.mxu0 0.0
        %5625 = vmatprep.subr.mxu0 0.0
        %5626 = vmatpush1.msra.mxu0 0.0
        %5627 = vmatprep.subr.mxu0 0.0
        %5628 = vmatpush1.msra.mxu0 0.0
        %5629 = vmatprep.subr.mxu0 0.0
        %5630 = vmatpush1.msra.mxu0 0.0
        %5631 = vmatprep.subr.mxu0 0.0
        %5632 = vmatpush1.msra.mxu0 0.0
        %5633 = vmatprep.subr.mxu0 0.0
        %5634 = vmatpush1.msra.mxu0 0.0
        %5635 = vmatprep.subr.mxu0 0.0
        %5636 = vmatpush1.msra.mxu0 0.0
        %5637 = vmatprep.subr.mxu0 0.0
        %5638 = vmatpush1.msra.mxu0 0.0
        %5639 = vmatprep.subr.mxu0 0.0
        %5640 = vmatpush1.msra.mxu0 0.0
        %5641 = vmatprep.subr.mxu0 0.0
        %5642 = vmatpush1.msra.mxu0 0.0
        %5643 = vmatprep.subr.mxu0 0.0
        %5644 = vmatpush1.msra.mxu0 0.0
        %5645 = vmatprep.subr.mxu0 0.0
        %5646 = vmatpush1.msra.mxu0 0.0
        %5647 = vmatprep.subr.mxu0 0.0
        %5648 = vmatpush1.msra.mxu0 0.0
        %5649 = vmatprep.subr.mxu0 0.0
        %5650 = vmatpush1.msra.mxu0 0.0
        %5651 = vmatprep.subr.mxu0 0.0
        %5652 = vmatpush1.msra.mxu0 0.0
        %5653 = vmatprep.subr.mxu0 0.0
        %5654 = vmatpush1.msra.mxu0 0.0
        %5655 = vmatprep.subr.mxu0 0.0
        %5656 = vmatpush1.msra.mxu0 0.0
        %5657 = vmatprep.subr.mxu0 0.0
        %5658 = vmatpush1.msra.mxu0 0.0
        %5659 = vmatprep.mubr.f32.mxu0 0.0
        %5660 = vmatmul.mubr.f32.gmra.mrb[0].mxu0 %v5593
        %v5661 = vpop.f32.mrb[0].mxu0
        %v5662 = vadd.f32 0.0, %v5661
        %v5663 = vpop.f32.mrb[0].mxu0
        %5664 = vdwg.mxu0
        %v5665 = vadd.f32 %v5577, %v5662
        %v5666 = vld [vmem:[%s4967 + $0x6] sm:$0x1]
        %5667 = vst.msk [vmem:[#allocation3] sm:$0x1] %vm4963, %v5666
        %v5668 = vld [vmem:[%s4967 + $0x8] sm:$0x1]
        %5669 = vst.msk [vmem:[#allocation3 + $0x1] sm:$0x1] %vm4963, %v5668
        %v5670 = vld [vmem:[%s5405 + $0x6] sm:$0x1]
        %5671 = vst.msk [vmem:[#allocation3 + $0x2] sm:$0x1] %vm4963, %v5670
        %v5672 = vld [vmem:[%s5405 + $0x8] sm:$0x1]
        %5673 = vst.msk [vmem:[#allocation3 + $0x3] sm:$0x1] %vm4963, %v5672
        %s5674 = scalar_lea.vmem [#allocation5], 256
        %v5675 = vld [vmem:[%s5674] sm:$0xff]
        %v5676 = vld [vmem:[%s5674 + $0x8] sm:$0xff]
        %v5677 = vld [vmem:[%s5674 + $0x10] sm:$0xff]
        %v5678 = vld [vmem:[%s5674 + $0x18] sm:$0xff]
        %v5679 = vld [vmem:[#allocation3] sm:$0xf]
        %v5681 = vsel %vm4938, %v5679, 0
        %5683 = vmatprep.subr.mxu0 0.0
        %5684 = vmatpush1.msra.mxu0 %v5675
        %5685 = vmatprep.subr.mxu0 0.0
        %5686 = vmatpush1.msra.mxu0 %v5676
        %5687 = vmatprep.subr.mxu0 0.0
        %5688 = vmatpush1.msra.mxu0 %v5677
        %5689 = vmatprep.subr.mxu0 0.0
        %5690 = vmatpush1.msra.mxu0 %v5678
        %5691 = vmatprep.subr.mxu0 0.0
        %5692 = vmatpush1.msra.mxu0 0.0
        %5693 = vmatprep.subr.mxu0 0.0
        %5694 = vmatpush1.msra.mxu0 0.0
        %5695 = vmatprep.subr.mxu0 0.0
        %5696 = vmatpush1.msra.mxu0 0.0
        %5697 = vmatprep.subr.mxu0 0.0
        %5698 = vmatpush1.msra.mxu0 0.0
        %5699 = vmatprep.subr.mxu0 0.0
        %5700 = vmatpush1.msra.mxu0 0.0
        %5701 = vmatprep.subr.mxu0 0.0
        %5702 = vmatpush1.msra.mxu0 0.0
        %5703 = vmatprep.subr.mxu0 0.0
        %5704 = vmatpush1.msra.mxu0 0.0
        %5705 = vmatprep.subr.mxu0 0.0
        %5706 = vmatpush1.msra.mxu0 0.0
        %5707 = vmatprep.subr.mxu0 0.0
        %5708 = vmatpush1.msra.mxu0 0.0
        %5709 = vmatprep.subr.mxu0 0.0
        %5710 = vmatpush1.msra.mxu0 0.0
        %5711 = vmatprep.subr.mxu0 0.0
        %5712 = vmatpush1.msra.mxu0 0.0
        %5713 = vmatprep.subr.mxu0 0.0
        %5714 = vmatpush1.msra.mxu0 0.0
        %5715 = vmatprep.subr.mxu0 0.0
        %5716 = vmatpush1.msra.mxu0 0.0
        %5717 = vmatprep.subr.mxu0 0.0
        %5718 = vmatpush1.msra.mxu0 0.0
        %5719 = vmatprep.subr.mxu0 0.0
        %5720 = vmatpush1.msra.mxu0 0.0
        %5721 = vmatprep.subr.mxu0 0.0
        %5722 = vmatpush1.msra.mxu0 0.0
        %5723 = vmatprep.subr.mxu0 0.0
        %5724 = vmatpush1.msra.mxu0 0.0
        %5725 = vmatprep.subr.mxu0 0.0
        %5726 = vmatpush1.msra.mxu0 0.0
        %5727 = vmatprep.subr.mxu0 0.0
        %5728 = vmatpush1.msra.mxu0 0.0
        %5729 = vmatprep.subr.mxu0 0.0
        %5730 = vmatpush1.msra.mxu0 0.0
        %5731 = vmatprep.subr.mxu0 0.0
        %5732 = vmatpush1.msra.mxu0 0.0
        %5733 = vmatprep.subr.mxu0 0.0
        %5734 = vmatpush1.msra.mxu0 0.0
        %5735 = vmatprep.subr.mxu0 0.0
        %5736 = vmatpush1.msra.mxu0 0.0
        %5737 = vmatprep.subr.mxu0 0.0
        %5738 = vmatpush1.msra.mxu0 0.0
        %5739 = vmatprep.subr.mxu0 0.0
        %5740 = vmatpush1.msra.mxu0 0.0
        %5741 = vmatprep.subr.mxu0 0.0
        %5742 = vmatpush1.msra.mxu0 0.0
        %5743 = vmatprep.subr.mxu0 0.0
        %5744 = vmatpush1.msra.mxu0 0.0
        %5745 = vmatprep.subr.mxu0 0.0
        %5746 = vmatpush1.msra.mxu0 0.0
        %5747 = vmatprep.mubr.f32.mxu0 0.0
        %5748 = vmatmul.mubr.f32.gmra.mrb[0].mxu0 %v5681
        %v5749 = vpop.f32.mrb[0].mxu0
        %v5750 = vadd.f32 0.0, %v5749
        %v5751 = vpop.f32.mrb[0].mxu0
        %5752 = vdwg.mxu0
        %v5753 = vadd.f32 %v5665, %v5750
        %v5754 = vld [vmem:[%s4967 + $0x8] sm:$0x1]
        %5755 = vst.msk [vmem:[#allocation3] sm:$0x1] %vm4963, %v5754
        %v5756 = vld [vmem:[%s4967 + $0xa] sm:$0x1]
        %5757 = vst.msk [vmem:[#allocation3 + $0x1] sm:$0x1] %vm4963, %v5756
        %v5758 = vld [vmem:[%s5405 + $0x8] sm:$0x1]
        %5759 = vst.msk [vmem:[#allocation3 + $0x2] sm:$0x1] %vm4963, %v5758
        %v5760 = vld [vmem:[%s5405 + $0xa] sm:$0x1]
        %5761 = vst.msk [vmem:[#allocation3 + $0x3] sm:$0x1] %vm4963, %v5760
        %s5762 = scalar_lea.vmem [#allocation5], 288
        %v5763 = vld [vmem:[%s5762] sm:$0xff]
        %v5764 = vld [vmem:[%s5762 + $0x8] sm:$0xff]
        %v5765 = vld [vmem:[%s5762 + $0x10] sm:$0xff]
        %v5766 = vld [vmem:[%s5762 + $0x18] sm:$0xff]
        %v5767 = vld [vmem:[#allocation3] sm:$0xf]
        %v5769 = vsel %vm4938, %v5767, 0
        %5771 = vmatprep.subr.mxu0 0.0
        %5772 = vmatpush1.msra.mxu0 %v5763
        %5773 = vmatprep.subr.mxu0 0.0
        %5774 = vmatpush1.msra.mxu0 %v5764
        %5775 = vmatprep.subr.mxu0 0.0
        %5776 = vmatpush1.msra.mxu0 %v5765
        %5777 = vmatprep.subr.mxu0 0.0
        %5778 = vmatpush1.msra.mxu0 %v5766
        %5779 = vmatprep.subr.mxu0 0.0
        %5780 = vmatpush1.msra.mxu0 0.0
        %5781 = vmatprep.subr.mxu0 0.0
        %5782 = vmatpush1.msra.mxu0 0.0
        %5783 = vmatprep.subr.mxu0 0.0
        %5784 = vmatpush1.msra.mxu0 0.0
        %5785 = vmatprep.subr.mxu0 0.0
        %5786 = vmatpush1.msra.mxu0 0.0
        %5787 = vmatprep.subr.mxu0 0.0
        %5788 = vmatpush1.msra.mxu0 0.0
        %5789 = vmatprep.subr.mxu0 0.0
        %5790 = vmatpush1.msra.mxu0 0.0
        %5791 = vmatprep.subr.mxu0 0.0
        %5792 = vmatpush1.msra.mxu0 0.0
        %5793 = vmatprep.subr.mxu0 0.0
        %5794 = vmatpush1.msra.mxu0 0.0
        %5795 = vmatprep.subr.mxu0 0.0
        %5796 = vmatpush1.msra.mxu0 0.0
        %5797 = vmatprep.subr.mxu0 0.0
        %5798 = vmatpush1.msra.mxu0 0.0
        %5799 = vmatprep.subr.mxu0 0.0
        %5800 = vmatpush1.msra.mxu0 0.0
        %5801 = vmatprep.subr.mxu0 0.0
        %5802 = vmatpush1.msra.mxu0 0.0
        %5803 = vmatprep.subr.mxu0 0.0
        %5804 = vmatpush1.msra.mxu0 0.0
        %5805 = vmatprep.subr.mxu0 0.0
        %5806 = vmatpush1.msra.mxu0 0.0
        %5807 = vmatprep.subr.mxu0 0.0
        %5808 = vmatpush1.msra.mxu0 0.0
        %5809 = vmatprep.subr.mxu0 0.0
        %5810 = vmatpush1.msra.mxu0 0.0
        %5811 = vmatprep.subr.mxu0 0.0
        %5812 = vmatpush1.msra.mxu0 0.0
        %5813 = vmatprep.subr.mxu0 0.0
        %5814 = vmatpush1.msra.mxu0 0.0
        %5815 = vmatprep.subr.mxu0 0.0
        %5816 = vmatpush1.msra.mxu0 0.0
        %5817 = vmatprep.subr.mxu0 0.0
        %5818 = vmatpush1.msra.mxu0 0.0
        %5819 = vmatprep.subr.mxu0 0.0
        %5820 = vmatpush1.msra.mxu0 0.0
        %5821 = vmatprep.subr.mxu0 0.0
        %5822 = vmatpush1.msra.mxu0 0.0
        %5823 = vmatprep.subr.mxu0 0.0
        %5824 = vmatpush1.msra.mxu0 0.0
        %5825 = vmatprep.subr.mxu0 0.0
        %5826 = vmatpush1.msra.mxu0 0.0
        %5827 = vmatprep.subr.mxu0 0.0
        %5828 = vmatpush1.msra.mxu0 0.0
        %5829 = vmatprep.subr.mxu0 0.0
        %5830 = vmatpush1.msra.mxu0 0.0
        %5831 = vmatprep.subr.mxu0 0.0
        %5832 = vmatpush1.msra.mxu0 0.0
        %5833 = vmatprep.subr.mxu0 0.0
        %5834 = vmatpush1.msra.mxu0 0.0
        %5835 = vmatprep.mubr.f32.mxu0 0.0
        %5836 = vmatmul.mubr.f32.gmra.mrb[0].mxu0 %v5769
        %v5837 = vpop.f32.mrb[0].mxu0
        %v5838 = vadd.f32 0.0, %v5837
        %v5839 = vpop.f32.mrb[0].mxu0
        %5840 = vdwg.mxu0
        %v5841 = vadd.f32 %v5753, %v5838
        %v5842 = vld [vmem:[%s5405] sm:$0x1]
        %5843 = vst.msk [vmem:[#allocation3] sm:$0x1] %vm4963, %v5842
        %v5844 = vld [vmem:[%s5405 + $0x2] sm:$0x1]
        %5845 = vst.msk [vmem:[#allocation3 + $0x1] sm:$0x1] %vm4963, %v5844
        %s5846 = scalar_lea.vmem [#allocation2], 96
        %v5847 = vld [vmem:[%s5846] sm:$0x1]
        %5848 = vst.msk [vmem:[#allocation3 + $0x2] sm:$0x1] %vm4963, %v5847
        %v5849 = vld [vmem:[%s5846 + $0x2] sm:$0x1]
        %5850 = vst.msk [vmem:[#allocation3 + $0x3] sm:$0x1] %vm4963, %v5849
        %s5851 = scalar_lea.vmem [#allocation5], 320
        %v5852 = vld [vmem:[%s5851] sm:$0xff]
        %v5853 = vld [vmem:[%s5851 + $0x8] sm:$0xff]
        %v5854 = vld [vmem:[%s5851 + $0x10] sm:$0xff]
        %v5855 = vld [vmem:[%s5851 + $0x18] sm:$0xff]
        %v5856 = vld [vmem:[#allocation3] sm:$0xf]
        %v5858 = vsel %vm4938, %v5856, 0
        %5860 = vmatprep.subr.mxu0 0.0
        %5861 = vmatpush1.msra.mxu0 %v5852
        %5862 = vmatprep.subr.mxu0 0.0
        %5863 = vmatpush1.msra.mxu0 %v5853
        %5864 = vmatprep.subr.mxu0 0.0
        %5865 = vmatpush1.msra.mxu0 %v5854
        %5866 = vmatprep.subr.mxu0 0.0
        %5867 = vmatpush1.msra.mxu0 %v5855
        %5868 = vmatprep.subr.mxu0 0.0
        %5869 = vmatpush1.msra.mxu0 0.0
        %5870 = vmatprep.subr.mxu0 0.0
        %5871 = vmatpush1.msra.mxu0 0.0
        %5872 = vmatprep.subr.mxu0 0.0
        %5873 = vmatpush1.msra.mxu0 0.0
        %5874 = vmatprep.subr.mxu0 0.0
        %5875 = vmatpush1.msra.mxu0 0.0
        %5876 = vmatprep.subr.mxu0 0.0
        %5877 = vmatpush1.msra.mxu0 0.0
        %5878 = vmatprep.subr.mxu0 0.0
        %5879 = vmatpush1.msra.mxu0 0.0
        %5880 = vmatprep.subr.mxu0 0.0
        %5881 = vmatpush1.msra.mxu0 0.0
        %5882 = vmatprep.subr.mxu0 0.0
        %5883 = vmatpush1.msra.mxu0 0.0
        %5884 = vmatprep.subr.mxu0 0.0
        %5885 = vmatpush1.msra.mxu0 0.0
        %5886 = vmatprep.subr.mxu0 0.0
        %5887 = vmatpush1.msra.mxu0 0.0
        %5888 = vmatprep.subr.mxu0 0.0
        %5889 = vmatpush1.msra.mxu0 0.0
        %5890 = vmatprep.subr.mxu0 0.0
        %5891 = vmatpush1.msra.mxu0 0.0
        %5892 = vmatprep.subr.mxu0 0.0
        %5893 = vmatpush1.msra.mxu0 0.0
        %5894 = vmatprep.subr.mxu0 0.0
        %5895 = vmatpush1.msra.mxu0 0.0
        %5896 = vmatprep.subr.mxu0 0.0
        %5897 = vmatpush1.msra.mxu0 0.0
        %5898 = vmatprep.subr.mxu0 0.0
        %5899 = vmatpush1.msra.mxu0 0.0
        %5900 = vmatprep.subr.mxu0 0.0
        %5901 = vmatpush1.msra.mxu0 0.0
        %5902 = vmatprep.subr.mxu0 0.0
        %5903 = vmatpush1.msra.mxu0 0.0
        %5904 = vmatprep.subr.mxu0 0.0
        %5905 = vmatpush1.msra.mxu0 0.0
        %5906 = vmatprep.subr.mxu0 0.0
        %5907 = vmatpush1.msra.mxu0 0.0
        %5908 = vmatprep.subr.mxu0 0.0
        %5909 = vmatpush1.msra.mxu0 0.0
        %5910 = vmatprep.subr.mxu0 0.0
        %5911 = vmatpush1.msra.mxu0 0.0
        %5912 = vmatprep.subr.mxu0 0.0
        %5913 = vmatpush1.msra.mxu0 0.0
        %5914 = vmatprep.subr.mxu0 0.0
        %5915 = vmatpush1.msra.mxu0 0.0
        %5916 = vmatprep.subr.mxu0 0.0
        %5917 = vmatpush1.msra.mxu0 0.0
        %5918 = vmatprep.subr.mxu0 0.0
        %5919 = vmatpush1.msra.mxu0 0.0
        %5920 = vmatprep.subr.mxu0 0.0
        %5921 = vmatpush1.msra.mxu0 0.0
        %5922 = vmatprep.subr.mxu0 0.0
        %5923 = vmatpush1.msra.mxu0 0.0
        %5924 = vmatprep.mubr.f32.mxu0 0.0
        %5925 = vmatmul.mubr.f32.gmra.mrb[0].mxu0 %v5858
        %v5926 = vpop.f32.mrb[0].mxu0
        %v5927 = vadd.f32 0.0, %v5926
        %v5928 = vpop.f32.mrb[0].mxu0
        %5929 = vdwg.mxu0
        %v5930 = vadd.f32 %v5841, %v5927
        %v5931 = vld [vmem:[%s5405 + $0x2] sm:$0x1]
        %5932 = vst.msk [vmem:[#allocation3] sm:$0x1] %vm4963, %v5931
        %v5933 = vld [vmem:[%s5405 + $0x4] sm:$0x1]
        %5934 = vst.msk [vmem:[#allocation3 + $0x1] sm:$0x1] %vm4963, %v5933
        %v5935 = vld [vmem:[%s5846 + $0x2] sm:$0x1]
        %5936 = vst.msk [vmem:[#allocation3 + $0x2] sm:$0x1] %vm4963, %v5935
        %v5937 = vld [vmem:[%s5846 + $0x4] sm:$0x1]
        %5938 = vst.msk [vmem:[#allocation3 + $0x3] sm:$0x1] %vm4963, %v5937
        %s5939 = scalar_lea.vmem [#allocation5], 352
        %v5940 = vld [vmem:[%s5939] sm:$0xff]
        %v5941 = vld [vmem:[%s5939 + $0x8] sm:$0xff]
        %v5942 = vld [vmem:[%s5939 + $0x10] sm:$0xff]
        %v5943 = vld [vmem:[%s5939 + $0x18] sm:$0xff]
        %v5944 = vld [vmem:[#allocation3] sm:$0xf]
        %v5946 = vsel %vm4938, %v5944, 0
        %5948 = vmatprep.subr.mxu0 0.0
        %5949 = vmatpush1.msra.mxu0 %v5940
        %5950 = vmatprep.subr.mxu0 0.0
        %5951 = vmatpush1.msra.mxu0 %v5941
        %5952 = vmatprep.subr.mxu0 0.0
        %5953 = vmatpush1.msra.mxu0 %v5942
        %5954 = vmatprep.subr.mxu0 0.0
        %5955 = vmatpush1.msra.mxu0 %v5943
        %5956 = vmatprep.subr.mxu0 0.0
        %5957 = vmatpush1.msra.mxu0 0.0
        %5958 = vmatprep.subr.mxu0 0.0
        %5959 = vmatpush1.msra.mxu0 0.0
        %5960 = vmatprep.subr.mxu0 0.0
        %5961 = vmatpush1.msra.mxu0 0.0
        %5962 = vmatprep.subr.mxu0 0.0
        %5963 = vmatpush1.msra.mxu0 0.0
        %5964 = vmatprep.subr.mxu0 0.0
        %5965 = vmatpush1.msra.mxu0 0.0
        %5966 = vmatprep.subr.mxu0 0.0
        %5967 = vmatpush1.msra.mxu0 0.0
        %5968 = vmatprep.subr.mxu0 0.0
        %5969 = vmatpush1.msra.mxu0 0.0
        %5970 = vmatprep.subr.mxu0 0.0
        %5971 = vmatpush1.msra.mxu0 0.0
        %5972 = vmatprep.subr.mxu0 0.0
        %5973 = vmatpush1.msra.mxu0 0.0
        %5974 = vmatprep.subr.mxu0 0.0
        %5975 = vmatpush1.msra.mxu0 0.0
        %5976 = vmatprep.subr.mxu0 0.0
        %5977 = vmatpush1.msra.mxu0 0.0
        %5978 = vmatprep.subr.mxu0 0.0
        %5979 = vmatpush1.msra.mxu0 0.0
        %5980 = vmatprep.subr.mxu0 0.0
        %5981 = vmatpush1.msra.mxu0 0.0
        %5982 = vmatprep.subr.mxu0 0.0
        %5983 = vmatpush1.msra.mxu0 0.0
        %5984 = vmatprep.subr.mxu0 0.0
        %5985 = vmatpush1.msra.mxu0 0.0
        %5986 = vmatprep.subr.mxu0 0.0
        %5987 = vmatpush1.msra.mxu0 0.0
        %5988 = vmatprep.subr.mxu0 0.0
        %5989 = vmatpush1.msra.mxu0 0.0
        %5990 = vmatprep.subr.mxu0 0.0
        %5991 = vmatpush1.msra.mxu0 0.0
        %5992 = vmatprep.subr.mxu0 0.0
        %5993 = vmatpush1.msra.mxu0 0.0
        %5994 = vmatprep.subr.mxu0 0.0
        %5995 = vmatpush1.msra.mxu0 0.0
        %5996 = vmatprep.subr.mxu0 0.0
        %5997 = vmatpush1.msra.mxu0 0.0
        %5998 = vmatprep.subr.mxu0 0.0
        %5999 = vmatpush1.msra.mxu0 0.0
        %6000 = vmatprep.subr.mxu0 0.0
        %6001 = vmatpush1.msra.mxu0 0.0
        %6002 = vmatprep.subr.mxu0 0.0
        %6003 = vmatpush1.msra.mxu0 0.0
        %6004 = vmatprep.subr.mxu0 0.0
        %6005 = vmatpush1.msra.mxu0 0.0
        %6006 = vmatprep.subr.mxu0 0.0
        %6007 = vmatpush1.msra.mxu0 0.0
        %6008 = vmatprep.subr.mxu0 0.0
        %6009 = vmatpush1.msra.mxu0 0.0
        %6010 = vmatprep.subr.mxu0 0.0
        %6011 = vmatpush1.msra.mxu0 0.0
        %6012 = vmatprep.mubr.f32.mxu0 0.0
        %6013 = vmatmul.mubr.f32.gmra.mrb[0].mxu0 %v5946
        %v6014 = vpop.f32.mrb[0].mxu0
        %v6015 = vadd.f32 0.0, %v6014
        %v6016 = vpop.f32.mrb[0].mxu0
        %6017 = vdwg.mxu0
        %v6018 = vadd.f32 %v5930, %v6015
        %v6019 = vld [vmem:[%s5405 + $0x4] sm:$0x1]
        %6020 = vst.msk [vmem:[#allocation3] sm:$0x1] %vm4963, %v6019
        %v6021 = vld [vmem:[%s5405 + $0x6] sm:$0x1]
        %6022 = vst.msk [vmem:[#allocation3 + $0x1] sm:$0x1] %vm4963, %v6021
        %v6023 = vld [vmem:[%s5846 + $0x4] sm:$0x1]
        %6024 = vst.msk [vmem:[#allocation3 + $0x2] sm:$0x1] %vm4963, %v6023
        %v6025 = vld [vmem:[%s5846 + $0x6] sm:$0x1]
        %6026 = vst.msk [vmem:[#allocation3 + $0x3] sm:$0x1] %vm4963, %v6025
        %s6027 = scalar_lea.vmem [#allocation5], 384
        %v6028 = vld [vmem:[%s6027] sm:$0xff]
        %v6029 = vld [vmem:[%s6027 + $0x8] sm:$0xff]
        %v6030 = vld [vmem:[%s6027 + $0x10] sm:$0xff]
        %v6031 = vld [vmem:[%s6027 + $0x18] sm:$0xff]
        %v6032 = vld [vmem:[#allocation3] sm:$0xf]
        %v6034 = vsel %vm4938, %v6032, 0
        %6036 = vmatprep.subr.mxu0 0.0
        %6037 = vmatpush1.msra.mxu0 %v6028
        %6038 = vmatprep.subr.mxu0 0.0
        %6039 = vmatpush1.msra.mxu0 %v6029
        %6040 = vmatprep.subr.mxu0 0.0
        %6041 = vmatpush1.msra.mxu0 %v6030
        %6042 = vmatprep.subr.mxu0 0.0
        %6043 = vmatpush1.msra.mxu0 %v6031
        %6044 = vmatprep.subr.mxu0 0.0
        %6045 = vmatpush1.msra.mxu0 0.0
        %6046 = vmatprep.subr.mxu0 0.0
        %6047 = vmatpush1.msra.mxu0 0.0
        %6048 = vmatprep.subr.mxu0 0.0
        %6049 = vmatpush1.msra.mxu0 0.0
        %6050 = vmatprep.subr.mxu0 0.0
        %6051 = vmatpush1.msra.mxu0 0.0
        %6052 = vmatprep.subr.mxu0 0.0
        %6053 = vmatpush1.msra.mxu0 0.0
        %6054 = vmatprep.subr.mxu0 0.0
        %6055 = vmatpush1.msra.mxu0 0.0
        %6056 = vmatprep.subr.mxu0 0.0
        %6057 = vmatpush1.msra.mxu0 0.0
        %6058 = vmatprep.subr.mxu0 0.0
        %6059 = vmatpush1.msra.mxu0 0.0
        %6060 = vmatprep.subr.mxu0 0.0
        %6061 = vmatpush1.msra.mxu0 0.0
        %6062 = vmatprep.subr.mxu0 0.0
        %6063 = vmatpush1.msra.mxu0 0.0
        %6064 = vmatprep.subr.mxu0 0.0
        %6065 = vmatpush1.msra.mxu0 0.0
        %6066 = vmatprep.subr.mxu0 0.0
        %6067 = vmatpush1.msra.mxu0 0.0
        %6068 = vmatprep.subr.mxu0 0.0
        %6069 = vmatpush1.msra.mxu0 0.0
        %6070 = vmatprep.subr.mxu0 0.0
        %6071 = vmatpush1.msra.mxu0 0.0
        %6072 = vmatprep.subr.mxu0 0.0
        %6073 = vmatpush1.msra.mxu0 0.0
        %6074 = vmatprep.subr.mxu0 0.0
        %6075 = vmatpush1.msra.mxu0 0.0
        %6076 = vmatprep.subr.mxu0 0.0
        %6077 = vmatpush1.msra.mxu0 0.0
        %6078 = vmatprep.subr.mxu0 0.0
        %6079 = vmatpush1.msra.mxu0 0.0
        %6080 = vmatprep.subr.mxu0 0.0
        %6081 = vmatpush1.msra.mxu0 0.0
        %6082 = vmatprep.subr.mxu0 0.0
        %6083 = vmatpush1.msra.mxu0 0.0
        %6084 = vmatprep.subr.mxu0 0.0
        %6085 = vmatpush1.msra.mxu0 0.0
        %6086 = vmatprep.subr.mxu0 0.0
        %6087 = vmatpush1.msra.mxu0 0.0
        %6088 = vmatprep.subr.mxu0 0.0
        %6089 = vmatpush1.msra.mxu0 0.0
        %6090 = vmatprep.subr.mxu0 0.0
        %6091 = vmatpush1.msra.mxu0 0.0
        %6092 = vmatprep.subr.mxu0 0.0
        %6093 = vmatpush1.msra.mxu0 0.0
        %6094 = vmatprep.subr.mxu0 0.0
        %6095 = vmatpush1.msra.mxu0 0.0
        %6096 = vmatprep.subr.mxu0 0.0
        %6097 = vmatpush1.msra.mxu0 0.0
        %6098 = vmatprep.subr.mxu0 0.0
        %6099 = vmatpush1.msra.mxu0 0.0
        %6100 = vmatprep.mubr.f32.mxu0 0.0
        %6101 = vmatmul.mubr.f32.gmra.mrb[0].mxu0 %v6034
        %v6102 = vpop.f32.mrb[0].mxu0
        %v6103 = vadd.f32 0.0, %v6102
        %v6104 = vpop.f32.mrb[0].mxu0
        %6105 = vdwg.mxu0
        %v6106 = vadd.f32 %v6018, %v6103
        %v6107 = vld [vmem:[%s5405 + $0x6] sm:$0x1]
        %6108 = vst.msk [vmem:[#allocation3] sm:$0x1] %vm4963, %v6107
        %v6109 = vld [vmem:[%s5405 + $0x8] sm:$0x1]
        %6110 = vst.msk [vmem:[#allocation3 + $0x1] sm:$0x1] %vm4963, %v6109
        %v6111 = vld [vmem:[%s5846 + $0x6] sm:$0x1]
        %6112 = vst.msk [vmem:[#allocation3 + $0x2] sm:$0x1] %vm4963, %v6111
        %v6113 = vld [vmem:[%s5846 + $0x8] sm:$0x1]
        %6114 = vst.msk [vmem:[#allocation3 + $0x3] sm:$0x1] %vm4963, %v6113
        %s6115 = scalar_lea.vmem [#allocation5], 416
        %v6116 = vld [vmem:[%s6115] sm:$0xff]
        %v6117 = vld [vmem:[%s6115 + $0x8] sm:$0xff]
        %v6118 = vld [vmem:[%s6115 + $0x10] sm:$0xff]
        %v6119 = vld [vmem:[%s6115 + $0x18] sm:$0xff]
        %v6120 = vld [vmem:[#allocation3] sm:$0xf]
        %v6122 = vsel %vm4938, %v6120, 0
        %6124 = vmatprep.subr.mxu0 0.0
        %6125 = vmatpush1.msra.mxu0 %v6116
        %6126 = vmatprep.subr.mxu0 0.0
        %6127 = vmatpush1.msra.mxu0 %v6117
        %6128 = vmatprep.subr.mxu0 0.0
        %6129 = vmatpush1.msra.mxu0 %v6118
        %6130 = vmatprep.subr.mxu0 0.0
        %6131 = vmatpush1.msra.mxu0 %v6119
        %6132 = vmatprep.subr.mxu0 0.0
        %6133 = vmatpush1.msra.mxu0 0.0
        %6134 = vmatprep.subr.mxu0 0.0
        %6135 = vmatpush1.msra.mxu0 0.0
        %6136 = vmatprep.subr.mxu0 0.0
        %6137 = vmatpush1.msra.mxu0 0.0
        %6138 = vmatprep.subr.mxu0 0.0
        %6139 = vmatpush1.msra.mxu0 0.0
        %6140 = vmatprep.subr.mxu0 0.0
        %6141 = vmatpush1.msra.mxu0 0.0
        %6142 = vmatprep.subr.mxu0 0.0
        %6143 = vmatpush1.msra.mxu0 0.0
        %6144 = vmatprep.subr.mxu0 0.0
        %6145 = vmatpush1.msra.mxu0 0.0
        %6146 = vmatprep.subr.mxu0 0.0
        %6147 = vmatpush1.msra.mxu0 0.0
        %6148 = vmatprep.subr.mxu0 0.0
        %6149 = vmatpush1.msra.mxu0 0.0
        %6150 = vmatprep.subr.mxu0 0.0
        %6151 = vmatpush1.msra.mxu0 0.0
        %6152 = vmatprep.subr.mxu0 0.0
        %6153 = vmatpush1.msra.mxu0 0.0
        %6154 = vmatprep.subr.mxu0 0.0
        %6155 = vmatpush1.msra.mxu0 0.0
        %6156 = vmatprep.subr.mxu0 0.0
        %6157 = vmatpush1.msra.mxu0 0.0
        %6158 = vmatprep.subr.mxu0 0.0
        %6159 = vmatpush1.msra.mxu0 0.0
        %6160 = vmatprep.subr.mxu0 0.0
        %6161 = vmatpush1.msra.mxu0 0.0
        %6162 = vmatprep.subr.mxu0 0.0
        %6163 = vmatpush1.msra.mxu0 0.0
        %6164 = vmatprep.subr.mxu0 0.0
        %6165 = vmatpush1.msra.mxu0 0.0
        %6166 = vmatprep.subr.mxu0 0.0
        %6167 = vmatpush1.msra.mxu0 0.0
        %6168 = vmatprep.subr.mxu0 0.0
        %6169 = vmatpush1.msra.mxu0 0.0
        %6170 = vmatprep.subr.mxu0 0.0
        %6171 = vmatpush1.msra.mxu0 0.0
        %6172 = vmatprep.subr.mxu0 0.0
        %6173 = vmatpush1.msra.mxu0 0.0
        %6174 = vmatprep.subr.mxu0 0.0
        %6175 = vmatpush1.msra.mxu0 0.0
        %6176 = vmatprep.subr.mxu0 0.0
        %6177 = vmatpush1.msra.mxu0 0.0
        %6178 = vmatprep.subr.mxu0 0.0
        %6179 = vmatpush1.msra.mxu0 0.0
        %6180 = vmatprep.subr.mxu0 0.0
        %6181 = vmatpush1.msra.mxu0 0.0
        %6182 = vmatprep.subr.mxu0 0.0
        %6183 = vmatpush1.msra.mxu0 0.0
        %6184 = vmatprep.subr.mxu0 0.0
        %6185 = vmatpush1.msra.mxu0 0.0
        %6186 = vmatprep.subr.mxu0 0.0
        %6187 = vmatpush1.msra.mxu0 0.0
        %6188 = vmatprep.mubr.f32.mxu0 0.0
        %6189 = vmatmul.mubr.f32.gmra.mrb[0].mxu0 %v6122
        %v6190 = vpop.f32.mrb[0].mxu0
        %v6191 = vadd.f32 0.0, %v6190
        %v6192 = vpop.f32.mrb[0].mxu0
        %6193 = vdwg.mxu0
        %v6194 = vadd.f32 %v6106, %v6191
        %v6195 = vld [vmem:[%s5405 + $0x8] sm:$0x1]
        %6196 = vst.msk [vmem:[#allocation3] sm:$0x1] %vm4963, %v6195
        %v6197 = vld [vmem:[%s5405 + $0xa] sm:$0x1]
        %6198 = vst.msk [vmem:[#allocation3 + $0x1] sm:$0x1] %vm4963, %v6197
        %v6199 = vld [vmem:[%s5846 + $0x8] sm:$0x1]
        %6200 = vst.msk [vmem:[#allocation3 + $0x2] sm:$0x1] %vm4963, %v6199
        %v6201 = vld [vmem:[%s5846 + $0xa] sm:$0x1]
        %6202 = vst.msk [vmem:[#allocation3 + $0x3] sm:$0x1] %vm4963, %v6201
        %s6203 = scalar_lea.vmem [#allocation5], 448
        %v6204 = vld [vmem:[%s6203] sm:$0xff]
        %v6205 = vld [vmem:[%s6203 + $0x8] sm:$0xff]
        %v6206 = vld [vmem:[%s6203 + $0x10] sm:$0xff]
        %v6207 = vld [vmem:[%s6203 + $0x18] sm:$0xff]
        %v6208 = vld [vmem:[#allocation3] sm:$0xf]
        %v6210 = vsel %vm4938, %v6208, 0
        %6212 = vmatprep.subr.mxu0 0.0
        %6213 = vmatpush1.msra.mxu0 %v6204
        %6214 = vmatprep.subr.mxu0 0.0
        %6215 = vmatpush1.msra.mxu0 %v6205
        %6216 = vmatprep.subr.mxu0 0.0
        %6217 = vmatpush1.msra.mxu0 %v6206
        %6218 = vmatprep.subr.mxu0 0.0
        %6219 = vmatpush1.msra.mxu0 %v6207
        %6220 = vmatprep.subr.mxu0 0.0
        %6221 = vmatpush1.msra.mxu0 0.0
        %6222 = vmatprep.subr.mxu0 0.0
        %6223 = vmatpush1.msra.mxu0 0.0
        %6224 = vmatprep.subr.mxu0 0.0
        %6225 = vmatpush1.msra.mxu0 0.0
        %6226 = vmatprep.subr.mxu0 0.0
        %6227 = vmatpush1.msra.mxu0 0.0
        %6228 = vmatprep.subr.mxu0 0.0
        %6229 = vmatpush1.msra.mxu0 0.0
        %6230 = vmatprep.subr.mxu0 0.0
        %6231 = vmatpush1.msra.mxu0 0.0
        %6232 = vmatprep.subr.mxu0 0.0
        %6233 = vmatpush1.msra.mxu0 0.0
        %6234 = vmatprep.subr.mxu0 0.0
        %6235 = vmatpush1.msra.mxu0 0.0
        %6236 = vmatprep.subr.mxu0 0.0
        %6237 = vmatpush1.msra.mxu0 0.0
        %6238 = vmatprep.subr.mxu0 0.0
        %6239 = vmatpush1.msra.mxu0 0.0
        %6240 = vmatprep.subr.mxu0 0.0
        %6241 = vmatpush1.msra.mxu0 0.0
        %6242 = vmatprep.subr.mxu0 0.0
        %6243 = vmatpush1.msra.mxu0 0.0
        %6244 = vmatprep.subr.mxu0 0.0
        %6245 = vmatpush1.msra.mxu0 0.0
        %6246 = vmatprep.subr.mxu0 0.0
        %6247 = vmatpush1.msra.mxu0 0.0
        %6248 = vmatprep.subr.mxu0 0.0
        %6249 = vmatpush1.msra.mxu0 0.0
        %6250 = vmatprep.subr.mxu0 0.0
        %6251 = vmatpush1.msra.mxu0 0.0
        %6252 = vmatprep.subr.mxu0 0.0
        %6253 = vmatpush1.msra.mxu0 0.0
        %6254 = vmatprep.subr.mxu0 0.0
        %6255 = vmatpush1.msra.mxu0 0.0
        %6256 = vmatprep.subr.mxu0 0.0
        %6257 = vmatpush1.msra.mxu0 0.0
        %6258 = vmatprep.subr.mxu0 0.0
        %6259 = vmatpush1.msra.mxu0 0.0
        %6260 = vmatprep.subr.mxu0 0.0
        %6261 = vmatpush1.msra.mxu0 0.0
        %6262 = vmatprep.subr.mxu0 0.0
        %6263 = vmatpush1.msra.mxu0 0.0
        %6264 = vmatprep.subr.mxu0 0.0
        %6265 = vmatpush1.msra.mxu0 0.0
        %6266 = vmatprep.subr.mxu0 0.0
        %6267 = vmatpush1.msra.mxu0 0.0
        %6268 = vmatprep.subr.mxu0 0.0
        %6269 = vmatpush1.msra.mxu0 0.0
        %6270 = vmatprep.subr.mxu0 0.0
        %6271 = vmatpush1.msra.mxu0 0.0
        %6272 = vmatprep.subr.mxu0 0.0
        %6273 = vmatpush1.msra.mxu0 0.0
        %6274 = vmatprep.subr.mxu0 0.0
        %6275 = vmatpush1.msra.mxu0 0.0
        %6276 = vmatprep.mubr.f32.mxu0 0.0
        %6277 = vmatmul.mubr.f32.gmra.mrb[0].mxu0 %v6210
        %v6278 = vpop.f32.mrb[0].mxu0
        %v6279 = vadd.f32 0.0, %v6278
        %v6280 = vpop.f32.mrb[0].mxu0
        %6281 = vdwg.mxu0
        %v6282 = vadd.f32 %v6194, %v6279
        %v6283 = vld [vmem:[%s5846] sm:$0x1]
        %6284 = vst.msk [vmem:[#allocation3] sm:$0x1] %vm4963, %v6283
        %v6285 = vld [vmem:[%s5846 + $0x2] sm:$0x1]
        %6286 = vst.msk [vmem:[#allocation3 + $0x1] sm:$0x1] %vm4963, %v6285
        %s6287 = scalar_lea.vmem [#allocation2], 128
        %v6288 = vld [vmem:[%s6287] sm:$0x1]
        %6289 = vst.msk [vmem:[#allocation3 + $0x2] sm:$0x1] %vm4963, %v6288
        %v6290 = vld [vmem:[%s6287 + $0x2] sm:$0x1]
        %6291 = vst.msk [vmem:[#allocation3 + $0x3] sm:$0x1] %vm4963, %v6290
        %s6292 = scalar_lea.vmem [#allocation5], 480
        %v6293 = vld [vmem:[%s6292] sm:$0xff]
        %v6294 = vld [vmem:[%s6292 + $0x8] sm:$0xff]
        %v6295 = vld [vmem:[%s6292 + $0x10] sm:$0xff]
        %v6296 = vld [vmem:[%s6292 + $0x18] sm:$0xff]
        %v6297 = vld [vmem:[#allocation3] sm:$0xf]
        %v6299 = vsel %vm4938, %v6297, 0
        %6301 = vmatprep.subr.mxu0 0.0
        %6302 = vmatpush1.msra.mxu0 %v6293
        %6303 = vmatprep.subr.mxu0 0.0
        %6304 = vmatpush1.msra.mxu0 %v6294
        %6305 = vmatprep.subr.mxu0 0.0
        %6306 = vmatpush1.msra.mxu0 %v6295
        %6307 = vmatprep.subr.mxu0 0.0
        %6308 = vmatpush1.msra.mxu0 %v6296
        %6309 = vmatprep.subr.mxu0 0.0
        %6310 = vmatpush1.msra.mxu0 0.0
        %6311 = vmatprep.subr.mxu0 0.0
        %6312 = vmatpush1.msra.mxu0 0.0
        %6313 = vmatprep.subr.mxu0 0.0
        %6314 = vmatpush1.msra.mxu0 0.0
        %6315 = vmatprep.subr.mxu0 0.0
        %6316 = vmatpush1.msra.mxu0 0.0
        %6317 = vmatprep.subr.mxu0 0.0
        %6318 = vmatpush1.msra.mxu0 0.0
        %6319 = vmatprep.subr.mxu0 0.0
        %6320 = vmatpush1.msra.mxu0 0.0
        %6321 = vmatprep.subr.mxu0 0.0
        %6322 = vmatpush1.msra.mxu0 0.0
        %6323 = vmatprep.subr.mxu0 0.0
        %6324 = vmatpush1.msra.mxu0 0.0
        %6325 = vmatprep.subr.mxu0 0.0
        %6326 = vmatpush1.msra.mxu0 0.0
        %6327 = vmatprep.subr.mxu0 0.0
        %6328 = vmatpush1.msra.mxu0 0.0
        %6329 = vmatprep.subr.mxu0 0.0
        %6330 = vmatpush1.msra.mxu0 0.0
        %6331 = vmatprep.subr.mxu0 0.0
        %6332 = vmatpush1.msra.mxu0 0.0
        %6333 = vmatprep.subr.mxu0 0.0
        %6334 = vmatpush1.msra.mxu0 0.0
        %6335 = vmatprep.subr.mxu0 0.0
        %6336 = vmatpush1.msra.mxu0 0.0
        %6337 = vmatprep.subr.mxu0 0.0
        %6338 = vmatpush1.msra.mxu0 0.0
        %6339 = vmatprep.subr.mxu0 0.0
        %6340 = vmatpush1.msra.mxu0 0.0
        %6341 = vmatprep.subr.mxu0 0.0
        %6342 = vmatpush1.msra.mxu0 0.0
        %6343 = vmatprep.subr.mxu0 0.0
        %6344 = vmatpush1.msra.mxu0 0.0
        %6345 = vmatprep.subr.mxu0 0.0
        %6346 = vmatpush1.msra.mxu0 0.0
        %6347 = vmatprep.subr.mxu0 0.0
        %6348 = vmatpush1.msra.mxu0 0.0
        %6349 = vmatprep.subr.mxu0 0.0
        %6350 = vmatpush1.msra.mxu0 0.0
        %6351 = vmatprep.subr.mxu0 0.0
        %6352 = vmatpush1.msra.mxu0 0.0
        %6353 = vmatprep.subr.mxu0 0.0
        %6354 = vmatpush1.msra.mxu0 0.0
        %6355 = vmatprep.subr.mxu0 0.0
        %6356 = vmatpush1.msra.mxu0 0.0
        %6357 = vmatprep.subr.mxu0 0.0
        %6358 = vmatpush1.msra.mxu0 0.0
        %6359 = vmatprep.subr.mxu0 0.0
        %6360 = vmatpush1.msra.mxu0 0.0
        %6361 = vmatprep.subr.mxu0 0.0
        %6362 = vmatpush1.msra.mxu0 0.0
        %6363 = vmatprep.subr.mxu0 0.0
        %6364 = vmatpush1.msra.mxu0 0.0
        %6365 = vmatprep.mubr.f32.mxu0 0.0
        %6366 = vmatmul.mubr.f32.gmra.mrb[0].mxu0 %v6299
        %v6367 = vpop.f32.mrb[0].mxu0
        %v6368 = vadd.f32 0.0, %v6367
        %v6369 = vpop.f32.mrb[0].mxu0
        %6370 = vdwg.mxu0
        %v6371 = vadd.f32 %v6282, %v6368
        %v6372 = vld [vmem:[%s5846 + $0x2] sm:$0x1]
        %6373 = vst.msk [vmem:[#allocation3] sm:$0x1] %vm4963, %v6372
        %v6374 = vld [vmem:[%s5846 + $0x4] sm:$0x1]
        %6375 = vst.msk [vmem:[#allocation3 + $0x1] sm:$0x1] %vm4963, %v6374
        %v6376 = vld [vmem:[%s6287 + $0x2] sm:$0x1]
        %6377 = vst.msk [vmem:[#allocation3 + $0x2] sm:$0x1] %vm4963, %v6376
        %v6378 = vld [vmem:[%s6287 + $0x4] sm:$0x1]
        %6379 = vst.msk [vmem:[#allocation3 + $0x3] sm:$0x1] %vm4963, %v6378
        %s6380 = scalar_lea.vmem [#allocation5], 512
        %v6381 = vld [vmem:[%s6380] sm:$0xff]
        %v6382 = vld [vmem:[%s6380 + $0x8] sm:$0xff]
        %v6383 = vld [vmem:[%s6380 + $0x10] sm:$0xff]
        %v6384 = vld [vmem:[%s6380 + $0x18] sm:$0xff]
        %v6385 = vld [vmem:[#allocation3] sm:$0xf]
        %v6387 = vsel %vm4938, %v6385, 0
        %6389 = vmatprep.subr.mxu0 0.0
        %6390 = vmatpush1.msra.mxu0 %v6381
        %6391 = vmatprep.subr.mxu0 0.0
        %6392 = vmatpush1.msra.mxu0 %v6382
        %6393 = vmatprep.subr.mxu0 0.0
        %6394 = vmatpush1.msra.mxu0 %v6383
        %6395 = vmatprep.subr.mxu0 0.0
        %6396 = vmatpush1.msra.mxu0 %v6384
        %6397 = vmatprep.subr.mxu0 0.0
        %6398 = vmatpush1.msra.mxu0 0.0
        %6399 = vmatprep.subr.mxu0 0.0
        %6400 = vmatpush1.msra.mxu0 0.0
        %6401 = vmatprep.subr.mxu0 0.0
        %6402 = vmatpush1.msra.mxu0 0.0
        %6403 = vmatprep.subr.mxu0 0.0
        %6404 = vmatpush1.msra.mxu0 0.0
        %6405 = vmatprep.subr.mxu0 0.0
        %6406 = vmatpush1.msra.mxu0 0.0
        %6407 = vmatprep.subr.mxu0 0.0
        %6408 = vmatpush1.msra.mxu0 0.0
        %6409 = vmatprep.subr.mxu0 0.0
        %6410 = vmatpush1.msra.mxu0 0.0
        %6411 = vmatprep.subr.mxu0 0.0
        %6412 = vmatpush1.msra.mxu0 0.0
        %6413 = vmatprep.subr.mxu0 0.0
        %6414 = vmatpush1.msra.mxu0 0.0
        %6415 = vmatprep.subr.mxu0 0.0
        %6416 = vmatpush1.msra.mxu0 0.0
        %6417 = vmatprep.subr.mxu0 0.0
        %6418 = vmatpush1.msra.mxu0 0.0
        %6419 = vmatprep.subr.mxu0 0.0
        %6420 = vmatpush1.msra.mxu0 0.0
        %6421 = vmatprep.subr.mxu0 0.0
        %6422 = vmatpush1.msra.mxu0 0.0
        %6423 = vmatprep.subr.mxu0 0.0
        %6424 = vmatpush1.msra.mxu0 0.0
        %6425 = vmatprep.subr.mxu0 0.0
        %6426 = vmatpush1.msra.mxu0 0.0
        %6427 = vmatprep.subr.mxu0 0.0
        %6428 = vmatpush1.msra.mxu0 0.0
        %6429 = vmatprep.subr.mxu0 0.0
        %6430 = vmatpush1.msra.mxu0 0.0
        %6431 = vmatprep.subr.mxu0 0.0
        %6432 = vmatpush1.msra.mxu0 0.0
        %6433 = vmatprep.subr.mxu0 0.0
        %6434 = vmatpush1.msra.mxu0 0.0
        %6435 = vmatprep.subr.mxu0 0.0
        %6436 = vmatpush1.msra.mxu0 0.0
        %6437 = vmatprep.subr.mxu0 0.0
        %6438 = vmatpush1.msra.mxu0 0.0
        %6439 = vmatprep.subr.mxu0 0.0
        %6440 = vmatpush1.msra.mxu0 0.0
        %6441 = vmatprep.subr.mxu0 0.0
        %6442 = vmatpush1.msra.mxu0 0.0
        %6443 = vmatprep.subr.mxu0 0.0
        %6444 = vmatpush1.msra.mxu0 0.0
        %6445 = vmatprep.subr.mxu0 0.0
        %6446 = vmatpush1.msra.mxu0 0.0
        %6447 = vmatprep.subr.mxu0 0.0
        %6448 = vmatpush1.msra.mxu0 0.0
        %6449 = vmatprep.subr.mxu0 0.0
        %6450 = vmatpush1.msra.mxu0 0.0
        %6451 = vmatprep.subr.mxu0 0.0
        %6452 = vmatpush1.msra.mxu0 0.0
        %6453 = vmatprep.mubr.f32.mxu0 0.0
        %6454 = vmatmul.mubr.f32.gmra.mrb[0].mxu0 %v6387
        %v6455 = vpop.f32.mrb[0].mxu0
        %v6456 = vadd.f32 0.0, %v6455
        %v6457 = vpop.f32.mrb[0].mxu0
        %6458 = vdwg.mxu0
        %v6459 = vadd.f32 %v6371, %v6456
        %v6460 = vld [vmem:[%s5846 + $0x4] sm:$0x1]
        %6461 = vst.msk [vmem:[#allocation3] sm:$0x1] %vm4963, %v6460
        %v6462 = vld [vmem:[%s5846 + $0x6] sm:$0x1]
        %6463 = vst.msk [vmem:[#allocation3 + $0x1] sm:$0x1] %vm4963, %v6462
        %v6464 = vld [vmem:[%s6287 + $0x4] sm:$0x1]
        %6465 = vst.msk [vmem:[#allocation3 + $0x2] sm:$0x1] %vm4963, %v6464
        %v6466 = vld [vmem:[%s6287 + $0x6] sm:$0x1]
        %6467 = vst.msk [vmem:[#allocation3 + $0x3] sm:$0x1] %vm4963, %v6466
        %s6468 = scalar_lea.vmem [#allocation5], 544
        %v6469 = vld [vmem:[%s6468] sm:$0xff]
        %v6470 = vld [vmem:[%s6468 + $0x8] sm:$0xff]
        %v6471 = vld [vmem:[%s6468 + $0x10] sm:$0xff]
        %v6472 = vld [vmem:[%s6468 + $0x18] sm:$0xff]
        %v6473 = vld [vmem:[#allocation3] sm:$0xf]
        %v6475 = vsel %vm4938, %v6473, 0
        %6477 = vmatprep.subr.mxu0 0.0
        %6478 = vmatpush1.msra.mxu0 %v6469
        %6479 = vmatprep.subr.mxu0 0.0
        %6480 = vmatpush1.msra.mxu0 %v6470
        %6481 = vmatprep.subr.mxu0 0.0
        %6482 = vmatpush1.msra.mxu0 %v6471
        %6483 = vmatprep.subr.mxu0 0.0
        %6484 = vmatpush1.msra.mxu0 %v6472
        %6485 = vmatprep.subr.mxu0 0.0
        %6486 = vmatpush1.msra.mxu0 0.0
        %6487 = vmatprep.subr.mxu0 0.0
        %6488 = vmatpush1.msra.mxu0 0.0
        %6489 = vmatprep.subr.mxu0 0.0
        %6490 = vmatpush1.msra.mxu0 0.0
        %6491 = vmatprep.subr.mxu0 0.0
        %6492 = vmatpush1.msra.mxu0 0.0
        %6493 = vmatprep.subr.mxu0 0.0
        %6494 = vmatpush1.msra.mxu0 0.0
        %6495 = vmatprep.subr.mxu0 0.0
        %6496 = vmatpush1.msra.mxu0 0.0
        %6497 = vmatprep.subr.mxu0 0.0
        %6498 = vmatpush1.msra.mxu0 0.0
        %6499 = vmatprep.subr.mxu0 0.0
        %6500 = vmatpush1.msra.mxu0 0.0
        %6501 = vmatprep.subr.mxu0 0.0
        %6502 = vmatpush1.msra.mxu0 0.0
        %6503 = vmatprep.subr.mxu0 0.0
        %6504 = vmatpush1.msra.mxu0 0.0
        %6505 = vmatprep.subr.mxu0 0.0
        %6506 = vmatpush1.msra.mxu0 0.0
        %6507 = vmatprep.subr.mxu0 0.0
        %6508 = vmatpush1.msra.mxu0 0.0
        %6509 = vmatprep.subr.mxu0 0.0
        %6510 = vmatpush1.msra.mxu0 0.0
        %6511 = vmatprep.subr.mxu0 0.0
        %6512 = vmatpush1.msra.mxu0 0.0
        %6513 = vmatprep.subr.mxu0 0.0
        %6514 = vmatpush1.msra.mxu0 0.0
        %6515 = vmatprep.subr.mxu0 0.0
        %6516 = vmatpush1.msra.mxu0 0.0
        %6517 = vmatprep.subr.mxu0 0.0
        %6518 = vmatpush1.msra.mxu0 0.0
        %6519 = vmatprep.subr.mxu0 0.0
        %6520 = vmatpush1.msra.mxu0 0.0
        %6521 = vmatprep.subr.mxu0 0.0
        %6522 = vmatpush1.msra.mxu0 0.0
        %6523 = vmatprep.subr.mxu0 0.0
        %6524 = vmatpush1.msra.mxu0 0.0
        %6525 = vmatprep.subr.mxu0 0.0
        %6526 = vmatpush1.msra.mxu0 0.0
        %6527 = vmatprep.subr.mxu0 0.0
        %6528 = vmatpush1.msra.mxu0 0.0
        %6529 = vmatprep.subr.mxu0 0.0
        %6530 = vmatpush1.msra.mxu0 0.0
        %6531 = vmatprep.subr.mxu0 0.0
        %6532 = vmatpush1.msra.mxu0 0.0
        %6533 = vmatprep.subr.mxu0 0.0
        %6534 = vmatpush1.msra.mxu0 0.0
        %6535 = vmatprep.subr.mxu0 0.0
        %6536 = vmatpush1.msra.mxu0 0.0
        %6537 = vmatprep.subr.mxu0 0.0
        %6538 = vmatpush1.msra.mxu0 0.0
        %6539 = vmatprep.subr.mxu0 0.0
        %6540 = vmatpush1.msra.mxu0 0.0
        %6541 = vmatprep.mubr.f32.mxu0 0.0
        %6542 = vmatmul.mubr.f32.gmra.mrb[0].mxu0 %v6475
        %v6543 = vpop.f32.mrb[0].mxu0
        %v6544 = vadd.f32 0.0, %v6543
        %v6545 = vpop.f32.mrb[0].mxu0
        %6546 = vdwg.mxu0
        %v6547 = vadd.f32 %v6459, %v6544
        %v6548 = vld [vmem:[%s5846 + $0x6] sm:$0x1]
        %6549 = vst.msk [vmem:[#allocation3] sm:$0x1] %vm4963, %v6548
        %v6550 = vld [vmem:[%s5846 + $0x8] sm:$0x1]
        %6551 = vst.msk [vmem:[#allocation3 + $0x1] sm:$0x1] %vm4963, %v6550
        %v6552 = vld [vmem:[%s6287 + $0x6] sm:$0x1]
        %6553 = vst.msk [vmem:[#allocation3 + $0x2] sm:$0x1] %vm4963, %v6552
        %v6554 = vld [vmem:[%s6287 + $0x8] sm:$0x1]
        %6555 = vst.msk [vmem:[#allocation3 + $0x3] sm:$0x1] %vm4963, %v6554
        %s6556 = scalar_lea.vmem [#allocation5], 576
        %v6557 = vld [vmem:[%s6556] sm:$0xff]
        %v6558 = vld [vmem:[%s6556 + $0x8] sm:$0xff]
        %v6559 = vld [vmem:[%s6556 + $0x10] sm:$0xff]
        %v6560 = vld [vmem:[%s6556 + $0x18] sm:$0xff]
        %v6561 = vld [vmem:[#allocation3] sm:$0xf]
        %v6563 = vsel %vm4938, %v6561, 0
        %6565 = vmatprep.subr.mxu0 0.0
        %6566 = vmatpush1.msra.mxu0 %v6557
        %6567 = vmatprep.subr.mxu0 0.0
        %6568 = vmatpush1.msra.mxu0 %v6558
        %6569 = vmatprep.subr.mxu0 0.0
        %6570 = vmatpush1.msra.mxu0 %v6559
        %6571 = vmatprep.subr.mxu0 0.0
        %6572 = vmatpush1.msra.mxu0 %v6560
        %6573 = vmatprep.subr.mxu0 0.0
        %6574 = vmatpush1.msra.mxu0 0.0
        %6575 = vmatprep.subr.mxu0 0.0
        %6576 = vmatpush1.msra.mxu0 0.0
        %6577 = vmatprep.subr.mxu0 0.0
        %6578 = vmatpush1.msra.mxu0 0.0
        %6579 = vmatprep.subr.mxu0 0.0
        %6580 = vmatpush1.msra.mxu0 0.0
        %6581 = vmatprep.subr.mxu0 0.0
        %6582 = vmatpush1.msra.mxu0 0.0
        %6583 = vmatprep.subr.mxu0 0.0
        %6584 = vmatpush1.msra.mxu0 0.0
        %6585 = vmatprep.subr.mxu0 0.0
        %6586 = vmatpush1.msra.mxu0 0.0
        %6587 = vmatprep.subr.mxu0 0.0
        %6588 = vmatpush1.msra.mxu0 0.0
        %6589 = vmatprep.subr.mxu0 0.0
        %6590 = vmatpush1.msra.mxu0 0.0
        %6591 = vmatprep.subr.mxu0 0.0
        %6592 = vmatpush1.msra.mxu0 0.0
        %6593 = vmatprep.subr.mxu0 0.0
        %6594 = vmatpush1.msra.mxu0 0.0
        %6595 = vmatprep.subr.mxu0 0.0
        %6596 = vmatpush1.msra.mxu0 0.0
        %6597 = vmatprep.subr.mxu0 0.0
        %6598 = vmatpush1.msra.mxu0 0.0
        %6599 = vmatprep.subr.mxu0 0.0
        %6600 = vmatpush1.msra.mxu0 0.0
        %6601 = vmatprep.subr.mxu0 0.0
        %6602 = vmatpush1.msra.mxu0 0.0
        %6603 = vmatprep.subr.mxu0 0.0
        %6604 = vmatpush1.msra.mxu0 0.0
        %6605 = vmatprep.subr.mxu0 0.0
        %6606 = vmatpush1.msra.mxu0 0.0
        %6607 = vmatprep.subr.mxu0 0.0
        %6608 = vmatpush1.msra.mxu0 0.0
        %6609 = vmatprep.subr.mxu0 0.0
        %6610 = vmatpush1.msra.mxu0 0.0
        %6611 = vmatprep.subr.mxu0 0.0
        %6612 = vmatpush1.msra.mxu0 0.0
        %6613 = vmatprep.subr.mxu0 0.0
        %6614 = vmatpush1.msra.mxu0 0.0
        %6615 = vmatprep.subr.mxu0 0.0
        %6616 = vmatpush1.msra.mxu0 0.0
        %6617 = vmatprep.subr.mxu0 0.0
        %6618 = vmatpush1.msra.mxu0 0.0
        %6619 = vmatprep.subr.mxu0 0.0
        %6620 = vmatpush1.msra.mxu0 0.0
        %6621 = vmatprep.subr.mxu0 0.0
        %6622 = vmatpush1.msra.mxu0 0.0
        %6623 = vmatprep.subr.mxu0 0.0
        %6624 = vmatpush1.msra.mxu0 0.0
        %6625 = vmatprep.subr.mxu0 0.0
        %6626 = vmatpush1.msra.mxu0 0.0
        %6627 = vmatprep.subr.mxu0 0.0
        %6628 = vmatpush1.msra.mxu0 0.0
        %6629 = vmatprep.mubr.f32.mxu0 0.0
        %6630 = vmatmul.mubr.f32.gmra.mrb[0].mxu0 %v6563
        %v6631 = vpop.f32.mrb[0].mxu0
        %v6632 = vadd.f32 0.0, %v6631
        %v6633 = vpop.f32.mrb[0].mxu0
        %6634 = vdwg.mxu0
        %v6635 = vadd.f32 %v6547, %v6632
        %v6636 = vld [vmem:[%s5846 + $0x8] sm:$0x1]
        %6637 = vst.msk [vmem:[#allocation3] sm:$0x1] %vm4963, %v6636
        %v6638 = vld [vmem:[%s5846 + $0xa] sm:$0x1]
        %6639 = vst.msk [vmem:[#allocation3 + $0x1] sm:$0x1] %vm4963, %v6638
        %v6640 = vld [vmem:[%s6287 + $0x8] sm:$0x1]
        %6641 = vst.msk [vmem:[#allocation3 + $0x2] sm:$0x1] %vm4963, %v6640
        %v6642 = vld [vmem:[%s6287 + $0xa] sm:$0x1]
        %6643 = vst.msk [vmem:[#allocation3 + $0x3] sm:$0x1] %vm4963, %v6642
        %s6644 = scalar_lea.vmem [#allocation5], 608
        %v6645 = vld [vmem:[%s6644] sm:$0xff]
        %v6646 = vld [vmem:[%s6644 + $0x8] sm:$0xff]
        %v6647 = vld [vmem:[%s6644 + $0x10] sm:$0xff]
        %v6648 = vld [vmem:[%s6644 + $0x18] sm:$0xff]
        %v6649 = vld [vmem:[#allocation3] sm:$0xf]
        %v6651 = vsel %vm4938, %v6649, 0
        %6653 = vmatprep.subr.mxu0 0.0
        %6654 = vmatpush1.msra.mxu0 %v6645
        %6655 = vmatprep.subr.mxu0 0.0
        %6656 = vmatpush1.msra.mxu0 %v6646
        %6657 = vmatprep.subr.mxu0 0.0
        %6658 = vmatpush1.msra.mxu0 %v6647
        %6659 = vmatprep.subr.mxu0 0.0
        %6660 = vmatpush1.msra.mxu0 %v6648
        %6661 = vmatprep.subr.mxu0 0.0
        %6662 = vmatpush1.msra.mxu0 0.0
        %6663 = vmatprep.subr.mxu0 0.0
        %6664 = vmatpush1.msra.mxu0 0.0
        %6665 = vmatprep.subr.mxu0 0.0
        %6666 = vmatpush1.msra.mxu0 0.0
        %6667 = vmatprep.subr.mxu0 0.0
        %6668 = vmatpush1.msra.mxu0 0.0
        %6669 = vmatprep.subr.mxu0 0.0
        %6670 = vmatpush1.msra.mxu0 0.0
        %6671 = vmatprep.subr.mxu0 0.0
        %6672 = vmatpush1.msra.mxu0 0.0
        %6673 = vmatprep.subr.mxu0 0.0
        %6674 = vmatpush1.msra.mxu0 0.0
        %6675 = vmatprep.subr.mxu0 0.0
        %6676 = vmatpush1.msra.mxu0 0.0
        %6677 = vmatprep.subr.mxu0 0.0
        %6678 = vmatpush1.msra.mxu0 0.0
        %6679 = vmatprep.subr.mxu0 0.0
        %6680 = vmatpush1.msra.mxu0 0.0
        %6681 = vmatprep.subr.mxu0 0.0
        %6682 = vmatpush1.msra.mxu0 0.0
        %6683 = vmatprep.subr.mxu0 0.0
        %6684 = vmatpush1.msra.mxu0 0.0
        %6685 = vmatprep.subr.mxu0 0.0
        %6686 = vmatpush1.msra.mxu0 0.0
        %6687 = vmatprep.subr.mxu0 0.0
        %6688 = vmatpush1.msra.mxu0 0.0
        %6689 = vmatprep.subr.mxu0 0.0
        %6690 = vmatpush1.msra.mxu0 0.0
        %6691 = vmatprep.subr.mxu0 0.0
        %6692 = vmatpush1.msra.mxu0 0.0
        %6693 = vmatprep.subr.mxu0 0.0
        %6694 = vmatpush1.msra.mxu0 0.0
        %6695 = vmatprep.subr.mxu0 0.0
        %6696 = vmatpush1.msra.mxu0 0.0
        %6697 = vmatprep.subr.mxu0 0.0
        %6698 = vmatpush1.msra.mxu0 0.0
        %6699 = vmatprep.subr.mxu0 0.0
        %6700 = vmatpush1.msra.mxu0 0.0
        %6701 = vmatprep.subr.mxu0 0.0
        %6702 = vmatpush1.msra.mxu0 0.0
        %6703 = vmatprep.subr.mxu0 0.0
        %6704 = vmatpush1.msra.mxu0 0.0
        %6705 = vmatprep.subr.mxu0 0.0
        %6706 = vmatpush1.msra.mxu0 0.0
        %6707 = vmatprep.subr.mxu0 0.0
        %6708 = vmatpush1.msra.mxu0 0.0
        %6709 = vmatprep.subr.mxu0 0.0
        %6710 = vmatpush1.msra.mxu0 0.0
        %6711 = vmatprep.subr.mxu0 0.0
        %6712 = vmatpush1.msra.mxu0 0.0
        %6713 = vmatprep.subr.mxu0 0.0
        %6714 = vmatpush1.msra.mxu0 0.0
        %6715 = vmatprep.subr.mxu0 0.0
        %6716 = vmatpush1.msra.mxu0 0.0
        %6717 = vmatprep.mubr.f32.mxu0 0.0
        %6718 = vmatmul.mubr.f32.gmra.mrb[0].mxu0 %v6651
        %v6719 = vpop.f32.mrb[0].mxu0
        %v6720 = vadd.f32 0.0, %v6719
        %v6721 = vpop.f32.mrb[0].mxu0
        %6722 = vdwg.mxu0
        %v6723 = vadd.f32 %v6635, %v6720
        %v6724 = vld [vmem:[%s6287] sm:$0x1]
        %6725 = vst.msk [vmem:[#allocation3] sm:$0x1] %vm4963, %v6724
        %v6726 = vld [vmem:[%s6287 + $0x2] sm:$0x1]
        %6727 = vst.msk [vmem:[#allocation3 + $0x1] sm:$0x1] %vm4963, %v6726
        %s6728 = scalar_lea.vmem [#allocation2], 160
        %v6729 = vld [vmem:[%s6728] sm:$0x1]
        %6730 = vst.msk [vmem:[#allocation3 + $0x2] sm:$0x1] %vm4963, %v6729
        %v6731 = vld [vmem:[%s6728 + $0x2] sm:$0x1]
        %6732 = vst.msk [vmem:[#allocation3 + $0x3] sm:$0x1] %vm4963, %v6731
        %s6733 = scalar_lea.vmem [#allocation5], 640
        %v6734 = vld [vmem:[%s6733] sm:$0xff]
        %v6735 = vld [vmem:[%s6733 + $0x8] sm:$0xff]
        %v6736 = vld [vmem:[%s6733 + $0x10] sm:$0xff]
        %v6737 = vld [vmem:[%s6733 + $0x18] sm:$0xff]
        %v6738 = vld [vmem:[#allocation3] sm:$0xf]
        %v6740 = vsel %vm4938, %v6738, 0
        %6742 = vmatprep.subr.mxu0 0.0
        %6743 = vmatpush1.msra.mxu0 %v6734
        %6744 = vmatprep.subr.mxu0 0.0
        %6745 = vmatpush1.msra.mxu0 %v6735
        %6746 = vmatprep.subr.mxu0 0.0
        %6747 = vmatpush1.msra.mxu0 %v6736
        %6748 = vmatprep.subr.mxu0 0.0
        %6749 = vmatpush1.msra.mxu0 %v6737
        %6750 = vmatprep.subr.mxu0 0.0
        %6751 = vmatpush1.msra.mxu0 0.0
        %6752 = vmatprep.subr.mxu0 0.0
        %6753 = vmatpush1.msra.mxu0 0.0
        %6754 = vmatprep.subr.mxu0 0.0
        %6755 = vmatpush1.msra.mxu0 0.0
        %6756 = vmatprep.subr.mxu0 0.0
        %6757 = vmatpush1.msra.mxu0 0.0
        %6758 = vmatprep.subr.mxu0 0.0
        %6759 = vmatpush1.msra.mxu0 0.0
        %6760 = vmatprep.subr.mxu0 0.0
        %6761 = vmatpush1.msra.mxu0 0.0
        %6762 = vmatprep.subr.mxu0 0.0
        %6763 = vmatpush1.msra.mxu0 0.0
        %6764 = vmatprep.subr.mxu0 0.0
        %6765 = vmatpush1.msra.mxu0 0.0
        %6766 = vmatprep.subr.mxu0 0.0
        %6767 = vmatpush1.msra.mxu0 0.0
        %6768 = vmatprep.subr.mxu0 0.0
        %6769 = vmatpush1.msra.mxu0 0.0
        %6770 = vmatprep.subr.mxu0 0.0
        %6771 = vmatpush1.msra.mxu0 0.0
        %6772 = vmatprep.subr.mxu0 0.0
        %6773 = vmatpush1.msra.mxu0 0.0
        %6774 = vmatprep.subr.mxu0 0.0
        %6775 = vmatpush1.msra.mxu0 0.0
        %6776 = vmatprep.subr.mxu0 0.0
        %6777 = vmatpush1.msra.mxu0 0.0
        %6778 = vmatprep.subr.mxu0 0.0
        %6779 = vmatpush1.msra.mxu0 0.0
        %6780 = vmatprep.subr.mxu0 0.0
        %6781 = vmatpush1.msra.mxu0 0.0
        %6782 = vmatprep.subr.mxu0 0.0
        %6783 = vmatpush1.msra.mxu0 0.0
        %6784 = vmatprep.subr.mxu0 0.0
        %6785 = vmatpush1.msra.mxu0 0.0
        %6786 = vmatprep.subr.mxu0 0.0
        %6787 = vmatpush1.msra.mxu0 0.0
        %6788 = vmatprep.subr.mxu0 0.0
        %6789 = vmatpush1.msra.mxu0 0.0
        %6790 = vmatprep.subr.mxu0 0.0
        %6791 = vmatpush1.msra.mxu0 0.0
        %6792 = vmatprep.subr.mxu0 0.0
        %6793 = vmatpush1.msra.mxu0 0.0
        %6794 = vmatprep.subr.mxu0 0.0
        %6795 = vmatpush1.msra.mxu0 0.0
        %6796 = vmatprep.subr.mxu0 0.0
        %6797 = vmatpush1.msra.mxu0 0.0
        %6798 = vmatprep.subr.mxu0 0.0
        %6799 = vmatpush1.msra.mxu0 0.0
        %6800 = vmatprep.subr.mxu0 0.0
        %6801 = vmatpush1.msra.mxu0 0.0
        %6802 = vmatprep.subr.mxu0 0.0
        %6803 = vmatpush1.msra.mxu0 0.0
        %6804 = vmatprep.subr.mxu0 0.0
        %6805 = vmatpush1.msra.mxu0 0.0
        %6806 = vmatprep.mubr.f32.mxu0 0.0
        %6807 = vmatmul.mubr.f32.gmra.mrb[0].mxu0 %v6740
        %v6808 = vpop.f32.mrb[0].mxu0
        %v6809 = vadd.f32 0.0, %v6808
        %v6810 = vpop.f32.mrb[0].mxu0
        %6811 = vdwg.mxu0
        %v6812 = vadd.f32 %v6723, %v6809
        %v6813 = vld [vmem:[%s6287 + $0x2] sm:$0x1]
        %6814 = vst.msk [vmem:[#allocation3] sm:$0x1] %vm4963, %v6813
        %v6815 = vld [vmem:[%s6287 + $0x4] sm:$0x1]
        %6816 = vst.msk [vmem:[#allocation3 + $0x1] sm:$0x1] %vm4963, %v6815
        %v6817 = vld [vmem:[%s6728 + $0x2] sm:$0x1]
        %6818 = vst.msk [vmem:[#allocation3 + $0x2] sm:$0x1] %vm4963, %v6817
        %v6819 = vld [vmem:[%s6728 + $0x4] sm:$0x1]
        %6820 = vst.msk [vmem:[#allocation3 + $0x3] sm:$0x1] %vm4963, %v6819
        %s6821 = scalar_lea.vmem [#allocation5], 672
        %v6822 = vld [vmem:[%s6821] sm:$0xff]
        %v6823 = vld [vmem:[%s6821 + $0x8] sm:$0xff]
        %v6824 = vld [vmem:[%s6821 + $0x10] sm:$0xff]
        %v6825 = vld [vmem:[%s6821 + $0x18] sm:$0xff]
        %v6826 = vld [vmem:[#allocation3] sm:$0xf]
        %v6828 = vsel %vm4938, %v6826, 0
        %6830 = vmatprep.subr.mxu0 0.0
        %6831 = vmatpush1.msra.mxu0 %v6822
        %6832 = vmatprep.subr.mxu0 0.0
        %6833 = vmatpush1.msra.mxu0 %v6823
        %6834 = vmatprep.subr.mxu0 0.0
        %6835 = vmatpush1.msra.mxu0 %v6824
        %6836 = vmatprep.subr.mxu0 0.0
        %6837 = vmatpush1.msra.mxu0 %v6825
        %6838 = vmatprep.subr.mxu0 0.0
        %6839 = vmatpush1.msra.mxu0 0.0
        %6840 = vmatprep.subr.mxu0 0.0
        %6841 = vmatpush1.msra.mxu0 0.0
        %6842 = vmatprep.subr.mxu0 0.0
        %6843 = vmatpush1.msra.mxu0 0.0
        %6844 = vmatprep.subr.mxu0 0.0
        %6845 = vmatpush1.msra.mxu0 0.0
        %6846 = vmatprep.subr.mxu0 0.0
        %6847 = vmatpush1.msra.mxu0 0.0
        %6848 = vmatprep.subr.mxu0 0.0
        %6849 = vmatpush1.msra.mxu0 0.0
        %6850 = vmatprep.subr.mxu0 0.0
        %6851 = vmatpush1.msra.mxu0 0.0
        %6852 = vmatprep.subr.mxu0 0.0
        %6853 = vmatpush1.msra.mxu0 0.0
        %6854 = vmatprep.subr.mxu0 0.0
        %6855 = vmatpush1.msra.mxu0 0.0
        %6856 = vmatprep.subr.mxu0 0.0
        %6857 = vmatpush1.msra.mxu0 0.0
        %6858 = vmatprep.subr.mxu0 0.0
        %6859 = vmatpush1.msra.mxu0 0.0
        %6860 = vmatprep.subr.mxu0 0.0
        %6861 = vmatpush1.msra.mxu0 0.0
        %6862 = vmatprep.subr.mxu0 0.0
        %6863 = vmatpush1.msra.mxu0 0.0
        %6864 = vmatprep.subr.mxu0 0.0
        %6865 = vmatpush1.msra.mxu0 0.0
        %6866 = vmatprep.subr.mxu0 0.0
        %6867 = vmatpush1.msra.mxu0 0.0
        %6868 = vmatprep.subr.mxu0 0.0
        %6869 = vmatpush1.msra.mxu0 0.0
        %6870 = vmatprep.subr.mxu0 0.0
        %6871 = vmatpush1.msra.mxu0 0.0
        %6872 = vmatprep.subr.mxu0 0.0
        %6873 = vmatpush1.msra.mxu0 0.0
        %6874 = vmatprep.subr.mxu0 0.0
        %6875 = vmatpush1.msra.mxu0 0.0
        %6876 = vmatprep.subr.mxu0 0.0
        %6877 = vmatpush1.msra.mxu0 0.0
        %6878 = vmatprep.subr.mxu0 0.0
        %6879 = vmatpush1.msra.mxu0 0.0
        %6880 = vmatprep.subr.mxu0 0.0
        %6881 = vmatpush1.msra.mxu0 0.0
        %6882 = vmatprep.subr.mxu0 0.0
        %6883 = vmatpush1.msra.mxu0 0.0
        %6884 = vmatprep.subr.mxu0 0.0
        %6885 = vmatpush1.msra.mxu0 0.0
        %6886 = vmatprep.subr.mxu0 0.0
        %6887 = vmatpush1.msra.mxu0 0.0
        %6888 = vmatprep.subr.mxu0 0.0
        %6889 = vmatpush1.msra.mxu0 0.0
        %6890 = vmatprep.subr.mxu0 0.0
        %6891 = vmatpush1.msra.mxu0 0.0
        %6892 = vmatprep.subr.mxu0 0.0
        %6893 = vmatpush1.msra.mxu0 0.0
        %6894 = vmatprep.mubr.f32.mxu0 0.0
        %6895 = vmatmul.mubr.f32.gmra.mrb[0].mxu0 %v6828
        %v6896 = vpop.f32.mrb[0].mxu0
        %v6897 = vadd.f32 0.0, %v6896
        %v6898 = vpop.f32.mrb[0].mxu0
        %6899 = vdwg.mxu0
        %v6900 = vadd.f32 %v6812, %v6897
        %v6901 = vld [vmem:[%s6287 + $0x4] sm:$0x1]
        %6902 = vst.msk [vmem:[#allocation3] sm:$0x1] %vm4963, %v6901
        %v6903 = vld [vmem:[%s6287 + $0x6] sm:$0x1]
        %6904 = vst.msk [vmem:[#allocation3 + $0x1] sm:$0x1] %vm4963, %v6903
        %v6905 = vld [vmem:[%s6728 + $0x4] sm:$0x1]
        %6906 = vst.msk [vmem:[#allocation3 + $0x2] sm:$0x1] %vm4963, %v6905
        %v6907 = vld [vmem:[%s6728 + $0x6] sm:$0x1]
        %6908 = vst.msk [vmem:[#allocation3 + $0x3] sm:$0x1] %vm4963, %v6907
        %s6909 = scalar_lea.vmem [#allocation5], 704
        %v6910 = vld [vmem:[%s6909] sm:$0xff]
        %v6911 = vld [vmem:[%s6909 + $0x8] sm:$0xff]
        %v6912 = vld [vmem:[%s6909 + $0x10] sm:$0xff]
        %v6913 = vld [vmem:[%s6909 + $0x18] sm:$0xff]
        %v6914 = vld [vmem:[#allocation3] sm:$0xf]
        %v6916 = vsel %vm4938, %v6914, 0
        %6918 = vmatprep.subr.mxu0 0.0
        %6919 = vmatpush1.msra.mxu0 %v6910
        %6920 = vmatprep.subr.mxu0 0.0
        %6921 = vmatpush1.msra.mxu0 %v6911
        %6922 = vmatprep.subr.mxu0 0.0
        %6923 = vmatpush1.msra.mxu0 %v6912
        %6924 = vmatprep.subr.mxu0 0.0
        %6925 = vmatpush1.msra.mxu0 %v6913
        %6926 = vmatprep.subr.mxu0 0.0
        %6927 = vmatpush1.msra.mxu0 0.0
        %6928 = vmatprep.subr.mxu0 0.0
        %6929 = vmatpush1.msra.mxu0 0.0
        %6930 = vmatprep.subr.mxu0 0.0
        %6931 = vmatpush1.msra.mxu0 0.0
        %6932 = vmatprep.subr.mxu0 0.0
        %6933 = vmatpush1.msra.mxu0 0.0
        %6934 = vmatprep.subr.mxu0 0.0
        %6935 = vmatpush1.msra.mxu0 0.0
        %6936 = vmatprep.subr.mxu0 0.0
        %6937 = vmatpush1.msra.mxu0 0.0
        %6938 = vmatprep.subr.mxu0 0.0
        %6939 = vmatpush1.msra.mxu0 0.0
        %6940 = vmatprep.subr.mxu0 0.0
        %6941 = vmatpush1.msra.mxu0 0.0
        %6942 = vmatprep.subr.mxu0 0.0
        %6943 = vmatpush1.msra.mxu0 0.0
        %6944 = vmatprep.subr.mxu0 0.0
        %6945 = vmatpush1.msra.mxu0 0.0
        %6946 = vmatprep.subr.mxu0 0.0
        %6947 = vmatpush1.msra.mxu0 0.0
        %6948 = vmatprep.subr.mxu0 0.0
        %6949 = vmatpush1.msra.mxu0 0.0
        %6950 = vmatprep.subr.mxu0 0.0
        %6951 = vmatpush1.msra.mxu0 0.0
        %6952 = vmatprep.subr.mxu0 0.0
        %6953 = vmatpush1.msra.mxu0 0.0
        %6954 = vmatprep.subr.mxu0 0.0
        %6955 = vmatpush1.msra.mxu0 0.0
        %6956 = vmatprep.subr.mxu0 0.0
        %6957 = vmatpush1.msra.mxu0 0.0
        %6958 = vmatprep.subr.mxu0 0.0
        %6959 = vmatpush1.msra.mxu0 0.0
        %6960 = vmatprep.subr.mxu0 0.0
        %6961 = vmatpush1.msra.mxu0 0.0
        %6962 = vmatprep.subr.mxu0 0.0
        %6963 = vmatpush1.msra.mxu0 0.0
        %6964 = vmatprep.subr.mxu0 0.0
        %6965 = vmatpush1.msra.mxu0 0.0
        %6966 = vmatprep.subr.mxu0 0.0
        %6967 = vmatpush1.msra.mxu0 0.0
        %6968 = vmatprep.subr.mxu0 0.0
        %6969 = vmatpush1.msra.mxu0 0.0
        %6970 = vmatprep.subr.mxu0 0.0
        %6971 = vmatpush1.msra.mxu0 0.0
        %6972 = vmatprep.subr.mxu0 0.0
        %6973 = vmatpush1.msra.mxu0 0.0
        %6974 = vmatprep.subr.mxu0 0.0
        %6975 = vmatpush1.msra.mxu0 0.0
        %6976 = vmatprep.subr.mxu0 0.0
        %6977 = vmatpush1.msra.mxu0 0.0
        %6978 = vmatprep.subr.mxu0 0.0
        %6979 = vmatpush1.msra.mxu0 0.0
        %6980 = vmatprep.subr.mxu0 0.0
        %6981 = vmatpush1.msra.mxu0 0.0
        %6982 = vmatprep.mubr.f32.mxu0 0.0
        %6983 = vmatmul.mubr.f32.gmra.mrb[0].mxu0 %v6916
        %v6984 = vpop.f32.mrb[0].mxu0
        %v6985 = vadd.f32 0.0, %v6984
        %v6986 = vpop.f32.mrb[0].mxu0
        %6987 = vdwg.mxu0
        %v6988 = vadd.f32 %v6900, %v6985
        %v6989 = vld [vmem:[%s6287 + $0x6] sm:$0x1]
        %6990 = vst.msk [vmem:[#allocation3] sm:$0x1] %vm4963, %v6989
        %v6991 = vld [vmem:[%s6287 + $0x8] sm:$0x1]
        %6992 = vst.msk [vmem:[#allocation3 + $0x1] sm:$0x1] %vm4963, %v6991
        %v6993 = vld [vmem:[%s6728 + $0x6] sm:$0x1]
        %6994 = vst.msk [vmem:[#allocation3 + $0x2] sm:$0x1] %vm4963, %v6993
        %v6995 = vld [vmem:[%s6728 + $0x8] sm:$0x1]
        %6996 = vst.msk [vmem:[#allocation3 + $0x3] sm:$0x1] %vm4963, %v6995
        %s6997 = scalar_lea.vmem [#allocation5], 736
        %v6998 = vld [vmem:[%s6997] sm:$0xff]
        %v6999 = vld [vmem:[%s6997 + $0x8] sm:$0xff]
        %v7000 = vld [vmem:[%s6997 + $0x10] sm:$0xff]
        %v7001 = vld [vmem:[%s6997 + $0x18] sm:$0xff]
        %v7002 = vld [vmem:[#allocation3] sm:$0xf]
        %v7004 = vsel %vm4938, %v7002, 0
        %7006 = vmatprep.subr.mxu0 0.0
        %7007 = vmatpush1.msra.mxu0 %v6998
        %7008 = vmatprep.subr.mxu0 0.0
        %7009 = vmatpush1.msra.mxu0 %v6999
        %7010 = vmatprep.subr.mxu0 0.0
        %7011 = vmatpush1.msra.mxu0 %v7000
        %7012 = vmatprep.subr.mxu0 0.0
        %7013 = vmatpush1.msra.mxu0 %v7001
        %7014 = vmatprep.subr.mxu0 0.0
        %7015 = vmatpush1.msra.mxu0 0.0
        %7016 = vmatprep.subr.mxu0 0.0
        %7017 = vmatpush1.msra.mxu0 0.0
        %7018 = vmatprep.subr.mxu0 0.0
        %7019 = vmatpush1.msra.mxu0 0.0
        %7020 = vmatprep.subr.mxu0 0.0
        %7021 = vmatpush1.msra.mxu0 0.0
        %7022 = vmatprep.subr.mxu0 0.0
        %7023 = vmatpush1.msra.mxu0 0.0
        %7024 = vmatprep.subr.mxu0 0.0
        %7025 = vmatpush1.msra.mxu0 0.0
        %7026 = vmatprep.subr.mxu0 0.0
        %7027 = vmatpush1.msra.mxu0 0.0
        %7028 = vmatprep.subr.mxu0 0.0
        %7029 = vmatpush1.msra.mxu0 0.0
        %7030 = vmatprep.subr.mxu0 0.0
        %7031 = vmatpush1.msra.mxu0 0.0
        %7032 = vmatprep.subr.mxu0 0.0
        %7033 = vmatpush1.msra.mxu0 0.0
        %7034 = vmatprep.subr.mxu0 0.0
        %7035 = vmatpush1.msra.mxu0 0.0
        %7036 = vmatprep.subr.mxu0 0.0
        %7037 = vmatpush1.msra.mxu0 0.0
        %7038 = vmatprep.subr.mxu0 0.0
        %7039 = vmatpush1.msra.mxu0 0.0
        %7040 = vmatprep.subr.mxu0 0.0
        %7041 = vmatpush1.msra.mxu0 0.0
        %7042 = vmatprep.subr.mxu0 0.0
        %7043 = vmatpush1.msra.mxu0 0.0
        %7044 = vmatprep.subr.mxu0 0.0
        %7045 = vmatpush1.msra.mxu0 0.0
        %7046 = vmatprep.subr.mxu0 0.0
        %7047 = vmatpush1.msra.mxu0 0.0
        %7048 = vmatprep.subr.mxu0 0.0
        %7049 = vmatpush1.msra.mxu0 0.0
        %7050 = vmatprep.subr.mxu0 0.0
        %7051 = vmatpush1.msra.mxu0 0.0
        %7052 = vmatprep.subr.mxu0 0.0
        %7053 = vmatpush1.msra.mxu0 0.0
        %7054 = vmatprep.subr.mxu0 0.0
        %7055 = vmatpush1.msra.mxu0 0.0
        %7056 = vmatprep.subr.mxu0 0.0
        %7057 = vmatpush1.msra.mxu0 0.0
        %7058 = vmatprep.subr.mxu0 0.0
        %7059 = vmatpush1.msra.mxu0 0.0
        %7060 = vmatprep.subr.mxu0 0.0
        %7061 = vmatpush1.msra.mxu0 0.0
        %7062 = vmatprep.subr.mxu0 0.0
        %7063 = vmatpush1.msra.mxu0 0.0
        %7064 = vmatprep.subr.mxu0 0.0
        %7065 = vmatpush1.msra.mxu0 0.0
        %7066 = vmatprep.subr.mxu0 0.0
        %7067 = vmatpush1.msra.mxu0 0.0
        %7068 = vmatprep.subr.mxu0 0.0
        %7069 = vmatpush1.msra.mxu0 0.0
        %7070 = vmatprep.mubr.f32.mxu0 0.0
        %7071 = vmatmul.mubr.f32.gmra.mrb[0].mxu0 %v7004
        %v7072 = vpop.f32.mrb[0].mxu0
        %v7073 = vadd.f32 0.0, %v7072
        %v7074 = vpop.f32.mrb[0].mxu0
        %7075 = vdwg.mxu0
        %v7076 = vadd.f32 %v6988, %v7073
        %v7077 = vld [vmem:[%s6287 + $0x8] sm:$0x1]
        %7078 = vst.msk [vmem:[#allocation3] sm:$0x1] %vm4963, %v7077
        %v7079 = vld [vmem:[%s6287 + $0xa] sm:$0x1]
        %7080 = vst.msk [vmem:[#allocation3 + $0x1] sm:$0x1] %vm4963, %v7079
        %v7081 = vld [vmem:[%s6728 + $0x8] sm:$0x1]
        %7082 = vst.msk [vmem:[#allocation3 + $0x2] sm:$0x1] %vm4963, %v7081
        %v7083 = vld [vmem:[%s6728 + $0xa] sm:$0x1]
        %7084 = vst.msk [vmem:[#allocation3 + $0x3] sm:$0x1] %vm4963, %v7083
        %s7085 = scalar_lea.vmem [#allocation5], 768
        %v7086 = vld [vmem:[%s7085] sm:$0xff]
        %v7087 = vld [vmem:[%s7085 + $0x8] sm:$0xff]
        %v7088 = vld [vmem:[%s7085 + $0x10] sm:$0xff]
        %v7089 = vld [vmem:[%s7085 + $0x18] sm:$0xff]
        %v7090 = vld [vmem:[#allocation3] sm:$0xf]
        %v7092 = vsel %vm4938, %v7090, 0
        %7094 = vmatprep.subr.mxu0 0.0
        %7095 = vmatpush1.msra.mxu0 %v7086
        %7096 = vmatprep.subr.mxu0 0.0
        %7097 = vmatpush1.msra.mxu0 %v7087
        %7098 = vmatprep.subr.mxu0 0.0
        %7099 = vmatpush1.msra.mxu0 %v7088
        %7100 = vmatprep.subr.mxu0 0.0
        %7101 = vmatpush1.msra.mxu0 %v7089
        %7102 = vmatprep.subr.mxu0 0.0
        %7103 = vmatpush1.msra.mxu0 0.0
        %7104 = vmatprep.subr.mxu0 0.0
        %7105 = vmatpush1.msra.mxu0 0.0
        %7106 = vmatprep.subr.mxu0 0.0
        %7107 = vmatpush1.msra.mxu0 0.0
        %7108 = vmatprep.subr.mxu0 0.0
        %7109 = vmatpush1.msra.mxu0 0.0
        %7110 = vmatprep.subr.mxu0 0.0
        %7111 = vmatpush1.msra.mxu0 0.0
        %7112 = vmatprep.subr.mxu0 0.0
        %7113 = vmatpush1.msra.mxu0 0.0
        %7114 = vmatprep.subr.mxu0 0.0
        %7115 = vmatpush1.msra.mxu0 0.0
        %7116 = vmatprep.subr.mxu0 0.0
        %7117 = vmatpush1.msra.mxu0 0.0
        %7118 = vmatprep.subr.mxu0 0.0
        %7119 = vmatpush1.msra.mxu0 0.0
        %7120 = vmatprep.subr.mxu0 0.0
        %7121 = vmatpush1.msra.mxu0 0.0
        %7122 = vmatprep.subr.mxu0 0.0
        %7123 = vmatpush1.msra.mxu0 0.0
        %7124 = vmatprep.subr.mxu0 0.0
        %7125 = vmatpush1.msra.mxu0 0.0
        %7126 = vmatprep.subr.mxu0 0.0
        %7127 = vmatpush1.msra.mxu0 0.0
        %7128 = vmatprep.subr.mxu0 0.0
        %7129 = vmatpush1.msra.mxu0 0.0
        %7130 = vmatprep.subr.mxu0 0.0
        %7131 = vmatpush1.msra.mxu0 0.0
        %7132 = vmatprep.subr.mxu0 0.0
        %7133 = vmatpush1.msra.mxu0 0.0
        %7134 = vmatprep.subr.mxu0 0.0
        %7135 = vmatpush1.msra.mxu0 0.0
        %7136 = vmatprep.subr.mxu0 0.0
        %7137 = vmatpush1.msra.mxu0 0.0
        %7138 = vmatprep.subr.mxu0 0.0
        %7139 = vmatpush1.msra.mxu0 0.0
        %7140 = vmatprep.subr.mxu0 0.0
        %7141 = vmatpush1.msra.mxu0 0.0
        %7142 = vmatprep.subr.mxu0 0.0
        %7143 = vmatpush1.msra.mxu0 0.0
        %7144 = vmatprep.subr.mxu0 0.0
        %7145 = vmatpush1.msra.mxu0 0.0
        %7146 = vmatprep.subr.mxu0 0.0
        %7147 = vmatpush1.msra.mxu0 0.0
        %7148 = vmatprep.subr.mxu0 0.0
        %7149 = vmatpush1.msra.mxu0 0.0
        %7150 = vmatprep.subr.mxu0 0.0
        %7151 = vmatpush1.msra.mxu0 0.0
        %7152 = vmatprep.subr.mxu0 0.0
        %7153 = vmatpush1.msra.mxu0 0.0
        %7154 = vmatprep.subr.mxu0 0.0
        %7155 = vmatpush1.msra.mxu0 0.0
        %7156 = vmatprep.subr.mxu0 0.0
        %7157 = vmatpush1.msra.mxu0 0.0
        %7158 = vmatprep.mubr.f32.mxu0 0.0
        %7159 = vmatmul.mubr.f32.gmra.mrb[0].mxu0 %v7092
        %v7160 = vpop.f32.mrb[0].mxu0
        %v7161 = vadd.f32 0.0, %v7160
        %v7162 = vpop.f32.mrb[0].mxu0
        %7163 = vdwg.mxu0
        %v7164 = vadd.f32 %v7076, %v7161
        %v7166 = vrot.slane %v7164, 1
        %v7168 = vmax.f32 %v7164, %v7166
        %v7170 = vrot.slane %v7168, 2
        %v7172 = vmax.f32 %v7168, %v7170
        %v7173 = vld [vmem:[%s4] sm:$0x1]
        %v7174 = vadd.f32 %v7172, %v7173
        %v7175 = vld [vmem:[%s5] sm:$0xff]
        %v7176 = vld [vmem:[%s5 + $0x8] sm:$0xff]
        %v7177 = vld [vmem:[%s5 + $0x10] sm:$0xff]
        %v7178 = vld [vmem:[%s5 + $0x18] sm:$0xff]
        %v7179 = vld [vmem:[%s5 + $0x20] sm:$0xff]
        %v7180 = vld [vmem:[%s5 + $0x28] sm:$0xff]
        %v7181 = vld [vmem:[%s5 + $0x30] sm:$0xff]
        %v7182 = vld [vmem:[%s5 + $0x38] sm:$0xff]
        %v7183 = vld [vmem:[%s6] sm:$0x1]
        %vm7184 = vcmask 523264
        %v7186 = vsel %vm7184, %v7174, 0
        %7188 = vmatprep.subr.mxu0 0.0
        %7189 = vmatpush1.msra.mxu0 %v7175
        %7190 = vmatprep.subr.mxu0 0.0
        %7191 = vmatpush1.msra.mxu0 %v7176
        %7192 = vmatprep.subr.mxu0 0.0
        %7193 = vmatpush1.msra.mxu0 %v7177
        %7194 = vmatprep.subr.mxu0 0.0
        %7195 = vmatpush1.msra.mxu0 %v7178
        %7196 = vmatprep.subr.mxu0 0.0
        %7197 = vmatpush1.msra.mxu0 %v7179
        %7198 = vmatprep.subr.mxu0 0.0
        %7199 = vmatpush1.msra.mxu0 %v7180
        %7200 = vmatprep.subr.mxu0 0.0
        %7201 = vmatpush1.msra.mxu0 %v7181
        %7202 = vmatprep.subr.mxu0 0.0
        %7203 = vmatpush1.msra.mxu0 %v7182
        %7204 = vmatprep.subr.mxu0 0.0
        %7205 = vmatpush1.msra.mxu0 0.0
        %7206 = vmatprep.subr.mxu0 0.0
        %7207 = vmatpush1.msra.mxu0 0.0
        %7208 = vmatprep.subr.mxu0 0.0
        %7209 = vmatpush1.msra.mxu0 0.0
        %7210 = vmatprep.subr.mxu0 0.0
        %7211 = vmatpush1.msra.mxu0 0.0
        %7212 = vmatprep.subr.mxu0 0.0
        %7213 = vmatpush1.msra.mxu0 0.0
        %7214 = vmatprep.subr.mxu0 0.0
        %7215 = vmatpush1.msra.mxu0 0.0
        %7216 = vmatprep.subr.mxu0 0.0
        %7217 = vmatpush1.msra.mxu0 0.0
        %7218 = vmatprep.subr.mxu0 0.0
        %7219 = vmatpush1.msra.mxu0 0.0
        %7220 = vmatprep.subr.mxu0 0.0
        %7221 = vmatpush1.msra.mxu0 0.0
        %7222 = vmatprep.subr.mxu0 0.0
        %7223 = vmatpush1.msra.mxu0 0.0
        %7224 = vmatprep.subr.mxu0 0.0
        %7225 = vmatpush1.msra.mxu0 0.0
        %7226 = vmatprep.subr.mxu0 0.0
        %7227 = vmatpush1.msra.mxu0 0.0
        %7228 = vmatprep.subr.mxu0 0.0
        %7229 = vmatpush1.msra.mxu0 0.0
        %7230 = vmatprep.subr.mxu0 0.0
        %7231 = vmatpush1.msra.mxu0 0.0
        %7232 = vmatprep.subr.mxu0 0.0
        %7233 = vmatpush1.msra.mxu0 0.0
        %7234 = vmatprep.subr.mxu0 0.0
        %7235 = vmatpush1.msra.mxu0 0.0
        %7236 = vmatprep.subr.mxu0 0.0
        %7237 = vmatpush1.msra.mxu0 0.0
        %7238 = vmatprep.subr.mxu0 0.0
        %7239 = vmatpush1.msra.mxu0 0.0
        %7240 = vmatprep.subr.mxu0 0.0
        %7241 = vmatpush1.msra.mxu0 0.0
        %7242 = vmatprep.subr.mxu0 0.0
        %7243 = vmatpush1.msra.mxu0 0.0
        %7244 = vmatprep.subr.mxu0 0.0
        %7245 = vmatpush1.msra.mxu0 0.0
        %7246 = vmatprep.subr.mxu0 0.0
        %7247 = vmatpush1.msra.mxu0 0.0
        %7248 = vmatprep.subr.mxu0 0.0
        %7249 = vmatpush1.msra.mxu0 0.0
        %7250 = vmatprep.subr.mxu0 0.0
        %7251 = vmatpush1.msra.mxu0 0.0
        %7252 = vmatprep.mubr.f32.mxu0 0.0
        %7253 = vmatmul.mubr.f32.gmra.mrb[0].mxu0 %v7186
        %v7254 = vpop.f32.mrb[0].mxu0
        %v7255 = vadd.f32 %v7183, %v7254
        %v7256 = vpop.f32.mrb[0].mxu0
        %7257 = vdwg.mxu0
        %v7258 = vmax.f32 %v7255, 0.0
        %v7259 = vld [vmem:[%s7] sm:$0xff]
        %v7260 = vld [vmem:[%s7 + $0x8] sm:$0xff]
        %v7261 = vld [vmem:[%s7 + $0x10] sm:$0xff]
        %v7262 = vld [vmem:[%s7 + $0x18] sm:$0xff]
        %v7263 = vld [vmem:[#allocation4] sm:$0x1]
        %v7265 = vsel %vm4938, %v7258, 0
        %7267 = vmatprep.subr.mxu0 0.0
        %7268 = vmatpush1.msra.mxu0 %v7259
        %7269 = vmatprep.subr.mxu0 0.0
        %7270 = vmatpush1.msra.mxu0 %v7260
        %7271 = vmatprep.subr.mxu0 0.0
        %7272 = vmatpush1.msra.mxu0 %v7261
        %7273 = vmatprep.subr.mxu0 0.0
        %7274 = vmatpush1.msra.mxu0 %v7262
        %7275 = vmatprep.subr.mxu0 0.0
        %7276 = vmatpush1.msra.mxu0 0.0
        %7277 = vmatprep.subr.mxu0 0.0
        %7278 = vmatpush1.msra.mxu0 0.0
        %7279 = vmatprep.subr.mxu0 0.0
        %7280 = vmatpush1.msra.mxu0 0.0
        %7281 = vmatprep.subr.mxu0 0.0
        %7282 = vmatpush1.msra.mxu0 0.0
        %7283 = vmatprep.subr.mxu0 0.0
        %7284 = vmatpush1.msra.mxu0 0.0
        %7285 = vmatprep.subr.mxu0 0.0
        %7286 = vmatpush1.msra.mxu0 0.0
        %7287 = vmatprep.subr.mxu0 0.0
        %7288 = vmatpush1.msra.mxu0 0.0
        %7289 = vmatprep.subr.mxu0 0.0
        %7290 = vmatpush1.msra.mxu0 0.0
        %7291 = vmatprep.subr.mxu0 0.0
        %7292 = vmatpush1.msra.mxu0 0.0
        %7293 = vmatprep.subr.mxu0 0.0
        %7294 = vmatpush1.msra.mxu0 0.0
        %7295 = vmatprep.subr.mxu0 0.0
        %7296 = vmatpush1.msra.mxu0 0.0
        %7297 = vmatprep.subr.mxu0 0.0
        %7298 = vmatpush1.msra.mxu0 0.0
        %7299 = vmatprep.subr.mxu0 0.0
        %7300 = vmatpush1.msra.mxu0 0.0
        %7301 = vmatprep.subr.mxu0 0.0
        %7302 = vmatpush1.msra.mxu0 0.0
        %7303 = vmatprep.subr.mxu0 0.0
        %7304 = vmatpush1.msra.mxu0 0.0
        %7305 = vmatprep.subr.mxu0 0.0
        %7306 = vmatpush1.msra.mxu0 0.0
        %7307 = vmatprep.subr.mxu0 0.0
        %7308 = vmatpush1.msra.mxu0 0.0
        %7309 = vmatprep.subr.mxu0 0.0
        %7310 = vmatpush1.msra.mxu0 0.0
        %7311 = vmatprep.subr.mxu0 0.0
        %7312 = vmatpush1.msra.mxu0 0.0
        %7313 = vmatprep.subr.mxu0 0.0
        %7314 = vmatpush1.msra.mxu0 0.0
        %7315 = vmatprep.subr.mxu0 0.0
        %7316 = vmatpush1.msra.mxu0 0.0
        %7317 = vmatprep.subr.mxu0 0.0
        %7318 = vmatpush1.msra.mxu0 0.0
        %7319 = vmatprep.subr.mxu0 0.0
        %7320 = vmatpush1.msra.mxu0 0.0
        %7321 = vmatprep.subr.mxu0 0.0
        %7322 = vmatpush1.msra.mxu0 0.0
        %7323 = vmatprep.subr.mxu0 0.0
        %7324 = vmatpush1.msra.mxu0 0.0
        %7325 = vmatprep.subr.mxu0 0.0
        %7326 = vmatpush1.msra.mxu0 0.0
        %7327 = vmatprep.subr.mxu0 0.0
        %7328 = vmatpush1.msra.mxu0 0.0
        %7329 = vmatprep.subr.mxu0 0.0
        %7330 = vmatpush1.msra.mxu0 0.0
        %7331 = vmatprep.mubr.f32.mxu0 0.0
        %7332 = vmatmul.mubr.f32.gmra.mrb[0].mxu0 %v7265
        %v7333 = vpop.f32.mrb[0].mxu0
        %v7334 = vadd.f32 %v7263, %v7333
        %v7335 = vpop.f32.mrb[0].mxu0
        %7336 = vdwg.mxu0
        %v7337 = vxor.u32 %v7334, 2147483648
        %v7338 = vmul.f32 %v7337, 1.442695
        %v7339 = vpow.pop %v7338
        %v7340 = vadd.f32 %v7339, 1.0
        %v7341 = vrcp.pop %v7340
        %v7342 = vmul.f32 1.0, %v7341
        %vm7343 = vcmask 0
        %7344 = vst.msk [vmem:[%s345] sm:$0x1] %vm7343, %v7342
        %p7345 = scmp.lt.s32.totalorder %s23, 1
        %s7346 = scalar_select %p7345, %s23, 1
        %s7347 = scalar_lea.vmem %s9, %s7346
        // Predicated region
        $region61: #{net_forward.1} parent=55 // pred_check
          %p7348 = pneg %p235
        $region62: #{net_forward.1} parent=55 // pred_check_branch
          %7350 = sbr.rel (%p7348) target = $region64
        $region63: #{net_forward.1} parent=55 // pred_region
          _
        $region64: #{net_forward.1} parent=55 // pred_fallthru
          _
      $region56: #{net_forward.1} parent=5 // pred_fallthru
        _
      %p7351 = scmp.le.s32.totalorder 2, %s18
      // Predicated region
      $region65: #{net_forward.1} parent=5 // pred_check
        %p7352 = pneg %p7351
      $region66: #{net_forward.1} parent=5 // pred_check_branch
        %7354 = sbr.rel (%p7352) target = $region68
      $region67: #{net_forward.1} parent=5 // pred_region
        %s7355 = ssub.s32 %s18, 2
        // Predicated region
        $region69: #{net_forward.1} parent=67 // pred_check
          %p7356 = pneg %p241
        $region70: #{net_forward.1} parent=67 // pred_check_branch
          %7358 = sbr.rel (%p7356) target = $region72
        $region71: #{net_forward.1} parent=67 // pred_region
          %p7359 = scmp.lt.s32.totalorder %s24, 1
          %s7360 = scalar_select %p7359, %s24, 1
          %s7361 = scalar_lea.vmem %s9, %s7360
        $region72: #{net_forward.1} parent=67 // pred_fallthru
          _
      $region68: #{net_forward.1} parent=5 // pred_fallthru
        _
    $region6: #{net_forward.1} parent=1 // loop_footer
      %s22 = sadd.s32 1, %s18
    $region7: #{net_forward.1} parent=1 // loop_footer_branch
      %17 = sbr.rel target = $region3
    $region8: #{net_forward.1} parent=1 // loop_exit
      _
    %7362 = vsyncpa [#allocation6], 1
    %s7363 = scalar_lea.sflag [#allocation6], 1
    %7364 = vsyncpa %s7363, 1

</llo_original>
